<compile_context>
chip_gen: v6e
topology: v6e:2x2x1
jax: 0.10.0
libtpu: 0.0.40
codegen_flags: <defaults>
</compile_context>

<pallas_src>
import functools

import jax
import jax.numpy as jnp
from jax import lax
from jax.experimental import pallas as pl
from jax.experimental.pallas import tpu as pltpu


def _round_up(x, m):
    return (x + m - 1) // m * m


# ---------------------------------------------------------------------------
# Pallas kernel: per-batch  conv (49 shifted matmuls) -> instance-norm -> ReLU
# ---------------------------------------------------------------------------
def _c7s1k_kernel(x_ref, w_ref, mask_ref, o_ref, *, k, wp, l, inv_count, eps):
    # x_ref:    (C_in_pad, FLAT)           bf16  flattened padded image (+ zero tail)
    # w_ref:    (k*k, C_out_pad, C_in_pad) bf16  weight, (kh, kw)-major
    # mask_ref: (1, L)                     f32   1.0 where column is valid (w < Wo)
    # o_ref:    (C_out_pad, L)             f32   L = Ho * Wp  (lane-dense)
    c_out_p = o_ref.shape[0]
    acc = jnp.zeros((c_out_p, l), jnp.float32)

    # Convolution: for every (kh, kw), the flat slice starting at kh*Wp + kw satisfies
    #   x_flat[ci, kh*Wp + kw + (ho*Wp + w)] == x_pad[ci, ho + kh, w + kw]   for w < Wo,
    # so each tap is one bf16 matmul contracting over C_in, accumulated in f32.
    for kh in range(k):
        for kw in range(k):
            off = kh * wp + kw                              # static offset
            x_sl = x_ref[:, pl.ds(off, l)]                  # (C_in_pad, L) bf16
            w_kk = w_ref[kh * k + kw]                       # (C_out_pad, C_in_pad) bf16
            acc = acc + jnp.dot(w_kk, x_sl, preferred_element_type=jnp.float32)

    # InstanceNorm2d (affine=False, biased variance) over the valid columns only.
    # (The conv bias is omitted entirely: mean subtraction cancels it exactly.)
    mask = mask_ref[...]                                    # (1, L)
    mean = jnp.sum(acc * mask, axis=1, keepdims=True) * inv_count
    cen = acc - mean
    var = jnp.sum(cen * cen * mask, axis=1, keepdims=True) * inv_count
    y = cen * lax.rsqrt(var + eps)

    # ReLU; garbage columns (masked out above) are discarded by the wrapper slice.
    o_ref[...] = jnp.maximum(y, 0.0).astype(o_ref.dtype)


def c7s1_k_forward(x, weight, bias=None, *, eps=1e-5):
    """x: (N, C_in, H, W); weight: (C_out, C_in, 7, 7); bias unused (cancelled by InstanceNorm)."""
    del bias  # per-channel bias is exactly cancelled by InstanceNorm's mean subtraction
    n, c_in, h, w = x.shape
    c_out = weight.shape[0]
    k = 7
    pad = c_in  # the module pads by `in_channel`
    if pad >= h or pad >= w:
        raise ValueError("ReflectionPad2d requires pad < spatial dims (pad=C_in here).")

    # Reflection padding (cheap XLA glue; matches torch.nn.ReflectionPad2d).
    x_pad = jnp.pad(x, ((0, 0), (0, 0), (pad, pad), (pad, pad)), mode="reflect")
    hp, wp = h + 2 * pad, w + 2 * pad
    ho, wo = hp - k + 1, wp - k + 1
    l = ho * wp                                   # lane-dense per-batch output width
    flat = _round_up(hp * wp + (k - 1), 128)      # flattened image + tail for largest shift
    c_in_p = _round_up(c_in, 8)
    c_out_p = _round_up(c_out, 8)

    # Flatten rows, zero-pad channel dim to 8 and tail to a lane multiple, cast to bf16.
    xf = x_pad.reshape(n, c_in, hp * wp)
    xf = jnp.pad(xf, ((0, 0), (0, c_in_p - c_in), (0, flat - hp * wp))).astype(jnp.bfloat16)

    # Weight as (k*k, C_out_pad, C_in_pad), bf16, (kh, kw)-major to match the kernel loop.
    w_k = jnp.transpose(weight, (2, 3, 0, 1)).reshape(k * k, c_out, c_in)
    w_k = jnp.pad(w_k, ((0, 0), (0, c_out_p - c_out), (0, c_in_p - c_in))).astype(jnp.bfloat16)

    # Validity mask over the flattened (Ho, Wp) grid: column index mod Wp < Wo.
    col = jnp.arange(l, dtype=jnp.int32) % wp
    mask = (col < wo).astype(jnp.float32).reshape(1, l)

    kernel = functools.partial(
        _c7s1k_kernel, k=k, wp=wp, l=l, inv_count=1.0 / float(ho * wo), eps=eps)

    # Explicit VMEM budget (double-buffered inputs/outputs + f32 accumulator headroom),
    # kept well under v7x's 64 MiB physical VMEM.
    vmem_bytes = (2 * c_in_p * flat * 2
                  + 2 * k * k * c_out_p * c_in_p * 2
                  + 2 * l * 4
                  + 2 * c_out_p * l * 4
                  + 4 * c_out_p * l * 4
                  + (4 << 20))
    vmem_limit = int(min(max(vmem_bytes, 8 << 20), 48 << 20))

    out = pl.pallas_call(
        kernel,
        out_shape=jax.ShapeDtypeStruct((n, c_out_p, l), jnp.float32),
        grid_spec=pltpu.PrefetchScalarGridSpec(
            num_scalar_prefetch=0,
            grid=(n,),
            in_specs=[
                pl.BlockSpec((None, c_in_p, flat), lambda i: (i, 0, 0)),     # padded image (per batch)
                pl.BlockSpec((k * k, c_out_p, c_in_p), lambda i: (0, 0, 0)),  # weights (resident)
                pl.BlockSpec((1, l), lambda i: (0, 0)),                       # validity mask (resident)
            ],
            out_specs=pl.BlockSpec((None, c_out_p, l), lambda i: (i, 0, 0)),
        ),
        compiler_params=pltpu.CompilerParams(
            dimension_semantics=("parallel",),
            vmem_limit_bytes=vmem_limit,
        ),
    )(xf, w_k, mask)

    # (N, C_out_pad, Ho*Wp) -> NCHW via free reshape + narrow slice (no transpose).
    out = out[:, :c_out, :].reshape(n, c_out, ho, wp)[:, :, :, :wo]
    return out


# Pure-JAX reference (same math as the PyTorch module, f32 throughout).
def _reference(x, weight, bias, *, eps=1e-5):
    c_in = x.shape[1]
    pad = c_in
    x_pad = jnp.pad(x, ((0, 0), (0, 0), (pad, pad), (pad, pad)), mode="reflect")
    y = lax.conv_general_dilated(
        x_pad.astype(jnp.float32), weight.astype(jnp.float32),
        window_strides=(1, 1), padding="VALID",
        dimension_numbers=("NCHW", "OIHW", "NCHW"),
    ) + bias.reshape(1, -1, 1, 1)
    mean = y.mean(axis=(2, 3), keepdims=True)
    var = ((y - mean) ** 2).mean(axis=(2, 3), keepdims=True)
    return jnp.maximum((y - mean) * lax.rsqrt(var + eps), 0.0)


if __name__ == "__main__":
    # Small shapes consistent with the module.
    N, C_IN, C_OUT, H, W = 2, 4, 8, 16, 16

    key = jax.random.PRNGKey(0)
    kx, kwt, kb = jax.random.split(key, 3)
    x = jax.random.normal(kx, (N, C_IN, H, W), dtype=jnp.float32)
    fan_in = C_IN * 7 * 7
    bound = 1.0 / (fan_in ** 0.5)
    weight = jax.random.uniform(kwt, (C_OUT, C_IN, 7, 7), jnp.float32, -bound, bound)
    bias = jax.random.uniform(kb, (C_OUT,), jnp.float32, -bound, bound)

    out = jax.block_until_ready(c7s1_k_forward(x, weight, bias))
    ref = jax.block_until_ready(_reference(x, weight, bias))

    assert out.shape == (N, C_OUT, H + 2 * C_IN - 6, W + 2 * C_IN - 6), out.shape
    max_err = float(jnp.max(jnp.abs(out - ref)))
    # bf16 matmul operands with f32 accumulation -> relaxed tolerance vs. the f32 reference.
    assert jnp.allclose(out, ref, atol=5e-2, rtol=5e-2), max_err
    print("KERNEL_OK")
</pallas_src>

<mosaic_0001>
module attributes {stable_mosaic.version = 11 : i64} {
  func.func @_c7s1k_kernel(%arg0: i32, %arg1: memref<1x8x640xbf16, #tpu.memory_space<vmem>>, %arg2: memref<49x8x8xbf16, #tpu.memory_space<vmem>>, %arg3: memref<1x432xf32, #tpu.memory_space<vmem>>, %arg4: memref<1x8x432xf32, #tpu.memory_space<vmem>>) attributes {dimension_semantics = [#tpu.dimension_semantics<parallel>], iteration_bounds = array<i64: 2>, scalar_prefetch = 0 : i64, scratch_operands = 0 : i64, tpu.core_type = #tpu.core_type<tc>, window_params = [{transform_indices = @transform_0, window_bounds = array<i64: 1, 8, 640>}, {pipeline_mode = #tpu.pipeline_mode<synchronous>, transform_indices = @transform_1, window_bounds = array<i64: 49, 8, 8>}, {pipeline_mode = #tpu.pipeline_mode<synchronous>, transform_indices = @transform_2, window_bounds = array<i64: 1, 432>}, {transform_indices = @transform_3, window_bounds = array<i64: 1, 8, 432>}]} {
    %cst = arith.constant 0.000000e+00 : f32
    %0 = vector.broadcast %cst : f32 to vector<8x432xf32>
    %c0 = arith.constant 0 : index
    %c0_0 = arith.constant 0 : index
    %c0_1 = arith.constant 0 : index
    %1 = vector.load %arg1[%c0, %c0_0, %c0_1] : memref<1x8x640xbf16, #tpu.memory_space<vmem>>, vector<1x8x432xbf16>
    %2 = vector.shape_cast %1 : vector<1x8x432xbf16> to vector<8x432xbf16>
    %c0_2 = arith.constant 0 : index
    %c0_3 = arith.constant 0 : index
    %c0_4 = arith.constant 0 : index
    %3 = vector.load %arg2[%c0_2, %c0_3, %c0_4] : memref<49x8x8xbf16, #tpu.memory_space<vmem>>, vector<1x8x8xbf16>
    %4 = vector.shape_cast %3 : vector<1x8x8xbf16> to vector<8x8xbf16>
    %cst_5 = arith.constant dense<0.000000e+00> : vector<8x432xf32>
    %5 = tpu.matmul %4, %2, %cst_5 {dimension_numbers = #tpu.dot_dimension_numbers<[1], [0], [0], [1], [0, 0, 1, 1], [], []>} : vector<8x8xbf16>, vector<8x432xbf16>, vector<8x432xf32> -> vector<8x432xf32>
    %6 = arith.addf %0, %5 : vector<8x432xf32>
    %c0_6 = arith.constant 0 : index
    %c0_7 = arith.constant 0 : index
    %c1 = arith.constant 1 : index
    %7 = vector.load %arg1[%c0_6, %c0_7, %c1] : memref<1x8x640xbf16, #tpu.memory_space<vmem>>, vector<1x8x432xbf16>
    %8 = vector.shape_cast %7 : vector<1x8x432xbf16> to vector<8x432xbf16>
    %c1_8 = arith.constant 1 : index
    %c0_9 = arith.constant 0 : index
    %c0_10 = arith.constant 0 : index
    %9 = vector.load %arg2[%c1_8, %c0_9, %c0_10] : memref<49x8x8xbf16, #tpu.memory_space<vmem>>, vector<1x8x8xbf16>
    %10 = vector.shape_cast %9 : vector<1x8x8xbf16> to vector<8x8xbf16>
    %cst_11 = arith.constant dense<0.000000e+00> : vector<8x432xf32>
    %11 = tpu.matmul %10, %8, %cst_11 {dimension_numbers = #tpu.dot_dimension_numbers<[1], [0], [0], [1], [0, 0, 1, 1], [], []>} : vector<8x8xbf16>, vector<8x432xbf16>, vector<8x432xf32> -> vector<8x432xf32>
    %12 = arith.addf %6, %11 : vector<8x432xf32>
    %c0_12 = arith.constant 0 : index
    %c0_13 = arith.constant 0 : index
    %c2 = arith.constant 2 : index
    %13 = vector.load %arg1[%c0_12, %c0_13, %c2] : memref<1x8x640xbf16, #tpu.memory_space<vmem>>, vector<1x8x432xbf16>
    %14 = vector.shape_cast %13 : vector<1x8x432xbf16> to vector<8x432xbf16>
    %c2_14 = arith.constant 2 : index
    %c0_15 = arith.constant 0 : index
    %c0_16 = arith.constant 0 : index
    %15 = vector.load %arg2[%c2_14, %c0_15, %c0_16] : memref<49x8x8xbf16, #tpu.memory_space<vmem>>, vector<1x8x8xbf16>
    %16 = vector.shape_cast %15 : vector<1x8x8xbf16> to vector<8x8xbf16>
    %cst_17 = arith.constant dense<0.000000e+00> : vector<8x432xf32>
    %17 = tpu.matmul %16, %14, %cst_17 {dimension_numbers = #tpu.dot_dimension_numbers<[1], [0], [0], [1], [0, 0, 1, 1], [], []>} : vector<8x8xbf16>, vector<8x432xbf16>, vector<8x432xf32> -> vector<8x432xf32>
    %18 = arith.addf %12, %17 : vector<8x432xf32>
    %c0_18 = arith.constant 0 : index
    %c0_19 = arith.constant 0 : index
    %c3 = arith.constant 3 : index
    %19 = vector.load %arg1[%c0_18, %c0_19, %c3] : memref<1x8x640xbf16, #tpu.memory_space<vmem>>, vector<1x8x432xbf16>
    %20 = vector.shape_cast %19 : vector<1x8x432xbf16> to vector<8x432xbf16>
    %c3_20 = arith.constant 3 : index
    %c0_21 = arith.constant 0 : index
    %c0_22 = arith.constant 0 : index
    %21 = vector.load %arg2[%c3_20, %c0_21, %c0_22] : memref<49x8x8xbf16, #tpu.memory_space<vmem>>, vector<1x8x8xbf16>
    %22 = vector.shape_cast %21 : vector<1x8x8xbf16> to vector<8x8xbf16>
    %cst_23 = arith.constant dense<0.000000e+00> : vector<8x432xf32>
    %23 = tpu.matmul %22, %20, %cst_23 {dimension_numbers = #tpu.dot_dimension_numbers<[1], [0], [0], [1], [0, 0, 1, 1], [], []>} : vector<8x8xbf16>, vector<8x432xbf16>, vector<8x432xf32> -> vector<8x432xf32>
    %24 = arith.addf %18, %23 : vector<8x432xf32>
    %c0_24 = arith.constant 0 : index
    %c0_25 = arith.constant 0 : index
    %c4 = arith.constant 4 : index
    %25 = vector.load %arg1[%c0_24, %c0_25, %c4] : memref<1x8x640xbf16, #tpu.memory_space<vmem>>, vector<1x8x432xbf16>
    %26 = vector.shape_cast %25 : vector<1x8x432xbf16> to vector<8x432xbf16>
    %c4_26 = arith.constant 4 : index
    %c0_27 = arith.constant 0 : index
    %c0_28 = arith.constant 0 : index
    %27 = vector.load %arg2[%c4_26, %c0_27, %c0_28] : memref<49x8x8xbf16, #tpu.memory_space<vmem>>, vector<1x8x8xbf16>
    %28 = vector.shape_cast %27 : vector<1x8x8xbf16> to vector<8x8xbf16>
    %cst_29 = arith.constant dense<0.000000e+00> : vector<8x432xf32>
    %29 = tpu.matmul %28, %26, %cst_29 {dimension_numbers = #tpu.dot_dimension_numbers<[1], [0], [0], [1], [0, 0, 1, 1], [], []>} : vector<8x8xbf16>, vector<8x432xbf16>, vector<8x432xf32> -> vector<8x432xf32>
    %30 = arith.addf %24, %29 : vector<8x432xf32>
    %c0_30 = arith.constant 0 : index
    %c0_31 = arith.constant 0 : index
    %c5 = arith.constant 5 : index
    %31 = vector.load %arg1[%c0_30, %c0_31, %c5] : memref<1x8x640xbf16, #tpu.memory_space<vmem>>, vector<1x8x432xbf16>
    %32 = vector.shape_cast %31 : vector<1x8x432xbf16> to vector<8x432xbf16>
    %c5_32 = arith.constant 5 : index
    %c0_33 = arith.constant 0 : index
    %c0_34 = arith.constant 0 : index
    %33 = vector.load %arg2[%c5_32, %c0_33, %c0_34] : memref<49x8x8xbf16, #tpu.memory_space<vmem>>, vector<1x8x8xbf16>
    %34 = vector.shape_cast %33 : vector<1x8x8xbf16> to vector<8x8xbf16>
    %cst_35 = arith.constant dense<0.000000e+00> : vector<8x432xf32>
    %35 = tpu.matmul %34, %32, %cst_35 {dimension_numbers = #tpu.dot_dimension_numbers<[1], [0], [0], [1], [0, 0, 1, 1], [], []>} : vector<8x8xbf16>, vector<8x432xbf16>, vector<8x432xf32> -> vector<8x432xf32>
    %36 = arith.addf %30, %35 : vector<8x432xf32>
    %c0_36 = arith.constant 0 : index
    %c0_37 = arith.constant 0 : index
    %c6 = arith.constant 6 : index
    %37 = vector.load %arg1[%c0_36, %c0_37, %c6] : memref<1x8x640xbf16, #tpu.memory_space<vmem>>, vector<1x8x432xbf16>
    %38 = vector.shape_cast %37 : vector<1x8x432xbf16> to vector<8x432xbf16>
    %c6_38 = arith.constant 6 : index
    %c0_39 = arith.constant 0 : index
    %c0_40 = arith.constant 0 : index
    %39 = vector.load %arg2[%c6_38, %c0_39, %c0_40] : memref<49x8x8xbf16, #tpu.memory_space<vmem>>, vector<1x8x8xbf16>
    %40 = vector.shape_cast %39 : vector<1x8x8xbf16> to vector<8x8xbf16>
    %cst_41 = arith.constant dense<0.000000e+00> : vector<8x432xf32>
    %41 = tpu.matmul %40, %38, %cst_41 {dimension_numbers = #tpu.dot_dimension_numbers<[1], [0], [0], [1], [0, 0, 1, 1], [], []>} : vector<8x8xbf16>, vector<8x432xbf16>, vector<8x432xf32> -> vector<8x432xf32>
    %42 = arith.addf %36, %41 : vector<8x432xf32>
    %c0_42 = arith.constant 0 : index
    %c0_43 = arith.constant 0 : index
    %c24 = arith.constant 24 : index
    %43 = vector.load %arg1[%c0_42, %c0_43, %c24] : memref<1x8x640xbf16, #tpu.memory_space<vmem>>, vector<1x8x432xbf16>
    %44 = vector.shape_cast %43 : vector<1x8x432xbf16> to vector<8x432xbf16>
    %c7 = arith.constant 7 : index
    %c0_44 = arith.constant 0 : index
    %c0_45 = arith.constant 0 : index
    %45 = vector.load %arg2[%c7, %c0_44, %c0_45] : memref<49x8x8xbf16, #tpu.memory_space<vmem>>, vector<1x8x8xbf16>
    %46 = vector.shape_cast %45 : vector<1x8x8xbf16> to vector<8x8xbf16>
    %cst_46 = arith.constant dense<0.000000e+00> : vector<8x432xf32>
    %47 = tpu.matmul %46, %44, %cst_46 {dimension_numbers = #tpu.dot_dimension_numbers<[1], [0], [0], [1], [0, 0, 1, 1], [], []>} : vector<8x8xbf16>, vector<8x432xbf16>, vector<8x432xf32> -> vector<8x432xf32>
    %48 = arith.addf %42, %47 : vector<8x432xf32>
    %c0_47 = arith.constant 0 : index
    %c0_48 = arith.constant 0 : index
    %c25 = arith.constant 25 : index
    %49 = vector.load %arg1[%c0_47, %c0_48, %c25] : memref<1x8x640xbf16, #tpu.memory_space<vmem>>, vector<1x8x432xbf16>
    %50 = vector.shape_cast %49 : vector<1x8x432xbf16> to vector<8x432xbf16>
    %c8 = arith.constant 8 : index
    %c0_49 = arith.constant 0 : index
    %c0_50 = arith.constant 0 : index
    %51 = vector.load %arg2[%c8, %c0_49, %c0_50] : memref<49x8x8xbf16, #tpu.memory_space<vmem>>, vector<1x8x8xbf16>
    %52 = vector.shape_cast %51 : vector<1x8x8xbf16> to vector<8x8xbf16>
    %cst_51 = arith.constant dense<0.000000e+00> : vector<8x432xf32>
    %53 = tpu.matmul %52, %50, %cst_51 {dimension_numbers = #tpu.dot_dimension_numbers<[1], [0], [0], [1], [0, 0, 1, 1], [], []>} : vector<8x8xbf16>, vector<8x432xbf16>, vector<8x432xf32> -> vector<8x432xf32>
    %54 = arith.addf %48, %53 : vector<8x432xf32>
    %c0_52 = arith.constant 0 : index
    %c0_53 = arith.constant 0 : index
    %c26 = arith.constant 26 : index
    %55 = vector.load %arg1[%c0_52, %c0_53, %c26] : memref<1x8x640xbf16, #tpu.memory_space<vmem>>, vector<1x8x432xbf16>
    %56 = vector.shape_cast %55 : vector<1x8x432xbf16> to vector<8x432xbf16>
    %c9 = arith.constant 9 : index
    %c0_54 = arith.constant 0 : index
    %c0_55 = arith.constant 0 : index
    %57 = vector.load %arg2[%c9, %c0_54, %c0_55] : memref<49x8x8xbf16, #tpu.memory_space<vmem>>, vector<1x8x8xbf16>
    %58 = vector.shape_cast %57 : vector<1x8x8xbf16> to vector<8x8xbf16>
    %cst_56 = arith.constant dense<0.000000e+00> : vector<8x432xf32>
    %59 = tpu.matmul %58, %56, %cst_56 {dimension_numbers = #tpu.dot_dimension_numbers<[1], [0], [0], [1], [0, 0, 1, 1], [], []>} : vector<8x8xbf16>, vector<8x432xbf16>, vector<8x432xf32> -> vector<8x432xf32>
    %60 = arith.addf %54, %59 : vector<8x432xf32>
    %c0_57 = arith.constant 0 : index
    %c0_58 = arith.constant 0 : index
    %c27 = arith.constant 27 : index
    %61 = vector.load %arg1[%c0_57, %c0_58, %c27] : memref<1x8x640xbf16, #tpu.memory_space<vmem>>, vector<1x8x432xbf16>
    %62 = vector.shape_cast %61 : vector<1x8x432xbf16> to vector<8x432xbf16>
    %c10 = arith.constant 10 : index
    %c0_59 = arith.constant 0 : index
    %c0_60 = arith.constant 0 : index
    %63 = vector.load %arg2[%c10, %c0_59, %c0_60] : memref<49x8x8xbf16, #tpu.memory_space<vmem>>, vector<1x8x8xbf16>
    %64 = vector.shape_cast %63 : vector<1x8x8xbf16> to vector<8x8xbf16>
    %cst_61 = arith.constant dense<0.000000e+00> : vector<8x432xf32>
    %65 = tpu.matmul %64, %62, %cst_61 {dimension_numbers = #tpu.dot_dimension_numbers<[1], [0], [0], [1], [0, 0, 1, 1], [], []>} : vector<8x8xbf16>, vector<8x432xbf16>, vector<8x432xf32> -> vector<8x432xf32>
    %66 = arith.addf %60, %65 : vector<8x432xf32>
    %c0_62 = arith.constant 0 : index
    %c0_63 = arith.constant 0 : index
    %c28 = arith.constant 28 : index
    %67 = vector.load %arg1[%c0_62, %c0_63, %c28] : memref<1x8x640xbf16, #tpu.memory_space<vmem>>, vector<1x8x432xbf16>
    %68 = vector.shape_cast %67 : vector<1x8x432xbf16> to vector<8x432xbf16>
    %c11 = arith.constant 11 : index
    %c0_64 = arith.constant 0 : index
    %c0_65 = arith.constant 0 : index
    %69 = vector.load %arg2[%c11, %c0_64, %c0_65] : memref<49x8x8xbf16, #tpu.memory_space<vmem>>, vector<1x8x8xbf16>
    %70 = vector.shape_cast %69 : vector<1x8x8xbf16> to vector<8x8xbf16>
    %cst_66 = arith.constant dense<0.000000e+00> : vector<8x432xf32>
    %71 = tpu.matmul %70, %68, %cst_66 {dimension_numbers = #tpu.dot_dimension_numbers<[1], [0], [0], [1], [0, 0, 1, 1], [], []>} : vector<8x8xbf16>, vector<8x432xbf16>, vector<8x432xf32> -> vector<8x432xf32>
    %72 = arith.addf %66, %71 : vector<8x432xf32>
    %c0_67 = arith.constant 0 : index
    %c0_68 = arith.constant 0 : index
    %c29 = arith.constant 29 : index
    %73 = vector.load %arg1[%c0_67, %c0_68, %c29] : memref<1x8x640xbf16, #tpu.memory_space<vmem>>, vector<1x8x432xbf16>
    %74 = vector.shape_cast %73 : vector<1x8x432xbf16> to vector<8x432xbf16>
    %c12 = arith.constant 12 : index
    %c0_69 = arith.constant 0 : index
    %c0_70 = arith.constant 0 : index
    %75 = vector.load %arg2[%c12, %c0_69, %c0_70] : memref<49x8x8xbf16, #tpu.memory_space<vmem>>, vector<1x8x8xbf16>
    %76 = vector.shape_cast %75 : vector<1x8x8xbf16> to vector<8x8xbf16>
    %cst_71 = arith.constant dense<0.000000e+00> : vector<8x432xf32>
    %77 = tpu.matmul %76, %74, %cst_71 {dimension_numbers = #tpu.dot_dimension_numbers<[1], [0], [0], [1], [0, 0, 1, 1], [], []>} : vector<8x8xbf16>, vector<8x432xbf16>, vector<8x432xf32> -> vector<8x432xf32>
    %78 = arith.addf %72, %77 : vector<8x432xf32>
    %c0_72 = arith.constant 0 : index
    %c0_73 = arith.constant 0 : index
    %c30 = arith.constant 30 : index
    %79 = vector.load %arg1[%c0_72, %c0_73, %c30] : memref<1x8x640xbf16, #tpu.memory_space<vmem>>, vector<1x8x432xbf16>
    %80 = vector.shape_cast %79 : vector<1x8x432xbf16> to vector<8x432xbf16>
    %c13 = arith.constant 13 : index
    %c0_74 = arith.constant 0 : index
    %c0_75 = arith.constant 0 : index
    %81 = vector.load %arg2[%c13, %c0_74, %c0_75] : memref<49x8x8xbf16, #tpu.memory_space<vmem>>, vector<1x8x8xbf16>
    %82 = vector.shape_cast %81 : vector<1x8x8xbf16> to vector<8x8xbf16>
    %cst_76 = arith.constant dense<0.000000e+00> : vector<8x432xf32>
    %83 = tpu.matmul %82, %80, %cst_76 {dimension_numbers = #tpu.dot_dimension_numbers<[1], [0], [0], [1], [0, 0, 1, 1], [], []>} : vector<8x8xbf16>, vector<8x432xbf16>, vector<8x432xf32> -> vector<8x432xf32>
    %84 = arith.addf %78, %83 : vector<8x432xf32>
    %c0_77 = arith.constant 0 : index
    %c0_78 = arith.constant 0 : index
    %c48 = arith.constant 48 : index
    %85 = vector.load %arg1[%c0_77, %c0_78, %c48] : memref<1x8x640xbf16, #tpu.memory_space<vmem>>, vector<1x8x432xbf16>
    %86 = vector.shape_cast %85 : vector<1x8x432xbf16> to vector<8x432xbf16>
    %c14 = arith.constant 14 : index
    %c0_79 = arith.constant 0 : index
    %c0_80 = arith.constant 0 : index
    %87 = vector.load %arg2[%c14, %c0_79, %c0_80] : memref<49x8x8xbf16, #tpu.memory_space<vmem>>, vector<1x8x8xbf16>
    %88 = vector.shape_cast %87 : vector<1x8x8xbf16> to vector<8x8xbf16>
    %cst_81 = arith.constant dense<0.000000e+00> : vector<8x432xf32>
    %89 = tpu.matmul %88, %86, %cst_81 {dimension_numbers = #tpu.dot_dimension_numbers<[1], [0], [0], [1], [0, 0, 1, 1], [], []>} : vector<8x8xbf16>, vector<8x432xbf16>, vector<8x432xf32> -> vector<8x432xf32>
    %90 = arith.addf %84, %89 : vector<8x432xf32>
    %c0_82 = arith.constant 0 : index
    %c0_83 = arith.constant 0 : index
    %c49 = arith.constant 49 : index
    %91 = vector.load %arg1[%c0_82, %c0_83, %c49] : memref<1x8x640xbf16, #tpu.memory_space<vmem>>, vector<1x8x432xbf16>
    %92 = vector.shape_cast %91 : vector<1x8x432xbf16> to vector<8x432xbf16>
    %c15 = arith.constant 15 : index
    %c0_84 = arith.constant 0 : index
    %c0_85 = arith.constant 0 : index
    %93 = vector.load %arg2[%c15, %c0_84, %c0_85] : memref<49x8x8xbf16, #tpu.memory_space<vmem>>, vector<1x8x8xbf16>
    %94 = vector.shape_cast %93 : vector<1x8x8xbf16> to vector<8x8xbf16>
    %cst_86 = arith.constant dense<0.000000e+00> : vector<8x432xf32>
    %95 = tpu.matmul %94, %92, %cst_86 {dimension_numbers = #tpu.dot_dimension_numbers<[1], [0], [0], [1], [0, 0, 1, 1], [], []>} : vector<8x8xbf16>, vector<8x432xbf16>, vector<8x432xf32> -> vector<8x432xf32>
    %96 = arith.addf %90, %95 : vector<8x432xf32>
    %c0_87 = arith.constant 0 : index
    %c0_88 = arith.constant 0 : index
    %c50 = arith.constant 50 : index
    %97 = vector.load %arg1[%c0_87, %c0_88, %c50] : memref<1x8x640xbf16, #tpu.memory_space<vmem>>, vector<1x8x432xbf16>
    %98 = vector.shape_cast %97 : vector<1x8x432xbf16> to vector<8x432xbf16>
    %c16 = arith.constant 16 : index
    %c0_89 = arith.constant 0 : index
    %c0_90 = arith.constant 0 : index
    %99 = vector.load %arg2[%c16, %c0_89, %c0_90] : memref<49x8x8xbf16, #tpu.memory_space<vmem>>, vector<1x8x8xbf16>
    %100 = vector.shape_cast %99 : vector<1x8x8xbf16> to vector<8x8xbf16>
    %cst_91 = arith.constant dense<0.000000e+00> : vector<8x432xf32>
    %101 = tpu.matmul %100, %98, %cst_91 {dimension_numbers = #tpu.dot_dimension_numbers<[1], [0], [0], [1], [0, 0, 1, 1], [], []>} : vector<8x8xbf16>, vector<8x432xbf16>, vector<8x432xf32> -> vector<8x432xf32>
    %102 = arith.addf %96, %101 : vector<8x432xf32>
    %c0_92 = arith.constant 0 : index
    %c0_93 = arith.constant 0 : index
    %c51 = arith.constant 51 : index
    %103 = vector.load %arg1[%c0_92, %c0_93, %c51] : memref<1x8x640xbf16, #tpu.memory_space<vmem>>, vector<1x8x432xbf16>
    %104 = vector.shape_cast %103 : vector<1x8x432xbf16> to vector<8x432xbf16>
    %c17 = arith.constant 17 : index
    %c0_94 = arith.constant 0 : index
    %c0_95 = arith.constant 0 : index
    %105 = vector.load %arg2[%c17, %c0_94, %c0_95] : memref<49x8x8xbf16, #tpu.memory_space<vmem>>, vector<1x8x8xbf16>
    %106 = vector.shape_cast %105 : vector<1x8x8xbf16> to vector<8x8xbf16>
    %cst_96 = arith.constant dense<0.000000e+00> : vector<8x432xf32>
    %107 = tpu.matmul %106, %104, %cst_96 {dimension_numbers = #tpu.dot_dimension_numbers<[1], [0], [0], [1], [0, 0, 1, 1], [], []>} : vector<8x8xbf16>, vector<8x432xbf16>, vector<8x432xf32> -> vector<8x432xf32>
    %108 = arith.addf %102, %107 : vector<8x432xf32>
    %c0_97 = arith.constant 0 : index
    %c0_98 = arith.constant 0 : index
    %c52 = arith.constant 52 : index
    %109 = vector.load %arg1[%c0_97, %c0_98, %c52] : memref<1x8x640xbf16, #tpu.memory_space<vmem>>, vector<1x8x432xbf16>
    %110 = vector.shape_cast %109 : vector<1x8x432xbf16> to vector<8x432xbf16>
    %c18 = arith.constant 18 : index
    %c0_99 = arith.constant 0 : index
    %c0_100 = arith.constant 0 : index
    %111 = vector.load %arg2[%c18, %c0_99, %c0_100] : memref<49x8x8xbf16, #tpu.memory_space<vmem>>, vector<1x8x8xbf16>
    %112 = vector.shape_cast %111 : vector<1x8x8xbf16> to vector<8x8xbf16>
    %cst_101 = arith.constant dense<0.000000e+00> : vector<8x432xf32>
    %113 = tpu.matmul %112, %110, %cst_101 {dimension_numbers = #tpu.dot_dimension_numbers<[1], [0], [0], [1], [0, 0, 1, 1], [], []>} : vector<8x8xbf16>, vector<8x432xbf16>, vector<8x432xf32> -> vector<8x432xf32>
    %114 = arith.addf %108, %113 : vector<8x432xf32>
    %c0_102 = arith.constant 0 : index
    %c0_103 = arith.constant 0 : index
    %c53 = arith.constant 53 : index
    %115 = vector.load %arg1[%c0_102, %c0_103, %c53] : memref<1x8x640xbf16, #tpu.memory_space<vmem>>, vector<1x8x432xbf16>
    %116 = vector.shape_cast %115 : vector<1x8x432xbf16> to vector<8x432xbf16>
    %c19 = arith.constant 19 : index
    %c0_104 = arith.constant 0 : index
    %c0_105 = arith.constant 0 : index
    %117 = vector.load %arg2[%c19, %c0_104, %c0_105] : memref<49x8x8xbf16, #tpu.memory_space<vmem>>, vector<1x8x8xbf16>
    %118 = vector.shape_cast %117 : vector<1x8x8xbf16> to vector<8x8xbf16>
    %cst_106 = arith.constant dense<0.000000e+00> : vector<8x432xf32>
    %119 = tpu.matmul %118, %116, %cst_106 {dimension_numbers = #tpu.dot_dimension_numbers<[1], [0], [0], [1], [0, 0, 1, 1], [], []>} : vector<8x8xbf16>, vector<8x432xbf16>, vector<8x432xf32> -> vector<8x432xf32>
    %120 = arith.addf %114, %119 : vector<8x432xf32>
    %c0_107 = arith.constant 0 : index
    %c0_108 = arith.constant 0 : index
    %c54 = arith.constant 54 : index
    %121 = vector.load %arg1[%c0_107, %c0_108, %c54] : memref<1x8x640xbf16, #tpu.memory_space<vmem>>, vector<1x8x432xbf16>
    %122 = vector.shape_cast %121 : vector<1x8x432xbf16> to vector<8x432xbf16>
    %c20 = arith.constant 20 : index
    %c0_109 = arith.constant 0 : index
    %c0_110 = arith.constant 0 : index
    %123 = vector.load %arg2[%c20, %c0_109, %c0_110] : memref<49x8x8xbf16, #tpu.memory_space<vmem>>, vector<1x8x8xbf16>
    %124 = vector.shape_cast %123 : vector<1x8x8xbf16> to vector<8x8xbf16>
    %cst_111 = arith.constant dense<0.000000e+00> : vector<8x432xf32>
    %125 = tpu.matmul %124, %122, %cst_111 {dimension_numbers = #tpu.dot_dimension_numbers<[1], [0], [0], [1], [0, 0, 1, 1], [], []>} : vector<8x8xbf16>, vector<8x432xbf16>, vector<8x432xf32> -> vector<8x432xf32>
    %126 = arith.addf %120, %125 : vector<8x432xf32>
    %c0_112 = arith.constant 0 : index
    %c0_113 = arith.constant 0 : index
    %c72 = arith.constant 72 : index
    %127 = vector.load %arg1[%c0_112, %c0_113, %c72] : memref<1x8x640xbf16, #tpu.memory_space<vmem>>, vector<1x8x432xbf16>
    %128 = vector.shape_cast %127 : vector<1x8x432xbf16> to vector<8x432xbf16>
    %c21 = arith.constant 21 : index
    %c0_114 = arith.constant 0 : index
    %c0_115 = arith.constant 0 : index
    %129 = vector.load %arg2[%c21, %c0_114, %c0_115] : memref<49x8x8xbf16, #tpu.memory_space<vmem>>, vector<1x8x8xbf16>
    %130 = vector.shape_cast %129 : vector<1x8x8xbf16> to vector<8x8xbf16>
    %cst_116 = arith.constant dense<0.000000e+00> : vector<8x432xf32>
    %131 = tpu.matmul %130, %128, %cst_116 {dimension_numbers = #tpu.dot_dimension_numbers<[1], [0], [0], [1], [0, 0, 1, 1], [], []>} : vector<8x8xbf16>, vector<8x432xbf16>, vector<8x432xf32> -> vector<8x432xf32>
    %132 = arith.addf %126, %131 : vector<8x432xf32>
    %c0_117 = arith.constant 0 : index
    %c0_118 = arith.constant 0 : index
    %c73 = arith.constant 73 : index
    %133 = vector.load %arg1[%c0_117, %c0_118, %c73] : memref<1x8x640xbf16, #tpu.memory_space<vmem>>, vector<1x8x432xbf16>
    %134 = vector.shape_cast %133 : vector<1x8x432xbf16> to vector<8x432xbf16>
    %c22 = arith.constant 22 : index
    %c0_119 = arith.constant 0 : index
    %c0_120 = arith.constant 0 : index
    %135 = vector.load %arg2[%c22, %c0_119, %c0_120] : memref<49x8x8xbf16, #tpu.memory_space<vmem>>, vector<1x8x8xbf16>
    %136 = vector.shape_cast %135 : vector<1x8x8xbf16> to vector<8x8xbf16>
    %cst_121 = arith.constant dense<0.000000e+00> : vector<8x432xf32>
    %137 = tpu.matmul %136, %134, %cst_121 {dimension_numbers = #tpu.dot_dimension_numbers<[1], [0], [0], [1], [0, 0, 1, 1], [], []>} : vector<8x8xbf16>, vector<8x432xbf16>, vector<8x432xf32> -> vector<8x432xf32>
    %138 = arith.addf %132, %137 : vector<8x432xf32>
    %c0_122 = arith.constant 0 : index
    %c0_123 = arith.constant 0 : index
    %c74 = arith.constant 74 : index
    %139 = vector.load %arg1[%c0_122, %c0_123, %c74] : memref<1x8x640xbf16, #tpu.memory_space<vmem>>, vector<1x8x432xbf16>
    %140 = vector.shape_cast %139 : vector<1x8x432xbf16> to vector<8x432xbf16>
    %c23 = arith.constant 23 : index
    %c0_124 = arith.constant 0 : index
    %c0_125 = arith.constant 0 : index
    %141 = vector.load %arg2[%c23, %c0_124, %c0_125] : memref<49x8x8xbf16, #tpu.memory_space<vmem>>, vector<1x8x8xbf16>
    %142 = vector.shape_cast %141 : vector<1x8x8xbf16> to vector<8x8xbf16>
    %cst_126 = arith.constant dense<0.000000e+00> : vector<8x432xf32>
    %143 = tpu.matmul %142, %140, %cst_126 {dimension_numbers = #tpu.dot_dimension_numbers<[1], [0], [0], [1], [0, 0, 1, 1], [], []>} : vector<8x8xbf16>, vector<8x432xbf16>, vector<8x432xf32> -> vector<8x432xf32>
    %144 = arith.addf %138, %143 : vector<8x432xf32>
    %c0_127 = arith.constant 0 : index
    %c0_128 = arith.constant 0 : index
    %c75 = arith.constant 75 : index
    %145 = vector.load %arg1[%c0_127, %c0_128, %c75] : memref<1x8x640xbf16, #tpu.memory_space<vmem>>, vector<1x8x432xbf16>
    %146 = vector.shape_cast %145 : vector<1x8x432xbf16> to vector<8x432xbf16>
    %c24_129 = arith.constant 24 : index
    %c0_130 = arith.constant 0 : index
    %c0_131 = arith.constant 0 : index
    %147 = vector.load %arg2[%c24_129, %c0_130, %c0_131] : memref<49x8x8xbf16, #tpu.memory_space<vmem>>, vector<1x8x8xbf16>
    %148 = vector.shape_cast %147 : vector<1x8x8xbf16> to vector<8x8xbf16>
    %cst_132 = arith.constant dense<0.000000e+00> : vector<8x432xf32>
    %149 = tpu.matmul %148, %146, %cst_132 {dimension_numbers = #tpu.dot_dimension_numbers<[1], [0], [0], [1], [0, 0, 1, 1], [], []>} : vector<8x8xbf16>, vector<8x432xbf16>, vector<8x432xf32> -> vector<8x432xf32>
    %150 = arith.addf %144, %149 : vector<8x432xf32>
    %c0_133 = arith.constant 0 : index
    %c0_134 = arith.constant 0 : index
    %c76 = arith.constant 76 : index
    %151 = vector.load %arg1[%c0_133, %c0_134, %c76] : memref<1x8x640xbf16, #tpu.memory_space<vmem>>, vector<1x8x432xbf16>
    %152 = vector.shape_cast %151 : vector<1x8x432xbf16> to vector<8x432xbf16>
    %c25_135 = arith.constant 25 : index
    %c0_136 = arith.constant 0 : index
    %c0_137 = arith.constant 0 : index
    %153 = vector.load %arg2[%c25_135, %c0_136, %c0_137] : memref<49x8x8xbf16, #tpu.memory_space<vmem>>, vector<1x8x8xbf16>
    %154 = vector.shape_cast %153 : vector<1x8x8xbf16> to vector<8x8xbf16>
    %cst_138 = arith.constant dense<0.000000e+00> : vector<8x432xf32>
    %155 = tpu.matmul %154, %152, %cst_138 {dimension_numbers = #tpu.dot_dimension_numbers<[1], [0], [0], [1], [0, 0, 1, 1], [], []>} : vector<8x8xbf16>, vector<8x432xbf16>, vector<8x432xf32> -> vector<8x432xf32>
    %156 = arith.addf %150, %155 : vector<8x432xf32>
    %c0_139 = arith.constant 0 : index
    %c0_140 = arith.constant 0 : index
    %c77 = arith.constant 77 : index
    %157 = vector.load %arg1[%c0_139, %c0_140, %c77] : memref<1x8x640xbf16, #tpu.memory_space<vmem>>, vector<1x8x432xbf16>
    %158 = vector.shape_cast %157 : vector<1x8x432xbf16> to vector<8x432xbf16>
    %c26_141 = arith.constant 26 : index
    %c0_142 = arith.constant 0 : index
    %c0_143 = arith.constant 0 : index
    %159 = vector.load %arg2[%c26_141, %c0_142, %c0_143] : memref<49x8x8xbf16, #tpu.memory_space<vmem>>, vector<1x8x8xbf16>
    %160 = vector.shape_cast %159 : vector<1x8x8xbf16> to vector<8x8xbf16>
    %cst_144 = arith.constant dense<0.000000e+00> : vector<8x432xf32>
    %161 = tpu.matmul %160, %158, %cst_144 {dimension_numbers = #tpu.dot_dimension_numbers<[1], [0], [0], [1], [0, 0, 1, 1], [], []>} : vector<8x8xbf16>, vector<8x432xbf16>, vector<8x432xf32> -> vector<8x432xf32>
    %162 = arith.addf %156, %161 : vector<8x432xf32>
    %c0_145 = arith.constant 0 : index
    %c0_146 = arith.constant 0 : index
    %c78 = arith.constant 78 : index
    %163 = vector.load %arg1[%c0_145, %c0_146, %c78] : memref<1x8x640xbf16, #tpu.memory_space<vmem>>, vector<1x8x432xbf16>
    %164 = vector.shape_cast %163 : vector<1x8x432xbf16> to vector<8x432xbf16>
    %c27_147 = arith.constant 27 : index
    %c0_148 = arith.constant 0 : index
    %c0_149 = arith.constant 0 : index
    %165 = vector.load %arg2[%c27_147, %c0_148, %c0_149] : memref<49x8x8xbf16, #tpu.memory_space<vmem>>, vector<1x8x8xbf16>
    %166 = vector.shape_cast %165 : vector<1x8x8xbf16> to vector<8x8xbf16>
    %cst_150 = arith.constant dense<0.000000e+00> : vector<8x432xf32>
    %167 = tpu.matmul %166, %164, %cst_150 {dimension_numbers = #tpu.dot_dimension_numbers<[1], [0], [0], [1], [0, 0, 1, 1], [], []>} : vector<8x8xbf16>, vector<8x432xbf16>, vector<8x432xf32> -> vector<8x432xf32>
    %168 = arith.addf %162, %167 : vector<8x432xf32>
    %c0_151 = arith.constant 0 : index
    %c0_152 = arith.constant 0 : index
    %c96 = arith.constant 96 : index
    %169 = vector.load %arg1[%c0_151, %c0_152, %c96] : memref<1x8x640xbf16, #tpu.memory_space<vmem>>, vector<1x8x432xbf16>
    %170 = vector.shape_cast %169 : vector<1x8x432xbf16> to vector<8x432xbf16>
    %c28_153 = arith.constant 28 : index
    %c0_154 = arith.constant 0 : index
    %c0_155 = arith.constant 0 : index
    %171 = vector.load %arg2[%c28_153, %c0_154, %c0_155] : memref<49x8x8xbf16, #tpu.memory_space<vmem>>, vector<1x8x8xbf16>
    %172 = vector.shape_cast %171 : vector<1x8x8xbf16> to vector<8x8xbf16>
    %cst_156 = arith.constant dense<0.000000e+00> : vector<8x432xf32>
    %173 = tpu.matmul %172, %170, %cst_156 {dimension_numbers = #tpu.dot_dimension_numbers<[1], [0], [0], [1], [0, 0, 1, 1], [], []>} : vector<8x8xbf16>, vector<8x432xbf16>, vector<8x432xf32> -> vector<8x432xf32>
    %174 = arith.addf %168, %173 : vector<8x432xf32>
    %c0_157 = arith.constant 0 : index
    %c0_158 = arith.constant 0 : index
    %c97 = arith.constant 97 : index
    %175 = vector.load %arg1[%c0_157, %c0_158, %c97] : memref<1x8x640xbf16, #tpu.memory_space<vmem>>, vector<1x8x432xbf16>
    %176 = vector.shape_cast %175 : vector<1x8x432xbf16> to vector<8x432xbf16>
    %c29_159 = arith.constant 29 : index
    %c0_160 = arith.constant 0 : index
    %c0_161 = arith.constant 0 : index
    %177 = vector.load %arg2[%c29_159, %c0_160, %c0_161] : memref<49x8x8xbf16, #tpu.memory_space<vmem>>, vector<1x8x8xbf16>
    %178 = vector.shape_cast %177 : vector<1x8x8xbf16> to vector<8x8xbf16>
    %cst_162 = arith.constant dense<0.000000e+00> : vector<8x432xf32>
    %179 = tpu.matmul %178, %176, %cst_162 {dimension_numbers = #tpu.dot_dimension_numbers<[1], [0], [0], [1], [0, 0, 1, 1], [], []>} : vector<8x8xbf16>, vector<8x432xbf16>, vector<8x432xf32> -> vector<8x432xf32>
    %180 = arith.addf %174, %179 : vector<8x432xf32>
    %c0_163 = arith.constant 0 : index
    %c0_164 = arith.constant 0 : index
    %c98 = arith.constant 98 : index
    %181 = vector.load %arg1[%c0_163, %c0_164, %c98] : memref<1x8x640xbf16, #tpu.memory_space<vmem>>, vector<1x8x432xbf16>
    %182 = vector.shape_cast %181 : vector<1x8x432xbf16> to vector<8x432xbf16>
    %c30_165 = arith.constant 30 : index
    %c0_166 = arith.constant 0 : index
    %c0_167 = arith.constant 0 : index
    %183 = vector.load %arg2[%c30_165, %c0_166, %c0_167] : memref<49x8x8xbf16, #tpu.memory_space<vmem>>, vector<1x8x8xbf16>
    %184 = vector.shape_cast %183 : vector<1x8x8xbf16> to vector<8x8xbf16>
    %cst_168 = arith.constant dense<0.000000e+00> : vector<8x432xf32>
    %185 = tpu.matmul %184, %182, %cst_168 {dimension_numbers = #tpu.dot_dimension_numbers<[1], [0], [0], [1], [0, 0, 1, 1], [], []>} : vector<8x8xbf16>, vector<8x432xbf16>, vector<8x432xf32> -> vector<8x432xf32>
    %186 = arith.addf %180, %185 : vector<8x432xf32>
    %c0_169 = arith.constant 0 : index
    %c0_170 = arith.constant 0 : index
    %c99 = arith.constant 99 : index
    %187 = vector.load %arg1[%c0_169, %c0_170, %c99] : memref<1x8x640xbf16, #tpu.memory_space<vmem>>, vector<1x8x432xbf16>
    %188 = vector.shape_cast %187 : vector<1x8x432xbf16> to vector<8x432xbf16>
    %c31 = arith.constant 31 : index
    %c0_171 = arith.constant 0 : index
    %c0_172 = arith.constant 0 : index
    %189 = vector.load %arg2[%c31, %c0_171, %c0_172] : memref<49x8x8xbf16, #tpu.memory_space<vmem>>, vector<1x8x8xbf16>
    %190 = vector.shape_cast %189 : vector<1x8x8xbf16> to vector<8x8xbf16>
    %cst_173 = arith.constant dense<0.000000e+00> : vector<8x432xf32>
    %191 = tpu.matmul %190, %188, %cst_173 {dimension_numbers = #tpu.dot_dimension_numbers<[1], [0], [0], [1], [0, 0, 1, 1], [], []>} : vector<8x8xbf16>, vector<8x432xbf16>, vector<8x432xf32> -> vector<8x432xf32>
    %192 = arith.addf %186, %191 : vector<8x432xf32>
    %c0_174 = arith.constant 0 : index
    %c0_175 = arith.constant 0 : index
    %c100 = arith.constant 100 : index
    %193 = vector.load %arg1[%c0_174, %c0_175, %c100] : memref<1x8x640xbf16, #tpu.memory_space<vmem>>, vector<1x8x432xbf16>
    %194 = vector.shape_cast %193 : vector<1x8x432xbf16> to vector<8x432xbf16>
    %c32 = arith.constant 32 : index
    %c0_176 = arith.constant 0 : index
    %c0_177 = arith.constant 0 : index
    %195 = vector.load %arg2[%c32, %c0_176, %c0_177] : memref<49x8x8xbf16, #tpu.memory_space<vmem>>, vector<1x8x8xbf16>
    %196 = vector.shape_cast %195 : vector<1x8x8xbf16> to vector<8x8xbf16>
    %cst_178 = arith.constant dense<0.000000e+00> : vector<8x432xf32>
    %197 = tpu.matmul %196, %194, %cst_178 {dimension_numbers = #tpu.dot_dimension_numbers<[1], [0], [0], [1], [0, 0, 1, 1], [], []>} : vector<8x8xbf16>, vector<8x432xbf16>, vector<8x432xf32> -> vector<8x432xf32>
    %198 = arith.addf %192, %197 : vector<8x432xf32>
    %c0_179 = arith.constant 0 : index
    %c0_180 = arith.constant 0 : index
    %c101 = arith.constant 101 : index
    %199 = vector.load %arg1[%c0_179, %c0_180, %c101] : memref<1x8x640xbf16, #tpu.memory_space<vmem>>, vector<1x8x432xbf16>
    %200 = vector.shape_cast %199 : vector<1x8x432xbf16> to vector<8x432xbf16>
    %c33 = arith.constant 33 : index
    %c0_181 = arith.constant 0 : index
    %c0_182 = arith.constant 0 : index
    %201 = vector.load %arg2[%c33, %c0_181, %c0_182] : memref<49x8x8xbf16, #tpu.memory_space<vmem>>, vector<1x8x8xbf16>
    %202 = vector.shape_cast %201 : vector<1x8x8xbf16> to vector<8x8xbf16>
    %cst_183 = arith.constant dense<0.000000e+00> : vector<8x432xf32>
    %203 = tpu.matmul %202, %200, %cst_183 {dimension_numbers = #tpu.dot_dimension_numbers<[1], [0], [0], [1], [0, 0, 1, 1], [], []>} : vector<8x8xbf16>, vector<8x432xbf16>, vector<8x432xf32> -> vector<8x432xf32>
    %204 = arith.addf %198, %203 : vector<8x432xf32>
    %c0_184 = arith.constant 0 : index
    %c0_185 = arith.constant 0 : index
    %c102 = arith.constant 102 : index
    %205 = vector.load %arg1[%c0_184, %c0_185, %c102] : memref<1x8x640xbf16, #tpu.memory_space<vmem>>, vector<1x8x432xbf16>
    %206 = vector.shape_cast %205 : vector<1x8x432xbf16> to vector<8x432xbf16>
    %c34 = arith.constant 34 : index
    %c0_186 = arith.constant 0 : index
    %c0_187 = arith.constant 0 : index
    %207 = vector.load %arg2[%c34, %c0_186, %c0_187] : memref<49x8x8xbf16, #tpu.memory_space<vmem>>, vector<1x8x8xbf16>
    %208 = vector.shape_cast %207 : vector<1x8x8xbf16> to vector<8x8xbf16>
    %cst_188 = arith.constant dense<0.000000e+00> : vector<8x432xf32>
    %209 = tpu.matmul %208, %206, %cst_188 {dimension_numbers = #tpu.dot_dimension_numbers<[1], [0], [0], [1], [0, 0, 1, 1], [], []>} : vector<8x8xbf16>, vector<8x432xbf16>, vector<8x432xf32> -> vector<8x432xf32>
    %210 = arith.addf %204, %209 : vector<8x432xf32>
    %c0_189 = arith.constant 0 : index
    %c0_190 = arith.constant 0 : index
    %c120 = arith.constant 120 : index
    %211 = vector.load %arg1[%c0_189, %c0_190, %c120] : memref<1x8x640xbf16, #tpu.memory_space<vmem>>, vector<1x8x432xbf16>
    %212 = vector.shape_cast %211 : vector<1x8x432xbf16> to vector<8x432xbf16>
    %c35 = arith.constant 35 : index
    %c0_191 = arith.constant 0 : index
    %c0_192 = arith.constant 0 : index
    %213 = vector.load %arg2[%c35, %c0_191, %c0_192] : memref<49x8x8xbf16, #tpu.memory_space<vmem>>, vector<1x8x8xbf16>
    %214 = vector.shape_cast %213 : vector<1x8x8xbf16> to vector<8x8xbf16>
    %cst_193 = arith.constant dense<0.000000e+00> : vector<8x432xf32>
    %215 = tpu.matmul %214, %212, %cst_193 {dimension_numbers = #tpu.dot_dimension_numbers<[1], [0], [0], [1], [0, 0, 1, 1], [], []>} : vector<8x8xbf16>, vector<8x432xbf16>, vector<8x432xf32> -> vector<8x432xf32>
    %216 = arith.addf %210, %215 : vector<8x432xf32>
    %c0_194 = arith.constant 0 : index
    %c0_195 = arith.constant 0 : index
    %c121 = arith.constant 121 : index
    %217 = vector.load %arg1[%c0_194, %c0_195, %c121] : memref<1x8x640xbf16, #tpu.memory_space<vmem>>, vector<1x8x432xbf16>
    %218 = vector.shape_cast %217 : vector<1x8x432xbf16> to vector<8x432xbf16>
    %c36 = arith.constant 36 : index
    %c0_196 = arith.constant 0 : index
    %c0_197 = arith.constant 0 : index
    %219 = vector.load %arg2[%c36, %c0_196, %c0_197] : memref<49x8x8xbf16, #tpu.memory_space<vmem>>, vector<1x8x8xbf16>
    %220 = vector.shape_cast %219 : vector<1x8x8xbf16> to vector<8x8xbf16>
    %cst_198 = arith.constant dense<0.000000e+00> : vector<8x432xf32>
    %221 = tpu.matmul %220, %218, %cst_198 {dimension_numbers = #tpu.dot_dimension_numbers<[1], [0], [0], [1], [0, 0, 1, 1], [], []>} : vector<8x8xbf16>, vector<8x432xbf16>, vector<8x432xf32> -> vector<8x432xf32>
    %222 = arith.addf %216, %221 : vector<8x432xf32>
    %c0_199 = arith.constant 0 : index
    %c0_200 = arith.constant 0 : index
    %c122 = arith.constant 122 : index
    %223 = vector.load %arg1[%c0_199, %c0_200, %c122] : memref<1x8x640xbf16, #tpu.memory_space<vmem>>, vector<1x8x432xbf16>
    %224 = vector.shape_cast %223 : vector<1x8x432xbf16> to vector<8x432xbf16>
    %c37 = arith.constant 37 : index
    %c0_201 = arith.constant 0 : index
    %c0_202 = arith.constant 0 : index
    %225 = vector.load %arg2[%c37, %c0_201, %c0_202] : memref<49x8x8xbf16, #tpu.memory_space<vmem>>, vector<1x8x8xbf16>
    %226 = vector.shape_cast %225 : vector<1x8x8xbf16> to vector<8x8xbf16>
    %cst_203 = arith.constant dense<0.000000e+00> : vector<8x432xf32>
    %227 = tpu.matmul %226, %224, %cst_203 {dimension_numbers = #tpu.dot_dimension_numbers<[1], [0], [0], [1], [0, 0, 1, 1], [], []>} : vector<8x8xbf16>, vector<8x432xbf16>, vector<8x432xf32> -> vector<8x432xf32>
    %228 = arith.addf %222, %227 : vector<8x432xf32>
    %c0_204 = arith.constant 0 : index
    %c0_205 = arith.constant 0 : index
    %c123 = arith.constant 123 : index
    %229 = vector.load %arg1[%c0_204, %c0_205, %c123] : memref<1x8x640xbf16, #tpu.memory_space<vmem>>, vector<1x8x432xbf16>
    %230 = vector.shape_cast %229 : vector<1x8x432xbf16> to vector<8x432xbf16>
    %c38 = arith.constant 38 : index
    %c0_206 = arith.constant 0 : index
    %c0_207 = arith.constant 0 : index
    %231 = vector.load %arg2[%c38, %c0_206, %c0_207] : memref<49x8x8xbf16, #tpu.memory_space<vmem>>, vector<1x8x8xbf16>
    %232 = vector.shape_cast %231 : vector<1x8x8xbf16> to vector<8x8xbf16>
    %cst_208 = arith.constant dense<0.000000e+00> : vector<8x432xf32>
    %233 = tpu.matmul %232, %230, %cst_208 {dimension_numbers = #tpu.dot_dimension_numbers<[1], [0], [0], [1], [0, 0, 1, 1], [], []>} : vector<8x8xbf16>, vector<8x432xbf16>, vector<8x432xf32> -> vector<8x432xf32>
    %234 = arith.addf %228, %233 : vector<8x432xf32>
    %c0_209 = arith.constant 0 : index
    %c0_210 = arith.constant 0 : index
    %c124 = arith.constant 124 : index
    %235 = vector.load %arg1[%c0_209, %c0_210, %c124] : memref<1x8x640xbf16, #tpu.memory_space<vmem>>, vector<1x8x432xbf16>
    %236 = vector.shape_cast %235 : vector<1x8x432xbf16> to vector<8x432xbf16>
    %c39 = arith.constant 39 : index
    %c0_211 = arith.constant 0 : index
    %c0_212 = arith.constant 0 : index
    %237 = vector.load %arg2[%c39, %c0_211, %c0_212] : memref<49x8x8xbf16, #tpu.memory_space<vmem>>, vector<1x8x8xbf16>
    %238 = vector.shape_cast %237 : vector<1x8x8xbf16> to vector<8x8xbf16>
    %cst_213 = arith.constant dense<0.000000e+00> : vector<8x432xf32>
    %239 = tpu.matmul %238, %236, %cst_213 {dimension_numbers = #tpu.dot_dimension_numbers<[1], [0], [0], [1], [0, 0, 1, 1], [], []>} : vector<8x8xbf16>, vector<8x432xbf16>, vector<8x432xf32> -> vector<8x432xf32>
    %240 = arith.addf %234, %239 : vector<8x432xf32>
    %c0_214 = arith.constant 0 : index
    %c0_215 = arith.constant 0 : index
    %c125 = arith.constant 125 : index
    %241 = vector.load %arg1[%c0_214, %c0_215, %c125] : memref<1x8x640xbf16, #tpu.memory_space<vmem>>, vector<1x8x432xbf16>
    %242 = vector.shape_cast %241 : vector<1x8x432xbf16> to vector<8x432xbf16>
    %c40 = arith.constant 40 : index
    %c0_216 = arith.constant 0 : index
    %c0_217 = arith.constant 0 : index
    %243 = vector.load %arg2[%c40, %c0_216, %c0_217] : memref<49x8x8xbf16, #tpu.memory_space<vmem>>, vector<1x8x8xbf16>
    %244 = vector.shape_cast %243 : vector<1x8x8xbf16> to vector<8x8xbf16>
    %cst_218 = arith.constant dense<0.000000e+00> : vector<8x432xf32>
    %245 = tpu.matmul %244, %242, %cst_218 {dimension_numbers = #tpu.dot_dimension_numbers<[1], [0], [0], [1], [0, 0, 1, 1], [], []>} : vector<8x8xbf16>, vector<8x432xbf16>, vector<8x432xf32> -> vector<8x432xf32>
    %246 = arith.addf %240, %245 : vector<8x432xf32>
    %c0_219 = arith.constant 0 : index
    %c0_220 = arith.constant 0 : index
    %c126 = arith.constant 126 : index
    %247 = vector.load %arg1[%c0_219, %c0_220, %c126] : memref<1x8x640xbf16, #tpu.memory_space<vmem>>, vector<1x8x432xbf16>
    %248 = vector.shape_cast %247 : vector<1x8x432xbf16> to vector<8x432xbf16>
    %c41 = arith.constant 41 : index
    %c0_221 = arith.constant 0 : index
    %c0_222 = arith.constant 0 : index
    %249 = vector.load %arg2[%c41, %c0_221, %c0_222] : memref<49x8x8xbf16, #tpu.memory_space<vmem>>, vector<1x8x8xbf16>
    %250 = vector.shape_cast %249 : vector<1x8x8xbf16> to vector<8x8xbf16>
    %cst_223 = arith.constant dense<0.000000e+00> : vector<8x432xf32>
    %251 = tpu.matmul %250, %248, %cst_223 {dimension_numbers = #tpu.dot_dimension_numbers<[1], [0], [0], [1], [0, 0, 1, 1], [], []>} : vector<8x8xbf16>, vector<8x432xbf16>, vector<8x432xf32> -> vector<8x432xf32>
    %252 = arith.addf %246, %251 : vector<8x432xf32>
    %c0_224 = arith.constant 0 : index
    %c0_225 = arith.constant 0 : index
    %c144 = arith.constant 144 : index
    %253 = vector.load %arg1[%c0_224, %c0_225, %c144] : memref<1x8x640xbf16, #tpu.memory_space<vmem>>, vector<1x8x432xbf16>
    %254 = vector.shape_cast %253 : vector<1x8x432xbf16> to vector<8x432xbf16>
    %c42 = arith.constant 42 : index
    %c0_226 = arith.constant 0 : index
    %c0_227 = arith.constant 0 : index
    %255 = vector.load %arg2[%c42, %c0_226, %c0_227] : memref<49x8x8xbf16, #tpu.memory_space<vmem>>, vector<1x8x8xbf16>
    %256 = vector.shape_cast %255 : vector<1x8x8xbf16> to vector<8x8xbf16>
    %cst_228 = arith.constant dense<0.000000e+00> : vector<8x432xf32>
    %257 = tpu.matmul %256, %254, %cst_228 {dimension_numbers = #tpu.dot_dimension_numbers<[1], [0], [0], [1], [0, 0, 1, 1], [], []>} : vector<8x8xbf16>, vector<8x432xbf16>, vector<8x432xf32> -> vector<8x432xf32>
    %258 = arith.addf %252, %257 : vector<8x432xf32>
    %c0_229 = arith.constant 0 : index
    %c0_230 = arith.constant 0 : index
    %c145 = arith.constant 145 : index
    %259 = vector.load %arg1[%c0_229, %c0_230, %c145] : memref<1x8x640xbf16, #tpu.memory_space<vmem>>, vector<1x8x432xbf16>
    %260 = vector.shape_cast %259 : vector<1x8x432xbf16> to vector<8x432xbf16>
    %c43 = arith.constant 43 : index
    %c0_231 = arith.constant 0 : index
    %c0_232 = arith.constant 0 : index
    %261 = vector.load %arg2[%c43, %c0_231, %c0_232] : memref<49x8x8xbf16, #tpu.memory_space<vmem>>, vector<1x8x8xbf16>
    %262 = vector.shape_cast %261 : vector<1x8x8xbf16> to vector<8x8xbf16>
    %cst_233 = arith.constant dense<0.000000e+00> : vector<8x432xf32>
    %263 = tpu.matmul %262, %260, %cst_233 {dimension_numbers = #tpu.dot_dimension_numbers<[1], [0], [0], [1], [0, 0, 1, 1], [], []>} : vector<8x8xbf16>, vector<8x432xbf16>, vector<8x432xf32> -> vector<8x432xf32>
    %264 = arith.addf %258, %263 : vector<8x432xf32>
    %c0_234 = arith.constant 0 : index
    %c0_235 = arith.constant 0 : index
    %c146 = arith.constant 146 : index
    %265 = vector.load %arg1[%c0_234, %c0_235, %c146] : memref<1x8x640xbf16, #tpu.memory_space<vmem>>, vector<1x8x432xbf16>
    %266 = vector.shape_cast %265 : vector<1x8x432xbf16> to vector<8x432xbf16>
    %c44 = arith.constant 44 : index
    %c0_236 = arith.constant 0 : index
    %c0_237 = arith.constant 0 : index
    %267 = vector.load %arg2[%c44, %c0_236, %c0_237] : memref<49x8x8xbf16, #tpu.memory_space<vmem>>, vector<1x8x8xbf16>
    %268 = vector.shape_cast %267 : vector<1x8x8xbf16> to vector<8x8xbf16>
    %cst_238 = arith.constant dense<0.000000e+00> : vector<8x432xf32>
    %269 = tpu.matmul %268, %266, %cst_238 {dimension_numbers = #tpu.dot_dimension_numbers<[1], [0], [0], [1], [0, 0, 1, 1], [], []>} : vector<8x8xbf16>, vector<8x432xbf16>, vector<8x432xf32> -> vector<8x432xf32>
    %270 = arith.addf %264, %269 : vector<8x432xf32>
    %c0_239 = arith.constant 0 : index
    %c0_240 = arith.constant 0 : index
    %c147 = arith.constant 147 : index
    %271 = vector.load %arg1[%c0_239, %c0_240, %c147] : memref<1x8x640xbf16, #tpu.memory_space<vmem>>, vector<1x8x432xbf16>
    %272 = vector.shape_cast %271 : vector<1x8x432xbf16> to vector<8x432xbf16>
    %c45 = arith.constant 45 : index
    %c0_241 = arith.constant 0 : index
    %c0_242 = arith.constant 0 : index
    %273 = vector.load %arg2[%c45, %c0_241, %c0_242] : memref<49x8x8xbf16, #tpu.memory_space<vmem>>, vector<1x8x8xbf16>
    %274 = vector.shape_cast %273 : vector<1x8x8xbf16> to vector<8x8xbf16>
    %cst_243 = arith.constant dense<0.000000e+00> : vector<8x432xf32>
    %275 = tpu.matmul %274, %272, %cst_243 {dimension_numbers = #tpu.dot_dimension_numbers<[1], [0], [0], [1], [0, 0, 1, 1], [], []>} : vector<8x8xbf16>, vector<8x432xbf16>, vector<8x432xf32> -> vector<8x432xf32>
    %276 = arith.addf %270, %275 : vector<8x432xf32>
    %c0_244 = arith.constant 0 : index
    %c0_245 = arith.constant 0 : index
    %c148 = arith.constant 148 : index
    %277 = vector.load %arg1[%c0_244, %c0_245, %c148] : memref<1x8x640xbf16, #tpu.memory_space<vmem>>, vector<1x8x432xbf16>
    %278 = vector.shape_cast %277 : vector<1x8x432xbf16> to vector<8x432xbf16>
    %c46 = arith.constant 46 : index
    %c0_246 = arith.constant 0 : index
    %c0_247 = arith.constant 0 : index
    %279 = vector.load %arg2[%c46, %c0_246, %c0_247] : memref<49x8x8xbf16, #tpu.memory_space<vmem>>, vector<1x8x8xbf16>
    %280 = vector.shape_cast %279 : vector<1x8x8xbf16> to vector<8x8xbf16>
    %cst_248 = arith.constant dense<0.000000e+00> : vector<8x432xf32>
    %281 = tpu.matmul %280, %278, %cst_248 {dimension_numbers = #tpu.dot_dimension_numbers<[1], [0], [0], [1], [0, 0, 1, 1], [], []>} : vector<8x8xbf16>, vector<8x432xbf16>, vector<8x432xf32> -> vector<8x432xf32>
    %282 = arith.addf %276, %281 : vector<8x432xf32>
    %c0_249 = arith.constant 0 : index
    %c0_250 = arith.constant 0 : index
    %c149 = arith.constant 149 : index
    %283 = vector.load %arg1[%c0_249, %c0_250, %c149] : memref<1x8x640xbf16, #tpu.memory_space<vmem>>, vector<1x8x432xbf16>
    %284 = vector.shape_cast %283 : vector<1x8x432xbf16> to vector<8x432xbf16>
    %c47 = arith.constant 47 : index
    %c0_251 = arith.constant 0 : index
    %c0_252 = arith.constant 0 : index
    %285 = vector.load %arg2[%c47, %c0_251, %c0_252] : memref<49x8x8xbf16, #tpu.memory_space<vmem>>, vector<1x8x8xbf16>
    %286 = vector.shape_cast %285 : vector<1x8x8xbf16> to vector<8x8xbf16>
    %cst_253 = arith.constant dense<0.000000e+00> : vector<8x432xf32>
    %287 = tpu.matmul %286, %284, %cst_253 {dimension_numbers = #tpu.dot_dimension_numbers<[1], [0], [0], [1], [0, 0, 1, 1], [], []>} : vector<8x8xbf16>, vector<8x432xbf16>, vector<8x432xf32> -> vector<8x432xf32>
    %288 = arith.addf %282, %287 : vector<8x432xf32>
    %c0_254 = arith.constant 0 : index
    %c0_255 = arith.constant 0 : index
    %c150 = arith.constant 150 : index
    %289 = vector.load %arg1[%c0_254, %c0_255, %c150] : memref<1x8x640xbf16, #tpu.memory_space<vmem>>, vector<1x8x432xbf16>
    %290 = vector.shape_cast %289 : vector<1x8x432xbf16> to vector<8x432xbf16>
    %c48_256 = arith.constant 48 : index
    %c0_257 = arith.constant 0 : index
    %c0_258 = arith.constant 0 : index
    %291 = vector.load %arg2[%c48_256, %c0_257, %c0_258] : memref<49x8x8xbf16, #tpu.memory_space<vmem>>, vector<1x8x8xbf16>
    %292 = vector.shape_cast %291 : vector<1x8x8xbf16> to vector<8x8xbf16>
    %cst_259 = arith.constant dense<0.000000e+00> : vector<8x432xf32>
    %293 = tpu.matmul %292, %290, %cst_259 {dimension_numbers = #tpu.dot_dimension_numbers<[1], [0], [0], [1], [0, 0, 1, 1], [], []>} : vector<8x8xbf16>, vector<8x432xbf16>, vector<8x432xf32> -> vector<8x432xf32>
    %294 = arith.addf %288, %293 : vector<8x432xf32>
    %c0_260 = arith.constant 0 : index
    %c0_261 = arith.constant 0 : index
    %295 = vector.load %arg3[%c0_260, %c0_261] : memref<1x432xf32, #tpu.memory_space<vmem>>, vector<1x432xf32>
    %296 = vector.broadcast %295 : vector<1x432xf32> to vector<8x432xf32>
    %297 = arith.mulf %294, %296 : vector<8x432xf32>
    %cst_262 = arith.constant dense<0.000000e+00> : vector<8xf32>
    %298 = vector.multi_reduction <add>, %297, %cst_262 [1] : vector<8x432xf32> to vector<8xf32>
    %299 = vector.shape_cast %298 : vector<8xf32> to vector<8x1xf32>
    %cst_263 = arith.constant 0.00308641978 : f32
    %300 = vector.broadcast %cst_263 : f32 to vector<8x1xf32>
    %301 = arith.mulf %299, %300 : vector<8x1xf32>
    %302 = vector.broadcast %301 : vector<8x1xf32> to vector<8x432xf32>
    %303 = arith.subf %294, %302 : vector<8x432xf32>
    %304 = arith.mulf %303, %303 : vector<8x432xf32>
    %305 = vector.broadcast %295 : vector<1x432xf32> to vector<8x432xf32>
    %306 = arith.mulf %304, %305 : vector<8x432xf32>
    %cst_264 = arith.constant dense<0.000000e+00> : vector<8xf32>
    %307 = vector.multi_reduction <add>, %306, %cst_264 [1] : vector<8x432xf32> to vector<8xf32>
    %308 = vector.shape_cast %307 : vector<8xf32> to vector<8x1xf32>
    %cst_265 = arith.constant 0.00308641978 : f32
    %309 = vector.broadcast %cst_265 : f32 to vector<8x1xf32>
    %310 = arith.mulf %308, %309 : vector<8x1xf32>
    %cst_266 = arith.constant 9.99999974E-6 : f32
    %311 = vector.broadcast %cst_266 : f32 to vector<8x1xf32>
    %312 = arith.addf %310, %311 : vector<8x1xf32>
    %313 = math.rsqrt %312 : vector<8x1xf32>
    %314 = vector.broadcast %313 : vector<8x1xf32> to vector<8x432xf32>
    %315 = arith.mulf %303, %314 : vector<8x432xf32>
    %cst_267 = arith.constant 0.000000e+00 : f32
    %316 = vector.broadcast %cst_267 : f32 to vector<8x432xf32>
    %317 = arith.maximumf %315, %316 : vector<8x432xf32>
    %c0_268 = arith.constant 0 : index
    %c0_269 = arith.constant 0 : index
    %c0_270 = arith.constant 0 : index
    %318 = vector.load %arg4[%c0_268, %c0_269, %c0_270] : memref<1x8x432xf32, #tpu.memory_space<vmem>>, vector<1x8x432xf32>
    %319 = vector.shape_cast %318 : vector<1x8x432xf32> to vector<8x432xf32>
    %320 = vector.shape_cast %317 : vector<8x432xf32> to vector<1x8x432xf32>
    tpu.vector_store %arg4[%c0_268, %c0_269, %c0_270], %320 {strides = array<i32>} : memref<1x8x432xf32, #tpu.memory_space<vmem>>, vector<1x8x432xf32>,
    return
  }
  func.func @transform_0(%arg0: i32) -> (i32, i32, i32) {
    %c0_i32 = arith.constant 0 : i32
    %c0_i32_0 = arith.constant 0 : i32
    %c0_i32_1 = arith.constant 0 : i32
    return %arg0, %c0_i32, %c0_i32_0 : i32, i32, i32
  }
  func.func @transform_1(%arg0: i32) -> (i32, i32, i32) {
    %c0_i32 = arith.constant 0 : i32
    %c0_i32_0 = arith.constant 0 : i32
    %c0_i32_1 = arith.constant 0 : i32
    %c0_i32_2 = arith.constant 0 : i32
    return %c0_i32, %c0_i32_0, %c0_i32_1 : i32, i32, i32
  }
  func.func @transform_2(%arg0: i32) -> (i32, i32) {
    %c0_i32 = arith.constant 0 : i32
    %c0_i32_0 = arith.constant 0 : i32
    %c0_i32_1 = arith.constant 0 : i32
    return %c0_i32, %c0_i32_0 : i32, i32
  }
  func.func @transform_3(%arg0: i32) -> (i32, i32, i32) {
    %c0_i32 = arith.constant 0 : i32
    %c0_i32_0 = arith.constant 0 : i32
    %c0_i32_1 = arith.constant 0 : i32
    return %arg0, %c0_i32, %c0_i32_0 : i32, i32, i32
  }
}

</mosaic_0001>

<llo_original>
// kernel: tpu_custom_call.1
$region0: #{tpu_custom_call.1}
  #allocation0 [shape = 'u32[]', space=smem, size = 0x4, offset = 0x4, fixed_abs, tag = 'smem constant byte address 0x4 - core index']
  #allocation1 [shape = 'u32[144,128]{1,0:T(1,128)}', space=vmem, size = 0x12000, scoped, tag = 'internal scratch']
  %s0 = inlined_call_operand.vmem [shape: bf16[2,8,640], index: 0, kind: input, shape index: {}]
  %s1 = inlined_call_operand.vmem [shape: bf16[49,8,8], index: 1, kind: input, shape index: {}]
  %s2 = inlined_call_operand.vmem [shape: f32[1,432], index: 2, kind: input, shape index: {}]
  %s3 = inlined_call_operand.hbm [shape: f32[2,8,432], index: 3, kind: output, shape index: {}]
  %s4 = sld [smem:[#allocation0]]
  $region45: #{tpu_custom_call.1} parent=0
    _
  %s6 = ssub.s32 1, %s4
  %s7 = scalar_select 0, %s6, %s4
  $region1: #{tpu_custom_call.1} parent=0
    #allocation2 [shape = 'u8[32768]{0}', space=vmem, size = 0x8000, scoped, tag = 'output window, operand 0']
    #allocation3 [shape = 's32[2]{0}', space=sflag, size = 0x8, scoped, tag = 'scoped memory for tpu_custom_call.1']
    %8 = vsyncpa [#allocation3], 0
    %s9 = scalar_lea.sflag [#allocation3], 1
    %10 = vsyncpa %s9, 0
    loop: start=0, step=1, limit=4
    $region2: #{tpu_custom_call.1} parent=1 // loop_pre_header
      _
    $region3: #{tpu_custom_call.1} parent=1 // loop_header
      %s12 = sphi 0, %s16
      %p13 = scmp.ge.s32.totalorder %s12, 4
      %s22 = sphi 0, %s24
      %s25 = sphi 0, %s22
      %s26 = sphi 0, %s25
      %s42 = sphi 0, %s26
      %s46 = sphi 0, %s46
      %s48 = sphi 0, %s46
      %s49 = sphi 0, %s48
      %s63 = sphi 0, %s49
      %s67 = sphi 0, %s67
      %s69 = sphi 0, %s67
      %s70 = sphi 0, %s69
      %s84 = sphi 0, %s70
      %s90 = sphi 0, %s92
      %s93 = sphi 0, %s90
      %s94 = sphi 0, %s93
      %s110 = sphi 0, %s94
    $region4: #{tpu_custom_call.1} parent=1 // loop_header_branch
      %15 = sbr.rel (%p13) target = $region8
    $region5: #{tpu_custom_call.1} parent=1 // loop_body
      %s17 = ssub.s32 %s12, 1
      %s18 = ssub.s32 %s12, 2
      %s19 = sadd.s32 %s12, 1
      %s20 = ssub.s32 %s12, %s19
      %p21 = scmp.eq.s32.totalorder %s20, 0
      %s23 = sadd.s32 %s22, 1
      %s24 = scalar_select %p21, %s22, %s23
      %p27 = pneg %p21
      %p28 = scmp.eq.s32.totalorder %s12, 1
      %p29 = por %p27, %p28
      %p30 = scmp.ne.s32.totalorder %s22, %s25
      %p31 = scmp.eq.s32.totalorder %s12, 0
      %p32 = por %p30, %p31
      %p33 = scmp.ne.s32.totalorder %s22, %s25
      %p34 = scmp.eq.s32.totalorder %s17, 1
      %p35 = por %p33, %p34
      %p36 = scmp.ne.s32.totalorder %s25, %s26
      %p37 = scmp.eq.s32.totalorder %s17, 0
      %p38 = por %p36, %p37
      %p39 = scmp.ne.s32.totalorder %s25, %s26
      %p40 = scmp.eq.s32.totalorder %s18, 1
      %p41 = por %p39, %p40
      %p43 = scmp.ne.s32.totalorder %s26, %s42
      %p44 = scmp.eq.s32.totalorder %s18, 0
      %p45 = por %p43, %p44
      %s47 = sadd.s32 %s46, 1
      %p50 = scmp.eq.s32.totalorder %s12, 1
      %p51 = scmp.ne.s32.totalorder %s46, %s48
      %p52 = scmp.eq.s32.totalorder %s12, 0
      %p53 = por %p51, %p52
      %p54 = scmp.ne.s32.totalorder %s46, %s48
      %p55 = scmp.eq.s32.totalorder %s17, 1
      %p56 = por %p54, %p55
      %p57 = scmp.ne.s32.totalorder %s48, %s49
      %p58 = scmp.eq.s32.totalorder %s17, 0
      %p59 = por %p57, %p58
      %p60 = scmp.ne.s32.totalorder %s48, %s49
      %p61 = scmp.eq.s32.totalorder %s18, 1
      %p62 = por %p60, %p61
      %p64 = scmp.ne.s32.totalorder %s49, %s63
      %p65 = scmp.eq.s32.totalorder %s18, 0
      %p66 = por %p64, %p65
      %s68 = sadd.s32 %s67, 1
      %p71 = scmp.eq.s32.totalorder %s12, 1
      %p72 = scmp.ne.s32.totalorder %s67, %s69
      %p73 = scmp.eq.s32.totalorder %s12, 0
      %p74 = por %p72, %p73
      %p75 = scmp.ne.s32.totalorder %s67, %s69
      %p76 = scmp.eq.s32.totalorder %s17, 1
      %p77 = por %p75, %p76
      %p78 = scmp.ne.s32.totalorder %s69, %s70
      %p79 = scmp.eq.s32.totalorder %s17, 0
      %p80 = por %p78, %p79
      %p81 = scmp.ne.s32.totalorder %s69, %s70
      %p82 = scmp.eq.s32.totalorder %s18, 1
      %p83 = por %p81, %p82
      %p85 = scmp.ne.s32.totalorder %s70, %s84
      %p86 = scmp.eq.s32.totalorder %s18, 0
      %p87 = por %p85, %p86
      %s88 = ssub.s32 %s12, %s19
      %p89 = scmp.eq.s32.totalorder %s88, 0
      %s91 = sadd.s32 %s90, 1
      %s92 = scalar_select %p89, %s90, %s91
      %p95 = pneg %p89
      %p96 = scmp.eq.s32.totalorder %s12, 1
      %p97 = por %p95, %p96
      %p98 = scmp.ne.s32.totalorder %s90, %s93
      %p99 = scmp.eq.s32.totalorder %s12, 0
      %p100 = por %p98, %p99
      %p101 = scmp.ne.s32.totalorder %s90, %s93
      %p102 = scmp.eq.s32.totalorder %s17, 1
      %p103 = por %p101, %p102
      %p104 = scmp.ne.s32.totalorder %s93, %s94
      %p105 = scmp.eq.s32.totalorder %s17, 0
      %p106 = por %p104, %p105
      %p107 = scmp.ne.s32.totalorder %s93, %s94
      %p108 = scmp.eq.s32.totalorder %s18, 1
      %p109 = por %p107, %p108
      %p111 = scmp.ne.s32.totalorder %s94, %s110
      %p112 = scmp.eq.s32.totalorder %s18, 0
      %p113 = por %p111, %p112
      %p114 = scmp.le.s32.totalorder 1, %s12
      %p115 = scmp.lt.s32.totalorder %s12, 3
      %p116 = pnand %p114, %p115
      %p117 = pneg %p116
      // Predicated region
      $region9: #{tpu_custom_call.1} parent=5 // pred_check
        _
      $region10: #{tpu_custom_call.1} parent=5 // pred_check_branch
        %119 = sbr.rel (%p116) target = $region12
      $region11: #{tpu_custom_call.1} parent=5 // pred_region
        %s120 = ssub.s32 %s12, 1
        // Predicated region
        $region13: #{tpu_custom_call.1} parent=11 // pred_check
          %p121 = pneg %p59
        $region14: #{tpu_custom_call.1} parent=11 // pred_check_branch
          %123 = sbr.rel (%p121) target = $region16
        $region15: #{tpu_custom_call.1} parent=11 // pred_region
          _
        $region16: #{tpu_custom_call.1} parent=11 // pred_fallthru
          _
        // Predicated region
        $region17: #{tpu_custom_call.1} parent=11 // pred_check
          %p124 = pneg %p80
        $region18: #{tpu_custom_call.1} parent=11 // pred_check_branch
          %126 = sbr.rel (%p124) target = $region20
        $region19: #{tpu_custom_call.1} parent=11 // pred_region
          _
        $region20: #{tpu_custom_call.1} parent=11 // pred_fallthru
          _
      $region12: #{tpu_custom_call.1} parent=5 // pred_fallthru
        _
      %p127 = scmp.lt.s32.totalorder %s12, 2
      // Predicated region
      $region21: #{tpu_custom_call.1} parent=5 // pred_check
        %p128 = pneg %p127
      $region22: #{tpu_custom_call.1} parent=5 // pred_check_branch
        %130 = sbr.rel (%p128) target = $region24
      $region23: #{tpu_custom_call.1} parent=5 // pred_region
        // Predicated region
        $region25: #{tpu_custom_call.1} parent=23 // pred_check
          %p131 = pneg %p32
        $region26: #{tpu_custom_call.1} parent=23 // pred_check_branch
          %133 = sbr.rel (%p131) target = $region28
        $region27: #{tpu_custom_call.1} parent=23 // pred_region
          %p134 = scmp.lt.s32.totalorder %s12, 1
          %s135 = scalar_select %p134, %s12, 1
          %s136 = smul.addr %s135, 5
          %s137 = smul.addr %s136, 4
          %s138 = scalar_lea.vmem %s0, %s137
        $region28: #{tpu_custom_call.1} parent=23 // pred_fallthru
          _
      $region24: #{tpu_custom_call.1} parent=5 // pred_fallthru
        _
      %p139 = scmp.le.s32.totalorder 1, %s12
      %p140 = scmp.lt.s32.totalorder %s12, 3
      %p141 = pnand %p139, %p140
      %p142 = pneg %p141
      // Predicated region
      $region29: #{tpu_custom_call.1} parent=5 // pred_check
        _
      $region30: #{tpu_custom_call.1} parent=5 // pred_check_branch
        %144 = sbr.rel (%p141) target = $region32
      $region31: #{tpu_custom_call.1} parent=5 // pred_region
        %s145 = ssub.s32 %s12, 1
        %p146 = scmp.lt.s32.totalorder %s17, 1
        %s147 = scalar_select %p146, %s17, 1
        %s148 = smul.addr %s147, 5
        %s149 = smul.addr %s148, 4
        %s150 = scalar_lea.vmem %s0, %s149
        %p151 = pneg %p38
        %p152 = pneg %p35
        %p153 = pneg %p59
        %p154 = pneg %p56
        %p155 = pneg %p80
        %p156 = pneg %p77
        %p157 = pneg %p106
        %p158 = pneg %p103
        %s159 = sand.u32 %s93, 1
        %s160 = scalar_lea.sflag [#allocation3], %s159
        %s161 = sand.u32 %s93, 1
        %s162 = smul.addr %s161, 32
        %s163 = scalar_lea.vmem [#allocation2], %s162
        %p164 = scmp.lt.s32.totalorder %s17, 1
        %s165 = scalar_select %p164, %s17, 1
        %s166 = smul.addr %s165, 5
        %s167 = smul.addr %s166, 4
        %s168 = scalar_lea.vmem %s0, %s167
        %v170 = vld [vmem:[%s168] sm:$0xff]
        %v171 = vld [vmem:[%s168 + $0x8] sm:$0xff]
        %v172 = vld [vmem:[%s1] sm:$0xf]
        %s173 = scalar_lea.vmem %s1, 4
        %v174 = vld [vmem:[%s173] sm:$0xf]
        %v177 = vunpack.c.l.b16 %v170
        %v178 = vunpack.c.h.b16 %v170
        %v179 = vunpack.c.l.b16 %v171
        %v180 = vunpack.c.h.b16 %v171
        %v181 = vpack.c.b16 %v177, %v177
        %v182 = vpack.c.b16 %v178, %v178
        %v183 = vpack.c.b16 %v179, %v179
        %v184 = vpack.c.b16 %v180, %v180
        %185 = vrot.lane.b32.xlu0 %v181, 127
        %v186 = vpop.permute.xlu0 %185
        %187 = vrot.lane.b32.xlu0 %v182, 127
        %v188 = vpop.permute.xlu0 %187
        %189 = vrot.lane.b32.xlu0 %v183, 127
        %v190 = vpop.permute.xlu0 %189
        %191 = vrot.lane.b32.xlu0 %v184, 127
        %v192 = vpop.permute.xlu0 %191
        %vm193 = vcmask 1039360
        %v194 = vsel %vm193, %v186, %v188
        %v195 = vsel %vm193, %v188, %v190
        %v196 = vsel %vm193, %v190, %v192
        %vm197 = vcmask 64512
        %v199 = vsel %vm197, %v174, 0
        %vm201 = vcmask 1043456
        %v203 = vsel %vm201, %v194, 0
        %v206 = vsel %vm201, %v195, 0
        %v209 = vsel %vm201, %v196, 0
        %v212 = vsel %vm201, %v192, 0
        %214 = vmatprep.subr.bf16.mxu0 0
        %215 = vmatpush1.bf16.msra.mxu0 0
        %216 = vmatprep.subr.bf16.mxu0 0
        %217 = vmatpush1.bf16.msra.mxu0 0
        %218 = vmatprep.subr.bf16.mxu0 0
        %219 = vmatpush1.bf16.msra.mxu0 0
        %220 = vmatprep.subr.bf16.mxu0 0
        %221 = vmatpush1.bf16.msra.mxu0 0
        %222 = vmatprep.subr.bf16.mxu0 0
        %223 = vmatpush1.bf16.msra.mxu0 0
        %224 = vmatprep.subr.bf16.mxu0 0
        %225 = vmatpush1.bf16.msra.mxu0 0
        %226 = vmatprep.subr.bf16.mxu0 0
        %227 = vmatpush1.bf16.msra.mxu0 0
        %228 = vmatprep.subr.bf16.mxu0 %v206
        %229 = vmatpush1.bf16.msra.mxu0 %v203
        %230 = vmatprep.subr.bf16.mxu0 0
        %231 = vmatpush2.bf16.msra.mxu0 0
        %232 = vmatprep.subr.bf16.mxu0 0
        %233 = vmatpush2.bf16.msra.mxu0 0
        %234 = vmatprep.subr.bf16.mxu0 0
        %235 = vmatpush2.bf16.msra.mxu0 0
        %236 = vmatprep.subr.bf16.mxu0 0
        %237 = vmatpush2.bf16.msra.mxu0 0
        %238 = vmatprep.subr.bf16.mxu0 0
        %239 = vmatpush2.bf16.msra.mxu0 0
        %240 = vmatprep.subr.bf16.mxu0 0
        %241 = vmatpush2.bf16.msra.mxu0 0
        %242 = vmatprep.subr.bf16.mxu0 0
        %243 = vmatpush2.bf16.msra.mxu0 0
        %244 = vmatprep.subr.bf16.mxu0 0
        %245 = vmatpush2.bf16.msra.mxu0 0
        %246 = vmatprep.mubr.bf16.mxu0 0
        %247 = vmatmul.mubr.bf16.gmra.mxu0 %v199
        %v248 = vpop.f32.mrf.mxu0
        %v249 = vadd.f32 0.0, %v248
        %v250 = vpop.f32.mrf.mxu0
        %v251 = vadd.f32 0.0, %v250
        %v252 = vpop.f32.mrf.mxu0
        %v253 = vpop.f32.mrf.mxu0
        %254 = vdwg.mxu0
        %255 = vmatprep.subr.bf16.mxu0 0
        %256 = vmatpush1.bf16.msra.mxu0 0
        %257 = vmatprep.subr.bf16.mxu0 0
        %258 = vmatpush1.bf16.msra.mxu0 0
        %259 = vmatprep.subr.bf16.mxu0 0
        %260 = vmatpush1.bf16.msra.mxu0 0
        %261 = vmatprep.subr.bf16.mxu0 0
        %262 = vmatpush1.bf16.msra.mxu0 0
        %263 = vmatprep.subr.bf16.mxu0 0
        %264 = vmatpush1.bf16.msra.mxu0 0
        %265 = vmatprep.subr.bf16.mxu0 0
        %266 = vmatpush1.bf16.msra.mxu0 0
        %267 = vmatprep.subr.bf16.mxu0 0
        %268 = vmatpush1.bf16.msra.mxu0 0
        %269 = vmatprep.subr.bf16.mxu0 %v212
        %270 = vmatpush1.bf16.msra.mxu0 %v209
        %271 = vmatprep.subr.bf16.mxu0 0
        %272 = vmatpush2.bf16.msra.mxu0 0
        %273 = vmatprep.subr.bf16.mxu0 0
        %274 = vmatpush2.bf16.msra.mxu0 0
        %275 = vmatprep.subr.bf16.mxu0 0
        %276 = vmatpush2.bf16.msra.mxu0 0
        %277 = vmatprep.subr.bf16.mxu0 0
        %278 = vmatpush2.bf16.msra.mxu0 0
        %279 = vmatprep.subr.bf16.mxu0 0
        %280 = vmatpush2.bf16.msra.mxu0 0
        %281 = vmatprep.subr.bf16.mxu0 0
        %282 = vmatpush2.bf16.msra.mxu0 0
        %283 = vmatprep.subr.bf16.mxu0 0
        %284 = vmatpush2.bf16.msra.mxu0 0
        %285 = vmatprep.subr.bf16.mxu0 0
        %286 = vmatpush2.bf16.msra.mxu0 0
        %287 = vmatprep.mubr.bf16.mxu0 0
        %288 = vmatmul.mubr.bf16.gmra.mxu0 %v199
        %v289 = vpop.f32.mrf.mxu0
        %v290 = vadd.f32 0.0, %v289
        %v291 = vpop.f32.mrf.mxu0
        %v292 = vadd.f32 0.0, %v291
        %v293 = vpop.f32.mrf.mxu0
        %v294 = vpop.f32.mrf.mxu0
        %295 = vdwg.mxu0
        %v297 = vsel %vm197, %v172, 0
        %v300 = vsel %vm201, %v181, 0
        %v303 = vsel %vm201, %v182, 0
        %v306 = vsel %vm201, %v183, 0
        %v309 = vsel %vm201, %v184, 0
        %311 = vmatprep.subr.bf16.mxu0 0
        %312 = vmatpush1.bf16.msra.mxu0 0
        %313 = vmatprep.subr.bf16.mxu0 0
        %314 = vmatpush1.bf16.msra.mxu0 0
        %315 = vmatprep.subr.bf16.mxu0 0
        %316 = vmatpush1.bf16.msra.mxu0 0
        %317 = vmatprep.subr.bf16.mxu0 0
        %318 = vmatpush1.bf16.msra.mxu0 0
        %319 = vmatprep.subr.bf16.mxu0 0
        %320 = vmatpush1.bf16.msra.mxu0 0
        %321 = vmatprep.subr.bf16.mxu0 0
        %322 = vmatpush1.bf16.msra.mxu0 0
        %323 = vmatprep.subr.bf16.mxu0 0
        %324 = vmatpush1.bf16.msra.mxu0 0
        %325 = vmatprep.subr.bf16.mxu0 %v303
        %326 = vmatpush1.bf16.msra.mxu0 %v300
        %327 = vmatprep.subr.bf16.mxu0 0
        %328 = vmatpush2.bf16.msra.mxu0 0
        %329 = vmatprep.subr.bf16.mxu0 0
        %330 = vmatpush2.bf16.msra.mxu0 0
        %331 = vmatprep.subr.bf16.mxu0 0
        %332 = vmatpush2.bf16.msra.mxu0 0
        %333 = vmatprep.subr.bf16.mxu0 0
        %334 = vmatpush2.bf16.msra.mxu0 0
        %335 = vmatprep.subr.bf16.mxu0 0
        %336 = vmatpush2.bf16.msra.mxu0 0
        %337 = vmatprep.subr.bf16.mxu0 0
        %338 = vmatpush2.bf16.msra.mxu0 0
        %339 = vmatprep.subr.bf16.mxu0 0
        %340 = vmatpush2.bf16.msra.mxu0 0
        %341 = vmatprep.subr.bf16.mxu0 0
        %342 = vmatpush2.bf16.msra.mxu0 0
        %343 = vmatprep.mubr.bf16.mxu0 0
        %344 = vmatmul.mubr.bf16.gmra.mxu0 %v297
        %v345 = vpop.f32.mrf.mxu0
        %v346 = vadd.f32 %v249, %v345
        %v347 = vpop.f32.mrf.mxu0
        %v348 = vadd.f32 %v251, %v347
        %v349 = vpop.f32.mrf.mxu0
        %v350 = vpop.f32.mrf.mxu0
        %351 = vdwg.mxu0
        %352 = vmatprep.subr.bf16.mxu0 0
        %353 = vmatpush1.bf16.msra.mxu0 0
        %354 = vmatprep.subr.bf16.mxu0 0
        %355 = vmatpush1.bf16.msra.mxu0 0
        %356 = vmatprep.subr.bf16.mxu0 0
        %357 = vmatpush1.bf16.msra.mxu0 0
        %358 = vmatprep.subr.bf16.mxu0 0
        %359 = vmatpush1.bf16.msra.mxu0 0
        %360 = vmatprep.subr.bf16.mxu0 0
        %361 = vmatpush1.bf16.msra.mxu0 0
        %362 = vmatprep.subr.bf16.mxu0 0
        %363 = vmatpush1.bf16.msra.mxu0 0
        %364 = vmatprep.subr.bf16.mxu0 0
        %365 = vmatpush1.bf16.msra.mxu0 0
        %366 = vmatprep.subr.bf16.mxu0 %v309
        %367 = vmatpush1.bf16.msra.mxu0 %v306
        %368 = vmatprep.subr.bf16.mxu0 0
        %369 = vmatpush2.bf16.msra.mxu0 0
        %370 = vmatprep.subr.bf16.mxu0 0
        %371 = vmatpush2.bf16.msra.mxu0 0
        %372 = vmatprep.subr.bf16.mxu0 0
        %373 = vmatpush2.bf16.msra.mxu0 0
        %374 = vmatprep.subr.bf16.mxu0 0
        %375 = vmatpush2.bf16.msra.mxu0 0
        %376 = vmatprep.subr.bf16.mxu0 0
        %377 = vmatpush2.bf16.msra.mxu0 0
        %378 = vmatprep.subr.bf16.mxu0 0
        %379 = vmatpush2.bf16.msra.mxu0 0
        %380 = vmatprep.subr.bf16.mxu0 0
        %381 = vmatpush2.bf16.msra.mxu0 0
        %382 = vmatprep.subr.bf16.mxu0 0
        %383 = vmatpush2.bf16.msra.mxu0 0
        %384 = vmatprep.mubr.bf16.mxu0 0
        %385 = vmatmul.mubr.bf16.gmra.mxu0 %v297
        %v386 = vpop.f32.mrf.mxu0
        %v387 = vadd.f32 %v290, %v386
        %v388 = vpop.f32.mrf.mxu0
        %v389 = vadd.f32 %v292, %v388
        %v390 = vpop.f32.mrf.mxu0
        %v391 = vpop.f32.mrf.mxu0
        %392 = vdwg.mxu0
        %s393 = scalar_lea.vmem %s1, 8
        %v394 = vld [vmem:[%s393] sm:$0xf]
        %395 = vrot.lane.b32.xlu0 %v181, 126
        %v396 = vpop.permute.xlu0 %395
        %397 = vrot.lane.b32.xlu0 %v182, 126
        %v398 = vpop.permute.xlu0 %397
        %399 = vrot.lane.b32.xlu0 %v183, 126
        %v400 = vpop.permute.xlu0 %399
        %401 = vrot.lane.b32.xlu0 %v184, 126
        %v402 = vpop.permute.xlu0 %401
        %vm403 = vcmask 1031168
        %v404 = vsel %vm403, %v396, %v398
        %v405 = vsel %vm403, %v398, %v400
        %v406 = vsel %vm403, %v400, %v402
        %v408 = vsel %vm197, %v394, 0
        %v411 = vsel %vm201, %v404, 0
        %v414 = vsel %vm201, %v405, 0
        %v417 = vsel %vm201, %v406, 0
        %v420 = vsel %vm201, %v402, 0
        %422 = vmatprep.subr.bf16.mxu0 0
        %423 = vmatpush1.bf16.msra.mxu0 0
        %424 = vmatprep.subr.bf16.mxu0 0
        %425 = vmatpush1.bf16.msra.mxu0 0
        %426 = vmatprep.subr.bf16.mxu0 0
        %427 = vmatpush1.bf16.msra.mxu0 0
        %428 = vmatprep.subr.bf16.mxu0 0
        %429 = vmatpush1.bf16.msra.mxu0 0
        %430 = vmatprep.subr.bf16.mxu0 0
        %431 = vmatpush1.bf16.msra.mxu0 0
        %432 = vmatprep.subr.bf16.mxu0 0
        %433 = vmatpush1.bf16.msra.mxu0 0
        %434 = vmatprep.subr.bf16.mxu0 0
        %435 = vmatpush1.bf16.msra.mxu0 0
        %436 = vmatprep.subr.bf16.mxu0 %v414
        %437 = vmatpush1.bf16.msra.mxu0 %v411
        %438 = vmatprep.subr.bf16.mxu0 0
        %439 = vmatpush2.bf16.msra.mxu0 0
        %440 = vmatprep.subr.bf16.mxu0 0
        %441 = vmatpush2.bf16.msra.mxu0 0
        %442 = vmatprep.subr.bf16.mxu0 0
        %443 = vmatpush2.bf16.msra.mxu0 0
        %444 = vmatprep.subr.bf16.mxu0 0
        %445 = vmatpush2.bf16.msra.mxu0 0
        %446 = vmatprep.subr.bf16.mxu0 0
        %447 = vmatpush2.bf16.msra.mxu0 0
        %448 = vmatprep.subr.bf16.mxu0 0
        %449 = vmatpush2.bf16.msra.mxu0 0
        %450 = vmatprep.subr.bf16.mxu0 0
        %451 = vmatpush2.bf16.msra.mxu0 0
        %452 = vmatprep.subr.bf16.mxu0 0
        %453 = vmatpush2.bf16.msra.mxu0 0
        %454 = vmatprep.mubr.bf16.mxu0 0
        %455 = vmatmul.mubr.bf16.gmra.mxu0 %v408
        %v456 = vpop.f32.mrf.mxu0
        %v457 = vadd.f32 0.0, %v456
        %v458 = vpop.f32.mrf.mxu0
        %v459 = vadd.f32 0.0, %v458
        %v460 = vpop.f32.mrf.mxu0
        %v461 = vpop.f32.mrf.mxu0
        %462 = vdwg.mxu0
        %463 = vmatprep.subr.bf16.mxu0 0
        %464 = vmatpush1.bf16.msra.mxu0 0
        %465 = vmatprep.subr.bf16.mxu0 0
        %466 = vmatpush1.bf16.msra.mxu0 0
        %467 = vmatprep.subr.bf16.mxu0 0
        %468 = vmatpush1.bf16.msra.mxu0 0
        %469 = vmatprep.subr.bf16.mxu0 0
        %470 = vmatpush1.bf16.msra.mxu0 0
        %471 = vmatprep.subr.bf16.mxu0 0
        %472 = vmatpush1.bf16.msra.mxu0 0
        %473 = vmatprep.subr.bf16.mxu0 0
        %474 = vmatpush1.bf16.msra.mxu0 0
        %475 = vmatprep.subr.bf16.mxu0 0
        %476 = vmatpush1.bf16.msra.mxu0 0
        %477 = vmatprep.subr.bf16.mxu0 %v420
        %478 = vmatpush1.bf16.msra.mxu0 %v417
        %479 = vmatprep.subr.bf16.mxu0 0
        %480 = vmatpush2.bf16.msra.mxu0 0
        %481 = vmatprep.subr.bf16.mxu0 0
        %482 = vmatpush2.bf16.msra.mxu0 0
        %483 = vmatprep.subr.bf16.mxu0 0
        %484 = vmatpush2.bf16.msra.mxu0 0
        %485 = vmatprep.subr.bf16.mxu0 0
        %486 = vmatpush2.bf16.msra.mxu0 0
        %487 = vmatprep.subr.bf16.mxu0 0
        %488 = vmatpush2.bf16.msra.mxu0 0
        %489 = vmatprep.subr.bf16.mxu0 0
        %490 = vmatpush2.bf16.msra.mxu0 0
        %491 = vmatprep.subr.bf16.mxu0 0
        %492 = vmatpush2.bf16.msra.mxu0 0
        %493 = vmatprep.subr.bf16.mxu0 0
        %494 = vmatpush2.bf16.msra.mxu0 0
        %495 = vmatprep.mubr.bf16.mxu0 0
        %496 = vmatmul.mubr.bf16.gmra.mxu0 %v408
        %v497 = vpop.f32.mrf.mxu0
        %v498 = vadd.f32 0.0, %v497
        %v499 = vpop.f32.mrf.mxu0
        %v500 = vadd.f32 0.0, %v499
        %v501 = vpop.f32.mrf.mxu0
        %v502 = vpop.f32.mrf.mxu0
        %503 = vdwg.mxu0
        %v504 = vadd.f32 %v346, %v457
        %v505 = vadd.f32 %v348, %v459
        %v506 = vadd.f32 %v387, %v498
        %v507 = vadd.f32 %v389, %v500
        %s508 = scalar_lea.vmem %s1, 12
        %v509 = vld [vmem:[%s508] sm:$0xf]
        %510 = vrot.lane.b32.xlu0 %v181, 125
        %v511 = vpop.permute.xlu0 %510
        %512 = vrot.lane.b32.xlu0 %v182, 125
        %v513 = vpop.permute.xlu0 %512
        %514 = vrot.lane.b32.xlu0 %v183, 125
        %v515 = vpop.permute.xlu0 %514
        %516 = vrot.lane.b32.xlu0 %v184, 125
        %v517 = vpop.permute.xlu0 %516
        %vm518 = vcmask 1022976
        %v519 = vsel %vm518, %v511, %v513
        %v520 = vsel %vm518, %v513, %v515
        %v521 = vsel %vm518, %v515, %v517
        %v523 = vsel %vm197, %v509, 0
        %v526 = vsel %vm201, %v519, 0
        %v529 = vsel %vm201, %v520, 0
        %v532 = vsel %vm201, %v521, 0
        %v535 = vsel %vm201, %v517, 0
        %537 = vmatprep.subr.bf16.mxu0 0
        %538 = vmatpush1.bf16.msra.mxu0 0
        %539 = vmatprep.subr.bf16.mxu0 0
        %540 = vmatpush1.bf16.msra.mxu0 0
        %541 = vmatprep.subr.bf16.mxu0 0
        %542 = vmatpush1.bf16.msra.mxu0 0
        %543 = vmatprep.subr.bf16.mxu0 0
        %544 = vmatpush1.bf16.msra.mxu0 0
        %545 = vmatprep.subr.bf16.mxu0 0
        %546 = vmatpush1.bf16.msra.mxu0 0
        %547 = vmatprep.subr.bf16.mxu0 0
        %548 = vmatpush1.bf16.msra.mxu0 0
        %549 = vmatprep.subr.bf16.mxu0 0
        %550 = vmatpush1.bf16.msra.mxu0 0
        %551 = vmatprep.subr.bf16.mxu0 %v529
        %552 = vmatpush1.bf16.msra.mxu0 %v526
        %553 = vmatprep.subr.bf16.mxu0 0
        %554 = vmatpush2.bf16.msra.mxu0 0
        %555 = vmatprep.subr.bf16.mxu0 0
        %556 = vmatpush2.bf16.msra.mxu0 0
        %557 = vmatprep.subr.bf16.mxu0 0
        %558 = vmatpush2.bf16.msra.mxu0 0
        %559 = vmatprep.subr.bf16.mxu0 0
        %560 = vmatpush2.bf16.msra.mxu0 0
        %561 = vmatprep.subr.bf16.mxu0 0
        %562 = vmatpush2.bf16.msra.mxu0 0
        %563 = vmatprep.subr.bf16.mxu0 0
        %564 = vmatpush2.bf16.msra.mxu0 0
        %565 = vmatprep.subr.bf16.mxu0 0
        %566 = vmatpush2.bf16.msra.mxu0 0
        %567 = vmatprep.subr.bf16.mxu0 0
        %568 = vmatpush2.bf16.msra.mxu0 0
        %569 = vmatprep.mubr.bf16.mxu0 0
        %570 = vmatmul.mubr.bf16.gmra.mxu0 %v523
        %v571 = vpop.f32.mrf.mxu0
        %v572 = vadd.f32 0.0, %v571
        %v573 = vpop.f32.mrf.mxu0
        %v574 = vadd.f32 0.0, %v573
        %v575 = vpop.f32.mrf.mxu0
        %v576 = vpop.f32.mrf.mxu0
        %577 = vdwg.mxu0
        %578 = vmatprep.subr.bf16.mxu0 0
        %579 = vmatpush1.bf16.msra.mxu0 0
        %580 = vmatprep.subr.bf16.mxu0 0
        %581 = vmatpush1.bf16.msra.mxu0 0
        %582 = vmatprep.subr.bf16.mxu0 0
        %583 = vmatpush1.bf16.msra.mxu0 0
        %584 = vmatprep.subr.bf16.mxu0 0
        %585 = vmatpush1.bf16.msra.mxu0 0
        %586 = vmatprep.subr.bf16.mxu0 0
        %587 = vmatpush1.bf16.msra.mxu0 0
        %588 = vmatprep.subr.bf16.mxu0 0
        %589 = vmatpush1.bf16.msra.mxu0 0
        %590 = vmatprep.subr.bf16.mxu0 0
        %591 = vmatpush1.bf16.msra.mxu0 0
        %592 = vmatprep.subr.bf16.mxu0 %v535
        %593 = vmatpush1.bf16.msra.mxu0 %v532
        %594 = vmatprep.subr.bf16.mxu0 0
        %595 = vmatpush2.bf16.msra.mxu0 0
        %596 = vmatprep.subr.bf16.mxu0 0
        %597 = vmatpush2.bf16.msra.mxu0 0
        %598 = vmatprep.subr.bf16.mxu0 0
        %599 = vmatpush2.bf16.msra.mxu0 0
        %600 = vmatprep.subr.bf16.mxu0 0
        %601 = vmatpush2.bf16.msra.mxu0 0
        %602 = vmatprep.subr.bf16.mxu0 0
        %603 = vmatpush2.bf16.msra.mxu0 0
        %604 = vmatprep.subr.bf16.mxu0 0
        %605 = vmatpush2.bf16.msra.mxu0 0
        %606 = vmatprep.subr.bf16.mxu0 0
        %607 = vmatpush2.bf16.msra.mxu0 0
        %608 = vmatprep.subr.bf16.mxu0 0
        %609 = vmatpush2.bf16.msra.mxu0 0
        %610 = vmatprep.mubr.bf16.mxu0 0
        %611 = vmatmul.mubr.bf16.gmra.mxu0 %v523
        %v612 = vpop.f32.mrf.mxu0
        %v613 = vadd.f32 0.0, %v612
        %v614 = vpop.f32.mrf.mxu0
        %v615 = vadd.f32 0.0, %v614
        %v616 = vpop.f32.mrf.mxu0
        %v617 = vpop.f32.mrf.mxu0
        %618 = vdwg.mxu0
        %v619 = vadd.f32 %v504, %v572
        %v620 = vadd.f32 %v505, %v574
        %v621 = vadd.f32 %v506, %v613
        %v622 = vadd.f32 %v507, %v615
        %s623 = scalar_lea.vmem %s1, 16
        %v624 = vld [vmem:[%s623] sm:$0xf]
        %625 = vrot.lane.b32.xlu0 %v181, 124
        %v626 = vpop.permute.xlu0 %625
        %627 = vrot.lane.b32.xlu0 %v182, 124
        %v628 = vpop.permute.xlu0 %627
        %629 = vrot.lane.b32.xlu0 %v183, 124
        %v630 = vpop.permute.xlu0 %629
        %631 = vrot.lane.b32.xlu0 %v184, 124
        %v632 = vpop.permute.xlu0 %631
        %vm633 = vcmask 1014784
        %v634 = vsel %vm633, %v626, %v628
        %v635 = vsel %vm633, %v628, %v630
        %v636 = vsel %vm633, %v630, %v632
        %v638 = vsel %vm197, %v624, 0
        %v641 = vsel %vm201, %v634, 0
        %v644 = vsel %vm201, %v635, 0
        %v647 = vsel %vm201, %v636, 0
        %v650 = vsel %vm201, %v632, 0
        %652 = vmatprep.subr.bf16.mxu0 0
        %653 = vmatpush1.bf16.msra.mxu0 0
        %654 = vmatprep.subr.bf16.mxu0 0
        %655 = vmatpush1.bf16.msra.mxu0 0
        %656 = vmatprep.subr.bf16.mxu0 0
        %657 = vmatpush1.bf16.msra.mxu0 0
        %658 = vmatprep.subr.bf16.mxu0 0
        %659 = vmatpush1.bf16.msra.mxu0 0
        %660 = vmatprep.subr.bf16.mxu0 0
        %661 = vmatpush1.bf16.msra.mxu0 0
        %662 = vmatprep.subr.bf16.mxu0 0
        %663 = vmatpush1.bf16.msra.mxu0 0
        %664 = vmatprep.subr.bf16.mxu0 0
        %665 = vmatpush1.bf16.msra.mxu0 0
        %666 = vmatprep.subr.bf16.mxu0 %v644
        %667 = vmatpush1.bf16.msra.mxu0 %v641
        %668 = vmatprep.subr.bf16.mxu0 0
        %669 = vmatpush2.bf16.msra.mxu0 0
        %670 = vmatprep.subr.bf16.mxu0 0
        %671 = vmatpush2.bf16.msra.mxu0 0
        %672 = vmatprep.subr.bf16.mxu0 0
        %673 = vmatpush2.bf16.msra.mxu0 0
        %674 = vmatprep.subr.bf16.mxu0 0
        %675 = vmatpush2.bf16.msra.mxu0 0
        %676 = vmatprep.subr.bf16.mxu0 0
        %677 = vmatpush2.bf16.msra.mxu0 0
        %678 = vmatprep.subr.bf16.mxu0 0
        %679 = vmatpush2.bf16.msra.mxu0 0
        %680 = vmatprep.subr.bf16.mxu0 0
        %681 = vmatpush2.bf16.msra.mxu0 0
        %682 = vmatprep.subr.bf16.mxu0 0
        %683 = vmatpush2.bf16.msra.mxu0 0
        %684 = vmatprep.mubr.bf16.mxu0 0
        %685 = vmatmul.mubr.bf16.gmra.mxu0 %v638
        %v686 = vpop.f32.mrf.mxu0
        %v687 = vadd.f32 0.0, %v686
        %v688 = vpop.f32.mrf.mxu0
        %v689 = vadd.f32 0.0, %v688
        %v690 = vpop.f32.mrf.mxu0
        %v691 = vpop.f32.mrf.mxu0
        %692 = vdwg.mxu0
        %693 = vmatprep.subr.bf16.mxu0 0
        %694 = vmatpush1.bf16.msra.mxu0 0
        %695 = vmatprep.subr.bf16.mxu0 0
        %696 = vmatpush1.bf16.msra.mxu0 0
        %697 = vmatprep.subr.bf16.mxu0 0
        %698 = vmatpush1.bf16.msra.mxu0 0
        %699 = vmatprep.subr.bf16.mxu0 0
        %700 = vmatpush1.bf16.msra.mxu0 0
        %701 = vmatprep.subr.bf16.mxu0 0
        %702 = vmatpush1.bf16.msra.mxu0 0
        %703 = vmatprep.subr.bf16.mxu0 0
        %704 = vmatpush1.bf16.msra.mxu0 0
        %705 = vmatprep.subr.bf16.mxu0 0
        %706 = vmatpush1.bf16.msra.mxu0 0
        %707 = vmatprep.subr.bf16.mxu0 %v650
        %708 = vmatpush1.bf16.msra.mxu0 %v647
        %709 = vmatprep.subr.bf16.mxu0 0
        %710 = vmatpush2.bf16.msra.mxu0 0
        %711 = vmatprep.subr.bf16.mxu0 0
        %712 = vmatpush2.bf16.msra.mxu0 0
        %713 = vmatprep.subr.bf16.mxu0 0
        %714 = vmatpush2.bf16.msra.mxu0 0
        %715 = vmatprep.subr.bf16.mxu0 0
        %716 = vmatpush2.bf16.msra.mxu0 0
        %717 = vmatprep.subr.bf16.mxu0 0
        %718 = vmatpush2.bf16.msra.mxu0 0
        %719 = vmatprep.subr.bf16.mxu0 0
        %720 = vmatpush2.bf16.msra.mxu0 0
        %721 = vmatprep.subr.bf16.mxu0 0
        %722 = vmatpush2.bf16.msra.mxu0 0
        %723 = vmatprep.subr.bf16.mxu0 0
        %724 = vmatpush2.bf16.msra.mxu0 0
        %725 = vmatprep.mubr.bf16.mxu0 0
        %726 = vmatmul.mubr.bf16.gmra.mxu0 %v638
        %v727 = vpop.f32.mrf.mxu0
        %v728 = vadd.f32 0.0, %v727
        %v729 = vpop.f32.mrf.mxu0
        %v730 = vadd.f32 0.0, %v729
        %v731 = vpop.f32.mrf.mxu0
        %v732 = vpop.f32.mrf.mxu0
        %733 = vdwg.mxu0
        %v734 = vadd.f32 %v619, %v687
        %v735 = vadd.f32 %v620, %v689
        %v736 = vadd.f32 %v621, %v728
        %v737 = vadd.f32 %v622, %v730
        %s738 = scalar_lea.vmem %s1, 20
        %v739 = vld [vmem:[%s738] sm:$0xf]
        %740 = vrot.lane.b32.xlu0 %v181, 123
        %v741 = vpop.permute.xlu0 %740
        %742 = vrot.lane.b32.xlu0 %v182, 123
        %v743 = vpop.permute.xlu0 %742
        %744 = vrot.lane.b32.xlu0 %v183, 123
        %v745 = vpop.permute.xlu0 %744
        %746 = vrot.lane.b32.xlu0 %v184, 123
        %v747 = vpop.permute.xlu0 %746
        %vm748 = vcmask 1006592
        %v749 = vsel %vm748, %v741, %v743
        %v750 = vsel %vm748, %v743, %v745
        %v751 = vsel %vm748, %v745, %v747
        %v753 = vsel %vm197, %v739, 0
        %v756 = vsel %vm201, %v749, 0
        %v759 = vsel %vm201, %v750, 0
        %v762 = vsel %vm201, %v751, 0
        %v765 = vsel %vm201, %v747, 0
        %767 = vmatprep.subr.bf16.mxu0 0
        %768 = vmatpush1.bf16.msra.mxu0 0
        %769 = vmatprep.subr.bf16.mxu0 0
        %770 = vmatpush1.bf16.msra.mxu0 0
        %771 = vmatprep.subr.bf16.mxu0 0
        %772 = vmatpush1.bf16.msra.mxu0 0
        %773 = vmatprep.subr.bf16.mxu0 0
        %774 = vmatpush1.bf16.msra.mxu0 0
        %775 = vmatprep.subr.bf16.mxu0 0
        %776 = vmatpush1.bf16.msra.mxu0 0
        %777 = vmatprep.subr.bf16.mxu0 0
        %778 = vmatpush1.bf16.msra.mxu0 0
        %779 = vmatprep.subr.bf16.mxu0 0
        %780 = vmatpush1.bf16.msra.mxu0 0
        %781 = vmatprep.subr.bf16.mxu0 %v759
        %782 = vmatpush1.bf16.msra.mxu0 %v756
        %783 = vmatprep.subr.bf16.mxu0 0
        %784 = vmatpush2.bf16.msra.mxu0 0
        %785 = vmatprep.subr.bf16.mxu0 0
        %786 = vmatpush2.bf16.msra.mxu0 0
        %787 = vmatprep.subr.bf16.mxu0 0
        %788 = vmatpush2.bf16.msra.mxu0 0
        %789 = vmatprep.subr.bf16.mxu0 0
        %790 = vmatpush2.bf16.msra.mxu0 0
        %791 = vmatprep.subr.bf16.mxu0 0
        %792 = vmatpush2.bf16.msra.mxu0 0
        %793 = vmatprep.subr.bf16.mxu0 0
        %794 = vmatpush2.bf16.msra.mxu0 0
        %795 = vmatprep.subr.bf16.mxu0 0
        %796 = vmatpush2.bf16.msra.mxu0 0
        %797 = vmatprep.subr.bf16.mxu0 0
        %798 = vmatpush2.bf16.msra.mxu0 0
        %799 = vmatprep.mubr.bf16.mxu0 0
        %800 = vmatmul.mubr.bf16.gmra.mxu0 %v753
        %v801 = vpop.f32.mrf.mxu0
        %v802 = vadd.f32 0.0, %v801
        %v803 = vpop.f32.mrf.mxu0
        %v804 = vadd.f32 0.0, %v803
        %v805 = vpop.f32.mrf.mxu0
        %v806 = vpop.f32.mrf.mxu0
        %807 = vdwg.mxu0
        %808 = vmatprep.subr.bf16.mxu0 0
        %809 = vmatpush1.bf16.msra.mxu0 0
        %810 = vmatprep.subr.bf16.mxu0 0
        %811 = vmatpush1.bf16.msra.mxu0 0
        %812 = vmatprep.subr.bf16.mxu0 0
        %813 = vmatpush1.bf16.msra.mxu0 0
        %814 = vmatprep.subr.bf16.mxu0 0
        %815 = vmatpush1.bf16.msra.mxu0 0
        %816 = vmatprep.subr.bf16.mxu0 0
        %817 = vmatpush1.bf16.msra.mxu0 0
        %818 = vmatprep.subr.bf16.mxu0 0
        %819 = vmatpush1.bf16.msra.mxu0 0
        %820 = vmatprep.subr.bf16.mxu0 0
        %821 = vmatpush1.bf16.msra.mxu0 0
        %822 = vmatprep.subr.bf16.mxu0 %v765
        %823 = vmatpush1.bf16.msra.mxu0 %v762
        %824 = vmatprep.subr.bf16.mxu0 0
        %825 = vmatpush2.bf16.msra.mxu0 0
        %826 = vmatprep.subr.bf16.mxu0 0
        %827 = vmatpush2.bf16.msra.mxu0 0
        %828 = vmatprep.subr.bf16.mxu0 0
        %829 = vmatpush2.bf16.msra.mxu0 0
        %830 = vmatprep.subr.bf16.mxu0 0
        %831 = vmatpush2.bf16.msra.mxu0 0
        %832 = vmatprep.subr.bf16.mxu0 0
        %833 = vmatpush2.bf16.msra.mxu0 0
        %834 = vmatprep.subr.bf16.mxu0 0
        %835 = vmatpush2.bf16.msra.mxu0 0
        %836 = vmatprep.subr.bf16.mxu0 0
        %837 = vmatpush2.bf16.msra.mxu0 0
        %838 = vmatprep.subr.bf16.mxu0 0
        %839 = vmatpush2.bf16.msra.mxu0 0
        %840 = vmatprep.mubr.bf16.mxu0 0
        %841 = vmatmul.mubr.bf16.gmra.mxu0 %v753
        %v842 = vpop.f32.mrf.mxu0
        %v843 = vadd.f32 0.0, %v842
        %v844 = vpop.f32.mrf.mxu0
        %v845 = vadd.f32 0.0, %v844
        %v846 = vpop.f32.mrf.mxu0
        %v847 = vpop.f32.mrf.mxu0
        %848 = vdwg.mxu0
        %v849 = vadd.f32 %v734, %v802
        %v850 = vadd.f32 %v735, %v804
        %v851 = vadd.f32 %v736, %v843
        %v852 = vadd.f32 %v737, %v845
        %s853 = scalar_lea.vmem %s1, 24
        %v854 = vld [vmem:[%s853] sm:$0xf]
        %855 = vrot.lane.b32.xlu0 %v181, 122
        %v856 = vpop.permute.xlu0 %855
        %857 = vrot.lane.b32.xlu0 %v182, 122
        %v858 = vpop.permute.xlu0 %857
        %859 = vrot.lane.b32.xlu0 %v183, 122
        %v860 = vpop.permute.xlu0 %859
        %861 = vrot.lane.b32.xlu0 %v184, 122
        %v862 = vpop.permute.xlu0 %861
        %vm863 = vcmask 998400
        %v864 = vsel %vm863, %v856, %v858
        %v865 = vsel %vm863, %v858, %v860
        %v866 = vsel %vm863, %v860, %v862
        %v868 = vsel %vm197, %v854, 0
        %v871 = vsel %vm201, %v864, 0
        %v874 = vsel %vm201, %v865, 0
        %v877 = vsel %vm201, %v866, 0
        %v880 = vsel %vm201, %v862, 0
        %882 = vmatprep.subr.bf16.mxu0 0
        %883 = vmatpush1.bf16.msra.mxu0 0
        %884 = vmatprep.subr.bf16.mxu0 0
        %885 = vmatpush1.bf16.msra.mxu0 0
        %886 = vmatprep.subr.bf16.mxu0 0
        %887 = vmatpush1.bf16.msra.mxu0 0
        %888 = vmatprep.subr.bf16.mxu0 0
        %889 = vmatpush1.bf16.msra.mxu0 0
        %890 = vmatprep.subr.bf16.mxu0 0
        %891 = vmatpush1.bf16.msra.mxu0 0
        %892 = vmatprep.subr.bf16.mxu0 0
        %893 = vmatpush1.bf16.msra.mxu0 0
        %894 = vmatprep.subr.bf16.mxu0 0
        %895 = vmatpush1.bf16.msra.mxu0 0
        %896 = vmatprep.subr.bf16.mxu0 %v874
        %897 = vmatpush1.bf16.msra.mxu0 %v871
        %898 = vmatprep.subr.bf16.mxu0 0
        %899 = vmatpush2.bf16.msra.mxu0 0
        %900 = vmatprep.subr.bf16.mxu0 0
        %901 = vmatpush2.bf16.msra.mxu0 0
        %902 = vmatprep.subr.bf16.mxu0 0
        %903 = vmatpush2.bf16.msra.mxu0 0
        %904 = vmatprep.subr.bf16.mxu0 0
        %905 = vmatpush2.bf16.msra.mxu0 0
        %906 = vmatprep.subr.bf16.mxu0 0
        %907 = vmatpush2.bf16.msra.mxu0 0
        %908 = vmatprep.subr.bf16.mxu0 0
        %909 = vmatpush2.bf16.msra.mxu0 0
        %910 = vmatprep.subr.bf16.mxu0 0
        %911 = vmatpush2.bf16.msra.mxu0 0
        %912 = vmatprep.subr.bf16.mxu0 0
        %913 = vmatpush2.bf16.msra.mxu0 0
        %914 = vmatprep.mubr.bf16.mxu0 0
        %915 = vmatmul.mubr.bf16.gmra.mxu0 %v868
        %v916 = vpop.f32.mrf.mxu0
        %v917 = vadd.f32 0.0, %v916
        %v918 = vpop.f32.mrf.mxu0
        %v919 = vadd.f32 0.0, %v918
        %v920 = vpop.f32.mrf.mxu0
        %v921 = vpop.f32.mrf.mxu0
        %922 = vdwg.mxu0
        %923 = vmatprep.subr.bf16.mxu0 0
        %924 = vmatpush1.bf16.msra.mxu0 0
        %925 = vmatprep.subr.bf16.mxu0 0
        %926 = vmatpush1.bf16.msra.mxu0 0
        %927 = vmatprep.subr.bf16.mxu0 0
        %928 = vmatpush1.bf16.msra.mxu0 0
        %929 = vmatprep.subr.bf16.mxu0 0
        %930 = vmatpush1.bf16.msra.mxu0 0
        %931 = vmatprep.subr.bf16.mxu0 0
        %932 = vmatpush1.bf16.msra.mxu0 0
        %933 = vmatprep.subr.bf16.mxu0 0
        %934 = vmatpush1.bf16.msra.mxu0 0
        %935 = vmatprep.subr.bf16.mxu0 0
        %936 = vmatpush1.bf16.msra.mxu0 0
        %937 = vmatprep.subr.bf16.mxu0 %v880
        %938 = vmatpush1.bf16.msra.mxu0 %v877
        %939 = vmatprep.subr.bf16.mxu0 0
        %940 = vmatpush2.bf16.msra.mxu0 0
        %941 = vmatprep.subr.bf16.mxu0 0
        %942 = vmatpush2.bf16.msra.mxu0 0
        %943 = vmatprep.subr.bf16.mxu0 0
        %944 = vmatpush2.bf16.msra.mxu0 0
        %945 = vmatprep.subr.bf16.mxu0 0
        %946 = vmatpush2.bf16.msra.mxu0 0
        %947 = vmatprep.subr.bf16.mxu0 0
        %948 = vmatpush2.bf16.msra.mxu0 0
        %949 = vmatprep.subr.bf16.mxu0 0
        %950 = vmatpush2.bf16.msra.mxu0 0
        %951 = vmatprep.subr.bf16.mxu0 0
        %952 = vmatpush2.bf16.msra.mxu0 0
        %953 = vmatprep.subr.bf16.mxu0 0
        %954 = vmatpush2.bf16.msra.mxu0 0
        %955 = vmatprep.mubr.bf16.mxu0 0
        %956 = vmatmul.mubr.bf16.gmra.mxu0 %v868
        %v957 = vpop.f32.mrf.mxu0
        %v958 = vadd.f32 0.0, %v957
        %v959 = vpop.f32.mrf.mxu0
        %v960 = vadd.f32 0.0, %v959
        %v961 = vpop.f32.mrf.mxu0
        %v962 = vpop.f32.mrf.mxu0
        %963 = vdwg.mxu0
        %v964 = vadd.f32 %v849, %v917
        %v965 = vadd.f32 %v850, %v919
        %v966 = vadd.f32 %v851, %v958
        %v967 = vadd.f32 %v852, %v960
        %s968 = scalar_lea.vmem %s1, 28
        %v969 = vld [vmem:[%s968] sm:$0xf]
        %970 = vrot.lane.b32.xlu0 %v181, 104
        %v971 = vpop.permute.xlu0 %970
        %972 = vrot.lane.b32.xlu0 %v182, 104
        %v973 = vpop.permute.xlu0 %972
        %974 = vrot.lane.b32.xlu0 %v183, 104
        %v975 = vpop.permute.xlu0 %974
        %976 = vrot.lane.b32.xlu0 %v184, 104
        %v977 = vpop.permute.xlu0 %976
        %vm978 = vcmask 850944
        %v979 = vsel %vm978, %v971, %v973
        %v980 = vsel %vm978, %v973, %v975
        %v981 = vsel %vm978, %v975, %v977
        %v983 = vsel %vm197, %v969, 0
        %v986 = vsel %vm201, %v979, 0
        %v989 = vsel %vm201, %v980, 0
        %v992 = vsel %vm201, %v981, 0
        %v995 = vsel %vm201, %v977, 0
        %997 = vmatprep.subr.bf16.mxu0 0
        %998 = vmatpush1.bf16.msra.mxu0 0
        %999 = vmatprep.subr.bf16.mxu0 0
        %1000 = vmatpush1.bf16.msra.mxu0 0
        %1001 = vmatprep.subr.bf16.mxu0 0
        %1002 = vmatpush1.bf16.msra.mxu0 0
        %1003 = vmatprep.subr.bf16.mxu0 0
        %1004 = vmatpush1.bf16.msra.mxu0 0
        %1005 = vmatprep.subr.bf16.mxu0 0
        %1006 = vmatpush1.bf16.msra.mxu0 0
        %1007 = vmatprep.subr.bf16.mxu0 0
        %1008 = vmatpush1.bf16.msra.mxu0 0
        %1009 = vmatprep.subr.bf16.mxu0 0
        %1010 = vmatpush1.bf16.msra.mxu0 0
        %1011 = vmatprep.subr.bf16.mxu0 %v989
        %1012 = vmatpush1.bf16.msra.mxu0 %v986
        %1013 = vmatprep.subr.bf16.mxu0 0
        %1014 = vmatpush2.bf16.msra.mxu0 0
        %1015 = vmatprep.subr.bf16.mxu0 0
        %1016 = vmatpush2.bf16.msra.mxu0 0
        %1017 = vmatprep.subr.bf16.mxu0 0
        %1018 = vmatpush2.bf16.msra.mxu0 0
        %1019 = vmatprep.subr.bf16.mxu0 0
        %1020 = vmatpush2.bf16.msra.mxu0 0
        %1021 = vmatprep.subr.bf16.mxu0 0
        %1022 = vmatpush2.bf16.msra.mxu0 0
        %1023 = vmatprep.subr.bf16.mxu0 0
        %1024 = vmatpush2.bf16.msra.mxu0 0
        %1025 = vmatprep.subr.bf16.mxu0 0
        %1026 = vmatpush2.bf16.msra.mxu0 0
        %1027 = vmatprep.subr.bf16.mxu0 0
        %1028 = vmatpush2.bf16.msra.mxu0 0
        %1029 = vmatprep.mubr.bf16.mxu0 0
        %1030 = vmatmul.mubr.bf16.gmra.mxu0 %v983
        %v1031 = vpop.f32.mrf.mxu0
        %v1032 = vadd.f32 0.0, %v1031
        %v1033 = vpop.f32.mrf.mxu0
        %v1034 = vadd.f32 0.0, %v1033
        %v1035 = vpop.f32.mrf.mxu0
        %v1036 = vpop.f32.mrf.mxu0
        %1037 = vdwg.mxu0
        %1038 = vmatprep.subr.bf16.mxu0 0
        %1039 = vmatpush1.bf16.msra.mxu0 0
        %1040 = vmatprep.subr.bf16.mxu0 0
        %1041 = vmatpush1.bf16.msra.mxu0 0
        %1042 = vmatprep.subr.bf16.mxu0 0
        %1043 = vmatpush1.bf16.msra.mxu0 0
        %1044 = vmatprep.subr.bf16.mxu0 0
        %1045 = vmatpush1.bf16.msra.mxu0 0
        %1046 = vmatprep.subr.bf16.mxu0 0
        %1047 = vmatpush1.bf16.msra.mxu0 0
        %1048 = vmatprep.subr.bf16.mxu0 0
        %1049 = vmatpush1.bf16.msra.mxu0 0
        %1050 = vmatprep.subr.bf16.mxu0 0
        %1051 = vmatpush1.bf16.msra.mxu0 0
        %1052 = vmatprep.subr.bf16.mxu0 %v995
        %1053 = vmatpush1.bf16.msra.mxu0 %v992
        %1054 = vmatprep.subr.bf16.mxu0 0
        %1055 = vmatpush2.bf16.msra.mxu0 0
        %1056 = vmatprep.subr.bf16.mxu0 0
        %1057 = vmatpush2.bf16.msra.mxu0 0
        %1058 = vmatprep.subr.bf16.mxu0 0
        %1059 = vmatpush2.bf16.msra.mxu0 0
        %1060 = vmatprep.subr.bf16.mxu0 0
        %1061 = vmatpush2.bf16.msra.mxu0 0
        %1062 = vmatprep.subr.bf16.mxu0 0
        %1063 = vmatpush2.bf16.msra.mxu0 0
        %1064 = vmatprep.subr.bf16.mxu0 0
        %1065 = vmatpush2.bf16.msra.mxu0 0
        %1066 = vmatprep.subr.bf16.mxu0 0
        %1067 = vmatpush2.bf16.msra.mxu0 0
        %1068 = vmatprep.subr.bf16.mxu0 0
        %1069 = vmatpush2.bf16.msra.mxu0 0
        %1070 = vmatprep.mubr.bf16.mxu0 0
        %1071 = vmatmul.mubr.bf16.gmra.mxu0 %v983
        %v1072 = vpop.f32.mrf.mxu0
        %v1073 = vadd.f32 0.0, %v1072
        %v1074 = vpop.f32.mrf.mxu0
        %v1075 = vadd.f32 0.0, %v1074
        %v1076 = vpop.f32.mrf.mxu0
        %v1077 = vpop.f32.mrf.mxu0
        %1078 = vdwg.mxu0
        %v1079 = vadd.f32 %v964, %v1032
        %v1080 = vadd.f32 %v965, %v1034
        %v1081 = vadd.f32 %v966, %v1073
        %v1082 = vadd.f32 %v967, %v1075
        %s1083 = scalar_lea.vmem %s1, 32
        %v1084 = vld [vmem:[%s1083] sm:$0xf]
        %1085 = vrot.lane.b32.xlu0 %v181, 103
        %v1086 = vpop.permute.xlu0 %1085
        %1087 = vrot.lane.b32.xlu0 %v182, 103
        %v1088 = vpop.permute.xlu0 %1087
        %1089 = vrot.lane.b32.xlu0 %v183, 103
        %v1090 = vpop.permute.xlu0 %1089
        %1091 = vrot.lane.b32.xlu0 %v184, 103
        %v1092 = vpop.permute.xlu0 %1091
        %vm1093 = vcmask 842752
        %v1094 = vsel %vm1093, %v1086, %v1088
        %v1095 = vsel %vm1093, %v1088, %v1090
        %v1096 = vsel %vm1093, %v1090, %v1092
        %v1098 = vsel %vm197, %v1084, 0
        %v1101 = vsel %vm201, %v1094, 0
        %v1104 = vsel %vm201, %v1095, 0
        %v1107 = vsel %vm201, %v1096, 0
        %v1110 = vsel %vm201, %v1092, 0
        %1112 = vmatprep.subr.bf16.mxu0 0
        %1113 = vmatpush1.bf16.msra.mxu0 0
        %1114 = vmatprep.subr.bf16.mxu0 0
        %1115 = vmatpush1.bf16.msra.mxu0 0
        %1116 = vmatprep.subr.bf16.mxu0 0
        %1117 = vmatpush1.bf16.msra.mxu0 0
        %1118 = vmatprep.subr.bf16.mxu0 0
        %1119 = vmatpush1.bf16.msra.mxu0 0
        %1120 = vmatprep.subr.bf16.mxu0 0
        %1121 = vmatpush1.bf16.msra.mxu0 0
        %1122 = vmatprep.subr.bf16.mxu0 0
        %1123 = vmatpush1.bf16.msra.mxu0 0
        %1124 = vmatprep.subr.bf16.mxu0 0
        %1125 = vmatpush1.bf16.msra.mxu0 0
        %1126 = vmatprep.subr.bf16.mxu0 %v1104
        %1127 = vmatpush1.bf16.msra.mxu0 %v1101
        %1128 = vmatprep.subr.bf16.mxu0 0
        %1129 = vmatpush2.bf16.msra.mxu0 0
        %1130 = vmatprep.subr.bf16.mxu0 0
        %1131 = vmatpush2.bf16.msra.mxu0 0
        %1132 = vmatprep.subr.bf16.mxu0 0
        %1133 = vmatpush2.bf16.msra.mxu0 0
        %1134 = vmatprep.subr.bf16.mxu0 0
        %1135 = vmatpush2.bf16.msra.mxu0 0
        %1136 = vmatprep.subr.bf16.mxu0 0
        %1137 = vmatpush2.bf16.msra.mxu0 0
        %1138 = vmatprep.subr.bf16.mxu0 0
        %1139 = vmatpush2.bf16.msra.mxu0 0
        %1140 = vmatprep.subr.bf16.mxu0 0
        %1141 = vmatpush2.bf16.msra.mxu0 0
        %1142 = vmatprep.subr.bf16.mxu0 0
        %1143 = vmatpush2.bf16.msra.mxu0 0
        %1144 = vmatprep.mubr.bf16.mxu0 0
        %1145 = vmatmul.mubr.bf16.gmra.mxu0 %v1098
        %v1146 = vpop.f32.mrf.mxu0
        %v1147 = vadd.f32 0.0, %v1146
        %v1148 = vpop.f32.mrf.mxu0
        %v1149 = vadd.f32 0.0, %v1148
        %v1150 = vpop.f32.mrf.mxu0
        %v1151 = vpop.f32.mrf.mxu0
        %1152 = vdwg.mxu0
        %1153 = vmatprep.subr.bf16.mxu0 0
        %1154 = vmatpush1.bf16.msra.mxu0 0
        %1155 = vmatprep.subr.bf16.mxu0 0
        %1156 = vmatpush1.bf16.msra.mxu0 0
        %1157 = vmatprep.subr.bf16.mxu0 0
        %1158 = vmatpush1.bf16.msra.mxu0 0
        %1159 = vmatprep.subr.bf16.mxu0 0
        %1160 = vmatpush1.bf16.msra.mxu0 0
        %1161 = vmatprep.subr.bf16.mxu0 0
        %1162 = vmatpush1.bf16.msra.mxu0 0
        %1163 = vmatprep.subr.bf16.mxu0 0
        %1164 = vmatpush1.bf16.msra.mxu0 0
        %1165 = vmatprep.subr.bf16.mxu0 0
        %1166 = vmatpush1.bf16.msra.mxu0 0
        %1167 = vmatprep.subr.bf16.mxu0 %v1110
        %1168 = vmatpush1.bf16.msra.mxu0 %v1107
        %1169 = vmatprep.subr.bf16.mxu0 0
        %1170 = vmatpush2.bf16.msra.mxu0 0
        %1171 = vmatprep.subr.bf16.mxu0 0
        %1172 = vmatpush2.bf16.msra.mxu0 0
        %1173 = vmatprep.subr.bf16.mxu0 0
        %1174 = vmatpush2.bf16.msra.mxu0 0
        %1175 = vmatprep.subr.bf16.mxu0 0
        %1176 = vmatpush2.bf16.msra.mxu0 0
        %1177 = vmatprep.subr.bf16.mxu0 0
        %1178 = vmatpush2.bf16.msra.mxu0 0
        %1179 = vmatprep.subr.bf16.mxu0 0
        %1180 = vmatpush2.bf16.msra.mxu0 0
        %1181 = vmatprep.subr.bf16.mxu0 0
        %1182 = vmatpush2.bf16.msra.mxu0 0
        %1183 = vmatprep.subr.bf16.mxu0 0
        %1184 = vmatpush2.bf16.msra.mxu0 0
        %1185 = vmatprep.mubr.bf16.mxu0 0
        %1186 = vmatmul.mubr.bf16.gmra.mxu0 %v1098
        %v1187 = vpop.f32.mrf.mxu0
        %v1188 = vadd.f32 0.0, %v1187
        %v1189 = vpop.f32.mrf.mxu0
        %v1190 = vadd.f32 0.0, %v1189
        %v1191 = vpop.f32.mrf.mxu0
        %v1192 = vpop.f32.mrf.mxu0
        %1193 = vdwg.mxu0
        %v1194 = vadd.f32 %v1079, %v1147
        %v1195 = vadd.f32 %v1080, %v1149
        %v1196 = vadd.f32 %v1081, %v1188
        %v1197 = vadd.f32 %v1082, %v1190
        %s1198 = scalar_lea.vmem %s1, 36
        %v1199 = vld [vmem:[%s1198] sm:$0xf]
        %1200 = vrot.lane.b32.xlu0 %v181, 102
        %v1201 = vpop.permute.xlu0 %1200
        %1202 = vrot.lane.b32.xlu0 %v182, 102
        %v1203 = vpop.permute.xlu0 %1202
        %1204 = vrot.lane.b32.xlu0 %v183, 102
        %v1205 = vpop.permute.xlu0 %1204
        %1206 = vrot.lane.b32.xlu0 %v184, 102
        %v1207 = vpop.permute.xlu0 %1206
        %vm1208 = vcmask 834560
        %v1209 = vsel %vm1208, %v1201, %v1203
        %v1210 = vsel %vm1208, %v1203, %v1205
        %v1211 = vsel %vm1208, %v1205, %v1207
        %v1213 = vsel %vm197, %v1199, 0
        %v1216 = vsel %vm201, %v1209, 0
        %v1219 = vsel %vm201, %v1210, 0
        %v1222 = vsel %vm201, %v1211, 0
        %v1225 = vsel %vm201, %v1207, 0
        %1227 = vmatprep.subr.bf16.mxu0 0
        %1228 = vmatpush1.bf16.msra.mxu0 0
        %1229 = vmatprep.subr.bf16.mxu0 0
        %1230 = vmatpush1.bf16.msra.mxu0 0
        %1231 = vmatprep.subr.bf16.mxu0 0
        %1232 = vmatpush1.bf16.msra.mxu0 0
        %1233 = vmatprep.subr.bf16.mxu0 0
        %1234 = vmatpush1.bf16.msra.mxu0 0
        %1235 = vmatprep.subr.bf16.mxu0 0
        %1236 = vmatpush1.bf16.msra.mxu0 0
        %1237 = vmatprep.subr.bf16.mxu0 0
        %1238 = vmatpush1.bf16.msra.mxu0 0
        %1239 = vmatprep.subr.bf16.mxu0 0
        %1240 = vmatpush1.bf16.msra.mxu0 0
        %1241 = vmatprep.subr.bf16.mxu0 %v1219
        %1242 = vmatpush1.bf16.msra.mxu0 %v1216
        %1243 = vmatprep.subr.bf16.mxu0 0
        %1244 = vmatpush2.bf16.msra.mxu0 0
        %1245 = vmatprep.subr.bf16.mxu0 0
        %1246 = vmatpush2.bf16.msra.mxu0 0
        %1247 = vmatprep.subr.bf16.mxu0 0
        %1248 = vmatpush2.bf16.msra.mxu0 0
        %1249 = vmatprep.subr.bf16.mxu0 0
        %1250 = vmatpush2.bf16.msra.mxu0 0
        %1251 = vmatprep.subr.bf16.mxu0 0
        %1252 = vmatpush2.bf16.msra.mxu0 0
        %1253 = vmatprep.subr.bf16.mxu0 0
        %1254 = vmatpush2.bf16.msra.mxu0 0
        %1255 = vmatprep.subr.bf16.mxu0 0
        %1256 = vmatpush2.bf16.msra.mxu0 0
        %1257 = vmatprep.subr.bf16.mxu0 0
        %1258 = vmatpush2.bf16.msra.mxu0 0
        %1259 = vmatprep.mubr.bf16.mxu0 0
        %1260 = vmatmul.mubr.bf16.gmra.mxu0 %v1213
        %v1261 = vpop.f32.mrf.mxu0
        %v1262 = vadd.f32 0.0, %v1261
        %v1263 = vpop.f32.mrf.mxu0
        %v1264 = vadd.f32 0.0, %v1263
        %v1265 = vpop.f32.mrf.mxu0
        %v1266 = vpop.f32.mrf.mxu0
        %1267 = vdwg.mxu0
        %1268 = vmatprep.subr.bf16.mxu0 0
        %1269 = vmatpush1.bf16.msra.mxu0 0
        %1270 = vmatprep.subr.bf16.mxu0 0
        %1271 = vmatpush1.bf16.msra.mxu0 0
        %1272 = vmatprep.subr.bf16.mxu0 0
        %1273 = vmatpush1.bf16.msra.mxu0 0
        %1274 = vmatprep.subr.bf16.mxu0 0
        %1275 = vmatpush1.bf16.msra.mxu0 0
        %1276 = vmatprep.subr.bf16.mxu0 0
        %1277 = vmatpush1.bf16.msra.mxu0 0
        %1278 = vmatprep.subr.bf16.mxu0 0
        %1279 = vmatpush1.bf16.msra.mxu0 0
        %1280 = vmatprep.subr.bf16.mxu0 0
        %1281 = vmatpush1.bf16.msra.mxu0 0
        %1282 = vmatprep.subr.bf16.mxu0 %v1225
        %1283 = vmatpush1.bf16.msra.mxu0 %v1222
        %1284 = vmatprep.subr.bf16.mxu0 0
        %1285 = vmatpush2.bf16.msra.mxu0 0
        %1286 = vmatprep.subr.bf16.mxu0 0
        %1287 = vmatpush2.bf16.msra.mxu0 0
        %1288 = vmatprep.subr.bf16.mxu0 0
        %1289 = vmatpush2.bf16.msra.mxu0 0
        %1290 = vmatprep.subr.bf16.mxu0 0
        %1291 = vmatpush2.bf16.msra.mxu0 0
        %1292 = vmatprep.subr.bf16.mxu0 0
        %1293 = vmatpush2.bf16.msra.mxu0 0
        %1294 = vmatprep.subr.bf16.mxu0 0
        %1295 = vmatpush2.bf16.msra.mxu0 0
        %1296 = vmatprep.subr.bf16.mxu0 0
        %1297 = vmatpush2.bf16.msra.mxu0 0
        %1298 = vmatprep.subr.bf16.mxu0 0
        %1299 = vmatpush2.bf16.msra.mxu0 0
        %1300 = vmatprep.mubr.bf16.mxu0 0
        %1301 = vmatmul.mubr.bf16.gmra.mxu0 %v1213
        %v1302 = vpop.f32.mrf.mxu0
        %v1303 = vadd.f32 0.0, %v1302
        %v1304 = vpop.f32.mrf.mxu0
        %v1305 = vadd.f32 0.0, %v1304
        %v1306 = vpop.f32.mrf.mxu0
        %v1307 = vpop.f32.mrf.mxu0
        %1308 = vdwg.mxu0
        %v1309 = vadd.f32 %v1194, %v1262
        %v1310 = vadd.f32 %v1195, %v1264
        %v1311 = vadd.f32 %v1196, %v1303
        %v1312 = vadd.f32 %v1197, %v1305
        %s1313 = scalar_lea.vmem %s1, 40
        %v1314 = vld [vmem:[%s1313] sm:$0xf]
        %1315 = vrot.lane.b32.xlu0 %v181, 101
        %v1316 = vpop.permute.xlu0 %1315
        %1317 = vrot.lane.b32.xlu0 %v182, 101
        %v1318 = vpop.permute.xlu0 %1317
        %1319 = vrot.lane.b32.xlu0 %v183, 101
        %v1320 = vpop.permute.xlu0 %1319
        %1321 = vrot.lane.b32.xlu0 %v184, 101
        %v1322 = vpop.permute.xlu0 %1321
        %vm1323 = vcmask 826368
        %v1324 = vsel %vm1323, %v1316, %v1318
        %v1325 = vsel %vm1323, %v1318, %v1320
        %v1326 = vsel %vm1323, %v1320, %v1322
        %v1328 = vsel %vm197, %v1314, 0
        %v1331 = vsel %vm201, %v1324, 0
        %v1334 = vsel %vm201, %v1325, 0
        %v1337 = vsel %vm201, %v1326, 0
        %v1340 = vsel %vm201, %v1322, 0
        %1342 = vmatprep.subr.bf16.mxu0 0
        %1343 = vmatpush1.bf16.msra.mxu0 0
        %1344 = vmatprep.subr.bf16.mxu0 0
        %1345 = vmatpush1.bf16.msra.mxu0 0
        %1346 = vmatprep.subr.bf16.mxu0 0
        %1347 = vmatpush1.bf16.msra.mxu0 0
        %1348 = vmatprep.subr.bf16.mxu0 0
        %1349 = vmatpush1.bf16.msra.mxu0 0
        %1350 = vmatprep.subr.bf16.mxu0 0
        %1351 = vmatpush1.bf16.msra.mxu0 0
        %1352 = vmatprep.subr.bf16.mxu0 0
        %1353 = vmatpush1.bf16.msra.mxu0 0
        %1354 = vmatprep.subr.bf16.mxu0 0
        %1355 = vmatpush1.bf16.msra.mxu0 0
        %1356 = vmatprep.subr.bf16.mxu0 %v1334
        %1357 = vmatpush1.bf16.msra.mxu0 %v1331
        %1358 = vmatprep.subr.bf16.mxu0 0
        %1359 = vmatpush2.bf16.msra.mxu0 0
        %1360 = vmatprep.subr.bf16.mxu0 0
        %1361 = vmatpush2.bf16.msra.mxu0 0
        %1362 = vmatprep.subr.bf16.mxu0 0
        %1363 = vmatpush2.bf16.msra.mxu0 0
        %1364 = vmatprep.subr.bf16.mxu0 0
        %1365 = vmatpush2.bf16.msra.mxu0 0
        %1366 = vmatprep.subr.bf16.mxu0 0
        %1367 = vmatpush2.bf16.msra.mxu0 0
        %1368 = vmatprep.subr.bf16.mxu0 0
        %1369 = vmatpush2.bf16.msra.mxu0 0
        %1370 = vmatprep.subr.bf16.mxu0 0
        %1371 = vmatpush2.bf16.msra.mxu0 0
        %1372 = vmatprep.subr.bf16.mxu0 0
        %1373 = vmatpush2.bf16.msra.mxu0 0
        %1374 = vmatprep.mubr.bf16.mxu0 0
        %1375 = vmatmul.mubr.bf16.gmra.mxu0 %v1328
        %v1376 = vpop.f32.mrf.mxu0
        %v1377 = vadd.f32 0.0, %v1376
        %v1378 = vpop.f32.mrf.mxu0
        %v1379 = vadd.f32 0.0, %v1378
        %v1380 = vpop.f32.mrf.mxu0
        %v1381 = vpop.f32.mrf.mxu0
        %1382 = vdwg.mxu0
        %1383 = vmatprep.subr.bf16.mxu0 0
        %1384 = vmatpush1.bf16.msra.mxu0 0
        %1385 = vmatprep.subr.bf16.mxu0 0
        %1386 = vmatpush1.bf16.msra.mxu0 0
        %1387 = vmatprep.subr.bf16.mxu0 0
        %1388 = vmatpush1.bf16.msra.mxu0 0
        %1389 = vmatprep.subr.bf16.mxu0 0
        %1390 = vmatpush1.bf16.msra.mxu0 0
        %1391 = vmatprep.subr.bf16.mxu0 0
        %1392 = vmatpush1.bf16.msra.mxu0 0
        %1393 = vmatprep.subr.bf16.mxu0 0
        %1394 = vmatpush1.bf16.msra.mxu0 0
        %1395 = vmatprep.subr.bf16.mxu0 0
        %1396 = vmatpush1.bf16.msra.mxu0 0
        %1397 = vmatprep.subr.bf16.mxu0 %v1340
        %1398 = vmatpush1.bf16.msra.mxu0 %v1337
        %1399 = vmatprep.subr.bf16.mxu0 0
        %1400 = vmatpush2.bf16.msra.mxu0 0
        %1401 = vmatprep.subr.bf16.mxu0 0
        %1402 = vmatpush2.bf16.msra.mxu0 0
        %1403 = vmatprep.subr.bf16.mxu0 0
        %1404 = vmatpush2.bf16.msra.mxu0 0
        %1405 = vmatprep.subr.bf16.mxu0 0
        %1406 = vmatpush2.bf16.msra.mxu0 0
        %1407 = vmatprep.subr.bf16.mxu0 0
        %1408 = vmatpush2.bf16.msra.mxu0 0
        %1409 = vmatprep.subr.bf16.mxu0 0
        %1410 = vmatpush2.bf16.msra.mxu0 0
        %1411 = vmatprep.subr.bf16.mxu0 0
        %1412 = vmatpush2.bf16.msra.mxu0 0
        %1413 = vmatprep.subr.bf16.mxu0 0
        %1414 = vmatpush2.bf16.msra.mxu0 0
        %1415 = vmatprep.mubr.bf16.mxu0 0
        %1416 = vmatmul.mubr.bf16.gmra.mxu0 %v1328
        %v1417 = vpop.f32.mrf.mxu0
        %v1418 = vadd.f32 0.0, %v1417
        %v1419 = vpop.f32.mrf.mxu0
        %v1420 = vadd.f32 0.0, %v1419
        %v1421 = vpop.f32.mrf.mxu0
        %v1422 = vpop.f32.mrf.mxu0
        %1423 = vdwg.mxu0
        %v1424 = vadd.f32 %v1309, %v1377
        %v1425 = vadd.f32 %v1310, %v1379
        %v1426 = vadd.f32 %v1311, %v1418
        %v1427 = vadd.f32 %v1312, %v1420
        %s1428 = scalar_lea.vmem %s1, 44
        %v1429 = vld [vmem:[%s1428] sm:$0xf]
        %1430 = vrot.lane.b32.xlu0 %v181, 100
        %v1431 = vpop.permute.xlu0 %1430
        %1432 = vrot.lane.b32.xlu0 %v182, 100
        %v1433 = vpop.permute.xlu0 %1432
        %1434 = vrot.lane.b32.xlu0 %v183, 100
        %v1435 = vpop.permute.xlu0 %1434
        %1436 = vrot.lane.b32.xlu0 %v184, 100
        %v1437 = vpop.permute.xlu0 %1436
        %vm1438 = vcmask 818176
        %v1439 = vsel %vm1438, %v1431, %v1433
        %v1440 = vsel %vm1438, %v1433, %v1435
        %v1441 = vsel %vm1438, %v1435, %v1437
        %v1443 = vsel %vm197, %v1429, 0
        %v1446 = vsel %vm201, %v1439, 0
        %v1449 = vsel %vm201, %v1440, 0
        %v1452 = vsel %vm201, %v1441, 0
        %v1455 = vsel %vm201, %v1437, 0
        %1457 = vmatprep.subr.bf16.mxu0 0
        %1458 = vmatpush1.bf16.msra.mxu0 0
        %1459 = vmatprep.subr.bf16.mxu0 0
        %1460 = vmatpush1.bf16.msra.mxu0 0
        %1461 = vmatprep.subr.bf16.mxu0 0
        %1462 = vmatpush1.bf16.msra.mxu0 0
        %1463 = vmatprep.subr.bf16.mxu0 0
        %1464 = vmatpush1.bf16.msra.mxu0 0
        %1465 = vmatprep.subr.bf16.mxu0 0
        %1466 = vmatpush1.bf16.msra.mxu0 0
        %1467 = vmatprep.subr.bf16.mxu0 0
        %1468 = vmatpush1.bf16.msra.mxu0 0
        %1469 = vmatprep.subr.bf16.mxu0 0
        %1470 = vmatpush1.bf16.msra.mxu0 0
        %1471 = vmatprep.subr.bf16.mxu0 %v1449
        %1472 = vmatpush1.bf16.msra.mxu0 %v1446
        %1473 = vmatprep.subr.bf16.mxu0 0
        %1474 = vmatpush2.bf16.msra.mxu0 0
        %1475 = vmatprep.subr.bf16.mxu0 0
        %1476 = vmatpush2.bf16.msra.mxu0 0
        %1477 = vmatprep.subr.bf16.mxu0 0
        %1478 = vmatpush2.bf16.msra.mxu0 0
        %1479 = vmatprep.subr.bf16.mxu0 0
        %1480 = vmatpush2.bf16.msra.mxu0 0
        %1481 = vmatprep.subr.bf16.mxu0 0
        %1482 = vmatpush2.bf16.msra.mxu0 0
        %1483 = vmatprep.subr.bf16.mxu0 0
        %1484 = vmatpush2.bf16.msra.mxu0 0
        %1485 = vmatprep.subr.bf16.mxu0 0
        %1486 = vmatpush2.bf16.msra.mxu0 0
        %1487 = vmatprep.subr.bf16.mxu0 0
        %1488 = vmatpush2.bf16.msra.mxu0 0
        %1489 = vmatprep.mubr.bf16.mxu0 0
        %1490 = vmatmul.mubr.bf16.gmra.mxu0 %v1443
        %v1491 = vpop.f32.mrf.mxu0
        %v1492 = vadd.f32 0.0, %v1491
        %v1493 = vpop.f32.mrf.mxu0
        %v1494 = vadd.f32 0.0, %v1493
        %v1495 = vpop.f32.mrf.mxu0
        %v1496 = vpop.f32.mrf.mxu0
        %1497 = vdwg.mxu0
        %1498 = vmatprep.subr.bf16.mxu0 0
        %1499 = vmatpush1.bf16.msra.mxu0 0
        %1500 = vmatprep.subr.bf16.mxu0 0
        %1501 = vmatpush1.bf16.msra.mxu0 0
        %1502 = vmatprep.subr.bf16.mxu0 0
        %1503 = vmatpush1.bf16.msra.mxu0 0
        %1504 = vmatprep.subr.bf16.mxu0 0
        %1505 = vmatpush1.bf16.msra.mxu0 0
        %1506 = vmatprep.subr.bf16.mxu0 0
        %1507 = vmatpush1.bf16.msra.mxu0 0
        %1508 = vmatprep.subr.bf16.mxu0 0
        %1509 = vmatpush1.bf16.msra.mxu0 0
        %1510 = vmatprep.subr.bf16.mxu0 0
        %1511 = vmatpush1.bf16.msra.mxu0 0
        %1512 = vmatprep.subr.bf16.mxu0 %v1455
        %1513 = vmatpush1.bf16.msra.mxu0 %v1452
        %1514 = vmatprep.subr.bf16.mxu0 0
        %1515 = vmatpush2.bf16.msra.mxu0 0
        %1516 = vmatprep.subr.bf16.mxu0 0
        %1517 = vmatpush2.bf16.msra.mxu0 0
        %1518 = vmatprep.subr.bf16.mxu0 0
        %1519 = vmatpush2.bf16.msra.mxu0 0
        %1520 = vmatprep.subr.bf16.mxu0 0
        %1521 = vmatpush2.bf16.msra.mxu0 0
        %1522 = vmatprep.subr.bf16.mxu0 0
        %1523 = vmatpush2.bf16.msra.mxu0 0
        %1524 = vmatprep.subr.bf16.mxu0 0
        %1525 = vmatpush2.bf16.msra.mxu0 0
        %1526 = vmatprep.subr.bf16.mxu0 0
        %1527 = vmatpush2.bf16.msra.mxu0 0
        %1528 = vmatprep.subr.bf16.mxu0 0
        %1529 = vmatpush2.bf16.msra.mxu0 0
        %1530 = vmatprep.mubr.bf16.mxu0 0
        %1531 = vmatmul.mubr.bf16.gmra.mxu0 %v1443
        %v1532 = vpop.f32.mrf.mxu0
        %v1533 = vadd.f32 0.0, %v1532
        %v1534 = vpop.f32.mrf.mxu0
        %v1535 = vadd.f32 0.0, %v1534
        %v1536 = vpop.f32.mrf.mxu0
        %v1537 = vpop.f32.mrf.mxu0
        %1538 = vdwg.mxu0
        %v1539 = vadd.f32 %v1424, %v1492
        %v1540 = vadd.f32 %v1425, %v1494
        %v1541 = vadd.f32 %v1426, %v1533
        %v1542 = vadd.f32 %v1427, %v1535
        %s1543 = scalar_lea.vmem %s1, 48
        %v1544 = vld [vmem:[%s1543] sm:$0xf]
        %1545 = vrot.lane.b32.xlu0 %v181, 99
        %v1546 = vpop.permute.xlu0 %1545
        %1547 = vrot.lane.b32.xlu0 %v182, 99
        %v1548 = vpop.permute.xlu0 %1547
        %1549 = vrot.lane.b32.xlu0 %v183, 99
        %v1550 = vpop.permute.xlu0 %1549
        %1551 = vrot.lane.b32.xlu0 %v184, 99
        %v1552 = vpop.permute.xlu0 %1551
        %vm1553 = vcmask 809984
        %v1554 = vsel %vm1553, %v1546, %v1548
        %v1555 = vsel %vm1553, %v1548, %v1550
        %v1556 = vsel %vm1553, %v1550, %v1552
        %v1558 = vsel %vm197, %v1544, 0
        %v1561 = vsel %vm201, %v1554, 0
        %v1564 = vsel %vm201, %v1555, 0
        %v1567 = vsel %vm201, %v1556, 0
        %v1570 = vsel %vm201, %v1552, 0
        %1572 = vmatprep.subr.bf16.mxu0 0
        %1573 = vmatpush1.bf16.msra.mxu0 0
        %1574 = vmatprep.subr.bf16.mxu0 0
        %1575 = vmatpush1.bf16.msra.mxu0 0
        %1576 = vmatprep.subr.bf16.mxu0 0
        %1577 = vmatpush1.bf16.msra.mxu0 0
        %1578 = vmatprep.subr.bf16.mxu0 0
        %1579 = vmatpush1.bf16.msra.mxu0 0
        %1580 = vmatprep.subr.bf16.mxu0 0
        %1581 = vmatpush1.bf16.msra.mxu0 0
        %1582 = vmatprep.subr.bf16.mxu0 0
        %1583 = vmatpush1.bf16.msra.mxu0 0
        %1584 = vmatprep.subr.bf16.mxu0 0
        %1585 = vmatpush1.bf16.msra.mxu0 0
        %1586 = vmatprep.subr.bf16.mxu0 %v1564
        %1587 = vmatpush1.bf16.msra.mxu0 %v1561
        %1588 = vmatprep.subr.bf16.mxu0 0
        %1589 = vmatpush2.bf16.msra.mxu0 0
        %1590 = vmatprep.subr.bf16.mxu0 0
        %1591 = vmatpush2.bf16.msra.mxu0 0
        %1592 = vmatprep.subr.bf16.mxu0 0
        %1593 = vmatpush2.bf16.msra.mxu0 0
        %1594 = vmatprep.subr.bf16.mxu0 0
        %1595 = vmatpush2.bf16.msra.mxu0 0
        %1596 = vmatprep.subr.bf16.mxu0 0
        %1597 = vmatpush2.bf16.msra.mxu0 0
        %1598 = vmatprep.subr.bf16.mxu0 0
        %1599 = vmatpush2.bf16.msra.mxu0 0
        %1600 = vmatprep.subr.bf16.mxu0 0
        %1601 = vmatpush2.bf16.msra.mxu0 0
        %1602 = vmatprep.subr.bf16.mxu0 0
        %1603 = vmatpush2.bf16.msra.mxu0 0
        %1604 = vmatprep.mubr.bf16.mxu0 0
        %1605 = vmatmul.mubr.bf16.gmra.mxu0 %v1558
        %v1606 = vpop.f32.mrf.mxu0
        %v1607 = vadd.f32 0.0, %v1606
        %v1608 = vpop.f32.mrf.mxu0
        %v1609 = vadd.f32 0.0, %v1608
        %v1610 = vpop.f32.mrf.mxu0
        %v1611 = vpop.f32.mrf.mxu0
        %1612 = vdwg.mxu0
        %1613 = vmatprep.subr.bf16.mxu0 0
        %1614 = vmatpush1.bf16.msra.mxu0 0
        %1615 = vmatprep.subr.bf16.mxu0 0
        %1616 = vmatpush1.bf16.msra.mxu0 0
        %1617 = vmatprep.subr.bf16.mxu0 0
        %1618 = vmatpush1.bf16.msra.mxu0 0
        %1619 = vmatprep.subr.bf16.mxu0 0
        %1620 = vmatpush1.bf16.msra.mxu0 0
        %1621 = vmatprep.subr.bf16.mxu0 0
        %1622 = vmatpush1.bf16.msra.mxu0 0
        %1623 = vmatprep.subr.bf16.mxu0 0
        %1624 = vmatpush1.bf16.msra.mxu0 0
        %1625 = vmatprep.subr.bf16.mxu0 0
        %1626 = vmatpush1.bf16.msra.mxu0 0
        %1627 = vmatprep.subr.bf16.mxu0 %v1570
        %1628 = vmatpush1.bf16.msra.mxu0 %v1567
        %1629 = vmatprep.subr.bf16.mxu0 0
        %1630 = vmatpush2.bf16.msra.mxu0 0
        %1631 = vmatprep.subr.bf16.mxu0 0
        %1632 = vmatpush2.bf16.msra.mxu0 0
        %1633 = vmatprep.subr.bf16.mxu0 0
        %1634 = vmatpush2.bf16.msra.mxu0 0
        %1635 = vmatprep.subr.bf16.mxu0 0
        %1636 = vmatpush2.bf16.msra.mxu0 0
        %1637 = vmatprep.subr.bf16.mxu0 0
        %1638 = vmatpush2.bf16.msra.mxu0 0
        %1639 = vmatprep.subr.bf16.mxu0 0
        %1640 = vmatpush2.bf16.msra.mxu0 0
        %1641 = vmatprep.subr.bf16.mxu0 0
        %1642 = vmatpush2.bf16.msra.mxu0 0
        %1643 = vmatprep.subr.bf16.mxu0 0
        %1644 = vmatpush2.bf16.msra.mxu0 0
        %1645 = vmatprep.mubr.bf16.mxu0 0
        %1646 = vmatmul.mubr.bf16.gmra.mxu0 %v1558
        %v1647 = vpop.f32.mrf.mxu0
        %v1648 = vadd.f32 0.0, %v1647
        %v1649 = vpop.f32.mrf.mxu0
        %v1650 = vadd.f32 0.0, %v1649
        %v1651 = vpop.f32.mrf.mxu0
        %v1652 = vpop.f32.mrf.mxu0
        %1653 = vdwg.mxu0
        %v1654 = vadd.f32 %v1539, %v1607
        %v1655 = vadd.f32 %v1540, %v1609
        %v1656 = vadd.f32 %v1541, %v1648
        %v1657 = vadd.f32 %v1542, %v1650
        %s1658 = scalar_lea.vmem %s1, 52
        %v1659 = vld [vmem:[%s1658] sm:$0xf]
        %1660 = vrot.lane.b32.xlu0 %v181, 98
        %v1661 = vpop.permute.xlu0 %1660
        %1662 = vrot.lane.b32.xlu0 %v182, 98
        %v1663 = vpop.permute.xlu0 %1662
        %1664 = vrot.lane.b32.xlu0 %v183, 98
        %v1665 = vpop.permute.xlu0 %1664
        %1666 = vrot.lane.b32.xlu0 %v184, 98
        %v1667 = vpop.permute.xlu0 %1666
        %vm1668 = vcmask 801792
        %v1669 = vsel %vm1668, %v1661, %v1663
        %v1670 = vsel %vm1668, %v1663, %v1665
        %v1671 = vsel %vm1668, %v1665, %v1667
        %v1673 = vsel %vm197, %v1659, 0
        %v1676 = vsel %vm201, %v1669, 0
        %v1679 = vsel %vm201, %v1670, 0
        %v1682 = vsel %vm201, %v1671, 0
        %v1685 = vsel %vm201, %v1667, 0
        %1687 = vmatprep.subr.bf16.mxu0 0
        %1688 = vmatpush1.bf16.msra.mxu0 0
        %1689 = vmatprep.subr.bf16.mxu0 0
        %1690 = vmatpush1.bf16.msra.mxu0 0
        %1691 = vmatprep.subr.bf16.mxu0 0
        %1692 = vmatpush1.bf16.msra.mxu0 0
        %1693 = vmatprep.subr.bf16.mxu0 0
        %1694 = vmatpush1.bf16.msra.mxu0 0
        %1695 = vmatprep.subr.bf16.mxu0 0
        %1696 = vmatpush1.bf16.msra.mxu0 0
        %1697 = vmatprep.subr.bf16.mxu0 0
        %1698 = vmatpush1.bf16.msra.mxu0 0
        %1699 = vmatprep.subr.bf16.mxu0 0
        %1700 = vmatpush1.bf16.msra.mxu0 0
        %1701 = vmatprep.subr.bf16.mxu0 %v1679
        %1702 = vmatpush1.bf16.msra.mxu0 %v1676
        %1703 = vmatprep.subr.bf16.mxu0 0
        %1704 = vmatpush2.bf16.msra.mxu0 0
        %1705 = vmatprep.subr.bf16.mxu0 0
        %1706 = vmatpush2.bf16.msra.mxu0 0
        %1707 = vmatprep.subr.bf16.mxu0 0
        %1708 = vmatpush2.bf16.msra.mxu0 0
        %1709 = vmatprep.subr.bf16.mxu0 0
        %1710 = vmatpush2.bf16.msra.mxu0 0
        %1711 = vmatprep.subr.bf16.mxu0 0
        %1712 = vmatpush2.bf16.msra.mxu0 0
        %1713 = vmatprep.subr.bf16.mxu0 0
        %1714 = vmatpush2.bf16.msra.mxu0 0
        %1715 = vmatprep.subr.bf16.mxu0 0
        %1716 = vmatpush2.bf16.msra.mxu0 0
        %1717 = vmatprep.subr.bf16.mxu0 0
        %1718 = vmatpush2.bf16.msra.mxu0 0
        %1719 = vmatprep.mubr.bf16.mxu0 0
        %1720 = vmatmul.mubr.bf16.gmra.mxu0 %v1673
        %v1721 = vpop.f32.mrf.mxu0
        %v1722 = vadd.f32 0.0, %v1721
        %v1723 = vpop.f32.mrf.mxu0
        %v1724 = vadd.f32 0.0, %v1723
        %v1725 = vpop.f32.mrf.mxu0
        %v1726 = vpop.f32.mrf.mxu0
        %1727 = vdwg.mxu0
        %1728 = vmatprep.subr.bf16.mxu0 0
        %1729 = vmatpush1.bf16.msra.mxu0 0
        %1730 = vmatprep.subr.bf16.mxu0 0
        %1731 = vmatpush1.bf16.msra.mxu0 0
        %1732 = vmatprep.subr.bf16.mxu0 0
        %1733 = vmatpush1.bf16.msra.mxu0 0
        %1734 = vmatprep.subr.bf16.mxu0 0
        %1735 = vmatpush1.bf16.msra.mxu0 0
        %1736 = vmatprep.subr.bf16.mxu0 0
        %1737 = vmatpush1.bf16.msra.mxu0 0
        %1738 = vmatprep.subr.bf16.mxu0 0
        %1739 = vmatpush1.bf16.msra.mxu0 0
        %1740 = vmatprep.subr.bf16.mxu0 0
        %1741 = vmatpush1.bf16.msra.mxu0 0
        %1742 = vmatprep.subr.bf16.mxu0 %v1685
        %1743 = vmatpush1.bf16.msra.mxu0 %v1682
        %1744 = vmatprep.subr.bf16.mxu0 0
        %1745 = vmatpush2.bf16.msra.mxu0 0
        %1746 = vmatprep.subr.bf16.mxu0 0
        %1747 = vmatpush2.bf16.msra.mxu0 0
        %1748 = vmatprep.subr.bf16.mxu0 0
        %1749 = vmatpush2.bf16.msra.mxu0 0
        %1750 = vmatprep.subr.bf16.mxu0 0
        %1751 = vmatpush2.bf16.msra.mxu0 0
        %1752 = vmatprep.subr.bf16.mxu0 0
        %1753 = vmatpush2.bf16.msra.mxu0 0
        %1754 = vmatprep.subr.bf16.mxu0 0
        %1755 = vmatpush2.bf16.msra.mxu0 0
        %1756 = vmatprep.subr.bf16.mxu0 0
        %1757 = vmatpush2.bf16.msra.mxu0 0
        %1758 = vmatprep.subr.bf16.mxu0 0
        %1759 = vmatpush2.bf16.msra.mxu0 0
        %1760 = vmatprep.mubr.bf16.mxu0 0
        %1761 = vmatmul.mubr.bf16.gmra.mxu0 %v1673
        %v1762 = vpop.f32.mrf.mxu0
        %v1763 = vadd.f32 0.0, %v1762
        %v1764 = vpop.f32.mrf.mxu0
        %v1765 = vadd.f32 0.0, %v1764
        %v1766 = vpop.f32.mrf.mxu0
        %v1767 = vpop.f32.mrf.mxu0
        %1768 = vdwg.mxu0
        %v1769 = vadd.f32 %v1654, %v1722
        %v1770 = vadd.f32 %v1655, %v1724
        %v1771 = vadd.f32 %v1656, %v1763
        %v1772 = vadd.f32 %v1657, %v1765
        %s1773 = scalar_lea.vmem %s1, 56
        %v1774 = vld [vmem:[%s1773] sm:$0xf]
        %1775 = vrot.lane.b32.xlu0 %v181, 80
        %v1776 = vpop.permute.xlu0 %1775
        %1777 = vrot.lane.b32.xlu0 %v182, 80
        %v1778 = vpop.permute.xlu0 %1777
        %1779 = vrot.lane.b32.xlu0 %v183, 80
        %v1780 = vpop.permute.xlu0 %1779
        %1781 = vrot.lane.b32.xlu0 %v184, 80
        %v1782 = vpop.permute.xlu0 %1781
        %vm1783 = vcmask 654336
        %v1784 = vsel %vm1783, %v1776, %v1778
        %v1785 = vsel %vm1783, %v1778, %v1780
        %v1786 = vsel %vm1783, %v1780, %v1782
        %v1788 = vsel %vm197, %v1774, 0
        %v1791 = vsel %vm201, %v1784, 0
        %v1794 = vsel %vm201, %v1785, 0
        %v1797 = vsel %vm201, %v1786, 0
        %v1800 = vsel %vm201, %v1782, 0
        %1802 = vmatprep.subr.bf16.mxu0 0
        %1803 = vmatpush1.bf16.msra.mxu0 0
        %1804 = vmatprep.subr.bf16.mxu0 0
        %1805 = vmatpush1.bf16.msra.mxu0 0
        %1806 = vmatprep.subr.bf16.mxu0 0
        %1807 = vmatpush1.bf16.msra.mxu0 0
        %1808 = vmatprep.subr.bf16.mxu0 0
        %1809 = vmatpush1.bf16.msra.mxu0 0
        %1810 = vmatprep.subr.bf16.mxu0 0
        %1811 = vmatpush1.bf16.msra.mxu0 0
        %1812 = vmatprep.subr.bf16.mxu0 0
        %1813 = vmatpush1.bf16.msra.mxu0 0
        %1814 = vmatprep.subr.bf16.mxu0 0
        %1815 = vmatpush1.bf16.msra.mxu0 0
        %1816 = vmatprep.subr.bf16.mxu0 %v1794
        %1817 = vmatpush1.bf16.msra.mxu0 %v1791
        %1818 = vmatprep.subr.bf16.mxu0 0
        %1819 = vmatpush2.bf16.msra.mxu0 0
        %1820 = vmatprep.subr.bf16.mxu0 0
        %1821 = vmatpush2.bf16.msra.mxu0 0
        %1822 = vmatprep.subr.bf16.mxu0 0
        %1823 = vmatpush2.bf16.msra.mxu0 0
        %1824 = vmatprep.subr.bf16.mxu0 0
        %1825 = vmatpush2.bf16.msra.mxu0 0
        %1826 = vmatprep.subr.bf16.mxu0 0
        %1827 = vmatpush2.bf16.msra.mxu0 0
        %1828 = vmatprep.subr.bf16.mxu0 0
        %1829 = vmatpush2.bf16.msra.mxu0 0
        %1830 = vmatprep.subr.bf16.mxu0 0
        %1831 = vmatpush2.bf16.msra.mxu0 0
        %1832 = vmatprep.subr.bf16.mxu0 0
        %1833 = vmatpush2.bf16.msra.mxu0 0
        %1834 = vmatprep.mubr.bf16.mxu0 0
        %1835 = vmatmul.mubr.bf16.gmra.mxu0 %v1788
        %v1836 = vpop.f32.mrf.mxu0
        %v1837 = vadd.f32 0.0, %v1836
        %v1838 = vpop.f32.mrf.mxu0
        %v1839 = vadd.f32 0.0, %v1838
        %v1840 = vpop.f32.mrf.mxu0
        %v1841 = vpop.f32.mrf.mxu0
        %1842 = vdwg.mxu0
        %1843 = vmatprep.subr.bf16.mxu0 0
        %1844 = vmatpush1.bf16.msra.mxu0 0
        %1845 = vmatprep.subr.bf16.mxu0 0
        %1846 = vmatpush1.bf16.msra.mxu0 0
        %1847 = vmatprep.subr.bf16.mxu0 0
        %1848 = vmatpush1.bf16.msra.mxu0 0
        %1849 = vmatprep.subr.bf16.mxu0 0
        %1850 = vmatpush1.bf16.msra.mxu0 0
        %1851 = vmatprep.subr.bf16.mxu0 0
        %1852 = vmatpush1.bf16.msra.mxu0 0
        %1853 = vmatprep.subr.bf16.mxu0 0
        %1854 = vmatpush1.bf16.msra.mxu0 0
        %1855 = vmatprep.subr.bf16.mxu0 0
        %1856 = vmatpush1.bf16.msra.mxu0 0
        %1857 = vmatprep.subr.bf16.mxu0 %v1800
        %1858 = vmatpush1.bf16.msra.mxu0 %v1797
        %1859 = vmatprep.subr.bf16.mxu0 0
        %1860 = vmatpush2.bf16.msra.mxu0 0
        %1861 = vmatprep.subr.bf16.mxu0 0
        %1862 = vmatpush2.bf16.msra.mxu0 0
        %1863 = vmatprep.subr.bf16.mxu0 0
        %1864 = vmatpush2.bf16.msra.mxu0 0
        %1865 = vmatprep.subr.bf16.mxu0 0
        %1866 = vmatpush2.bf16.msra.mxu0 0
        %1867 = vmatprep.subr.bf16.mxu0 0
        %1868 = vmatpush2.bf16.msra.mxu0 0
        %1869 = vmatprep.subr.bf16.mxu0 0
        %1870 = vmatpush2.bf16.msra.mxu0 0
        %1871 = vmatprep.subr.bf16.mxu0 0
        %1872 = vmatpush2.bf16.msra.mxu0 0
        %1873 = vmatprep.subr.bf16.mxu0 0
        %1874 = vmatpush2.bf16.msra.mxu0 0
        %1875 = vmatprep.mubr.bf16.mxu0 0
        %1876 = vmatmul.mubr.bf16.gmra.mxu0 %v1788
        %v1877 = vpop.f32.mrf.mxu0
        %v1878 = vadd.f32 0.0, %v1877
        %v1879 = vpop.f32.mrf.mxu0
        %v1880 = vadd.f32 0.0, %v1879
        %v1881 = vpop.f32.mrf.mxu0
        %v1882 = vpop.f32.mrf.mxu0
        %1883 = vdwg.mxu0
        %v1884 = vadd.f32 %v1769, %v1837
        %v1885 = vadd.f32 %v1770, %v1839
        %v1886 = vadd.f32 %v1771, %v1878
        %v1887 = vadd.f32 %v1772, %v1880
        %s1888 = scalar_lea.vmem %s1, 60
        %v1889 = vld [vmem:[%s1888] sm:$0xf]
        %1890 = vrot.lane.b32.xlu0 %v181, 79
        %v1891 = vpop.permute.xlu0 %1890
        %1892 = vrot.lane.b32.xlu0 %v182, 79
        %v1893 = vpop.permute.xlu0 %1892
        %1894 = vrot.lane.b32.xlu0 %v183, 79
        %v1895 = vpop.permute.xlu0 %1894
        %1896 = vrot.lane.b32.xlu0 %v184, 79
        %v1897 = vpop.permute.xlu0 %1896
        %vm1898 = vcmask 646144
        %v1899 = vsel %vm1898, %v1891, %v1893
        %v1900 = vsel %vm1898, %v1893, %v1895
        %v1901 = vsel %vm1898, %v1895, %v1897
        %v1903 = vsel %vm197, %v1889, 0
        %v1906 = vsel %vm201, %v1899, 0
        %v1909 = vsel %vm201, %v1900, 0
        %v1912 = vsel %vm201, %v1901, 0
        %v1915 = vsel %vm201, %v1897, 0
        %1917 = vmatprep.subr.bf16.mxu0 0
        %1918 = vmatpush1.bf16.msra.mxu0 0
        %1919 = vmatprep.subr.bf16.mxu0 0
        %1920 = vmatpush1.bf16.msra.mxu0 0
        %1921 = vmatprep.subr.bf16.mxu0 0
        %1922 = vmatpush1.bf16.msra.mxu0 0
        %1923 = vmatprep.subr.bf16.mxu0 0
        %1924 = vmatpush1.bf16.msra.mxu0 0
        %1925 = vmatprep.subr.bf16.mxu0 0
        %1926 = vmatpush1.bf16.msra.mxu0 0
        %1927 = vmatprep.subr.bf16.mxu0 0
        %1928 = vmatpush1.bf16.msra.mxu0 0
        %1929 = vmatprep.subr.bf16.mxu0 0
        %1930 = vmatpush1.bf16.msra.mxu0 0
        %1931 = vmatprep.subr.bf16.mxu0 %v1909
        %1932 = vmatpush1.bf16.msra.mxu0 %v1906
        %1933 = vmatprep.subr.bf16.mxu0 0
        %1934 = vmatpush2.bf16.msra.mxu0 0
        %1935 = vmatprep.subr.bf16.mxu0 0
        %1936 = vmatpush2.bf16.msra.mxu0 0
        %1937 = vmatprep.subr.bf16.mxu0 0
        %1938 = vmatpush2.bf16.msra.mxu0 0
        %1939 = vmatprep.subr.bf16.mxu0 0
        %1940 = vmatpush2.bf16.msra.mxu0 0
        %1941 = vmatprep.subr.bf16.mxu0 0
        %1942 = vmatpush2.bf16.msra.mxu0 0
        %1943 = vmatprep.subr.bf16.mxu0 0
        %1944 = vmatpush2.bf16.msra.mxu0 0
        %1945 = vmatprep.subr.bf16.mxu0 0
        %1946 = vmatpush2.bf16.msra.mxu0 0
        %1947 = vmatprep.subr.bf16.mxu0 0
        %1948 = vmatpush2.bf16.msra.mxu0 0
        %1949 = vmatprep.mubr.bf16.mxu0 0
        %1950 = vmatmul.mubr.bf16.gmra.mxu0 %v1903
        %v1951 = vpop.f32.mrf.mxu0
        %v1952 = vadd.f32 0.0, %v1951
        %v1953 = vpop.f32.mrf.mxu0
        %v1954 = vadd.f32 0.0, %v1953
        %v1955 = vpop.f32.mrf.mxu0
        %v1956 = vpop.f32.mrf.mxu0
        %1957 = vdwg.mxu0
        %1958 = vmatprep.subr.bf16.mxu0 0
        %1959 = vmatpush1.bf16.msra.mxu0 0
        %1960 = vmatprep.subr.bf16.mxu0 0
        %1961 = vmatpush1.bf16.msra.mxu0 0
        %1962 = vmatprep.subr.bf16.mxu0 0
        %1963 = vmatpush1.bf16.msra.mxu0 0
        %1964 = vmatprep.subr.bf16.mxu0 0
        %1965 = vmatpush1.bf16.msra.mxu0 0
        %1966 = vmatprep.subr.bf16.mxu0 0
        %1967 = vmatpush1.bf16.msra.mxu0 0
        %1968 = vmatprep.subr.bf16.mxu0 0
        %1969 = vmatpush1.bf16.msra.mxu0 0
        %1970 = vmatprep.subr.bf16.mxu0 0
        %1971 = vmatpush1.bf16.msra.mxu0 0
        %1972 = vmatprep.subr.bf16.mxu0 %v1915
        %1973 = vmatpush1.bf16.msra.mxu0 %v1912
        %1974 = vmatprep.subr.bf16.mxu0 0
        %1975 = vmatpush2.bf16.msra.mxu0 0
        %1976 = vmatprep.subr.bf16.mxu0 0
        %1977 = vmatpush2.bf16.msra.mxu0 0
        %1978 = vmatprep.subr.bf16.mxu0 0
        %1979 = vmatpush2.bf16.msra.mxu0 0
        %1980 = vmatprep.subr.bf16.mxu0 0
        %1981 = vmatpush2.bf16.msra.mxu0 0
        %1982 = vmatprep.subr.bf16.mxu0 0
        %1983 = vmatpush2.bf16.msra.mxu0 0
        %1984 = vmatprep.subr.bf16.mxu0 0
        %1985 = vmatpush2.bf16.msra.mxu0 0
        %1986 = vmatprep.subr.bf16.mxu0 0
        %1987 = vmatpush2.bf16.msra.mxu0 0
        %1988 = vmatprep.subr.bf16.mxu0 0
        %1989 = vmatpush2.bf16.msra.mxu0 0
        %1990 = vmatprep.mubr.bf16.mxu0 0
        %1991 = vmatmul.mubr.bf16.gmra.mxu0 %v1903
        %v1992 = vpop.f32.mrf.mxu0
        %v1993 = vadd.f32 0.0, %v1992
        %v1994 = vpop.f32.mrf.mxu0
        %v1995 = vadd.f32 0.0, %v1994
        %v1996 = vpop.f32.mrf.mxu0
        %v1997 = vpop.f32.mrf.mxu0
        %1998 = vdwg.mxu0
        %v1999 = vadd.f32 %v1884, %v1952
        %v2000 = vadd.f32 %v1885, %v1954
        %v2001 = vadd.f32 %v1886, %v1993
        %v2002 = vadd.f32 %v1887, %v1995
        %s2003 = scalar_lea.vmem %s1, 64
        %v2004 = vld [vmem:[%s2003] sm:$0xf]
        %2005 = vrot.lane.b32.xlu0 %v181, 78
        %v2006 = vpop.permute.xlu0 %2005
        %2007 = vrot.lane.b32.xlu0 %v182, 78
        %v2008 = vpop.permute.xlu0 %2007
        %2009 = vrot.lane.b32.xlu0 %v183, 78
        %v2010 = vpop.permute.xlu0 %2009
        %2011 = vrot.lane.b32.xlu0 %v184, 78
        %v2012 = vpop.permute.xlu0 %2011
        %vm2013 = vcmask 637952
        %v2014 = vsel %vm2013, %v2006, %v2008
        %v2015 = vsel %vm2013, %v2008, %v2010
        %v2016 = vsel %vm2013, %v2010, %v2012
        %v2018 = vsel %vm197, %v2004, 0
        %v2021 = vsel %vm201, %v2014, 0
        %v2024 = vsel %vm201, %v2015, 0
        %v2027 = vsel %vm201, %v2016, 0
        %v2030 = vsel %vm201, %v2012, 0
        %2032 = vmatprep.subr.bf16.mxu0 0
        %2033 = vmatpush1.bf16.msra.mxu0 0
        %2034 = vmatprep.subr.bf16.mxu0 0
        %2035 = vmatpush1.bf16.msra.mxu0 0
        %2036 = vmatprep.subr.bf16.mxu0 0
        %2037 = vmatpush1.bf16.msra.mxu0 0
        %2038 = vmatprep.subr.bf16.mxu0 0
        %2039 = vmatpush1.bf16.msra.mxu0 0
        %2040 = vmatprep.subr.bf16.mxu0 0
        %2041 = vmatpush1.bf16.msra.mxu0 0
        %2042 = vmatprep.subr.bf16.mxu0 0
        %2043 = vmatpush1.bf16.msra.mxu0 0
        %2044 = vmatprep.subr.bf16.mxu0 0
        %2045 = vmatpush1.bf16.msra.mxu0 0
        %2046 = vmatprep.subr.bf16.mxu0 %v2024
        %2047 = vmatpush1.bf16.msra.mxu0 %v2021
        %2048 = vmatprep.subr.bf16.mxu0 0
        %2049 = vmatpush2.bf16.msra.mxu0 0
        %2050 = vmatprep.subr.bf16.mxu0 0
        %2051 = vmatpush2.bf16.msra.mxu0 0
        %2052 = vmatprep.subr.bf16.mxu0 0
        %2053 = vmatpush2.bf16.msra.mxu0 0
        %2054 = vmatprep.subr.bf16.mxu0 0
        %2055 = vmatpush2.bf16.msra.mxu0 0
        %2056 = vmatprep.subr.bf16.mxu0 0
        %2057 = vmatpush2.bf16.msra.mxu0 0
        %2058 = vmatprep.subr.bf16.mxu0 0
        %2059 = vmatpush2.bf16.msra.mxu0 0
        %2060 = vmatprep.subr.bf16.mxu0 0
        %2061 = vmatpush2.bf16.msra.mxu0 0
        %2062 = vmatprep.subr.bf16.mxu0 0
        %2063 = vmatpush2.bf16.msra.mxu0 0
        %2064 = vmatprep.mubr.bf16.mxu0 0
        %2065 = vmatmul.mubr.bf16.gmra.mxu0 %v2018
        %v2066 = vpop.f32.mrf.mxu0
        %v2067 = vadd.f32 0.0, %v2066
        %v2068 = vpop.f32.mrf.mxu0
        %v2069 = vadd.f32 0.0, %v2068
        %v2070 = vpop.f32.mrf.mxu0
        %v2071 = vpop.f32.mrf.mxu0
        %2072 = vdwg.mxu0
        %2073 = vmatprep.subr.bf16.mxu0 0
        %2074 = vmatpush1.bf16.msra.mxu0 0
        %2075 = vmatprep.subr.bf16.mxu0 0
        %2076 = vmatpush1.bf16.msra.mxu0 0
        %2077 = vmatprep.subr.bf16.mxu0 0
        %2078 = vmatpush1.bf16.msra.mxu0 0
        %2079 = vmatprep.subr.bf16.mxu0 0
        %2080 = vmatpush1.bf16.msra.mxu0 0
        %2081 = vmatprep.subr.bf16.mxu0 0
        %2082 = vmatpush1.bf16.msra.mxu0 0
        %2083 = vmatprep.subr.bf16.mxu0 0
        %2084 = vmatpush1.bf16.msra.mxu0 0
        %2085 = vmatprep.subr.bf16.mxu0 0
        %2086 = vmatpush1.bf16.msra.mxu0 0
        %2087 = vmatprep.subr.bf16.mxu0 %v2030
        %2088 = vmatpush1.bf16.msra.mxu0 %v2027
        %2089 = vmatprep.subr.bf16.mxu0 0
        %2090 = vmatpush2.bf16.msra.mxu0 0
        %2091 = vmatprep.subr.bf16.mxu0 0
        %2092 = vmatpush2.bf16.msra.mxu0 0
        %2093 = vmatprep.subr.bf16.mxu0 0
        %2094 = vmatpush2.bf16.msra.mxu0 0
        %2095 = vmatprep.subr.bf16.mxu0 0
        %2096 = vmatpush2.bf16.msra.mxu0 0
        %2097 = vmatprep.subr.bf16.mxu0 0
        %2098 = vmatpush2.bf16.msra.mxu0 0
        %2099 = vmatprep.subr.bf16.mxu0 0
        %2100 = vmatpush2.bf16.msra.mxu0 0
        %2101 = vmatprep.subr.bf16.mxu0 0
        %2102 = vmatpush2.bf16.msra.mxu0 0
        %2103 = vmatprep.subr.bf16.mxu0 0
        %2104 = vmatpush2.bf16.msra.mxu0 0
        %2105 = vmatprep.mubr.bf16.mxu0 0
        %2106 = vmatmul.mubr.bf16.gmra.mxu0 %v2018
        %v2107 = vpop.f32.mrf.mxu0
        %v2108 = vadd.f32 0.0, %v2107
        %v2109 = vpop.f32.mrf.mxu0
        %v2110 = vadd.f32 0.0, %v2109
        %v2111 = vpop.f32.mrf.mxu0
        %v2112 = vpop.f32.mrf.mxu0
        %2113 = vdwg.mxu0
        %v2114 = vadd.f32 %v1999, %v2067
        %v2115 = vadd.f32 %v2000, %v2069
        %v2116 = vadd.f32 %v2001, %v2108
        %v2117 = vadd.f32 %v2002, %v2110
        %s2118 = scalar_lea.vmem %s1, 68
        %v2119 = vld [vmem:[%s2118] sm:$0xf]
        %2120 = vrot.lane.b32.xlu0 %v181, 77
        %v2121 = vpop.permute.xlu0 %2120
        %2122 = vrot.lane.b32.xlu0 %v182, 77
        %v2123 = vpop.permute.xlu0 %2122
        %2124 = vrot.lane.b32.xlu0 %v183, 77
        %v2125 = vpop.permute.xlu0 %2124
        %2126 = vrot.lane.b32.xlu0 %v184, 77
        %v2127 = vpop.permute.xlu0 %2126
        %vm2128 = vcmask 629760
        %v2129 = vsel %vm2128, %v2121, %v2123
        %v2130 = vsel %vm2128, %v2123, %v2125
        %v2131 = vsel %vm2128, %v2125, %v2127
        %v2133 = vsel %vm197, %v2119, 0
        %v2136 = vsel %vm201, %v2129, 0
        %v2139 = vsel %vm201, %v2130, 0
        %v2142 = vsel %vm201, %v2131, 0
        %v2145 = vsel %vm201, %v2127, 0
        %2147 = vmatprep.subr.bf16.mxu0 0
        %2148 = vmatpush1.bf16.msra.mxu0 0
        %2149 = vmatprep.subr.bf16.mxu0 0
        %2150 = vmatpush1.bf16.msra.mxu0 0
        %2151 = vmatprep.subr.bf16.mxu0 0
        %2152 = vmatpush1.bf16.msra.mxu0 0
        %2153 = vmatprep.subr.bf16.mxu0 0
        %2154 = vmatpush1.bf16.msra.mxu0 0
        %2155 = vmatprep.subr.bf16.mxu0 0
        %2156 = vmatpush1.bf16.msra.mxu0 0
        %2157 = vmatprep.subr.bf16.mxu0 0
        %2158 = vmatpush1.bf16.msra.mxu0 0
        %2159 = vmatprep.subr.bf16.mxu0 0
        %2160 = vmatpush1.bf16.msra.mxu0 0
        %2161 = vmatprep.subr.bf16.mxu0 %v2139
        %2162 = vmatpush1.bf16.msra.mxu0 %v2136
        %2163 = vmatprep.subr.bf16.mxu0 0
        %2164 = vmatpush2.bf16.msra.mxu0 0
        %2165 = vmatprep.subr.bf16.mxu0 0
        %2166 = vmatpush2.bf16.msra.mxu0 0
        %2167 = vmatprep.subr.bf16.mxu0 0
        %2168 = vmatpush2.bf16.msra.mxu0 0
        %2169 = vmatprep.subr.bf16.mxu0 0
        %2170 = vmatpush2.bf16.msra.mxu0 0
        %2171 = vmatprep.subr.bf16.mxu0 0
        %2172 = vmatpush2.bf16.msra.mxu0 0
        %2173 = vmatprep.subr.bf16.mxu0 0
        %2174 = vmatpush2.bf16.msra.mxu0 0
        %2175 = vmatprep.subr.bf16.mxu0 0
        %2176 = vmatpush2.bf16.msra.mxu0 0
        %2177 = vmatprep.subr.bf16.mxu0 0
        %2178 = vmatpush2.bf16.msra.mxu0 0
        %2179 = vmatprep.mubr.bf16.mxu0 0
        %2180 = vmatmul.mubr.bf16.gmra.mxu0 %v2133
        %v2181 = vpop.f32.mrf.mxu0
        %v2182 = vadd.f32 0.0, %v2181
        %v2183 = vpop.f32.mrf.mxu0
        %v2184 = vadd.f32 0.0, %v2183
        %v2185 = vpop.f32.mrf.mxu0
        %v2186 = vpop.f32.mrf.mxu0
        %2187 = vdwg.mxu0
        %2188 = vmatprep.subr.bf16.mxu0 0
        %2189 = vmatpush1.bf16.msra.mxu0 0
        %2190 = vmatprep.subr.bf16.mxu0 0
        %2191 = vmatpush1.bf16.msra.mxu0 0
        %2192 = vmatprep.subr.bf16.mxu0 0
        %2193 = vmatpush1.bf16.msra.mxu0 0
        %2194 = vmatprep.subr.bf16.mxu0 0
        %2195 = vmatpush1.bf16.msra.mxu0 0
        %2196 = vmatprep.subr.bf16.mxu0 0
        %2197 = vmatpush1.bf16.msra.mxu0 0
        %2198 = vmatprep.subr.bf16.mxu0 0
        %2199 = vmatpush1.bf16.msra.mxu0 0
        %2200 = vmatprep.subr.bf16.mxu0 0
        %2201 = vmatpush1.bf16.msra.mxu0 0
        %2202 = vmatprep.subr.bf16.mxu0 %v2145
        %2203 = vmatpush1.bf16.msra.mxu0 %v2142
        %2204 = vmatprep.subr.bf16.mxu0 0
        %2205 = vmatpush2.bf16.msra.mxu0 0
        %2206 = vmatprep.subr.bf16.mxu0 0
        %2207 = vmatpush2.bf16.msra.mxu0 0
        %2208 = vmatprep.subr.bf16.mxu0 0
        %2209 = vmatpush2.bf16.msra.mxu0 0
        %2210 = vmatprep.subr.bf16.mxu0 0
        %2211 = vmatpush2.bf16.msra.mxu0 0
        %2212 = vmatprep.subr.bf16.mxu0 0
        %2213 = vmatpush2.bf16.msra.mxu0 0
        %2214 = vmatprep.subr.bf16.mxu0 0
        %2215 = vmatpush2.bf16.msra.mxu0 0
        %2216 = vmatprep.subr.bf16.mxu0 0
        %2217 = vmatpush2.bf16.msra.mxu0 0
        %2218 = vmatprep.subr.bf16.mxu0 0
        %2219 = vmatpush2.bf16.msra.mxu0 0
        %2220 = vmatprep.mubr.bf16.mxu0 0
        %2221 = vmatmul.mubr.bf16.gmra.mxu0 %v2133
        %v2222 = vpop.f32.mrf.mxu0
        %v2223 = vadd.f32 0.0, %v2222
        %v2224 = vpop.f32.mrf.mxu0
        %v2225 = vadd.f32 0.0, %v2224
        %v2226 = vpop.f32.mrf.mxu0
        %v2227 = vpop.f32.mrf.mxu0
        %2228 = vdwg.mxu0
        %v2229 = vadd.f32 %v2114, %v2182
        %v2230 = vadd.f32 %v2115, %v2184
        %v2231 = vadd.f32 %v2116, %v2223
        %v2232 = vadd.f32 %v2117, %v2225
        %s2233 = scalar_lea.vmem %s1, 72
        %v2234 = vld [vmem:[%s2233] sm:$0xf]
        %2235 = vrot.lane.b32.xlu0 %v181, 76
        %v2236 = vpop.permute.xlu0 %2235
        %2237 = vrot.lane.b32.xlu0 %v182, 76
        %v2238 = vpop.permute.xlu0 %2237
        %2239 = vrot.lane.b32.xlu0 %v183, 76
        %v2240 = vpop.permute.xlu0 %2239
        %2241 = vrot.lane.b32.xlu0 %v184, 76
        %v2242 = vpop.permute.xlu0 %2241
        %vm2243 = vcmask 621568
        %v2244 = vsel %vm2243, %v2236, %v2238
        %v2245 = vsel %vm2243, %v2238, %v2240
        %v2246 = vsel %vm2243, %v2240, %v2242
        %v2248 = vsel %vm197, %v2234, 0
        %v2251 = vsel %vm201, %v2244, 0
        %v2254 = vsel %vm201, %v2245, 0
        %v2257 = vsel %vm201, %v2246, 0
        %v2260 = vsel %vm201, %v2242, 0
        %2262 = vmatprep.subr.bf16.mxu0 0
        %2263 = vmatpush1.bf16.msra.mxu0 0
        %2264 = vmatprep.subr.bf16.mxu0 0
        %2265 = vmatpush1.bf16.msra.mxu0 0
        %2266 = vmatprep.subr.bf16.mxu0 0
        %2267 = vmatpush1.bf16.msra.mxu0 0
        %2268 = vmatprep.subr.bf16.mxu0 0
        %2269 = vmatpush1.bf16.msra.mxu0 0
        %2270 = vmatprep.subr.bf16.mxu0 0
        %2271 = vmatpush1.bf16.msra.mxu0 0
        %2272 = vmatprep.subr.bf16.mxu0 0
        %2273 = vmatpush1.bf16.msra.mxu0 0
        %2274 = vmatprep.subr.bf16.mxu0 0
        %2275 = vmatpush1.bf16.msra.mxu0 0
        %2276 = vmatprep.subr.bf16.mxu0 %v2254
        %2277 = vmatpush1.bf16.msra.mxu0 %v2251
        %2278 = vmatprep.subr.bf16.mxu0 0
        %2279 = vmatpush2.bf16.msra.mxu0 0
        %2280 = vmatprep.subr.bf16.mxu0 0
        %2281 = vmatpush2.bf16.msra.mxu0 0
        %2282 = vmatprep.subr.bf16.mxu0 0
        %2283 = vmatpush2.bf16.msra.mxu0 0
        %2284 = vmatprep.subr.bf16.mxu0 0
        %2285 = vmatpush2.bf16.msra.mxu0 0
        %2286 = vmatprep.subr.bf16.mxu0 0
        %2287 = vmatpush2.bf16.msra.mxu0 0
        %2288 = vmatprep.subr.bf16.mxu0 0
        %2289 = vmatpush2.bf16.msra.mxu0 0
        %2290 = vmatprep.subr.bf16.mxu0 0
        %2291 = vmatpush2.bf16.msra.mxu0 0
        %2292 = vmatprep.subr.bf16.mxu0 0
        %2293 = vmatpush2.bf16.msra.mxu0 0
        %2294 = vmatprep.mubr.bf16.mxu0 0
        %2295 = vmatmul.mubr.bf16.gmra.mxu0 %v2248
        %v2296 = vpop.f32.mrf.mxu0
        %v2297 = vadd.f32 0.0, %v2296
        %v2298 = vpop.f32.mrf.mxu0
        %v2299 = vadd.f32 0.0, %v2298
        %v2300 = vpop.f32.mrf.mxu0
        %v2301 = vpop.f32.mrf.mxu0
        %2302 = vdwg.mxu0
        %2303 = vmatprep.subr.bf16.mxu0 0
        %2304 = vmatpush1.bf16.msra.mxu0 0
        %2305 = vmatprep.subr.bf16.mxu0 0
        %2306 = vmatpush1.bf16.msra.mxu0 0
        %2307 = vmatprep.subr.bf16.mxu0 0
        %2308 = vmatpush1.bf16.msra.mxu0 0
        %2309 = vmatprep.subr.bf16.mxu0 0
        %2310 = vmatpush1.bf16.msra.mxu0 0
        %2311 = vmatprep.subr.bf16.mxu0 0
        %2312 = vmatpush1.bf16.msra.mxu0 0
        %2313 = vmatprep.subr.bf16.mxu0 0
        %2314 = vmatpush1.bf16.msra.mxu0 0
        %2315 = vmatprep.subr.bf16.mxu0 0
        %2316 = vmatpush1.bf16.msra.mxu0 0
        %2317 = vmatprep.subr.bf16.mxu0 %v2260
        %2318 = vmatpush1.bf16.msra.mxu0 %v2257
        %2319 = vmatprep.subr.bf16.mxu0 0
        %2320 = vmatpush2.bf16.msra.mxu0 0
        %2321 = vmatprep.subr.bf16.mxu0 0
        %2322 = vmatpush2.bf16.msra.mxu0 0
        %2323 = vmatprep.subr.bf16.mxu0 0
        %2324 = vmatpush2.bf16.msra.mxu0 0
        %2325 = vmatprep.subr.bf16.mxu0 0
        %2326 = vmatpush2.bf16.msra.mxu0 0
        %2327 = vmatprep.subr.bf16.mxu0 0
        %2328 = vmatpush2.bf16.msra.mxu0 0
        %2329 = vmatprep.subr.bf16.mxu0 0
        %2330 = vmatpush2.bf16.msra.mxu0 0
        %2331 = vmatprep.subr.bf16.mxu0 0
        %2332 = vmatpush2.bf16.msra.mxu0 0
        %2333 = vmatprep.subr.bf16.mxu0 0
        %2334 = vmatpush2.bf16.msra.mxu0 0
        %2335 = vmatprep.mubr.bf16.mxu0 0
        %2336 = vmatmul.mubr.bf16.gmra.mxu0 %v2248
        %v2337 = vpop.f32.mrf.mxu0
        %v2338 = vadd.f32 0.0, %v2337
        %v2339 = vpop.f32.mrf.mxu0
        %v2340 = vadd.f32 0.0, %v2339
        %v2341 = vpop.f32.mrf.mxu0
        %v2342 = vpop.f32.mrf.mxu0
        %2343 = vdwg.mxu0
        %v2344 = vadd.f32 %v2229, %v2297
        %v2345 = vadd.f32 %v2230, %v2299
        %v2346 = vadd.f32 %v2231, %v2338
        %v2347 = vadd.f32 %v2232, %v2340
        %s2348 = scalar_lea.vmem %s1, 76
        %v2349 = vld [vmem:[%s2348] sm:$0xf]
        %2350 = vrot.lane.b32.xlu0 %v181, 75
        %v2351 = vpop.permute.xlu0 %2350
        %2352 = vrot.lane.b32.xlu0 %v182, 75
        %v2353 = vpop.permute.xlu0 %2352
        %2354 = vrot.lane.b32.xlu0 %v183, 75
        %v2355 = vpop.permute.xlu0 %2354
        %2356 = vrot.lane.b32.xlu0 %v184, 75
        %v2357 = vpop.permute.xlu0 %2356
        %vm2358 = vcmask 613376
        %v2359 = vsel %vm2358, %v2351, %v2353
        %v2360 = vsel %vm2358, %v2353, %v2355
        %v2361 = vsel %vm2358, %v2355, %v2357
        %v2363 = vsel %vm197, %v2349, 0
        %v2366 = vsel %vm201, %v2359, 0
        %v2369 = vsel %vm201, %v2360, 0
        %v2372 = vsel %vm201, %v2361, 0
        %v2375 = vsel %vm201, %v2357, 0
        %2377 = vmatprep.subr.bf16.mxu0 0
        %2378 = vmatpush1.bf16.msra.mxu0 0
        %2379 = vmatprep.subr.bf16.mxu0 0
        %2380 = vmatpush1.bf16.msra.mxu0 0
        %2381 = vmatprep.subr.bf16.mxu0 0
        %2382 = vmatpush1.bf16.msra.mxu0 0
        %2383 = vmatprep.subr.bf16.mxu0 0
        %2384 = vmatpush1.bf16.msra.mxu0 0
        %2385 = vmatprep.subr.bf16.mxu0 0
        %2386 = vmatpush1.bf16.msra.mxu0 0
        %2387 = vmatprep.subr.bf16.mxu0 0
        %2388 = vmatpush1.bf16.msra.mxu0 0
        %2389 = vmatprep.subr.bf16.mxu0 0
        %2390 = vmatpush1.bf16.msra.mxu0 0
        %2391 = vmatprep.subr.bf16.mxu0 %v2369
        %2392 = vmatpush1.bf16.msra.mxu0 %v2366
        %2393 = vmatprep.subr.bf16.mxu0 0
        %2394 = vmatpush2.bf16.msra.mxu0 0
        %2395 = vmatprep.subr.bf16.mxu0 0
        %2396 = vmatpush2.bf16.msra.mxu0 0
        %2397 = vmatprep.subr.bf16.mxu0 0
        %2398 = vmatpush2.bf16.msra.mxu0 0
        %2399 = vmatprep.subr.bf16.mxu0 0
        %2400 = vmatpush2.bf16.msra.mxu0 0
        %2401 = vmatprep.subr.bf16.mxu0 0
        %2402 = vmatpush2.bf16.msra.mxu0 0
        %2403 = vmatprep.subr.bf16.mxu0 0
        %2404 = vmatpush2.bf16.msra.mxu0 0
        %2405 = vmatprep.subr.bf16.mxu0 0
        %2406 = vmatpush2.bf16.msra.mxu0 0
        %2407 = vmatprep.subr.bf16.mxu0 0
        %2408 = vmatpush2.bf16.msra.mxu0 0
        %2409 = vmatprep.mubr.bf16.mxu0 0
        %2410 = vmatmul.mubr.bf16.gmra.mxu0 %v2363
        %v2411 = vpop.f32.mrf.mxu0
        %v2412 = vadd.f32 0.0, %v2411
        %v2413 = vpop.f32.mrf.mxu0
        %v2414 = vadd.f32 0.0, %v2413
        %v2415 = vpop.f32.mrf.mxu0
        %v2416 = vpop.f32.mrf.mxu0
        %2417 = vdwg.mxu0
        %2418 = vmatprep.subr.bf16.mxu0 0
        %2419 = vmatpush1.bf16.msra.mxu0 0
        %2420 = vmatprep.subr.bf16.mxu0 0
        %2421 = vmatpush1.bf16.msra.mxu0 0
        %2422 = vmatprep.subr.bf16.mxu0 0
        %2423 = vmatpush1.bf16.msra.mxu0 0
        %2424 = vmatprep.subr.bf16.mxu0 0
        %2425 = vmatpush1.bf16.msra.mxu0 0
        %2426 = vmatprep.subr.bf16.mxu0 0
        %2427 = vmatpush1.bf16.msra.mxu0 0
        %2428 = vmatprep.subr.bf16.mxu0 0
        %2429 = vmatpush1.bf16.msra.mxu0 0
        %2430 = vmatprep.subr.bf16.mxu0 0
        %2431 = vmatpush1.bf16.msra.mxu0 0
        %2432 = vmatprep.subr.bf16.mxu0 %v2375
        %2433 = vmatpush1.bf16.msra.mxu0 %v2372
        %2434 = vmatprep.subr.bf16.mxu0 0
        %2435 = vmatpush2.bf16.msra.mxu0 0
        %2436 = vmatprep.subr.bf16.mxu0 0
        %2437 = vmatpush2.bf16.msra.mxu0 0
        %2438 = vmatprep.subr.bf16.mxu0 0
        %2439 = vmatpush2.bf16.msra.mxu0 0
        %2440 = vmatprep.subr.bf16.mxu0 0
        %2441 = vmatpush2.bf16.msra.mxu0 0
        %2442 = vmatprep.subr.bf16.mxu0 0
        %2443 = vmatpush2.bf16.msra.mxu0 0
        %2444 = vmatprep.subr.bf16.mxu0 0
        %2445 = vmatpush2.bf16.msra.mxu0 0
        %2446 = vmatprep.subr.bf16.mxu0 0
        %2447 = vmatpush2.bf16.msra.mxu0 0
        %2448 = vmatprep.subr.bf16.mxu0 0
        %2449 = vmatpush2.bf16.msra.mxu0 0
        %2450 = vmatprep.mubr.bf16.mxu0 0
        %2451 = vmatmul.mubr.bf16.gmra.mxu0 %v2363
        %v2452 = vpop.f32.mrf.mxu0
        %v2453 = vadd.f32 0.0, %v2452
        %v2454 = vpop.f32.mrf.mxu0
        %v2455 = vadd.f32 0.0, %v2454
        %v2456 = vpop.f32.mrf.mxu0
        %v2457 = vpop.f32.mrf.mxu0
        %2458 = vdwg.mxu0
        %v2459 = vadd.f32 %v2344, %v2412
        %v2460 = vadd.f32 %v2345, %v2414
        %v2461 = vadd.f32 %v2346, %v2453
        %v2462 = vadd.f32 %v2347, %v2455
        %s2463 = scalar_lea.vmem %s1, 80
        %v2464 = vld [vmem:[%s2463] sm:$0xf]
        %2465 = vrot.lane.b32.xlu0 %v181, 74
        %v2466 = vpop.permute.xlu0 %2465
        %2467 = vrot.lane.b32.xlu0 %v182, 74
        %v2468 = vpop.permute.xlu0 %2467
        %2469 = vrot.lane.b32.xlu0 %v183, 74
        %v2470 = vpop.permute.xlu0 %2469
        %2471 = vrot.lane.b32.xlu0 %v184, 74
        %v2472 = vpop.permute.xlu0 %2471
        %vm2473 = vcmask 605184
        %v2474 = vsel %vm2473, %v2466, %v2468
        %v2475 = vsel %vm2473, %v2468, %v2470
        %v2476 = vsel %vm2473, %v2470, %v2472
        %v2478 = vsel %vm197, %v2464, 0
        %v2481 = vsel %vm201, %v2474, 0
        %v2484 = vsel %vm201, %v2475, 0
        %v2487 = vsel %vm201, %v2476, 0
        %v2490 = vsel %vm201, %v2472, 0
        %2492 = vmatprep.subr.bf16.mxu0 0
        %2493 = vmatpush1.bf16.msra.mxu0 0
        %2494 = vmatprep.subr.bf16.mxu0 0
        %2495 = vmatpush1.bf16.msra.mxu0 0
        %2496 = vmatprep.subr.bf16.mxu0 0
        %2497 = vmatpush1.bf16.msra.mxu0 0
        %2498 = vmatprep.subr.bf16.mxu0 0
        %2499 = vmatpush1.bf16.msra.mxu0 0
        %2500 = vmatprep.subr.bf16.mxu0 0
        %2501 = vmatpush1.bf16.msra.mxu0 0
        %2502 = vmatprep.subr.bf16.mxu0 0
        %2503 = vmatpush1.bf16.msra.mxu0 0
        %2504 = vmatprep.subr.bf16.mxu0 0
        %2505 = vmatpush1.bf16.msra.mxu0 0
        %2506 = vmatprep.subr.bf16.mxu0 %v2484
        %2507 = vmatpush1.bf16.msra.mxu0 %v2481
        %2508 = vmatprep.subr.bf16.mxu0 0
        %2509 = vmatpush2.bf16.msra.mxu0 0
        %2510 = vmatprep.subr.bf16.mxu0 0
        %2511 = vmatpush2.bf16.msra.mxu0 0
        %2512 = vmatprep.subr.bf16.mxu0 0
        %2513 = vmatpush2.bf16.msra.mxu0 0
        %2514 = vmatprep.subr.bf16.mxu0 0
        %2515 = vmatpush2.bf16.msra.mxu0 0
        %2516 = vmatprep.subr.bf16.mxu0 0
        %2517 = vmatpush2.bf16.msra.mxu0 0
        %2518 = vmatprep.subr.bf16.mxu0 0
        %2519 = vmatpush2.bf16.msra.mxu0 0
        %2520 = vmatprep.subr.bf16.mxu0 0
        %2521 = vmatpush2.bf16.msra.mxu0 0
        %2522 = vmatprep.subr.bf16.mxu0 0
        %2523 = vmatpush2.bf16.msra.mxu0 0
        %2524 = vmatprep.mubr.bf16.mxu0 0
        %2525 = vmatmul.mubr.bf16.gmra.mxu0 %v2478
        %v2526 = vpop.f32.mrf.mxu0
        %v2527 = vadd.f32 0.0, %v2526
        %v2528 = vpop.f32.mrf.mxu0
        %v2529 = vadd.f32 0.0, %v2528
        %v2530 = vpop.f32.mrf.mxu0
        %v2531 = vpop.f32.mrf.mxu0
        %2532 = vdwg.mxu0
        %2533 = vmatprep.subr.bf16.mxu0 0
        %2534 = vmatpush1.bf16.msra.mxu0 0
        %2535 = vmatprep.subr.bf16.mxu0 0
        %2536 = vmatpush1.bf16.msra.mxu0 0
        %2537 = vmatprep.subr.bf16.mxu0 0
        %2538 = vmatpush1.bf16.msra.mxu0 0
        %2539 = vmatprep.subr.bf16.mxu0 0
        %2540 = vmatpush1.bf16.msra.mxu0 0
        %2541 = vmatprep.subr.bf16.mxu0 0
        %2542 = vmatpush1.bf16.msra.mxu0 0
        %2543 = vmatprep.subr.bf16.mxu0 0
        %2544 = vmatpush1.bf16.msra.mxu0 0
        %2545 = vmatprep.subr.bf16.mxu0 0
        %2546 = vmatpush1.bf16.msra.mxu0 0
        %2547 = vmatprep.subr.bf16.mxu0 %v2490
        %2548 = vmatpush1.bf16.msra.mxu0 %v2487
        %2549 = vmatprep.subr.bf16.mxu0 0
        %2550 = vmatpush2.bf16.msra.mxu0 0
        %2551 = vmatprep.subr.bf16.mxu0 0
        %2552 = vmatpush2.bf16.msra.mxu0 0
        %2553 = vmatprep.subr.bf16.mxu0 0
        %2554 = vmatpush2.bf16.msra.mxu0 0
        %2555 = vmatprep.subr.bf16.mxu0 0
        %2556 = vmatpush2.bf16.msra.mxu0 0
        %2557 = vmatprep.subr.bf16.mxu0 0
        %2558 = vmatpush2.bf16.msra.mxu0 0
        %2559 = vmatprep.subr.bf16.mxu0 0
        %2560 = vmatpush2.bf16.msra.mxu0 0
        %2561 = vmatprep.subr.bf16.mxu0 0
        %2562 = vmatpush2.bf16.msra.mxu0 0
        %2563 = vmatprep.subr.bf16.mxu0 0
        %2564 = vmatpush2.bf16.msra.mxu0 0
        %2565 = vmatprep.mubr.bf16.mxu0 0
        %2566 = vmatmul.mubr.bf16.gmra.mxu0 %v2478
        %v2567 = vpop.f32.mrf.mxu0
        %v2568 = vadd.f32 0.0, %v2567
        %v2569 = vpop.f32.mrf.mxu0
        %v2570 = vadd.f32 0.0, %v2569
        %v2571 = vpop.f32.mrf.mxu0
        %v2572 = vpop.f32.mrf.mxu0
        %2573 = vdwg.mxu0
        %v2574 = vadd.f32 %v2459, %v2527
        %v2575 = vadd.f32 %v2460, %v2529
        %v2576 = vadd.f32 %v2461, %v2568
        %v2577 = vadd.f32 %v2462, %v2570
        %s2578 = scalar_lea.vmem %s1, 84
        %v2579 = vld [vmem:[%s2578] sm:$0xf]
        %2580 = vrot.lane.b32.xlu0 %v181, 56
        %v2581 = vpop.permute.xlu0 %2580
        %2582 = vrot.lane.b32.xlu0 %v182, 56
        %v2583 = vpop.permute.xlu0 %2582
        %2584 = vrot.lane.b32.xlu0 %v183, 56
        %v2585 = vpop.permute.xlu0 %2584
        %2586 = vrot.lane.b32.xlu0 %v184, 56
        %v2587 = vpop.permute.xlu0 %2586
        %vm2588 = vcmask 457728
        %v2589 = vsel %vm2588, %v2581, %v2583
        %v2590 = vsel %vm2588, %v2583, %v2585
        %v2591 = vsel %vm2588, %v2585, %v2587
        %v2593 = vsel %vm197, %v2579, 0
        %v2596 = vsel %vm201, %v2589, 0
        %v2599 = vsel %vm201, %v2590, 0
        %v2602 = vsel %vm201, %v2591, 0
        %v2605 = vsel %vm201, %v2587, 0
        %2607 = vmatprep.subr.bf16.mxu0 0
        %2608 = vmatpush1.bf16.msra.mxu0 0
        %2609 = vmatprep.subr.bf16.mxu0 0
        %2610 = vmatpush1.bf16.msra.mxu0 0
        %2611 = vmatprep.subr.bf16.mxu0 0
        %2612 = vmatpush1.bf16.msra.mxu0 0
        %2613 = vmatprep.subr.bf16.mxu0 0
        %2614 = vmatpush1.bf16.msra.mxu0 0
        %2615 = vmatprep.subr.bf16.mxu0 0
        %2616 = vmatpush1.bf16.msra.mxu0 0
        %2617 = vmatprep.subr.bf16.mxu0 0
        %2618 = vmatpush1.bf16.msra.mxu0 0
        %2619 = vmatprep.subr.bf16.mxu0 0
        %2620 = vmatpush1.bf16.msra.mxu0 0
        %2621 = vmatprep.subr.bf16.mxu0 %v2599
        %2622 = vmatpush1.bf16.msra.mxu0 %v2596
        %2623 = vmatprep.subr.bf16.mxu0 0
        %2624 = vmatpush2.bf16.msra.mxu0 0
        %2625 = vmatprep.subr.bf16.mxu0 0
        %2626 = vmatpush2.bf16.msra.mxu0 0
        %2627 = vmatprep.subr.bf16.mxu0 0
        %2628 = vmatpush2.bf16.msra.mxu0 0
        %2629 = vmatprep.subr.bf16.mxu0 0
        %2630 = vmatpush2.bf16.msra.mxu0 0
        %2631 = vmatprep.subr.bf16.mxu0 0
        %2632 = vmatpush2.bf16.msra.mxu0 0
        %2633 = vmatprep.subr.bf16.mxu0 0
        %2634 = vmatpush2.bf16.msra.mxu0 0
        %2635 = vmatprep.subr.bf16.mxu0 0
        %2636 = vmatpush2.bf16.msra.mxu0 0
        %2637 = vmatprep.subr.bf16.mxu0 0
        %2638 = vmatpush2.bf16.msra.mxu0 0
        %2639 = vmatprep.mubr.bf16.mxu0 0
        %2640 = vmatmul.mubr.bf16.gmra.mxu0 %v2593
        %v2641 = vpop.f32.mrf.mxu0
        %v2642 = vadd.f32 0.0, %v2641
        %v2643 = vpop.f32.mrf.mxu0
        %v2644 = vadd.f32 0.0, %v2643
        %v2645 = vpop.f32.mrf.mxu0
        %v2646 = vpop.f32.mrf.mxu0
        %2647 = vdwg.mxu0
        %2648 = vmatprep.subr.bf16.mxu0 0
        %2649 = vmatpush1.bf16.msra.mxu0 0
        %2650 = vmatprep.subr.bf16.mxu0 0
        %2651 = vmatpush1.bf16.msra.mxu0 0
        %2652 = vmatprep.subr.bf16.mxu0 0
        %2653 = vmatpush1.bf16.msra.mxu0 0
        %2654 = vmatprep.subr.bf16.mxu0 0
        %2655 = vmatpush1.bf16.msra.mxu0 0
        %2656 = vmatprep.subr.bf16.mxu0 0
        %2657 = vmatpush1.bf16.msra.mxu0 0
        %2658 = vmatprep.subr.bf16.mxu0 0
        %2659 = vmatpush1.bf16.msra.mxu0 0
        %2660 = vmatprep.subr.bf16.mxu0 0
        %2661 = vmatpush1.bf16.msra.mxu0 0
        %2662 = vmatprep.subr.bf16.mxu0 %v2605
        %2663 = vmatpush1.bf16.msra.mxu0 %v2602
        %2664 = vmatprep.subr.bf16.mxu0 0
        %2665 = vmatpush2.bf16.msra.mxu0 0
        %2666 = vmatprep.subr.bf16.mxu0 0
        %2667 = vmatpush2.bf16.msra.mxu0 0
        %2668 = vmatprep.subr.bf16.mxu0 0
        %2669 = vmatpush2.bf16.msra.mxu0 0
        %2670 = vmatprep.subr.bf16.mxu0 0
        %2671 = vmatpush2.bf16.msra.mxu0 0
        %2672 = vmatprep.subr.bf16.mxu0 0
        %2673 = vmatpush2.bf16.msra.mxu0 0
        %2674 = vmatprep.subr.bf16.mxu0 0
        %2675 = vmatpush2.bf16.msra.mxu0 0
        %2676 = vmatprep.subr.bf16.mxu0 0
        %2677 = vmatpush2.bf16.msra.mxu0 0
        %2678 = vmatprep.subr.bf16.mxu0 0
        %2679 = vmatpush2.bf16.msra.mxu0 0
        %2680 = vmatprep.mubr.bf16.mxu0 0
        %2681 = vmatmul.mubr.bf16.gmra.mxu0 %v2593
        %v2682 = vpop.f32.mrf.mxu0
        %v2683 = vadd.f32 0.0, %v2682
        %v2684 = vpop.f32.mrf.mxu0
        %v2685 = vadd.f32 0.0, %v2684
        %v2686 = vpop.f32.mrf.mxu0
        %v2687 = vpop.f32.mrf.mxu0
        %2688 = vdwg.mxu0
        %v2689 = vadd.f32 %v2574, %v2642
        %v2690 = vadd.f32 %v2575, %v2644
        %v2691 = vadd.f32 %v2576, %v2683
        %v2692 = vadd.f32 %v2577, %v2685
        %s2693 = scalar_lea.vmem %s1, 88
        %v2694 = vld [vmem:[%s2693] sm:$0xf]
        %2695 = vrot.lane.b32.xlu0 %v181, 55
        %v2696 = vpop.permute.xlu0 %2695
        %2697 = vrot.lane.b32.xlu0 %v182, 55
        %v2698 = vpop.permute.xlu0 %2697
        %2699 = vrot.lane.b32.xlu0 %v183, 55
        %v2700 = vpop.permute.xlu0 %2699
        %2701 = vrot.lane.b32.xlu0 %v184, 55
        %v2702 = vpop.permute.xlu0 %2701
        %vm2703 = vcmask 449536
        %v2704 = vsel %vm2703, %v2696, %v2698
        %v2705 = vsel %vm2703, %v2698, %v2700
        %v2706 = vsel %vm2703, %v2700, %v2702
        %v2708 = vsel %vm197, %v2694, 0
        %v2711 = vsel %vm201, %v2704, 0
        %v2714 = vsel %vm201, %v2705, 0
        %v2717 = vsel %vm201, %v2706, 0
        %v2720 = vsel %vm201, %v2702, 0
        %2722 = vmatprep.subr.bf16.mxu0 0
        %2723 = vmatpush1.bf16.msra.mxu0 0
        %2724 = vmatprep.subr.bf16.mxu0 0
        %2725 = vmatpush1.bf16.msra.mxu0 0
        %2726 = vmatprep.subr.bf16.mxu0 0
        %2727 = vmatpush1.bf16.msra.mxu0 0
        %2728 = vmatprep.subr.bf16.mxu0 0
        %2729 = vmatpush1.bf16.msra.mxu0 0
        %2730 = vmatprep.subr.bf16.mxu0 0
        %2731 = vmatpush1.bf16.msra.mxu0 0
        %2732 = vmatprep.subr.bf16.mxu0 0
        %2733 = vmatpush1.bf16.msra.mxu0 0
        %2734 = vmatprep.subr.bf16.mxu0 0
        %2735 = vmatpush1.bf16.msra.mxu0 0
        %2736 = vmatprep.subr.bf16.mxu0 %v2714
        %2737 = vmatpush1.bf16.msra.mxu0 %v2711
        %2738 = vmatprep.subr.bf16.mxu0 0
        %2739 = vmatpush2.bf16.msra.mxu0 0
        %2740 = vmatprep.subr.bf16.mxu0 0
        %2741 = vmatpush2.bf16.msra.mxu0 0
        %2742 = vmatprep.subr.bf16.mxu0 0
        %2743 = vmatpush2.bf16.msra.mxu0 0
        %2744 = vmatprep.subr.bf16.mxu0 0
        %2745 = vmatpush2.bf16.msra.mxu0 0
        %2746 = vmatprep.subr.bf16.mxu0 0
        %2747 = vmatpush2.bf16.msra.mxu0 0
        %2748 = vmatprep.subr.bf16.mxu0 0
        %2749 = vmatpush2.bf16.msra.mxu0 0
        %2750 = vmatprep.subr.bf16.mxu0 0
        %2751 = vmatpush2.bf16.msra.mxu0 0
        %2752 = vmatprep.subr.bf16.mxu0 0
        %2753 = vmatpush2.bf16.msra.mxu0 0
        %2754 = vmatprep.mubr.bf16.mxu0 0
        %2755 = vmatmul.mubr.bf16.gmra.mxu0 %v2708
        %v2756 = vpop.f32.mrf.mxu0
        %v2757 = vadd.f32 0.0, %v2756
        %v2758 = vpop.f32.mrf.mxu0
        %v2759 = vadd.f32 0.0, %v2758
        %v2760 = vpop.f32.mrf.mxu0
        %v2761 = vpop.f32.mrf.mxu0
        %2762 = vdwg.mxu0
        %2763 = vmatprep.subr.bf16.mxu0 0
        %2764 = vmatpush1.bf16.msra.mxu0 0
        %2765 = vmatprep.subr.bf16.mxu0 0
        %2766 = vmatpush1.bf16.msra.mxu0 0
        %2767 = vmatprep.subr.bf16.mxu0 0
        %2768 = vmatpush1.bf16.msra.mxu0 0
        %2769 = vmatprep.subr.bf16.mxu0 0
        %2770 = vmatpush1.bf16.msra.mxu0 0
        %2771 = vmatprep.subr.bf16.mxu0 0
        %2772 = vmatpush1.bf16.msra.mxu0 0
        %2773 = vmatprep.subr.bf16.mxu0 0
        %2774 = vmatpush1.bf16.msra.mxu0 0
        %2775 = vmatprep.subr.bf16.mxu0 0
        %2776 = vmatpush1.bf16.msra.mxu0 0
        %2777 = vmatprep.subr.bf16.mxu0 %v2720
        %2778 = vmatpush1.bf16.msra.mxu0 %v2717
        %2779 = vmatprep.subr.bf16.mxu0 0
        %2780 = vmatpush2.bf16.msra.mxu0 0
        %2781 = vmatprep.subr.bf16.mxu0 0
        %2782 = vmatpush2.bf16.msra.mxu0 0
        %2783 = vmatprep.subr.bf16.mxu0 0
        %2784 = vmatpush2.bf16.msra.mxu0 0
        %2785 = vmatprep.subr.bf16.mxu0 0
        %2786 = vmatpush2.bf16.msra.mxu0 0
        %2787 = vmatprep.subr.bf16.mxu0 0
        %2788 = vmatpush2.bf16.msra.mxu0 0
        %2789 = vmatprep.subr.bf16.mxu0 0
        %2790 = vmatpush2.bf16.msra.mxu0 0
        %2791 = vmatprep.subr.bf16.mxu0 0
        %2792 = vmatpush2.bf16.msra.mxu0 0
        %2793 = vmatprep.subr.bf16.mxu0 0
        %2794 = vmatpush2.bf16.msra.mxu0 0
        %2795 = vmatprep.mubr.bf16.mxu0 0
        %2796 = vmatmul.mubr.bf16.gmra.mxu0 %v2708
        %v2797 = vpop.f32.mrf.mxu0
        %v2798 = vadd.f32 0.0, %v2797
        %v2799 = vpop.f32.mrf.mxu0
        %v2800 = vadd.f32 0.0, %v2799
        %v2801 = vpop.f32.mrf.mxu0
        %v2802 = vpop.f32.mrf.mxu0
        %2803 = vdwg.mxu0
        %v2804 = vadd.f32 %v2689, %v2757
        %v2805 = vadd.f32 %v2690, %v2759
        %v2806 = vadd.f32 %v2691, %v2798
        %v2807 = vadd.f32 %v2692, %v2800
        %s2808 = scalar_lea.vmem %s1, 92
        %v2809 = vld [vmem:[%s2808] sm:$0xf]
        %2810 = vrot.lane.b32.xlu0 %v181, 54
        %v2811 = vpop.permute.xlu0 %2810
        %2812 = vrot.lane.b32.xlu0 %v182, 54
        %v2813 = vpop.permute.xlu0 %2812
        %2814 = vrot.lane.b32.xlu0 %v183, 54
        %v2815 = vpop.permute.xlu0 %2814
        %2816 = vrot.lane.b32.xlu0 %v184, 54
        %v2817 = vpop.permute.xlu0 %2816
        %vm2818 = vcmask 441344
        %v2819 = vsel %vm2818, %v2811, %v2813
        %v2820 = vsel %vm2818, %v2813, %v2815
        %v2821 = vsel %vm2818, %v2815, %v2817
        %v2823 = vsel %vm197, %v2809, 0
        %v2826 = vsel %vm201, %v2819, 0
        %v2829 = vsel %vm201, %v2820, 0
        %v2832 = vsel %vm201, %v2821, 0
        %v2835 = vsel %vm201, %v2817, 0
        %2837 = vmatprep.subr.bf16.mxu0 0
        %2838 = vmatpush1.bf16.msra.mxu0 0
        %2839 = vmatprep.subr.bf16.mxu0 0
        %2840 = vmatpush1.bf16.msra.mxu0 0
        %2841 = vmatprep.subr.bf16.mxu0 0
        %2842 = vmatpush1.bf16.msra.mxu0 0
        %2843 = vmatprep.subr.bf16.mxu0 0
        %2844 = vmatpush1.bf16.msra.mxu0 0
        %2845 = vmatprep.subr.bf16.mxu0 0
        %2846 = vmatpush1.bf16.msra.mxu0 0
        %2847 = vmatprep.subr.bf16.mxu0 0
        %2848 = vmatpush1.bf16.msra.mxu0 0
        %2849 = vmatprep.subr.bf16.mxu0 0
        %2850 = vmatpush1.bf16.msra.mxu0 0
        %2851 = vmatprep.subr.bf16.mxu0 %v2829
        %2852 = vmatpush1.bf16.msra.mxu0 %v2826
        %2853 = vmatprep.subr.bf16.mxu0 0
        %2854 = vmatpush2.bf16.msra.mxu0 0
        %2855 = vmatprep.subr.bf16.mxu0 0
        %2856 = vmatpush2.bf16.msra.mxu0 0
        %2857 = vmatprep.subr.bf16.mxu0 0
        %2858 = vmatpush2.bf16.msra.mxu0 0
        %2859 = vmatprep.subr.bf16.mxu0 0
        %2860 = vmatpush2.bf16.msra.mxu0 0
        %2861 = vmatprep.subr.bf16.mxu0 0
        %2862 = vmatpush2.bf16.msra.mxu0 0
        %2863 = vmatprep.subr.bf16.mxu0 0
        %2864 = vmatpush2.bf16.msra.mxu0 0
        %2865 = vmatprep.subr.bf16.mxu0 0
        %2866 = vmatpush2.bf16.msra.mxu0 0
        %2867 = vmatprep.subr.bf16.mxu0 0
        %2868 = vmatpush2.bf16.msra.mxu0 0
        %2869 = vmatprep.mubr.bf16.mxu0 0
        %2870 = vmatmul.mubr.bf16.gmra.mxu0 %v2823
        %v2871 = vpop.f32.mrf.mxu0
        %v2872 = vadd.f32 0.0, %v2871
        %v2873 = vpop.f32.mrf.mxu0
        %v2874 = vadd.f32 0.0, %v2873
        %v2875 = vpop.f32.mrf.mxu0
        %v2876 = vpop.f32.mrf.mxu0
        %2877 = vdwg.mxu0
        %2878 = vmatprep.subr.bf16.mxu0 0
        %2879 = vmatpush1.bf16.msra.mxu0 0
        %2880 = vmatprep.subr.bf16.mxu0 0
        %2881 = vmatpush1.bf16.msra.mxu0 0
        %2882 = vmatprep.subr.bf16.mxu0 0
        %2883 = vmatpush1.bf16.msra.mxu0 0
        %2884 = vmatprep.subr.bf16.mxu0 0
        %2885 = vmatpush1.bf16.msra.mxu0 0
        %2886 = vmatprep.subr.bf16.mxu0 0
        %2887 = vmatpush1.bf16.msra.mxu0 0
        %2888 = vmatprep.subr.bf16.mxu0 0
        %2889 = vmatpush1.bf16.msra.mxu0 0
        %2890 = vmatprep.subr.bf16.mxu0 0
        %2891 = vmatpush1.bf16.msra.mxu0 0
        %2892 = vmatprep.subr.bf16.mxu0 %v2835
        %2893 = vmatpush1.bf16.msra.mxu0 %v2832
        %2894 = vmatprep.subr.bf16.mxu0 0
        %2895 = vmatpush2.bf16.msra.mxu0 0
        %2896 = vmatprep.subr.bf16.mxu0 0
        %2897 = vmatpush2.bf16.msra.mxu0 0
        %2898 = vmatprep.subr.bf16.mxu0 0
        %2899 = vmatpush2.bf16.msra.mxu0 0
        %2900 = vmatprep.subr.bf16.mxu0 0
        %2901 = vmatpush2.bf16.msra.mxu0 0
        %2902 = vmatprep.subr.bf16.mxu0 0
        %2903 = vmatpush2.bf16.msra.mxu0 0
        %2904 = vmatprep.subr.bf16.mxu0 0
        %2905 = vmatpush2.bf16.msra.mxu0 0
        %2906 = vmatprep.subr.bf16.mxu0 0
        %2907 = vmatpush2.bf16.msra.mxu0 0
        %2908 = vmatprep.subr.bf16.mxu0 0
        %2909 = vmatpush2.bf16.msra.mxu0 0
        %2910 = vmatprep.mubr.bf16.mxu0 0
        %2911 = vmatmul.mubr.bf16.gmra.mxu0 %v2823
        %v2912 = vpop.f32.mrf.mxu0
        %v2913 = vadd.f32 0.0, %v2912
        %v2914 = vpop.f32.mrf.mxu0
        %v2915 = vadd.f32 0.0, %v2914
        %v2916 = vpop.f32.mrf.mxu0
        %v2917 = vpop.f32.mrf.mxu0
        %2918 = vdwg.mxu0
        %v2919 = vadd.f32 %v2804, %v2872
        %v2920 = vadd.f32 %v2805, %v2874
        %v2921 = vadd.f32 %v2806, %v2913
        %v2922 = vadd.f32 %v2807, %v2915
        %s2923 = scalar_lea.vmem %s1, 96
        %v2924 = vld [vmem:[%s2923] sm:$0xf]
        %2925 = vrot.lane.b32.xlu0 %v181, 53
        %v2926 = vpop.permute.xlu0 %2925
        %2927 = vrot.lane.b32.xlu0 %v182, 53
        %v2928 = vpop.permute.xlu0 %2927
        %2929 = vrot.lane.b32.xlu0 %v183, 53
        %v2930 = vpop.permute.xlu0 %2929
        %2931 = vrot.lane.b32.xlu0 %v184, 53
        %v2932 = vpop.permute.xlu0 %2931
        %vm2933 = vcmask 433152
        %v2934 = vsel %vm2933, %v2926, %v2928
        %v2935 = vsel %vm2933, %v2928, %v2930
        %v2936 = vsel %vm2933, %v2930, %v2932
        %v2938 = vsel %vm197, %v2924, 0
        %v2941 = vsel %vm201, %v2934, 0
        %v2944 = vsel %vm201, %v2935, 0
        %v2947 = vsel %vm201, %v2936, 0
        %v2950 = vsel %vm201, %v2932, 0
        %2952 = vmatprep.subr.bf16.mxu0 0
        %2953 = vmatpush1.bf16.msra.mxu0 0
        %2954 = vmatprep.subr.bf16.mxu0 0
        %2955 = vmatpush1.bf16.msra.mxu0 0
        %2956 = vmatprep.subr.bf16.mxu0 0
        %2957 = vmatpush1.bf16.msra.mxu0 0
        %2958 = vmatprep.subr.bf16.mxu0 0
        %2959 = vmatpush1.bf16.msra.mxu0 0
        %2960 = vmatprep.subr.bf16.mxu0 0
        %2961 = vmatpush1.bf16.msra.mxu0 0
        %2962 = vmatprep.subr.bf16.mxu0 0
        %2963 = vmatpush1.bf16.msra.mxu0 0
        %2964 = vmatprep.subr.bf16.mxu0 0
        %2965 = vmatpush1.bf16.msra.mxu0 0
        %2966 = vmatprep.subr.bf16.mxu0 %v2944
        %2967 = vmatpush1.bf16.msra.mxu0 %v2941
        %2968 = vmatprep.subr.bf16.mxu0 0
        %2969 = vmatpush2.bf16.msra.mxu0 0
        %2970 = vmatprep.subr.bf16.mxu0 0
        %2971 = vmatpush2.bf16.msra.mxu0 0
        %2972 = vmatprep.subr.bf16.mxu0 0
        %2973 = vmatpush2.bf16.msra.mxu0 0
        %2974 = vmatprep.subr.bf16.mxu0 0
        %2975 = vmatpush2.bf16.msra.mxu0 0
        %2976 = vmatprep.subr.bf16.mxu0 0
        %2977 = vmatpush2.bf16.msra.mxu0 0
        %2978 = vmatprep.subr.bf16.mxu0 0
        %2979 = vmatpush2.bf16.msra.mxu0 0
        %2980 = vmatprep.subr.bf16.mxu0 0
        %2981 = vmatpush2.bf16.msra.mxu0 0
        %2982 = vmatprep.subr.bf16.mxu0 0
        %2983 = vmatpush2.bf16.msra.mxu0 0
        %2984 = vmatprep.mubr.bf16.mxu0 0
        %2985 = vmatmul.mubr.bf16.gmra.mxu0 %v2938
        %v2986 = vpop.f32.mrf.mxu0
        %v2987 = vadd.f32 0.0, %v2986
        %v2988 = vpop.f32.mrf.mxu0
        %v2989 = vadd.f32 0.0, %v2988
        %v2990 = vpop.f32.mrf.mxu0
        %v2991 = vpop.f32.mrf.mxu0
        %2992 = vdwg.mxu0
        %2993 = vmatprep.subr.bf16.mxu0 0
        %2994 = vmatpush1.bf16.msra.mxu0 0
        %2995 = vmatprep.subr.bf16.mxu0 0
        %2996 = vmatpush1.bf16.msra.mxu0 0
        %2997 = vmatprep.subr.bf16.mxu0 0
        %2998 = vmatpush1.bf16.msra.mxu0 0
        %2999 = vmatprep.subr.bf16.mxu0 0
        %3000 = vmatpush1.bf16.msra.mxu0 0
        %3001 = vmatprep.subr.bf16.mxu0 0
        %3002 = vmatpush1.bf16.msra.mxu0 0
        %3003 = vmatprep.subr.bf16.mxu0 0
        %3004 = vmatpush1.bf16.msra.mxu0 0
        %3005 = vmatprep.subr.bf16.mxu0 0
        %3006 = vmatpush1.bf16.msra.mxu0 0
        %3007 = vmatprep.subr.bf16.mxu0 %v2950
        %3008 = vmatpush1.bf16.msra.mxu0 %v2947
        %3009 = vmatprep.subr.bf16.mxu0 0
        %3010 = vmatpush2.bf16.msra.mxu0 0
        %3011 = vmatprep.subr.bf16.mxu0 0
        %3012 = vmatpush2.bf16.msra.mxu0 0
        %3013 = vmatprep.subr.bf16.mxu0 0
        %3014 = vmatpush2.bf16.msra.mxu0 0
        %3015 = vmatprep.subr.bf16.mxu0 0
        %3016 = vmatpush2.bf16.msra.mxu0 0
        %3017 = vmatprep.subr.bf16.mxu0 0
        %3018 = vmatpush2.bf16.msra.mxu0 0
        %3019 = vmatprep.subr.bf16.mxu0 0
        %3020 = vmatpush2.bf16.msra.mxu0 0
        %3021 = vmatprep.subr.bf16.mxu0 0
        %3022 = vmatpush2.bf16.msra.mxu0 0
        %3023 = vmatprep.subr.bf16.mxu0 0
        %3024 = vmatpush2.bf16.msra.mxu0 0
        %3025 = vmatprep.mubr.bf16.mxu0 0
        %3026 = vmatmul.mubr.bf16.gmra.mxu0 %v2938
        %v3027 = vpop.f32.mrf.mxu0
        %v3028 = vadd.f32 0.0, %v3027
        %v3029 = vpop.f32.mrf.mxu0
        %v3030 = vadd.f32 0.0, %v3029
        %v3031 = vpop.f32.mrf.mxu0
        %v3032 = vpop.f32.mrf.mxu0
        %3033 = vdwg.mxu0
        %v3034 = vadd.f32 %v2919, %v2987
        %v3035 = vadd.f32 %v2920, %v2989
        %v3036 = vadd.f32 %v2921, %v3028
        %v3037 = vadd.f32 %v2922, %v3030
        %s3038 = scalar_lea.vmem %s1, 100
        %v3039 = vld [vmem:[%s3038] sm:$0xf]
        %3040 = vrot.lane.b32.xlu0 %v181, 52
        %v3041 = vpop.permute.xlu0 %3040
        %3042 = vrot.lane.b32.xlu0 %v182, 52
        %v3043 = vpop.permute.xlu0 %3042
        %3044 = vrot.lane.b32.xlu0 %v183, 52
        %v3045 = vpop.permute.xlu0 %3044
        %3046 = vrot.lane.b32.xlu0 %v184, 52
        %v3047 = vpop.permute.xlu0 %3046
        %vm3048 = vcmask 424960
        %v3049 = vsel %vm3048, %v3041, %v3043
        %v3050 = vsel %vm3048, %v3043, %v3045
        %v3051 = vsel %vm3048, %v3045, %v3047
        %v3053 = vsel %vm197, %v3039, 0
        %v3056 = vsel %vm201, %v3049, 0
        %v3059 = vsel %vm201, %v3050, 0
        %v3062 = vsel %vm201, %v3051, 0
        %v3065 = vsel %vm201, %v3047, 0
        %3067 = vmatprep.subr.bf16.mxu0 0
        %3068 = vmatpush1.bf16.msra.mxu0 0
        %3069 = vmatprep.subr.bf16.mxu0 0
        %3070 = vmatpush1.bf16.msra.mxu0 0
        %3071 = vmatprep.subr.bf16.mxu0 0
        %3072 = vmatpush1.bf16.msra.mxu0 0
        %3073 = vmatprep.subr.bf16.mxu0 0
        %3074 = vmatpush1.bf16.msra.mxu0 0
        %3075 = vmatprep.subr.bf16.mxu0 0
        %3076 = vmatpush1.bf16.msra.mxu0 0
        %3077 = vmatprep.subr.bf16.mxu0 0
        %3078 = vmatpush1.bf16.msra.mxu0 0
        %3079 = vmatprep.subr.bf16.mxu0 0
        %3080 = vmatpush1.bf16.msra.mxu0 0
        %3081 = vmatprep.subr.bf16.mxu0 %v3059
        %3082 = vmatpush1.bf16.msra.mxu0 %v3056
        %3083 = vmatprep.subr.bf16.mxu0 0
        %3084 = vmatpush2.bf16.msra.mxu0 0
        %3085 = vmatprep.subr.bf16.mxu0 0
        %3086 = vmatpush2.bf16.msra.mxu0 0
        %3087 = vmatprep.subr.bf16.mxu0 0
        %3088 = vmatpush2.bf16.msra.mxu0 0
        %3089 = vmatprep.subr.bf16.mxu0 0
        %3090 = vmatpush2.bf16.msra.mxu0 0
        %3091 = vmatprep.subr.bf16.mxu0 0
        %3092 = vmatpush2.bf16.msra.mxu0 0
        %3093 = vmatprep.subr.bf16.mxu0 0
        %3094 = vmatpush2.bf16.msra.mxu0 0
        %3095 = vmatprep.subr.bf16.mxu0 0
        %3096 = vmatpush2.bf16.msra.mxu0 0
        %3097 = vmatprep.subr.bf16.mxu0 0
        %3098 = vmatpush2.bf16.msra.mxu0 0
        %3099 = vmatprep.mubr.bf16.mxu0 0
        %3100 = vmatmul.mubr.bf16.gmra.mxu0 %v3053
        %v3101 = vpop.f32.mrf.mxu0
        %v3102 = vadd.f32 0.0, %v3101
        %v3103 = vpop.f32.mrf.mxu0
        %v3104 = vadd.f32 0.0, %v3103
        %v3105 = vpop.f32.mrf.mxu0
        %v3106 = vpop.f32.mrf.mxu0
        %3107 = vdwg.mxu0
        %3108 = vmatprep.subr.bf16.mxu0 0
        %3109 = vmatpush1.bf16.msra.mxu0 0
        %3110 = vmatprep.subr.bf16.mxu0 0
        %3111 = vmatpush1.bf16.msra.mxu0 0
        %3112 = vmatprep.subr.bf16.mxu0 0
        %3113 = vmatpush1.bf16.msra.mxu0 0
        %3114 = vmatprep.subr.bf16.mxu0 0
        %3115 = vmatpush1.bf16.msra.mxu0 0
        %3116 = vmatprep.subr.bf16.mxu0 0
        %3117 = vmatpush1.bf16.msra.mxu0 0
        %3118 = vmatprep.subr.bf16.mxu0 0
        %3119 = vmatpush1.bf16.msra.mxu0 0
        %3120 = vmatprep.subr.bf16.mxu0 0
        %3121 = vmatpush1.bf16.msra.mxu0 0
        %3122 = vmatprep.subr.bf16.mxu0 %v3065
        %3123 = vmatpush1.bf16.msra.mxu0 %v3062
        %3124 = vmatprep.subr.bf16.mxu0 0
        %3125 = vmatpush2.bf16.msra.mxu0 0
        %3126 = vmatprep.subr.bf16.mxu0 0
        %3127 = vmatpush2.bf16.msra.mxu0 0
        %3128 = vmatprep.subr.bf16.mxu0 0
        %3129 = vmatpush2.bf16.msra.mxu0 0
        %3130 = vmatprep.subr.bf16.mxu0 0
        %3131 = vmatpush2.bf16.msra.mxu0 0
        %3132 = vmatprep.subr.bf16.mxu0 0
        %3133 = vmatpush2.bf16.msra.mxu0 0
        %3134 = vmatprep.subr.bf16.mxu0 0
        %3135 = vmatpush2.bf16.msra.mxu0 0
        %3136 = vmatprep.subr.bf16.mxu0 0
        %3137 = vmatpush2.bf16.msra.mxu0 0
        %3138 = vmatprep.subr.bf16.mxu0 0
        %3139 = vmatpush2.bf16.msra.mxu0 0
        %3140 = vmatprep.mubr.bf16.mxu0 0
        %3141 = vmatmul.mubr.bf16.gmra.mxu0 %v3053
        %v3142 = vpop.f32.mrf.mxu0
        %v3143 = vadd.f32 0.0, %v3142
        %v3144 = vpop.f32.mrf.mxu0
        %v3145 = vadd.f32 0.0, %v3144
        %v3146 = vpop.f32.mrf.mxu0
        %v3147 = vpop.f32.mrf.mxu0
        %3148 = vdwg.mxu0
        %v3149 = vadd.f32 %v3034, %v3102
        %v3150 = vadd.f32 %v3035, %v3104
        %v3151 = vadd.f32 %v3036, %v3143
        %v3152 = vadd.f32 %v3037, %v3145
        %s3153 = scalar_lea.vmem %s1, 104
        %v3154 = vld [vmem:[%s3153] sm:$0xf]
        %3155 = vrot.lane.b32.xlu0 %v181, 51
        %v3156 = vpop.permute.xlu0 %3155
        %3157 = vrot.lane.b32.xlu0 %v182, 51
        %v3158 = vpop.permute.xlu0 %3157
        %3159 = vrot.lane.b32.xlu0 %v183, 51
        %v3160 = vpop.permute.xlu0 %3159
        %3161 = vrot.lane.b32.xlu0 %v184, 51
        %v3162 = vpop.permute.xlu0 %3161
        %vm3163 = vcmask 416768
        %v3164 = vsel %vm3163, %v3156, %v3158
        %v3165 = vsel %vm3163, %v3158, %v3160
        %v3166 = vsel %vm3163, %v3160, %v3162
        %v3168 = vsel %vm197, %v3154, 0
        %v3171 = vsel %vm201, %v3164, 0
        %v3174 = vsel %vm201, %v3165, 0
        %v3177 = vsel %vm201, %v3166, 0
        %v3180 = vsel %vm201, %v3162, 0
        %3182 = vmatprep.subr.bf16.mxu0 0
        %3183 = vmatpush1.bf16.msra.mxu0 0
        %3184 = vmatprep.subr.bf16.mxu0 0
        %3185 = vmatpush1.bf16.msra.mxu0 0
        %3186 = vmatprep.subr.bf16.mxu0 0
        %3187 = vmatpush1.bf16.msra.mxu0 0
        %3188 = vmatprep.subr.bf16.mxu0 0
        %3189 = vmatpush1.bf16.msra.mxu0 0
        %3190 = vmatprep.subr.bf16.mxu0 0
        %3191 = vmatpush1.bf16.msra.mxu0 0
        %3192 = vmatprep.subr.bf16.mxu0 0
        %3193 = vmatpush1.bf16.msra.mxu0 0
        %3194 = vmatprep.subr.bf16.mxu0 0
        %3195 = vmatpush1.bf16.msra.mxu0 0
        %3196 = vmatprep.subr.bf16.mxu0 %v3174
        %3197 = vmatpush1.bf16.msra.mxu0 %v3171
        %3198 = vmatprep.subr.bf16.mxu0 0
        %3199 = vmatpush2.bf16.msra.mxu0 0
        %3200 = vmatprep.subr.bf16.mxu0 0
        %3201 = vmatpush2.bf16.msra.mxu0 0
        %3202 = vmatprep.subr.bf16.mxu0 0
        %3203 = vmatpush2.bf16.msra.mxu0 0
        %3204 = vmatprep.subr.bf16.mxu0 0
        %3205 = vmatpush2.bf16.msra.mxu0 0
        %3206 = vmatprep.subr.bf16.mxu0 0
        %3207 = vmatpush2.bf16.msra.mxu0 0
        %3208 = vmatprep.subr.bf16.mxu0 0
        %3209 = vmatpush2.bf16.msra.mxu0 0
        %3210 = vmatprep.subr.bf16.mxu0 0
        %3211 = vmatpush2.bf16.msra.mxu0 0
        %3212 = vmatprep.subr.bf16.mxu0 0
        %3213 = vmatpush2.bf16.msra.mxu0 0
        %3214 = vmatprep.mubr.bf16.mxu0 0
        %3215 = vmatmul.mubr.bf16.gmra.mxu0 %v3168
        %v3216 = vpop.f32.mrf.mxu0
        %v3217 = vadd.f32 0.0, %v3216
        %v3218 = vpop.f32.mrf.mxu0
        %v3219 = vadd.f32 0.0, %v3218
        %v3220 = vpop.f32.mrf.mxu0
        %v3221 = vpop.f32.mrf.mxu0
        %3222 = vdwg.mxu0
        %3223 = vmatprep.subr.bf16.mxu0 0
        %3224 = vmatpush1.bf16.msra.mxu0 0
        %3225 = vmatprep.subr.bf16.mxu0 0
        %3226 = vmatpush1.bf16.msra.mxu0 0
        %3227 = vmatprep.subr.bf16.mxu0 0
        %3228 = vmatpush1.bf16.msra.mxu0 0
        %3229 = vmatprep.subr.bf16.mxu0 0
        %3230 = vmatpush1.bf16.msra.mxu0 0
        %3231 = vmatprep.subr.bf16.mxu0 0
        %3232 = vmatpush1.bf16.msra.mxu0 0
        %3233 = vmatprep.subr.bf16.mxu0 0
        %3234 = vmatpush1.bf16.msra.mxu0 0
        %3235 = vmatprep.subr.bf16.mxu0 0
        %3236 = vmatpush1.bf16.msra.mxu0 0
        %3237 = vmatprep.subr.bf16.mxu0 %v3180
        %3238 = vmatpush1.bf16.msra.mxu0 %v3177
        %3239 = vmatprep.subr.bf16.mxu0 0
        %3240 = vmatpush2.bf16.msra.mxu0 0
        %3241 = vmatprep.subr.bf16.mxu0 0
        %3242 = vmatpush2.bf16.msra.mxu0 0
        %3243 = vmatprep.subr.bf16.mxu0 0
        %3244 = vmatpush2.bf16.msra.mxu0 0
        %3245 = vmatprep.subr.bf16.mxu0 0
        %3246 = vmatpush2.bf16.msra.mxu0 0
        %3247 = vmatprep.subr.bf16.mxu0 0
        %3248 = vmatpush2.bf16.msra.mxu0 0
        %3249 = vmatprep.subr.bf16.mxu0 0
        %3250 = vmatpush2.bf16.msra.mxu0 0
        %3251 = vmatprep.subr.bf16.mxu0 0
        %3252 = vmatpush2.bf16.msra.mxu0 0
        %3253 = vmatprep.subr.bf16.mxu0 0
        %3254 = vmatpush2.bf16.msra.mxu0 0
        %3255 = vmatprep.mubr.bf16.mxu0 0
        %3256 = vmatmul.mubr.bf16.gmra.mxu0 %v3168
        %v3257 = vpop.f32.mrf.mxu0
        %v3258 = vadd.f32 0.0, %v3257
        %v3259 = vpop.f32.mrf.mxu0
        %v3260 = vadd.f32 0.0, %v3259
        %v3261 = vpop.f32.mrf.mxu0
        %v3262 = vpop.f32.mrf.mxu0
        %3263 = vdwg.mxu0
        %v3264 = vadd.f32 %v3149, %v3217
        %v3265 = vadd.f32 %v3150, %v3219
        %v3266 = vadd.f32 %v3151, %v3258
        %v3267 = vadd.f32 %v3152, %v3260
        %s3268 = scalar_lea.vmem %s1, 108
        %v3269 = vld [vmem:[%s3268] sm:$0xf]
        %3270 = vrot.lane.b32.xlu0 %v181, 50
        %v3271 = vpop.permute.xlu0 %3270
        %3272 = vrot.lane.b32.xlu0 %v182, 50
        %v3273 = vpop.permute.xlu0 %3272
        %3274 = vrot.lane.b32.xlu0 %v183, 50
        %v3275 = vpop.permute.xlu0 %3274
        %3276 = vrot.lane.b32.xlu0 %v184, 50
        %v3277 = vpop.permute.xlu0 %3276
        %vm3278 = vcmask 408576
        %v3279 = vsel %vm3278, %v3271, %v3273
        %v3280 = vsel %vm3278, %v3273, %v3275
        %v3281 = vsel %vm3278, %v3275, %v3277
        %v3283 = vsel %vm197, %v3269, 0
        %v3286 = vsel %vm201, %v3279, 0
        %v3289 = vsel %vm201, %v3280, 0
        %v3292 = vsel %vm201, %v3281, 0
        %v3295 = vsel %vm201, %v3277, 0
        %3297 = vmatprep.subr.bf16.mxu0 0
        %3298 = vmatpush1.bf16.msra.mxu0 0
        %3299 = vmatprep.subr.bf16.mxu0 0
        %3300 = vmatpush1.bf16.msra.mxu0 0
        %3301 = vmatprep.subr.bf16.mxu0 0
        %3302 = vmatpush1.bf16.msra.mxu0 0
        %3303 = vmatprep.subr.bf16.mxu0 0
        %3304 = vmatpush1.bf16.msra.mxu0 0
        %3305 = vmatprep.subr.bf16.mxu0 0
        %3306 = vmatpush1.bf16.msra.mxu0 0
        %3307 = vmatprep.subr.bf16.mxu0 0
        %3308 = vmatpush1.bf16.msra.mxu0 0
        %3309 = vmatprep.subr.bf16.mxu0 0
        %3310 = vmatpush1.bf16.msra.mxu0 0
        %3311 = vmatprep.subr.bf16.mxu0 %v3289
        %3312 = vmatpush1.bf16.msra.mxu0 %v3286
        %3313 = vmatprep.subr.bf16.mxu0 0
        %3314 = vmatpush2.bf16.msra.mxu0 0
        %3315 = vmatprep.subr.bf16.mxu0 0
        %3316 = vmatpush2.bf16.msra.mxu0 0
        %3317 = vmatprep.subr.bf16.mxu0 0
        %3318 = vmatpush2.bf16.msra.mxu0 0
        %3319 = vmatprep.subr.bf16.mxu0 0
        %3320 = vmatpush2.bf16.msra.mxu0 0
        %3321 = vmatprep.subr.bf16.mxu0 0
        %3322 = vmatpush2.bf16.msra.mxu0 0
        %3323 = vmatprep.subr.bf16.mxu0 0
        %3324 = vmatpush2.bf16.msra.mxu0 0
        %3325 = vmatprep.subr.bf16.mxu0 0
        %3326 = vmatpush2.bf16.msra.mxu0 0
        %3327 = vmatprep.subr.bf16.mxu0 0
        %3328 = vmatpush2.bf16.msra.mxu0 0
        %3329 = vmatprep.mubr.bf16.mxu0 0
        %3330 = vmatmul.mubr.bf16.gmra.mxu0 %v3283
        %v3331 = vpop.f32.mrf.mxu0
        %v3332 = vadd.f32 0.0, %v3331
        %v3333 = vpop.f32.mrf.mxu0
        %v3334 = vadd.f32 0.0, %v3333
        %v3335 = vpop.f32.mrf.mxu0
        %v3336 = vpop.f32.mrf.mxu0
        %3337 = vdwg.mxu0
        %3338 = vmatprep.subr.bf16.mxu0 0
        %3339 = vmatpush1.bf16.msra.mxu0 0
        %3340 = vmatprep.subr.bf16.mxu0 0
        %3341 = vmatpush1.bf16.msra.mxu0 0
        %3342 = vmatprep.subr.bf16.mxu0 0
        %3343 = vmatpush1.bf16.msra.mxu0 0
        %3344 = vmatprep.subr.bf16.mxu0 0
        %3345 = vmatpush1.bf16.msra.mxu0 0
        %3346 = vmatprep.subr.bf16.mxu0 0
        %3347 = vmatpush1.bf16.msra.mxu0 0
        %3348 = vmatprep.subr.bf16.mxu0 0
        %3349 = vmatpush1.bf16.msra.mxu0 0
        %3350 = vmatprep.subr.bf16.mxu0 0
        %3351 = vmatpush1.bf16.msra.mxu0 0
        %3352 = vmatprep.subr.bf16.mxu0 %v3295
        %3353 = vmatpush1.bf16.msra.mxu0 %v3292
        %3354 = vmatprep.subr.bf16.mxu0 0
        %3355 = vmatpush2.bf16.msra.mxu0 0
        %3356 = vmatprep.subr.bf16.mxu0 0
        %3357 = vmatpush2.bf16.msra.mxu0 0
        %3358 = vmatprep.subr.bf16.mxu0 0
        %3359 = vmatpush2.bf16.msra.mxu0 0
        %3360 = vmatprep.subr.bf16.mxu0 0
        %3361 = vmatpush2.bf16.msra.mxu0 0
        %3362 = vmatprep.subr.bf16.mxu0 0
        %3363 = vmatpush2.bf16.msra.mxu0 0
        %3364 = vmatprep.subr.bf16.mxu0 0
        %3365 = vmatpush2.bf16.msra.mxu0 0
        %3366 = vmatprep.subr.bf16.mxu0 0
        %3367 = vmatpush2.bf16.msra.mxu0 0
        %3368 = vmatprep.subr.bf16.mxu0 0
        %3369 = vmatpush2.bf16.msra.mxu0 0
        %3370 = vmatprep.mubr.bf16.mxu0 0
        %3371 = vmatmul.mubr.bf16.gmra.mxu0 %v3283
        %v3372 = vpop.f32.mrf.mxu0
        %v3373 = vadd.f32 0.0, %v3372
        %v3374 = vpop.f32.mrf.mxu0
        %v3375 = vadd.f32 0.0, %v3374
        %v3376 = vpop.f32.mrf.mxu0
        %v3377 = vpop.f32.mrf.mxu0
        %3378 = vdwg.mxu0
        %v3379 = vadd.f32 %v3264, %v3332
        %v3380 = vadd.f32 %v3265, %v3334
        %v3381 = vadd.f32 %v3266, %v3373
        %v3382 = vadd.f32 %v3267, %v3375
        %v3383 = vld [vmem:[%s168] sm:$0xff]
        %v3384 = vld [vmem:[%s168 + $0x8] sm:$0xff]
        %v3385 = vld [vmem:[%s168 + $0x10] sm:$0xf]
        %s3386 = scalar_lea.vmem %s1, 112
        %v3387 = vld [vmem:[%s3386] sm:$0xf]
        %v3391 = vunpack.c.l.b16 %v3383
        %v3392 = vunpack.c.h.b16 %v3383
        %v3393 = vunpack.c.l.b16 %v3384
        %v3394 = vunpack.c.h.b16 %v3384
        %v3395 = vunpack.c.l.b16 %v3385
        %v3396 = vpack.c.b16 %v3391, %v3391
        %v3397 = vpack.c.b16 %v3392, %v3392
        %v3398 = vpack.c.b16 %v3393, %v3393
        %v3399 = vpack.c.b16 %v3394, %v3394
        %v3400 = vpack.c.b16 %v3395, %v3395
        %3401 = vrot.lane.b32.xlu0 %v3396, 32
        %v3402 = vpop.permute.xlu0 %3401
        %3403 = vrot.lane.b32.xlu0 %v3397, 32
        %v3404 = vpop.permute.xlu0 %3403
        %3405 = vrot.lane.b32.xlu0 %v3398, 32
        %v3406 = vpop.permute.xlu0 %3405
        %3407 = vrot.lane.b32.xlu0 %v3399, 32
        %v3408 = vpop.permute.xlu0 %3407
        %3409 = vrot.lane.b32.xlu0 %v3400, 32
        %v3410 = vpop.permute.xlu0 %3409
        %vm3411 = vcmask 261120
        %v3412 = vsel %vm3411, %v3402, %v3404
        %v3413 = vsel %vm3411, %v3404, %v3406
        %v3414 = vsel %vm3411, %v3406, %v3408
        %v3415 = vsel %vm3411, %v3408, %v3410
        %v3417 = vsel %vm197, %v3387, 0
        %v3420 = vsel %vm201, %v3412, 0
        %v3423 = vsel %vm201, %v3413, 0
        %v3426 = vsel %vm201, %v3414, 0
        %v3429 = vsel %vm201, %v3415, 0
        %3431 = vmatprep.subr.bf16.mxu0 0
        %3432 = vmatpush1.bf16.msra.mxu0 0
        %3433 = vmatprep.subr.bf16.mxu0 0
        %3434 = vmatpush1.bf16.msra.mxu0 0
        %3435 = vmatprep.subr.bf16.mxu0 0
        %3436 = vmatpush1.bf16.msra.mxu0 0
        %3437 = vmatprep.subr.bf16.mxu0 0
        %3438 = vmatpush1.bf16.msra.mxu0 0
        %3439 = vmatprep.subr.bf16.mxu0 0
        %3440 = vmatpush1.bf16.msra.mxu0 0
        %3441 = vmatprep.subr.bf16.mxu0 0
        %3442 = vmatpush1.bf16.msra.mxu0 0
        %3443 = vmatprep.subr.bf16.mxu0 0
        %3444 = vmatpush1.bf16.msra.mxu0 0
        %3445 = vmatprep.subr.bf16.mxu0 %v3423
        %3446 = vmatpush1.bf16.msra.mxu0 %v3420
        %3447 = vmatprep.subr.bf16.mxu0 0
        %3448 = vmatpush2.bf16.msra.mxu0 0
        %3449 = vmatprep.subr.bf16.mxu0 0
        %3450 = vmatpush2.bf16.msra.mxu0 0
        %3451 = vmatprep.subr.bf16.mxu0 0
        %3452 = vmatpush2.bf16.msra.mxu0 0
        %3453 = vmatprep.subr.bf16.mxu0 0
        %3454 = vmatpush2.bf16.msra.mxu0 0
        %3455 = vmatprep.subr.bf16.mxu0 0
        %3456 = vmatpush2.bf16.msra.mxu0 0
        %3457 = vmatprep.subr.bf16.mxu0 0
        %3458 = vmatpush2.bf16.msra.mxu0 0
        %3459 = vmatprep.subr.bf16.mxu0 0
        %3460 = vmatpush2.bf16.msra.mxu0 0
        %3461 = vmatprep.subr.bf16.mxu0 0
        %3462 = vmatpush2.bf16.msra.mxu0 0
        %3463 = vmatprep.mubr.bf16.mxu0 0
        %3464 = vmatmul.mubr.bf16.gmra.mxu0 %v3417
        %v3465 = vpop.f32.mrf.mxu0
        %v3466 = vadd.f32 0.0, %v3465
        %v3467 = vpop.f32.mrf.mxu0
        %v3468 = vadd.f32 0.0, %v3467
        %v3469 = vpop.f32.mrf.mxu0
        %v3470 = vpop.f32.mrf.mxu0
        %3471 = vdwg.mxu0
        %3472 = vmatprep.subr.bf16.mxu0 0
        %3473 = vmatpush1.bf16.msra.mxu0 0
        %3474 = vmatprep.subr.bf16.mxu0 0
        %3475 = vmatpush1.bf16.msra.mxu0 0
        %3476 = vmatprep.subr.bf16.mxu0 0
        %3477 = vmatpush1.bf16.msra.mxu0 0
        %3478 = vmatprep.subr.bf16.mxu0 0
        %3479 = vmatpush1.bf16.msra.mxu0 0
        %3480 = vmatprep.subr.bf16.mxu0 0
        %3481 = vmatpush1.bf16.msra.mxu0 0
        %3482 = vmatprep.subr.bf16.mxu0 0
        %3483 = vmatpush1.bf16.msra.mxu0 0
        %3484 = vmatprep.subr.bf16.mxu0 0
        %3485 = vmatpush1.bf16.msra.mxu0 0
        %3486 = vmatprep.subr.bf16.mxu0 %v3429
        %3487 = vmatpush1.bf16.msra.mxu0 %v3426
        %3488 = vmatprep.subr.bf16.mxu0 0
        %3489 = vmatpush2.bf16.msra.mxu0 0
        %3490 = vmatprep.subr.bf16.mxu0 0
        %3491 = vmatpush2.bf16.msra.mxu0 0
        %3492 = vmatprep.subr.bf16.mxu0 0
        %3493 = vmatpush2.bf16.msra.mxu0 0
        %3494 = vmatprep.subr.bf16.mxu0 0
        %3495 = vmatpush2.bf16.msra.mxu0 0
        %3496 = vmatprep.subr.bf16.mxu0 0
        %3497 = vmatpush2.bf16.msra.mxu0 0
        %3498 = vmatprep.subr.bf16.mxu0 0
        %3499 = vmatpush2.bf16.msra.mxu0 0
        %3500 = vmatprep.subr.bf16.mxu0 0
        %3501 = vmatpush2.bf16.msra.mxu0 0
        %3502 = vmatprep.subr.bf16.mxu0 0
        %3503 = vmatpush2.bf16.msra.mxu0 0
        %3504 = vmatprep.mubr.bf16.mxu0 0
        %3505 = vmatmul.mubr.bf16.gmra.mxu0 %v3417
        %v3506 = vpop.f32.mrf.mxu0
        %v3507 = vadd.f32 0.0, %v3506
        %v3508 = vpop.f32.mrf.mxu0
        %v3509 = vadd.f32 0.0, %v3508
        %v3510 = vpop.f32.mrf.mxu0
        %v3511 = vpop.f32.mrf.mxu0
        %3512 = vdwg.mxu0
        %v3513 = vadd.f32 %v3379, %v3466
        %v3514 = vadd.f32 %v3380, %v3468
        %v3515 = vadd.f32 %v3381, %v3507
        %v3516 = vadd.f32 %v3382, %v3509
        %s3517 = scalar_lea.vmem %s1, 116
        %v3518 = vld [vmem:[%s3517] sm:$0xf]
        %3519 = vrot.lane.b32.xlu0 %v3396, 31
        %v3520 = vpop.permute.xlu0 %3519
        %3521 = vrot.lane.b32.xlu0 %v3397, 31
        %v3522 = vpop.permute.xlu0 %3521
        %3523 = vrot.lane.b32.xlu0 %v3398, 31
        %v3524 = vpop.permute.xlu0 %3523
        %3525 = vrot.lane.b32.xlu0 %v3399, 31
        %v3526 = vpop.permute.xlu0 %3525
        %3527 = vrot.lane.b32.xlu0 %v3400, 31
        %v3528 = vpop.permute.xlu0 %3527
        %vm3529 = vcmask 252928
        %v3530 = vsel %vm3529, %v3520, %v3522
        %v3531 = vsel %vm3529, %v3522, %v3524
        %v3532 = vsel %vm3529, %v3524, %v3526
        %v3533 = vsel %vm3529, %v3526, %v3528
        %v3535 = vsel %vm197, %v3518, 0
        %v3538 = vsel %vm201, %v3530, 0
        %v3541 = vsel %vm201, %v3531, 0
        %v3544 = vsel %vm201, %v3532, 0
        %v3547 = vsel %vm201, %v3533, 0
        %3549 = vmatprep.subr.bf16.mxu0 0
        %3550 = vmatpush1.bf16.msra.mxu0 0
        %3551 = vmatprep.subr.bf16.mxu0 0
        %3552 = vmatpush1.bf16.msra.mxu0 0
        %3553 = vmatprep.subr.bf16.mxu0 0
        %3554 = vmatpush1.bf16.msra.mxu0 0
        %3555 = vmatprep.subr.bf16.mxu0 0
        %3556 = vmatpush1.bf16.msra.mxu0 0
        %3557 = vmatprep.subr.bf16.mxu0 0
        %3558 = vmatpush1.bf16.msra.mxu0 0
        %3559 = vmatprep.subr.bf16.mxu0 0
        %3560 = vmatpush1.bf16.msra.mxu0 0
        %3561 = vmatprep.subr.bf16.mxu0 0
        %3562 = vmatpush1.bf16.msra.mxu0 0
        %3563 = vmatprep.subr.bf16.mxu0 %v3541
        %3564 = vmatpush1.bf16.msra.mxu0 %v3538
        %3565 = vmatprep.subr.bf16.mxu0 0
        %3566 = vmatpush2.bf16.msra.mxu0 0
        %3567 = vmatprep.subr.bf16.mxu0 0
        %3568 = vmatpush2.bf16.msra.mxu0 0
        %3569 = vmatprep.subr.bf16.mxu0 0
        %3570 = vmatpush2.bf16.msra.mxu0 0
        %3571 = vmatprep.subr.bf16.mxu0 0
        %3572 = vmatpush2.bf16.msra.mxu0 0
        %3573 = vmatprep.subr.bf16.mxu0 0
        %3574 = vmatpush2.bf16.msra.mxu0 0
        %3575 = vmatprep.subr.bf16.mxu0 0
        %3576 = vmatpush2.bf16.msra.mxu0 0
        %3577 = vmatprep.subr.bf16.mxu0 0
        %3578 = vmatpush2.bf16.msra.mxu0 0
        %3579 = vmatprep.subr.bf16.mxu0 0
        %3580 = vmatpush2.bf16.msra.mxu0 0
        %3581 = vmatprep.mubr.bf16.mxu0 0
        %3582 = vmatmul.mubr.bf16.gmra.mxu0 %v3535
        %v3583 = vpop.f32.mrf.mxu0
        %v3584 = vadd.f32 0.0, %v3583
        %v3585 = vpop.f32.mrf.mxu0
        %v3586 = vadd.f32 0.0, %v3585
        %v3587 = vpop.f32.mrf.mxu0
        %v3588 = vpop.f32.mrf.mxu0
        %3589 = vdwg.mxu0
        %3590 = vmatprep.subr.bf16.mxu0 0
        %3591 = vmatpush1.bf16.msra.mxu0 0
        %3592 = vmatprep.subr.bf16.mxu0 0
        %3593 = vmatpush1.bf16.msra.mxu0 0
        %3594 = vmatprep.subr.bf16.mxu0 0
        %3595 = vmatpush1.bf16.msra.mxu0 0
        %3596 = vmatprep.subr.bf16.mxu0 0
        %3597 = vmatpush1.bf16.msra.mxu0 0
        %3598 = vmatprep.subr.bf16.mxu0 0
        %3599 = vmatpush1.bf16.msra.mxu0 0
        %3600 = vmatprep.subr.bf16.mxu0 0
        %3601 = vmatpush1.bf16.msra.mxu0 0
        %3602 = vmatprep.subr.bf16.mxu0 0
        %3603 = vmatpush1.bf16.msra.mxu0 0
        %3604 = vmatprep.subr.bf16.mxu0 %v3547
        %3605 = vmatpush1.bf16.msra.mxu0 %v3544
        %3606 = vmatprep.subr.bf16.mxu0 0
        %3607 = vmatpush2.bf16.msra.mxu0 0
        %3608 = vmatprep.subr.bf16.mxu0 0
        %3609 = vmatpush2.bf16.msra.mxu0 0
        %3610 = vmatprep.subr.bf16.mxu0 0
        %3611 = vmatpush2.bf16.msra.mxu0 0
        %3612 = vmatprep.subr.bf16.mxu0 0
        %3613 = vmatpush2.bf16.msra.mxu0 0
        %3614 = vmatprep.subr.bf16.mxu0 0
        %3615 = vmatpush2.bf16.msra.mxu0 0
        %3616 = vmatprep.subr.bf16.mxu0 0
        %3617 = vmatpush2.bf16.msra.mxu0 0
        %3618 = vmatprep.subr.bf16.mxu0 0
        %3619 = vmatpush2.bf16.msra.mxu0 0
        %3620 = vmatprep.subr.bf16.mxu0 0
        %3621 = vmatpush2.bf16.msra.mxu0 0
        %3622 = vmatprep.mubr.bf16.mxu0 0
        %3623 = vmatmul.mubr.bf16.gmra.mxu0 %v3535
        %v3624 = vpop.f32.mrf.mxu0
        %v3625 = vadd.f32 0.0, %v3624
        %v3626 = vpop.f32.mrf.mxu0
        %v3627 = vadd.f32 0.0, %v3626
        %v3628 = vpop.f32.mrf.mxu0
        %v3629 = vpop.f32.mrf.mxu0
        %3630 = vdwg.mxu0
        %v3631 = vadd.f32 %v3513, %v3584
        %v3632 = vadd.f32 %v3514, %v3586
        %v3633 = vadd.f32 %v3515, %v3625
        %v3634 = vadd.f32 %v3516, %v3627
        %s3635 = scalar_lea.vmem %s1, 120
        %v3636 = vld [vmem:[%s3635] sm:$0xf]
        %3637 = vrot.lane.b32.xlu0 %v3396, 30
        %v3638 = vpop.permute.xlu0 %3637
        %3639 = vrot.lane.b32.xlu0 %v3397, 30
        %v3640 = vpop.permute.xlu0 %3639
        %3641 = vrot.lane.b32.xlu0 %v3398, 30
        %v3642 = vpop.permute.xlu0 %3641
        %3643 = vrot.lane.b32.xlu0 %v3399, 30
        %v3644 = vpop.permute.xlu0 %3643
        %3645 = vrot.lane.b32.xlu0 %v3400, 30
        %v3646 = vpop.permute.xlu0 %3645
        %vm3647 = vcmask 244736
        %v3648 = vsel %vm3647, %v3638, %v3640
        %v3649 = vsel %vm3647, %v3640, %v3642
        %v3650 = vsel %vm3647, %v3642, %v3644
        %v3651 = vsel %vm3647, %v3644, %v3646
        %v3653 = vsel %vm197, %v3636, 0
        %v3656 = vsel %vm201, %v3648, 0
        %v3659 = vsel %vm201, %v3649, 0
        %v3662 = vsel %vm201, %v3650, 0
        %v3665 = vsel %vm201, %v3651, 0
        %3667 = vmatprep.subr.bf16.mxu0 0
        %3668 = vmatpush1.bf16.msra.mxu0 0
        %3669 = vmatprep.subr.bf16.mxu0 0
        %3670 = vmatpush1.bf16.msra.mxu0 0
        %3671 = vmatprep.subr.bf16.mxu0 0
        %3672 = vmatpush1.bf16.msra.mxu0 0
        %3673 = vmatprep.subr.bf16.mxu0 0
        %3674 = vmatpush1.bf16.msra.mxu0 0
        %3675 = vmatprep.subr.bf16.mxu0 0
        %3676 = vmatpush1.bf16.msra.mxu0 0
        %3677 = vmatprep.subr.bf16.mxu0 0
        %3678 = vmatpush1.bf16.msra.mxu0 0
        %3679 = vmatprep.subr.bf16.mxu0 0
        %3680 = vmatpush1.bf16.msra.mxu0 0
        %3681 = vmatprep.subr.bf16.mxu0 %v3659
        %3682 = vmatpush1.bf16.msra.mxu0 %v3656
        %3683 = vmatprep.subr.bf16.mxu0 0
        %3684 = vmatpush2.bf16.msra.mxu0 0
        %3685 = vmatprep.subr.bf16.mxu0 0
        %3686 = vmatpush2.bf16.msra.mxu0 0
        %3687 = vmatprep.subr.bf16.mxu0 0
        %3688 = vmatpush2.bf16.msra.mxu0 0
        %3689 = vmatprep.subr.bf16.mxu0 0
        %3690 = vmatpush2.bf16.msra.mxu0 0
        %3691 = vmatprep.subr.bf16.mxu0 0
        %3692 = vmatpush2.bf16.msra.mxu0 0
        %3693 = vmatprep.subr.bf16.mxu0 0
        %3694 = vmatpush2.bf16.msra.mxu0 0
        %3695 = vmatprep.subr.bf16.mxu0 0
        %3696 = vmatpush2.bf16.msra.mxu0 0
        %3697 = vmatprep.subr.bf16.mxu0 0
        %3698 = vmatpush2.bf16.msra.mxu0 0
        %3699 = vmatprep.mubr.bf16.mxu0 0
        %3700 = vmatmul.mubr.bf16.gmra.mxu0 %v3653
        %v3701 = vpop.f32.mrf.mxu0
        %v3702 = vadd.f32 0.0, %v3701
        %v3703 = vpop.f32.mrf.mxu0
        %v3704 = vadd.f32 0.0, %v3703
        %v3705 = vpop.f32.mrf.mxu0
        %v3706 = vpop.f32.mrf.mxu0
        %3707 = vdwg.mxu0
        %3708 = vmatprep.subr.bf16.mxu0 0
        %3709 = vmatpush1.bf16.msra.mxu0 0
        %3710 = vmatprep.subr.bf16.mxu0 0
        %3711 = vmatpush1.bf16.msra.mxu0 0
        %3712 = vmatprep.subr.bf16.mxu0 0
        %3713 = vmatpush1.bf16.msra.mxu0 0
        %3714 = vmatprep.subr.bf16.mxu0 0
        %3715 = vmatpush1.bf16.msra.mxu0 0
        %3716 = vmatprep.subr.bf16.mxu0 0
        %3717 = vmatpush1.bf16.msra.mxu0 0
        %3718 = vmatprep.subr.bf16.mxu0 0
        %3719 = vmatpush1.bf16.msra.mxu0 0
        %3720 = vmatprep.subr.bf16.mxu0 0
        %3721 = vmatpush1.bf16.msra.mxu0 0
        %3722 = vmatprep.subr.bf16.mxu0 %v3665
        %3723 = vmatpush1.bf16.msra.mxu0 %v3662
        %3724 = vmatprep.subr.bf16.mxu0 0
        %3725 = vmatpush2.bf16.msra.mxu0 0
        %3726 = vmatprep.subr.bf16.mxu0 0
        %3727 = vmatpush2.bf16.msra.mxu0 0
        %3728 = vmatprep.subr.bf16.mxu0 0
        %3729 = vmatpush2.bf16.msra.mxu0 0
        %3730 = vmatprep.subr.bf16.mxu0 0
        %3731 = vmatpush2.bf16.msra.mxu0 0
        %3732 = vmatprep.subr.bf16.mxu0 0
        %3733 = vmatpush2.bf16.msra.mxu0 0
        %3734 = vmatprep.subr.bf16.mxu0 0
        %3735 = vmatpush2.bf16.msra.mxu0 0
        %3736 = vmatprep.subr.bf16.mxu0 0
        %3737 = vmatpush2.bf16.msra.mxu0 0
        %3738 = vmatprep.subr.bf16.mxu0 0
        %3739 = vmatpush2.bf16.msra.mxu0 0
        %3740 = vmatprep.mubr.bf16.mxu0 0
        %3741 = vmatmul.mubr.bf16.gmra.mxu0 %v3653
        %v3742 = vpop.f32.mrf.mxu0
        %v3743 = vadd.f32 0.0, %v3742
        %v3744 = vpop.f32.mrf.mxu0
        %v3745 = vadd.f32 0.0, %v3744
        %v3746 = vpop.f32.mrf.mxu0
        %v3747 = vpop.f32.mrf.mxu0
        %3748 = vdwg.mxu0
        %v3749 = vadd.f32 %v3631, %v3702
        %v3750 = vadd.f32 %v3632, %v3704
        %v3751 = vadd.f32 %v3633, %v3743
        %v3752 = vadd.f32 %v3634, %v3745
        %s3753 = scalar_lea.vmem %s1, 124
        %v3754 = vld [vmem:[%s3753] sm:$0xf]
        %3755 = vrot.lane.b32.xlu0 %v3396, 29
        %v3756 = vpop.permute.xlu0 %3755
        %3757 = vrot.lane.b32.xlu0 %v3397, 29
        %v3758 = vpop.permute.xlu0 %3757
        %3759 = vrot.lane.b32.xlu0 %v3398, 29
        %v3760 = vpop.permute.xlu0 %3759
        %3761 = vrot.lane.b32.xlu0 %v3399, 29
        %v3762 = vpop.permute.xlu0 %3761
        %3763 = vrot.lane.b32.xlu0 %v3400, 29
        %v3764 = vpop.permute.xlu0 %3763
        %vm3765 = vcmask 236544
        %v3766 = vsel %vm3765, %v3756, %v3758
        %v3767 = vsel %vm3765, %v3758, %v3760
        %v3768 = vsel %vm3765, %v3760, %v3762
        %v3769 = vsel %vm3765, %v3762, %v3764
        %v3771 = vsel %vm197, %v3754, 0
        %v3774 = vsel %vm201, %v3766, 0
        %v3777 = vsel %vm201, %v3767, 0
        %v3780 = vsel %vm201, %v3768, 0
        %v3783 = vsel %vm201, %v3769, 0
        %3785 = vmatprep.subr.bf16.mxu0 0
        %3786 = vmatpush1.bf16.msra.mxu0 0
        %3787 = vmatprep.subr.bf16.mxu0 0
        %3788 = vmatpush1.bf16.msra.mxu0 0
        %3789 = vmatprep.subr.bf16.mxu0 0
        %3790 = vmatpush1.bf16.msra.mxu0 0
        %3791 = vmatprep.subr.bf16.mxu0 0
        %3792 = vmatpush1.bf16.msra.mxu0 0
        %3793 = vmatprep.subr.bf16.mxu0 0
        %3794 = vmatpush1.bf16.msra.mxu0 0
        %3795 = vmatprep.subr.bf16.mxu0 0
        %3796 = vmatpush1.bf16.msra.mxu0 0
        %3797 = vmatprep.subr.bf16.mxu0 0
        %3798 = vmatpush1.bf16.msra.mxu0 0
        %3799 = vmatprep.subr.bf16.mxu0 %v3777
        %3800 = vmatpush1.bf16.msra.mxu0 %v3774
        %3801 = vmatprep.subr.bf16.mxu0 0
        %3802 = vmatpush2.bf16.msra.mxu0 0
        %3803 = vmatprep.subr.bf16.mxu0 0
        %3804 = vmatpush2.bf16.msra.mxu0 0
        %3805 = vmatprep.subr.bf16.mxu0 0
        %3806 = vmatpush2.bf16.msra.mxu0 0
        %3807 = vmatprep.subr.bf16.mxu0 0
        %3808 = vmatpush2.bf16.msra.mxu0 0
        %3809 = vmatprep.subr.bf16.mxu0 0
        %3810 = vmatpush2.bf16.msra.mxu0 0
        %3811 = vmatprep.subr.bf16.mxu0 0
        %3812 = vmatpush2.bf16.msra.mxu0 0
        %3813 = vmatprep.subr.bf16.mxu0 0
        %3814 = vmatpush2.bf16.msra.mxu0 0
        %3815 = vmatprep.subr.bf16.mxu0 0
        %3816 = vmatpush2.bf16.msra.mxu0 0
        %3817 = vmatprep.mubr.bf16.mxu0 0
        %3818 = vmatmul.mubr.bf16.gmra.mxu0 %v3771
        %v3819 = vpop.f32.mrf.mxu0
        %v3820 = vadd.f32 0.0, %v3819
        %v3821 = vpop.f32.mrf.mxu0
        %v3822 = vadd.f32 0.0, %v3821
        %v3823 = vpop.f32.mrf.mxu0
        %v3824 = vpop.f32.mrf.mxu0
        %3825 = vdwg.mxu0
        %3826 = vmatprep.subr.bf16.mxu0 0
        %3827 = vmatpush1.bf16.msra.mxu0 0
        %3828 = vmatprep.subr.bf16.mxu0 0
        %3829 = vmatpush1.bf16.msra.mxu0 0
        %3830 = vmatprep.subr.bf16.mxu0 0
        %3831 = vmatpush1.bf16.msra.mxu0 0
        %3832 = vmatprep.subr.bf16.mxu0 0
        %3833 = vmatpush1.bf16.msra.mxu0 0
        %3834 = vmatprep.subr.bf16.mxu0 0
        %3835 = vmatpush1.bf16.msra.mxu0 0
        %3836 = vmatprep.subr.bf16.mxu0 0
        %3837 = vmatpush1.bf16.msra.mxu0 0
        %3838 = vmatprep.subr.bf16.mxu0 0
        %3839 = vmatpush1.bf16.msra.mxu0 0
        %3840 = vmatprep.subr.bf16.mxu0 %v3783
        %3841 = vmatpush1.bf16.msra.mxu0 %v3780
        %3842 = vmatprep.subr.bf16.mxu0 0
        %3843 = vmatpush2.bf16.msra.mxu0 0
        %3844 = vmatprep.subr.bf16.mxu0 0
        %3845 = vmatpush2.bf16.msra.mxu0 0
        %3846 = vmatprep.subr.bf16.mxu0 0
        %3847 = vmatpush2.bf16.msra.mxu0 0
        %3848 = vmatprep.subr.bf16.mxu0 0
        %3849 = vmatpush2.bf16.msra.mxu0 0
        %3850 = vmatprep.subr.bf16.mxu0 0
        %3851 = vmatpush2.bf16.msra.mxu0 0
        %3852 = vmatprep.subr.bf16.mxu0 0
        %3853 = vmatpush2.bf16.msra.mxu0 0
        %3854 = vmatprep.subr.bf16.mxu0 0
        %3855 = vmatpush2.bf16.msra.mxu0 0
        %3856 = vmatprep.subr.bf16.mxu0 0
        %3857 = vmatpush2.bf16.msra.mxu0 0
        %3858 = vmatprep.mubr.bf16.mxu0 0
        %3859 = vmatmul.mubr.bf16.gmra.mxu0 %v3771
        %v3860 = vpop.f32.mrf.mxu0
        %v3861 = vadd.f32 0.0, %v3860
        %v3862 = vpop.f32.mrf.mxu0
        %v3863 = vadd.f32 0.0, %v3862
        %v3864 = vpop.f32.mrf.mxu0
        %v3865 = vpop.f32.mrf.mxu0
        %3866 = vdwg.mxu0
        %v3867 = vadd.f32 %v3749, %v3820
        %v3868 = vadd.f32 %v3750, %v3822
        %v3869 = vadd.f32 %v3751, %v3861
        %v3870 = vadd.f32 %v3752, %v3863
        %s3871 = scalar_lea.vmem %s1, 128
        %v3872 = vld [vmem:[%s3871] sm:$0xf]
        %3873 = vrot.lane.b32.xlu0 %v3396, 28
        %v3874 = vpop.permute.xlu0 %3873
        %3875 = vrot.lane.b32.xlu0 %v3397, 28
        %v3876 = vpop.permute.xlu0 %3875
        %3877 = vrot.lane.b32.xlu0 %v3398, 28
        %v3878 = vpop.permute.xlu0 %3877
        %3879 = vrot.lane.b32.xlu0 %v3399, 28
        %v3880 = vpop.permute.xlu0 %3879
        %3881 = vrot.lane.b32.xlu0 %v3400, 28
        %v3882 = vpop.permute.xlu0 %3881
        %vm3883 = vcmask 228352
        %v3884 = vsel %vm3883, %v3874, %v3876
        %v3885 = vsel %vm3883, %v3876, %v3878
        %v3886 = vsel %vm3883, %v3878, %v3880
        %v3887 = vsel %vm3883, %v3880, %v3882
        %v3889 = vsel %vm197, %v3872, 0
        %v3892 = vsel %vm201, %v3884, 0
        %v3895 = vsel %vm201, %v3885, 0
        %v3898 = vsel %vm201, %v3886, 0
        %v3901 = vsel %vm201, %v3887, 0
        %3903 = vmatprep.subr.bf16.mxu0 0
        %3904 = vmatpush1.bf16.msra.mxu0 0
        %3905 = vmatprep.subr.bf16.mxu0 0
        %3906 = vmatpush1.bf16.msra.mxu0 0
        %3907 = vmatprep.subr.bf16.mxu0 0
        %3908 = vmatpush1.bf16.msra.mxu0 0
        %3909 = vmatprep.subr.bf16.mxu0 0
        %3910 = vmatpush1.bf16.msra.mxu0 0
        %3911 = vmatprep.subr.bf16.mxu0 0
        %3912 = vmatpush1.bf16.msra.mxu0 0
        %3913 = vmatprep.subr.bf16.mxu0 0
        %3914 = vmatpush1.bf16.msra.mxu0 0
        %3915 = vmatprep.subr.bf16.mxu0 0
        %3916 = vmatpush1.bf16.msra.mxu0 0
        %3917 = vmatprep.subr.bf16.mxu0 %v3895
        %3918 = vmatpush1.bf16.msra.mxu0 %v3892
        %3919 = vmatprep.subr.bf16.mxu0 0
        %3920 = vmatpush2.bf16.msra.mxu0 0
        %3921 = vmatprep.subr.bf16.mxu0 0
        %3922 = vmatpush2.bf16.msra.mxu0 0
        %3923 = vmatprep.subr.bf16.mxu0 0
        %3924 = vmatpush2.bf16.msra.mxu0 0
        %3925 = vmatprep.subr.bf16.mxu0 0
        %3926 = vmatpush2.bf16.msra.mxu0 0
        %3927 = vmatprep.subr.bf16.mxu0 0
        %3928 = vmatpush2.bf16.msra.mxu0 0
        %3929 = vmatprep.subr.bf16.mxu0 0
        %3930 = vmatpush2.bf16.msra.mxu0 0
        %3931 = vmatprep.subr.bf16.mxu0 0
        %3932 = vmatpush2.bf16.msra.mxu0 0
        %3933 = vmatprep.subr.bf16.mxu0 0
        %3934 = vmatpush2.bf16.msra.mxu0 0
        %3935 = vmatprep.mubr.bf16.mxu0 0
        %3936 = vmatmul.mubr.bf16.gmra.mxu0 %v3889
        %v3937 = vpop.f32.mrf.mxu0
        %v3938 = vadd.f32 0.0, %v3937
        %v3939 = vpop.f32.mrf.mxu0
        %v3940 = vadd.f32 0.0, %v3939
        %v3941 = vpop.f32.mrf.mxu0
        %v3942 = vpop.f32.mrf.mxu0
        %3943 = vdwg.mxu0
        %3944 = vmatprep.subr.bf16.mxu0 0
        %3945 = vmatpush1.bf16.msra.mxu0 0
        %3946 = vmatprep.subr.bf16.mxu0 0
        %3947 = vmatpush1.bf16.msra.mxu0 0
        %3948 = vmatprep.subr.bf16.mxu0 0
        %3949 = vmatpush1.bf16.msra.mxu0 0
        %3950 = vmatprep.subr.bf16.mxu0 0
        %3951 = vmatpush1.bf16.msra.mxu0 0
        %3952 = vmatprep.subr.bf16.mxu0 0
        %3953 = vmatpush1.bf16.msra.mxu0 0
        %3954 = vmatprep.subr.bf16.mxu0 0
        %3955 = vmatpush1.bf16.msra.mxu0 0
        %3956 = vmatprep.subr.bf16.mxu0 0
        %3957 = vmatpush1.bf16.msra.mxu0 0
        %3958 = vmatprep.subr.bf16.mxu0 %v3901
        %3959 = vmatpush1.bf16.msra.mxu0 %v3898
        %3960 = vmatprep.subr.bf16.mxu0 0
        %3961 = vmatpush2.bf16.msra.mxu0 0
        %3962 = vmatprep.subr.bf16.mxu0 0
        %3963 = vmatpush2.bf16.msra.mxu0 0
        %3964 = vmatprep.subr.bf16.mxu0 0
        %3965 = vmatpush2.bf16.msra.mxu0 0
        %3966 = vmatprep.subr.bf16.mxu0 0
        %3967 = vmatpush2.bf16.msra.mxu0 0
        %3968 = vmatprep.subr.bf16.mxu0 0
        %3969 = vmatpush2.bf16.msra.mxu0 0
        %3970 = vmatprep.subr.bf16.mxu0 0
        %3971 = vmatpush2.bf16.msra.mxu0 0
        %3972 = vmatprep.subr.bf16.mxu0 0
        %3973 = vmatpush2.bf16.msra.mxu0 0
        %3974 = vmatprep.subr.bf16.mxu0 0
        %3975 = vmatpush2.bf16.msra.mxu0 0
        %3976 = vmatprep.mubr.bf16.mxu0 0
        %3977 = vmatmul.mubr.bf16.gmra.mxu0 %v3889
        %v3978 = vpop.f32.mrf.mxu0
        %v3979 = vadd.f32 0.0, %v3978
        %v3980 = vpop.f32.mrf.mxu0
        %v3981 = vadd.f32 0.0, %v3980
        %v3982 = vpop.f32.mrf.mxu0
        %v3983 = vpop.f32.mrf.mxu0
        %3984 = vdwg.mxu0
        %v3985 = vadd.f32 %v3867, %v3938
        %v3986 = vadd.f32 %v3868, %v3940
        %v3987 = vadd.f32 %v3869, %v3979
        %v3988 = vadd.f32 %v3870, %v3981
        %s3989 = scalar_lea.vmem %s1, 132
        %v3990 = vld [vmem:[%s3989] sm:$0xf]
        %3991 = vrot.lane.b32.xlu0 %v3396, 27
        %v3992 = vpop.permute.xlu0 %3991
        %3993 = vrot.lane.b32.xlu0 %v3397, 27
        %v3994 = vpop.permute.xlu0 %3993
        %3995 = vrot.lane.b32.xlu0 %v3398, 27
        %v3996 = vpop.permute.xlu0 %3995
        %3997 = vrot.lane.b32.xlu0 %v3399, 27
        %v3998 = vpop.permute.xlu0 %3997
        %3999 = vrot.lane.b32.xlu0 %v3400, 27
        %v4000 = vpop.permute.xlu0 %3999
        %vm4001 = vcmask 220160
        %v4002 = vsel %vm4001, %v3992, %v3994
        %v4003 = vsel %vm4001, %v3994, %v3996
        %v4004 = vsel %vm4001, %v3996, %v3998
        %v4005 = vsel %vm4001, %v3998, %v4000
        %v4007 = vsel %vm197, %v3990, 0
        %v4010 = vsel %vm201, %v4002, 0
        %v4013 = vsel %vm201, %v4003, 0
        %v4016 = vsel %vm201, %v4004, 0
        %v4019 = vsel %vm201, %v4005, 0
        %4021 = vmatprep.subr.bf16.mxu0 0
        %4022 = vmatpush1.bf16.msra.mxu0 0
        %4023 = vmatprep.subr.bf16.mxu0 0
        %4024 = vmatpush1.bf16.msra.mxu0 0
        %4025 = vmatprep.subr.bf16.mxu0 0
        %4026 = vmatpush1.bf16.msra.mxu0 0
        %4027 = vmatprep.subr.bf16.mxu0 0
        %4028 = vmatpush1.bf16.msra.mxu0 0
        %4029 = vmatprep.subr.bf16.mxu0 0
        %4030 = vmatpush1.bf16.msra.mxu0 0
        %4031 = vmatprep.subr.bf16.mxu0 0
        %4032 = vmatpush1.bf16.msra.mxu0 0
        %4033 = vmatprep.subr.bf16.mxu0 0
        %4034 = vmatpush1.bf16.msra.mxu0 0
        %4035 = vmatprep.subr.bf16.mxu0 %v4013
        %4036 = vmatpush1.bf16.msra.mxu0 %v4010
        %4037 = vmatprep.subr.bf16.mxu0 0
        %4038 = vmatpush2.bf16.msra.mxu0 0
        %4039 = vmatprep.subr.bf16.mxu0 0
        %4040 = vmatpush2.bf16.msra.mxu0 0
        %4041 = vmatprep.subr.bf16.mxu0 0
        %4042 = vmatpush2.bf16.msra.mxu0 0
        %4043 = vmatprep.subr.bf16.mxu0 0
        %4044 = vmatpush2.bf16.msra.mxu0 0
        %4045 = vmatprep.subr.bf16.mxu0 0
        %4046 = vmatpush2.bf16.msra.mxu0 0
        %4047 = vmatprep.subr.bf16.mxu0 0
        %4048 = vmatpush2.bf16.msra.mxu0 0
        %4049 = vmatprep.subr.bf16.mxu0 0
        %4050 = vmatpush2.bf16.msra.mxu0 0
        %4051 = vmatprep.subr.bf16.mxu0 0
        %4052 = vmatpush2.bf16.msra.mxu0 0
        %4053 = vmatprep.mubr.bf16.mxu0 0
        %4054 = vmatmul.mubr.bf16.gmra.mxu0 %v4007
        %v4055 = vpop.f32.mrf.mxu0
        %v4056 = vadd.f32 0.0, %v4055
        %v4057 = vpop.f32.mrf.mxu0
        %v4058 = vadd.f32 0.0, %v4057
        %v4059 = vpop.f32.mrf.mxu0
        %v4060 = vpop.f32.mrf.mxu0
        %4061 = vdwg.mxu0
        %4062 = vmatprep.subr.bf16.mxu0 0
        %4063 = vmatpush1.bf16.msra.mxu0 0
        %4064 = vmatprep.subr.bf16.mxu0 0
        %4065 = vmatpush1.bf16.msra.mxu0 0
        %4066 = vmatprep.subr.bf16.mxu0 0
        %4067 = vmatpush1.bf16.msra.mxu0 0
        %4068 = vmatprep.subr.bf16.mxu0 0
        %4069 = vmatpush1.bf16.msra.mxu0 0
        %4070 = vmatprep.subr.bf16.mxu0 0
        %4071 = vmatpush1.bf16.msra.mxu0 0
        %4072 = vmatprep.subr.bf16.mxu0 0
        %4073 = vmatpush1.bf16.msra.mxu0 0
        %4074 = vmatprep.subr.bf16.mxu0 0
        %4075 = vmatpush1.bf16.msra.mxu0 0
        %4076 = vmatprep.subr.bf16.mxu0 %v4019
        %4077 = vmatpush1.bf16.msra.mxu0 %v4016
        %4078 = vmatprep.subr.bf16.mxu0 0
        %4079 = vmatpush2.bf16.msra.mxu0 0
        %4080 = vmatprep.subr.bf16.mxu0 0
        %4081 = vmatpush2.bf16.msra.mxu0 0
        %4082 = vmatprep.subr.bf16.mxu0 0
        %4083 = vmatpush2.bf16.msra.mxu0 0
        %4084 = vmatprep.subr.bf16.mxu0 0
        %4085 = vmatpush2.bf16.msra.mxu0 0
        %4086 = vmatprep.subr.bf16.mxu0 0
        %4087 = vmatpush2.bf16.msra.mxu0 0
        %4088 = vmatprep.subr.bf16.mxu0 0
        %4089 = vmatpush2.bf16.msra.mxu0 0
        %4090 = vmatprep.subr.bf16.mxu0 0
        %4091 = vmatpush2.bf16.msra.mxu0 0
        %4092 = vmatprep.subr.bf16.mxu0 0
        %4093 = vmatpush2.bf16.msra.mxu0 0
        %4094 = vmatprep.mubr.bf16.mxu0 0
        %4095 = vmatmul.mubr.bf16.gmra.mxu0 %v4007
        %v4096 = vpop.f32.mrf.mxu0
        %v4097 = vadd.f32 0.0, %v4096
        %v4098 = vpop.f32.mrf.mxu0
        %v4099 = vadd.f32 0.0, %v4098
        %v4100 = vpop.f32.mrf.mxu0
        %v4101 = vpop.f32.mrf.mxu0
        %4102 = vdwg.mxu0
        %v4103 = vadd.f32 %v3985, %v4056
        %v4104 = vadd.f32 %v3986, %v4058
        %v4105 = vadd.f32 %v3987, %v4097
        %v4106 = vadd.f32 %v3988, %v4099
        %s4107 = scalar_lea.vmem %s1, 136
        %v4108 = vld [vmem:[%s4107] sm:$0xf]
        %4109 = vrot.lane.b32.xlu0 %v3396, 26
        %v4110 = vpop.permute.xlu0 %4109
        %4111 = vrot.lane.b32.xlu0 %v3397, 26
        %v4112 = vpop.permute.xlu0 %4111
        %4113 = vrot.lane.b32.xlu0 %v3398, 26
        %v4114 = vpop.permute.xlu0 %4113
        %4115 = vrot.lane.b32.xlu0 %v3399, 26
        %v4116 = vpop.permute.xlu0 %4115
        %4117 = vrot.lane.b32.xlu0 %v3400, 26
        %v4118 = vpop.permute.xlu0 %4117
        %vm4119 = vcmask 211968
        %v4120 = vsel %vm4119, %v4110, %v4112
        %v4121 = vsel %vm4119, %v4112, %v4114
        %v4122 = vsel %vm4119, %v4114, %v4116
        %v4123 = vsel %vm4119, %v4116, %v4118
        %v4125 = vsel %vm197, %v4108, 0
        %v4128 = vsel %vm201, %v4120, 0
        %v4131 = vsel %vm201, %v4121, 0
        %v4134 = vsel %vm201, %v4122, 0
        %v4137 = vsel %vm201, %v4123, 0
        %4139 = vmatprep.subr.bf16.mxu0 0
        %4140 = vmatpush1.bf16.msra.mxu0 0
        %4141 = vmatprep.subr.bf16.mxu0 0
        %4142 = vmatpush1.bf16.msra.mxu0 0
        %4143 = vmatprep.subr.bf16.mxu0 0
        %4144 = vmatpush1.bf16.msra.mxu0 0
        %4145 = vmatprep.subr.bf16.mxu0 0
        %4146 = vmatpush1.bf16.msra.mxu0 0
        %4147 = vmatprep.subr.bf16.mxu0 0
        %4148 = vmatpush1.bf16.msra.mxu0 0
        %4149 = vmatprep.subr.bf16.mxu0 0
        %4150 = vmatpush1.bf16.msra.mxu0 0
        %4151 = vmatprep.subr.bf16.mxu0 0
        %4152 = vmatpush1.bf16.msra.mxu0 0
        %4153 = vmatprep.subr.bf16.mxu0 %v4131
        %4154 = vmatpush1.bf16.msra.mxu0 %v4128
        %4155 = vmatprep.subr.bf16.mxu0 0
        %4156 = vmatpush2.bf16.msra.mxu0 0
        %4157 = vmatprep.subr.bf16.mxu0 0
        %4158 = vmatpush2.bf16.msra.mxu0 0
        %4159 = vmatprep.subr.bf16.mxu0 0
        %4160 = vmatpush2.bf16.msra.mxu0 0
        %4161 = vmatprep.subr.bf16.mxu0 0
        %4162 = vmatpush2.bf16.msra.mxu0 0
        %4163 = vmatprep.subr.bf16.mxu0 0
        %4164 = vmatpush2.bf16.msra.mxu0 0
        %4165 = vmatprep.subr.bf16.mxu0 0
        %4166 = vmatpush2.bf16.msra.mxu0 0
        %4167 = vmatprep.subr.bf16.mxu0 0
        %4168 = vmatpush2.bf16.msra.mxu0 0
        %4169 = vmatprep.subr.bf16.mxu0 0
        %4170 = vmatpush2.bf16.msra.mxu0 0
        %4171 = vmatprep.mubr.bf16.mxu0 0
        %4172 = vmatmul.mubr.bf16.gmra.mxu0 %v4125
        %v4173 = vpop.f32.mrf.mxu0
        %v4174 = vadd.f32 0.0, %v4173
        %v4175 = vpop.f32.mrf.mxu0
        %v4176 = vadd.f32 0.0, %v4175
        %v4177 = vpop.f32.mrf.mxu0
        %v4178 = vpop.f32.mrf.mxu0
        %4179 = vdwg.mxu0
        %4180 = vmatprep.subr.bf16.mxu0 0
        %4181 = vmatpush1.bf16.msra.mxu0 0
        %4182 = vmatprep.subr.bf16.mxu0 0
        %4183 = vmatpush1.bf16.msra.mxu0 0
        %4184 = vmatprep.subr.bf16.mxu0 0
        %4185 = vmatpush1.bf16.msra.mxu0 0
        %4186 = vmatprep.subr.bf16.mxu0 0
        %4187 = vmatpush1.bf16.msra.mxu0 0
        %4188 = vmatprep.subr.bf16.mxu0 0
        %4189 = vmatpush1.bf16.msra.mxu0 0
        %4190 = vmatprep.subr.bf16.mxu0 0
        %4191 = vmatpush1.bf16.msra.mxu0 0
        %4192 = vmatprep.subr.bf16.mxu0 0
        %4193 = vmatpush1.bf16.msra.mxu0 0
        %4194 = vmatprep.subr.bf16.mxu0 %v4137
        %4195 = vmatpush1.bf16.msra.mxu0 %v4134
        %4196 = vmatprep.subr.bf16.mxu0 0
        %4197 = vmatpush2.bf16.msra.mxu0 0
        %4198 = vmatprep.subr.bf16.mxu0 0
        %4199 = vmatpush2.bf16.msra.mxu0 0
        %4200 = vmatprep.subr.bf16.mxu0 0
        %4201 = vmatpush2.bf16.msra.mxu0 0
        %4202 = vmatprep.subr.bf16.mxu0 0
        %4203 = vmatpush2.bf16.msra.mxu0 0
        %4204 = vmatprep.subr.bf16.mxu0 0
        %4205 = vmatpush2.bf16.msra.mxu0 0
        %4206 = vmatprep.subr.bf16.mxu0 0
        %4207 = vmatpush2.bf16.msra.mxu0 0
        %4208 = vmatprep.subr.bf16.mxu0 0
        %4209 = vmatpush2.bf16.msra.mxu0 0
        %4210 = vmatprep.subr.bf16.mxu0 0
        %4211 = vmatpush2.bf16.msra.mxu0 0
        %4212 = vmatprep.mubr.bf16.mxu0 0
        %4213 = vmatmul.mubr.bf16.gmra.mxu0 %v4125
        %v4214 = vpop.f32.mrf.mxu0
        %v4215 = vadd.f32 0.0, %v4214
        %v4216 = vpop.f32.mrf.mxu0
        %v4217 = vadd.f32 0.0, %v4216
        %v4218 = vpop.f32.mrf.mxu0
        %v4219 = vpop.f32.mrf.mxu0
        %4220 = vdwg.mxu0
        %v4221 = vadd.f32 %v4103, %v4174
        %v4222 = vadd.f32 %v4104, %v4176
        %v4223 = vadd.f32 %v4105, %v4215
        %v4224 = vadd.f32 %v4106, %v4217
        %s4225 = scalar_lea.vmem %s1, 140
        %v4226 = vld [vmem:[%s4225] sm:$0xf]
        %4227 = vrot.lane.b32.xlu0 %v3396, 8
        %v4228 = vpop.permute.xlu0 %4227
        %4229 = vrot.lane.b32.xlu0 %v3397, 8
        %v4230 = vpop.permute.xlu0 %4229
        %4231 = vrot.lane.b32.xlu0 %v3398, 8
        %v4232 = vpop.permute.xlu0 %4231
        %4233 = vrot.lane.b32.xlu0 %v3399, 8
        %v4234 = vpop.permute.xlu0 %4233
        %4235 = vrot.lane.b32.xlu0 %v3400, 8
        %v4236 = vpop.permute.xlu0 %4235
        %vm4237 = vcmask 64512
        %v4238 = vsel %vm4237, %v4228, %v4230
        %v4239 = vsel %vm4237, %v4230, %v4232
        %v4240 = vsel %vm4237, %v4232, %v4234
        %v4241 = vsel %vm4237, %v4234, %v4236
        %v4243 = vsel %vm197, %v4226, 0
        %v4246 = vsel %vm201, %v4238, 0
        %v4249 = vsel %vm201, %v4239, 0
        %v4252 = vsel %vm201, %v4240, 0
        %v4255 = vsel %vm201, %v4241, 0
        %4257 = vmatprep.subr.bf16.mxu0 0
        %4258 = vmatpush1.bf16.msra.mxu0 0
        %4259 = vmatprep.subr.bf16.mxu0 0
        %4260 = vmatpush1.bf16.msra.mxu0 0
        %4261 = vmatprep.subr.bf16.mxu0 0
        %4262 = vmatpush1.bf16.msra.mxu0 0
        %4263 = vmatprep.subr.bf16.mxu0 0
        %4264 = vmatpush1.bf16.msra.mxu0 0
        %4265 = vmatprep.subr.bf16.mxu0 0
        %4266 = vmatpush1.bf16.msra.mxu0 0
        %4267 = vmatprep.subr.bf16.mxu0 0
        %4268 = vmatpush1.bf16.msra.mxu0 0
        %4269 = vmatprep.subr.bf16.mxu0 0
        %4270 = vmatpush1.bf16.msra.mxu0 0
        %4271 = vmatprep.subr.bf16.mxu0 %v4249
        %4272 = vmatpush1.bf16.msra.mxu0 %v4246
        %4273 = vmatprep.subr.bf16.mxu0 0
        %4274 = vmatpush2.bf16.msra.mxu0 0
        %4275 = vmatprep.subr.bf16.mxu0 0
        %4276 = vmatpush2.bf16.msra.mxu0 0
        %4277 = vmatprep.subr.bf16.mxu0 0
        %4278 = vmatpush2.bf16.msra.mxu0 0
        %4279 = vmatprep.subr.bf16.mxu0 0
        %4280 = vmatpush2.bf16.msra.mxu0 0
        %4281 = vmatprep.subr.bf16.mxu0 0
        %4282 = vmatpush2.bf16.msra.mxu0 0
        %4283 = vmatprep.subr.bf16.mxu0 0
        %4284 = vmatpush2.bf16.msra.mxu0 0
        %4285 = vmatprep.subr.bf16.mxu0 0
        %4286 = vmatpush2.bf16.msra.mxu0 0
        %4287 = vmatprep.subr.bf16.mxu0 0
        %4288 = vmatpush2.bf16.msra.mxu0 0
        %4289 = vmatprep.mubr.bf16.mxu0 0
        %4290 = vmatmul.mubr.bf16.gmra.mxu0 %v4243
        %v4291 = vpop.f32.mrf.mxu0
        %v4292 = vadd.f32 0.0, %v4291
        %v4293 = vpop.f32.mrf.mxu0
        %v4294 = vadd.f32 0.0, %v4293
        %v4295 = vpop.f32.mrf.mxu0
        %v4296 = vpop.f32.mrf.mxu0
        %4297 = vdwg.mxu0
        %4298 = vmatprep.subr.bf16.mxu0 0
        %4299 = vmatpush1.bf16.msra.mxu0 0
        %4300 = vmatprep.subr.bf16.mxu0 0
        %4301 = vmatpush1.bf16.msra.mxu0 0
        %4302 = vmatprep.subr.bf16.mxu0 0
        %4303 = vmatpush1.bf16.msra.mxu0 0
        %4304 = vmatprep.subr.bf16.mxu0 0
        %4305 = vmatpush1.bf16.msra.mxu0 0
        %4306 = vmatprep.subr.bf16.mxu0 0
        %4307 = vmatpush1.bf16.msra.mxu0 0
        %4308 = vmatprep.subr.bf16.mxu0 0
        %4309 = vmatpush1.bf16.msra.mxu0 0
        %4310 = vmatprep.subr.bf16.mxu0 0
        %4311 = vmatpush1.bf16.msra.mxu0 0
        %4312 = vmatprep.subr.bf16.mxu0 %v4255
        %4313 = vmatpush1.bf16.msra.mxu0 %v4252
        %4314 = vmatprep.subr.bf16.mxu0 0
        %4315 = vmatpush2.bf16.msra.mxu0 0
        %4316 = vmatprep.subr.bf16.mxu0 0
        %4317 = vmatpush2.bf16.msra.mxu0 0
        %4318 = vmatprep.subr.bf16.mxu0 0
        %4319 = vmatpush2.bf16.msra.mxu0 0
        %4320 = vmatprep.subr.bf16.mxu0 0
        %4321 = vmatpush2.bf16.msra.mxu0 0
        %4322 = vmatprep.subr.bf16.mxu0 0
        %4323 = vmatpush2.bf16.msra.mxu0 0
        %4324 = vmatprep.subr.bf16.mxu0 0
        %4325 = vmatpush2.bf16.msra.mxu0 0
        %4326 = vmatprep.subr.bf16.mxu0 0
        %4327 = vmatpush2.bf16.msra.mxu0 0
        %4328 = vmatprep.subr.bf16.mxu0 0
        %4329 = vmatpush2.bf16.msra.mxu0 0
        %4330 = vmatprep.mubr.bf16.mxu0 0
        %4331 = vmatmul.mubr.bf16.gmra.mxu0 %v4243
        %v4332 = vpop.f32.mrf.mxu0
        %v4333 = vadd.f32 0.0, %v4332
        %v4334 = vpop.f32.mrf.mxu0
        %v4335 = vadd.f32 0.0, %v4334
        %v4336 = vpop.f32.mrf.mxu0
        %v4337 = vpop.f32.mrf.mxu0
        %4338 = vdwg.mxu0
        %v4339 = vadd.f32 %v4221, %v4292
        %v4340 = vadd.f32 %v4222, %v4294
        %v4341 = vadd.f32 %v4223, %v4333
        %v4342 = vadd.f32 %v4224, %v4335
        %s4343 = scalar_lea.vmem %s1, 144
        %v4344 = vld [vmem:[%s4343] sm:$0xf]
        %4345 = vrot.lane.b32.xlu0 %v3396, 7
        %v4346 = vpop.permute.xlu0 %4345
        %4347 = vrot.lane.b32.xlu0 %v3397, 7
        %v4348 = vpop.permute.xlu0 %4347
        %4349 = vrot.lane.b32.xlu0 %v3398, 7
        %v4350 = vpop.permute.xlu0 %4349
        %4351 = vrot.lane.b32.xlu0 %v3399, 7
        %v4352 = vpop.permute.xlu0 %4351
        %4353 = vrot.lane.b32.xlu0 %v3400, 7
        %v4354 = vpop.permute.xlu0 %4353
        %vm4355 = vcmask 56320
        %v4356 = vsel %vm4355, %v4346, %v4348
        %v4357 = vsel %vm4355, %v4348, %v4350
        %v4358 = vsel %vm4355, %v4350, %v4352
        %v4359 = vsel %vm4355, %v4352, %v4354
        %v4361 = vsel %vm197, %v4344, 0
        %v4364 = vsel %vm201, %v4356, 0
        %v4367 = vsel %vm201, %v4357, 0
        %v4370 = vsel %vm201, %v4358, 0
        %v4373 = vsel %vm201, %v4359, 0
        %4375 = vmatprep.subr.bf16.mxu0 0
        %4376 = vmatpush1.bf16.msra.mxu0 0
        %4377 = vmatprep.subr.bf16.mxu0 0
        %4378 = vmatpush1.bf16.msra.mxu0 0
        %4379 = vmatprep.subr.bf16.mxu0 0
        %4380 = vmatpush1.bf16.msra.mxu0 0
        %4381 = vmatprep.subr.bf16.mxu0 0
        %4382 = vmatpush1.bf16.msra.mxu0 0
        %4383 = vmatprep.subr.bf16.mxu0 0
        %4384 = vmatpush1.bf16.msra.mxu0 0
        %4385 = vmatprep.subr.bf16.mxu0 0
        %4386 = vmatpush1.bf16.msra.mxu0 0
        %4387 = vmatprep.subr.bf16.mxu0 0
        %4388 = vmatpush1.bf16.msra.mxu0 0
        %4389 = vmatprep.subr.bf16.mxu0 %v4367
        %4390 = vmatpush1.bf16.msra.mxu0 %v4364
        %4391 = vmatprep.subr.bf16.mxu0 0
        %4392 = vmatpush2.bf16.msra.mxu0 0
        %4393 = vmatprep.subr.bf16.mxu0 0
        %4394 = vmatpush2.bf16.msra.mxu0 0
        %4395 = vmatprep.subr.bf16.mxu0 0
        %4396 = vmatpush2.bf16.msra.mxu0 0
        %4397 = vmatprep.subr.bf16.mxu0 0
        %4398 = vmatpush2.bf16.msra.mxu0 0
        %4399 = vmatprep.subr.bf16.mxu0 0
        %4400 = vmatpush2.bf16.msra.mxu0 0
        %4401 = vmatprep.subr.bf16.mxu0 0
        %4402 = vmatpush2.bf16.msra.mxu0 0
        %4403 = vmatprep.subr.bf16.mxu0 0
        %4404 = vmatpush2.bf16.msra.mxu0 0
        %4405 = vmatprep.subr.bf16.mxu0 0
        %4406 = vmatpush2.bf16.msra.mxu0 0
        %4407 = vmatprep.mubr.bf16.mxu0 0
        %4408 = vmatmul.mubr.bf16.gmra.mxu0 %v4361
        %v4409 = vpop.f32.mrf.mxu0
        %v4410 = vadd.f32 0.0, %v4409
        %v4411 = vpop.f32.mrf.mxu0
        %v4412 = vadd.f32 0.0, %v4411
        %v4413 = vpop.f32.mrf.mxu0
        %v4414 = vpop.f32.mrf.mxu0
        %4415 = vdwg.mxu0
        %4416 = vmatprep.subr.bf16.mxu0 0
        %4417 = vmatpush1.bf16.msra.mxu0 0
        %4418 = vmatprep.subr.bf16.mxu0 0
        %4419 = vmatpush1.bf16.msra.mxu0 0
        %4420 = vmatprep.subr.bf16.mxu0 0
        %4421 = vmatpush1.bf16.msra.mxu0 0
        %4422 = vmatprep.subr.bf16.mxu0 0
        %4423 = vmatpush1.bf16.msra.mxu0 0
        %4424 = vmatprep.subr.bf16.mxu0 0
        %4425 = vmatpush1.bf16.msra.mxu0 0
        %4426 = vmatprep.subr.bf16.mxu0 0
        %4427 = vmatpush1.bf16.msra.mxu0 0
        %4428 = vmatprep.subr.bf16.mxu0 0
        %4429 = vmatpush1.bf16.msra.mxu0 0
        %4430 = vmatprep.subr.bf16.mxu0 %v4373
        %4431 = vmatpush1.bf16.msra.mxu0 %v4370
        %4432 = vmatprep.subr.bf16.mxu0 0
        %4433 = vmatpush2.bf16.msra.mxu0 0
        %4434 = vmatprep.subr.bf16.mxu0 0
        %4435 = vmatpush2.bf16.msra.mxu0 0
        %4436 = vmatprep.subr.bf16.mxu0 0
        %4437 = vmatpush2.bf16.msra.mxu0 0
        %4438 = vmatprep.subr.bf16.mxu0 0
        %4439 = vmatpush2.bf16.msra.mxu0 0
        %4440 = vmatprep.subr.bf16.mxu0 0
        %4441 = vmatpush2.bf16.msra.mxu0 0
        %4442 = vmatprep.subr.bf16.mxu0 0
        %4443 = vmatpush2.bf16.msra.mxu0 0
        %4444 = vmatprep.subr.bf16.mxu0 0
        %4445 = vmatpush2.bf16.msra.mxu0 0
        %4446 = vmatprep.subr.bf16.mxu0 0
        %4447 = vmatpush2.bf16.msra.mxu0 0
        %4448 = vmatprep.mubr.bf16.mxu0 0
        %4449 = vmatmul.mubr.bf16.gmra.mxu0 %v4361
        %v4450 = vpop.f32.mrf.mxu0
        %v4451 = vadd.f32 0.0, %v4450
        %v4452 = vpop.f32.mrf.mxu0
        %v4453 = vadd.f32 0.0, %v4452
        %v4454 = vpop.f32.mrf.mxu0
        %v4455 = vpop.f32.mrf.mxu0
        %4456 = vdwg.mxu0
        %v4457 = vadd.f32 %v4339, %v4410
        %v4458 = vadd.f32 %v4340, %v4412
        %v4459 = vadd.f32 %v4341, %v4451
        %v4460 = vadd.f32 %v4342, %v4453
        %s4461 = scalar_lea.vmem %s1, 148
        %v4462 = vld [vmem:[%s4461] sm:$0xf]
        %4463 = vrot.lane.b32.xlu0 %v3396, 6
        %v4464 = vpop.permute.xlu0 %4463
        %4465 = vrot.lane.b32.xlu0 %v3397, 6
        %v4466 = vpop.permute.xlu0 %4465
        %4467 = vrot.lane.b32.xlu0 %v3398, 6
        %v4468 = vpop.permute.xlu0 %4467
        %4469 = vrot.lane.b32.xlu0 %v3399, 6
        %v4470 = vpop.permute.xlu0 %4469
        %4471 = vrot.lane.b32.xlu0 %v3400, 6
        %v4472 = vpop.permute.xlu0 %4471
        %vm4473 = vcmask 48128
        %v4474 = vsel %vm4473, %v4464, %v4466
        %v4475 = vsel %vm4473, %v4466, %v4468
        %v4476 = vsel %vm4473, %v4468, %v4470
        %v4477 = vsel %vm4473, %v4470, %v4472
        %v4479 = vsel %vm197, %v4462, 0
        %v4482 = vsel %vm201, %v4474, 0
        %v4485 = vsel %vm201, %v4475, 0
        %v4488 = vsel %vm201, %v4476, 0
        %v4491 = vsel %vm201, %v4477, 0
        %4493 = vmatprep.subr.bf16.mxu0 0
        %4494 = vmatpush1.bf16.msra.mxu0 0
        %4495 = vmatprep.subr.bf16.mxu0 0
        %4496 = vmatpush1.bf16.msra.mxu0 0
        %4497 = vmatprep.subr.bf16.mxu0 0
        %4498 = vmatpush1.bf16.msra.mxu0 0
        %4499 = vmatprep.subr.bf16.mxu0 0
        %4500 = vmatpush1.bf16.msra.mxu0 0
        %4501 = vmatprep.subr.bf16.mxu0 0
        %4502 = vmatpush1.bf16.msra.mxu0 0
        %4503 = vmatprep.subr.bf16.mxu0 0
        %4504 = vmatpush1.bf16.msra.mxu0 0
        %4505 = vmatprep.subr.bf16.mxu0 0
        %4506 = vmatpush1.bf16.msra.mxu0 0
        %4507 = vmatprep.subr.bf16.mxu0 %v4485
        %4508 = vmatpush1.bf16.msra.mxu0 %v4482
        %4509 = vmatprep.subr.bf16.mxu0 0
        %4510 = vmatpush2.bf16.msra.mxu0 0
        %4511 = vmatprep.subr.bf16.mxu0 0
        %4512 = vmatpush2.bf16.msra.mxu0 0
        %4513 = vmatprep.subr.bf16.mxu0 0
        %4514 = vmatpush2.bf16.msra.mxu0 0
        %4515 = vmatprep.subr.bf16.mxu0 0
        %4516 = vmatpush2.bf16.msra.mxu0 0
        %4517 = vmatprep.subr.bf16.mxu0 0
        %4518 = vmatpush2.bf16.msra.mxu0 0
        %4519 = vmatprep.subr.bf16.mxu0 0
        %4520 = vmatpush2.bf16.msra.mxu0 0
        %4521 = vmatprep.subr.bf16.mxu0 0
        %4522 = vmatpush2.bf16.msra.mxu0 0
        %4523 = vmatprep.subr.bf16.mxu0 0
        %4524 = vmatpush2.bf16.msra.mxu0 0
        %4525 = vmatprep.mubr.bf16.mxu0 0
        %4526 = vmatmul.mubr.bf16.gmra.mxu0 %v4479
        %v4527 = vpop.f32.mrf.mxu0
        %v4528 = vadd.f32 0.0, %v4527
        %v4529 = vpop.f32.mrf.mxu0
        %v4530 = vadd.f32 0.0, %v4529
        %v4531 = vpop.f32.mrf.mxu0
        %v4532 = vpop.f32.mrf.mxu0
        %4533 = vdwg.mxu0
        %4534 = vmatprep.subr.bf16.mxu0 0
        %4535 = vmatpush1.bf16.msra.mxu0 0
        %4536 = vmatprep.subr.bf16.mxu0 0
        %4537 = vmatpush1.bf16.msra.mxu0 0
        %4538 = vmatprep.subr.bf16.mxu0 0
        %4539 = vmatpush1.bf16.msra.mxu0 0
        %4540 = vmatprep.subr.bf16.mxu0 0
        %4541 = vmatpush1.bf16.msra.mxu0 0
        %4542 = vmatprep.subr.bf16.mxu0 0
        %4543 = vmatpush1.bf16.msra.mxu0 0
        %4544 = vmatprep.subr.bf16.mxu0 0
        %4545 = vmatpush1.bf16.msra.mxu0 0
        %4546 = vmatprep.subr.bf16.mxu0 0
        %4547 = vmatpush1.bf16.msra.mxu0 0
        %4548 = vmatprep.subr.bf16.mxu0 %v4491
        %4549 = vmatpush1.bf16.msra.mxu0 %v4488
        %4550 = vmatprep.subr.bf16.mxu0 0
        %4551 = vmatpush2.bf16.msra.mxu0 0
        %4552 = vmatprep.subr.bf16.mxu0 0
        %4553 = vmatpush2.bf16.msra.mxu0 0
        %4554 = vmatprep.subr.bf16.mxu0 0
        %4555 = vmatpush2.bf16.msra.mxu0 0
        %4556 = vmatprep.subr.bf16.mxu0 0
        %4557 = vmatpush2.bf16.msra.mxu0 0
        %4558 = vmatprep.subr.bf16.mxu0 0
        %4559 = vmatpush2.bf16.msra.mxu0 0
        %4560 = vmatprep.subr.bf16.mxu0 0
        %4561 = vmatpush2.bf16.msra.mxu0 0
        %4562 = vmatprep.subr.bf16.mxu0 0
        %4563 = vmatpush2.bf16.msra.mxu0 0
        %4564 = vmatprep.subr.bf16.mxu0 0
        %4565 = vmatpush2.bf16.msra.mxu0 0
        %4566 = vmatprep.mubr.bf16.mxu0 0
        %4567 = vmatmul.mubr.bf16.gmra.mxu0 %v4479
        %v4568 = vpop.f32.mrf.mxu0
        %v4569 = vadd.f32 0.0, %v4568
        %v4570 = vpop.f32.mrf.mxu0
        %v4571 = vadd.f32 0.0, %v4570
        %v4572 = vpop.f32.mrf.mxu0
        %v4573 = vpop.f32.mrf.mxu0
        %4574 = vdwg.mxu0
        %v4575 = vadd.f32 %v4457, %v4528
        %v4576 = vadd.f32 %v4458, %v4530
        %v4577 = vadd.f32 %v4459, %v4569
        %v4578 = vadd.f32 %v4460, %v4571
        %s4579 = scalar_lea.vmem %s1, 152
        %v4580 = vld [vmem:[%s4579] sm:$0xf]
        %4581 = vrot.lane.b32.xlu0 %v3396, 5
        %v4582 = vpop.permute.xlu0 %4581
        %4583 = vrot.lane.b32.xlu0 %v3397, 5
        %v4584 = vpop.permute.xlu0 %4583
        %4585 = vrot.lane.b32.xlu0 %v3398, 5
        %v4586 = vpop.permute.xlu0 %4585
        %4587 = vrot.lane.b32.xlu0 %v3399, 5
        %v4588 = vpop.permute.xlu0 %4587
        %4589 = vrot.lane.b32.xlu0 %v3400, 5
        %v4590 = vpop.permute.xlu0 %4589
        %vm4591 = vcmask 39936
        %v4592 = vsel %vm4591, %v4582, %v4584
        %v4593 = vsel %vm4591, %v4584, %v4586
        %v4594 = vsel %vm4591, %v4586, %v4588
        %v4595 = vsel %vm4591, %v4588, %v4590
        %v4597 = vsel %vm197, %v4580, 0
        %v4600 = vsel %vm201, %v4592, 0
        %v4603 = vsel %vm201, %v4593, 0
        %v4606 = vsel %vm201, %v4594, 0
        %v4609 = vsel %vm201, %v4595, 0
        %4611 = vmatprep.subr.bf16.mxu0 0
        %4612 = vmatpush1.bf16.msra.mxu0 0
        %4613 = vmatprep.subr.bf16.mxu0 0
        %4614 = vmatpush1.bf16.msra.mxu0 0
        %4615 = vmatprep.subr.bf16.mxu0 0
        %4616 = vmatpush1.bf16.msra.mxu0 0
        %4617 = vmatprep.subr.bf16.mxu0 0
        %4618 = vmatpush1.bf16.msra.mxu0 0
        %4619 = vmatprep.subr.bf16.mxu0 0
        %4620 = vmatpush1.bf16.msra.mxu0 0
        %4621 = vmatprep.subr.bf16.mxu0 0
        %4622 = vmatpush1.bf16.msra.mxu0 0
        %4623 = vmatprep.subr.bf16.mxu0 0
        %4624 = vmatpush1.bf16.msra.mxu0 0
        %4625 = vmatprep.subr.bf16.mxu0 %v4603
        %4626 = vmatpush1.bf16.msra.mxu0 %v4600
        %4627 = vmatprep.subr.bf16.mxu0 0
        %4628 = vmatpush2.bf16.msra.mxu0 0
        %4629 = vmatprep.subr.bf16.mxu0 0
        %4630 = vmatpush2.bf16.msra.mxu0 0
        %4631 = vmatprep.subr.bf16.mxu0 0
        %4632 = vmatpush2.bf16.msra.mxu0 0
        %4633 = vmatprep.subr.bf16.mxu0 0
        %4634 = vmatpush2.bf16.msra.mxu0 0
        %4635 = vmatprep.subr.bf16.mxu0 0
        %4636 = vmatpush2.bf16.msra.mxu0 0
        %4637 = vmatprep.subr.bf16.mxu0 0
        %4638 = vmatpush2.bf16.msra.mxu0 0
        %4639 = vmatprep.subr.bf16.mxu0 0
        %4640 = vmatpush2.bf16.msra.mxu0 0
        %4641 = vmatprep.subr.bf16.mxu0 0
        %4642 = vmatpush2.bf16.msra.mxu0 0
        %4643 = vmatprep.mubr.bf16.mxu0 0
        %4644 = vmatmul.mubr.bf16.gmra.mxu0 %v4597
        %v4645 = vpop.f32.mrf.mxu0
        %v4646 = vadd.f32 0.0, %v4645
        %v4647 = vpop.f32.mrf.mxu0
        %v4648 = vadd.f32 0.0, %v4647
        %v4649 = vpop.f32.mrf.mxu0
        %v4650 = vpop.f32.mrf.mxu0
        %4651 = vdwg.mxu0
        %4652 = vmatprep.subr.bf16.mxu0 0
        %4653 = vmatpush1.bf16.msra.mxu0 0
        %4654 = vmatprep.subr.bf16.mxu0 0
        %4655 = vmatpush1.bf16.msra.mxu0 0
        %4656 = vmatprep.subr.bf16.mxu0 0
        %4657 = vmatpush1.bf16.msra.mxu0 0
        %4658 = vmatprep.subr.bf16.mxu0 0
        %4659 = vmatpush1.bf16.msra.mxu0 0
        %4660 = vmatprep.subr.bf16.mxu0 0
        %4661 = vmatpush1.bf16.msra.mxu0 0
        %4662 = vmatprep.subr.bf16.mxu0 0
        %4663 = vmatpush1.bf16.msra.mxu0 0
        %4664 = vmatprep.subr.bf16.mxu0 0
        %4665 = vmatpush1.bf16.msra.mxu0 0
        %4666 = vmatprep.subr.bf16.mxu0 %v4609
        %4667 = vmatpush1.bf16.msra.mxu0 %v4606
        %4668 = vmatprep.subr.bf16.mxu0 0
        %4669 = vmatpush2.bf16.msra.mxu0 0
        %4670 = vmatprep.subr.bf16.mxu0 0
        %4671 = vmatpush2.bf16.msra.mxu0 0
        %4672 = vmatprep.subr.bf16.mxu0 0
        %4673 = vmatpush2.bf16.msra.mxu0 0
        %4674 = vmatprep.subr.bf16.mxu0 0
        %4675 = vmatpush2.bf16.msra.mxu0 0
        %4676 = vmatprep.subr.bf16.mxu0 0
        %4677 = vmatpush2.bf16.msra.mxu0 0
        %4678 = vmatprep.subr.bf16.mxu0 0
        %4679 = vmatpush2.bf16.msra.mxu0 0
        %4680 = vmatprep.subr.bf16.mxu0 0
        %4681 = vmatpush2.bf16.msra.mxu0 0
        %4682 = vmatprep.subr.bf16.mxu0 0
        %4683 = vmatpush2.bf16.msra.mxu0 0
        %4684 = vmatprep.mubr.bf16.mxu0 0
        %4685 = vmatmul.mubr.bf16.gmra.mxu0 %v4597
        %v4686 = vpop.f32.mrf.mxu0
        %v4687 = vadd.f32 0.0, %v4686
        %v4688 = vpop.f32.mrf.mxu0
        %v4689 = vadd.f32 0.0, %v4688
        %v4690 = vpop.f32.mrf.mxu0
        %v4691 = vpop.f32.mrf.mxu0
        %4692 = vdwg.mxu0
        %v4693 = vadd.f32 %v4575, %v4646
        %v4694 = vadd.f32 %v4576, %v4648
        %v4695 = vadd.f32 %v4577, %v4687
        %v4696 = vadd.f32 %v4578, %v4689
        %s4697 = scalar_lea.vmem %s1, 156
        %v4698 = vld [vmem:[%s4697] sm:$0xf]
        %4699 = vrot.lane.b32.xlu0 %v3396, 4
        %v4700 = vpop.permute.xlu0 %4699
        %4701 = vrot.lane.b32.xlu0 %v3397, 4
        %v4702 = vpop.permute.xlu0 %4701
        %4703 = vrot.lane.b32.xlu0 %v3398, 4
        %v4704 = vpop.permute.xlu0 %4703
        %4705 = vrot.lane.b32.xlu0 %v3399, 4
        %v4706 = vpop.permute.xlu0 %4705
        %4707 = vrot.lane.b32.xlu0 %v3400, 4
        %v4708 = vpop.permute.xlu0 %4707
        %vm4709 = vcmask 31744
        %v4710 = vsel %vm4709, %v4700, %v4702
        %v4711 = vsel %vm4709, %v4702, %v4704
        %v4712 = vsel %vm4709, %v4704, %v4706
        %v4713 = vsel %vm4709, %v4706, %v4708
        %v4715 = vsel %vm197, %v4698, 0
        %v4718 = vsel %vm201, %v4710, 0
        %v4721 = vsel %vm201, %v4711, 0
        %v4724 = vsel %vm201, %v4712, 0
        %v4727 = vsel %vm201, %v4713, 0
        %4729 = vmatprep.subr.bf16.mxu0 0
        %4730 = vmatpush1.bf16.msra.mxu0 0
        %4731 = vmatprep.subr.bf16.mxu0 0
        %4732 = vmatpush1.bf16.msra.mxu0 0
        %4733 = vmatprep.subr.bf16.mxu0 0
        %4734 = vmatpush1.bf16.msra.mxu0 0
        %4735 = vmatprep.subr.bf16.mxu0 0
        %4736 = vmatpush1.bf16.msra.mxu0 0
        %4737 = vmatprep.subr.bf16.mxu0 0
        %4738 = vmatpush1.bf16.msra.mxu0 0
        %4739 = vmatprep.subr.bf16.mxu0 0
        %4740 = vmatpush1.bf16.msra.mxu0 0
        %4741 = vmatprep.subr.bf16.mxu0 0
        %4742 = vmatpush1.bf16.msra.mxu0 0
        %4743 = vmatprep.subr.bf16.mxu0 %v4721
        %4744 = vmatpush1.bf16.msra.mxu0 %v4718
        %4745 = vmatprep.subr.bf16.mxu0 0
        %4746 = vmatpush2.bf16.msra.mxu0 0
        %4747 = vmatprep.subr.bf16.mxu0 0
        %4748 = vmatpush2.bf16.msra.mxu0 0
        %4749 = vmatprep.subr.bf16.mxu0 0
        %4750 = vmatpush2.bf16.msra.mxu0 0
        %4751 = vmatprep.subr.bf16.mxu0 0
        %4752 = vmatpush2.bf16.msra.mxu0 0
        %4753 = vmatprep.subr.bf16.mxu0 0
        %4754 = vmatpush2.bf16.msra.mxu0 0
        %4755 = vmatprep.subr.bf16.mxu0 0
        %4756 = vmatpush2.bf16.msra.mxu0 0
        %4757 = vmatprep.subr.bf16.mxu0 0
        %4758 = vmatpush2.bf16.msra.mxu0 0
        %4759 = vmatprep.subr.bf16.mxu0 0
        %4760 = vmatpush2.bf16.msra.mxu0 0
        %4761 = vmatprep.mubr.bf16.mxu0 0
        %4762 = vmatmul.mubr.bf16.gmra.mxu0 %v4715
        %v4763 = vpop.f32.mrf.mxu0
        %v4764 = vadd.f32 0.0, %v4763
        %v4765 = vpop.f32.mrf.mxu0
        %v4766 = vadd.f32 0.0, %v4765
        %v4767 = vpop.f32.mrf.mxu0
        %v4768 = vpop.f32.mrf.mxu0
        %4769 = vdwg.mxu0
        %4770 = vmatprep.subr.bf16.mxu0 0
        %4771 = vmatpush1.bf16.msra.mxu0 0
        %4772 = vmatprep.subr.bf16.mxu0 0
        %4773 = vmatpush1.bf16.msra.mxu0 0
        %4774 = vmatprep.subr.bf16.mxu0 0
        %4775 = vmatpush1.bf16.msra.mxu0 0
        %4776 = vmatprep.subr.bf16.mxu0 0
        %4777 = vmatpush1.bf16.msra.mxu0 0
        %4778 = vmatprep.subr.bf16.mxu0 0
        %4779 = vmatpush1.bf16.msra.mxu0 0
        %4780 = vmatprep.subr.bf16.mxu0 0
        %4781 = vmatpush1.bf16.msra.mxu0 0
        %4782 = vmatprep.subr.bf16.mxu0 0
        %4783 = vmatpush1.bf16.msra.mxu0 0
        %4784 = vmatprep.subr.bf16.mxu0 %v4727
        %4785 = vmatpush1.bf16.msra.mxu0 %v4724
        %4786 = vmatprep.subr.bf16.mxu0 0
        %4787 = vmatpush2.bf16.msra.mxu0 0
        %4788 = vmatprep.subr.bf16.mxu0 0
        %4789 = vmatpush2.bf16.msra.mxu0 0
        %4790 = vmatprep.subr.bf16.mxu0 0
        %4791 = vmatpush2.bf16.msra.mxu0 0
        %4792 = vmatprep.subr.bf16.mxu0 0
        %4793 = vmatpush2.bf16.msra.mxu0 0
        %4794 = vmatprep.subr.bf16.mxu0 0
        %4795 = vmatpush2.bf16.msra.mxu0 0
        %4796 = vmatprep.subr.bf16.mxu0 0
        %4797 = vmatpush2.bf16.msra.mxu0 0
        %4798 = vmatprep.subr.bf16.mxu0 0
        %4799 = vmatpush2.bf16.msra.mxu0 0
        %4800 = vmatprep.subr.bf16.mxu0 0
        %4801 = vmatpush2.bf16.msra.mxu0 0
        %4802 = vmatprep.mubr.bf16.mxu0 0
        %4803 = vmatmul.mubr.bf16.gmra.mxu0 %v4715
        %v4804 = vpop.f32.mrf.mxu0
        %v4805 = vadd.f32 0.0, %v4804
        %v4806 = vpop.f32.mrf.mxu0
        %v4807 = vadd.f32 0.0, %v4806
        %v4808 = vpop.f32.mrf.mxu0
        %v4809 = vpop.f32.mrf.mxu0
        %4810 = vdwg.mxu0
        %v4811 = vadd.f32 %v4693, %v4764
        %v4812 = vadd.f32 %v4694, %v4766
        %v4813 = vadd.f32 %v4695, %v4805
        %v4814 = vadd.f32 %v4696, %v4807
        %s4815 = scalar_lea.vmem %s1, 160
        %v4816 = vld [vmem:[%s4815] sm:$0xf]
        %4817 = vrot.lane.b32.xlu0 %v3396, 3
        %v4818 = vpop.permute.xlu0 %4817
        %4819 = vrot.lane.b32.xlu0 %v3397, 3
        %v4820 = vpop.permute.xlu0 %4819
        %4821 = vrot.lane.b32.xlu0 %v3398, 3
        %v4822 = vpop.permute.xlu0 %4821
        %4823 = vrot.lane.b32.xlu0 %v3399, 3
        %v4824 = vpop.permute.xlu0 %4823
        %4825 = vrot.lane.b32.xlu0 %v3400, 3
        %v4826 = vpop.permute.xlu0 %4825
        %vm4827 = vcmask 23552
        %v4828 = vsel %vm4827, %v4818, %v4820
        %v4829 = vsel %vm4827, %v4820, %v4822
        %v4830 = vsel %vm4827, %v4822, %v4824
        %v4831 = vsel %vm4827, %v4824, %v4826
        %v4833 = vsel %vm197, %v4816, 0
        %v4836 = vsel %vm201, %v4828, 0
        %v4839 = vsel %vm201, %v4829, 0
        %v4842 = vsel %vm201, %v4830, 0
        %v4845 = vsel %vm201, %v4831, 0
        %4847 = vmatprep.subr.bf16.mxu0 0
        %4848 = vmatpush1.bf16.msra.mxu0 0
        %4849 = vmatprep.subr.bf16.mxu0 0
        %4850 = vmatpush1.bf16.msra.mxu0 0
        %4851 = vmatprep.subr.bf16.mxu0 0
        %4852 = vmatpush1.bf16.msra.mxu0 0
        %4853 = vmatprep.subr.bf16.mxu0 0
        %4854 = vmatpush1.bf16.msra.mxu0 0
        %4855 = vmatprep.subr.bf16.mxu0 0
        %4856 = vmatpush1.bf16.msra.mxu0 0
        %4857 = vmatprep.subr.bf16.mxu0 0
        %4858 = vmatpush1.bf16.msra.mxu0 0
        %4859 = vmatprep.subr.bf16.mxu0 0
        %4860 = vmatpush1.bf16.msra.mxu0 0
        %4861 = vmatprep.subr.bf16.mxu0 %v4839
        %4862 = vmatpush1.bf16.msra.mxu0 %v4836
        %4863 = vmatprep.subr.bf16.mxu0 0
        %4864 = vmatpush2.bf16.msra.mxu0 0
        %4865 = vmatprep.subr.bf16.mxu0 0
        %4866 = vmatpush2.bf16.msra.mxu0 0
        %4867 = vmatprep.subr.bf16.mxu0 0
        %4868 = vmatpush2.bf16.msra.mxu0 0
        %4869 = vmatprep.subr.bf16.mxu0 0
        %4870 = vmatpush2.bf16.msra.mxu0 0
        %4871 = vmatprep.subr.bf16.mxu0 0
        %4872 = vmatpush2.bf16.msra.mxu0 0
        %4873 = vmatprep.subr.bf16.mxu0 0
        %4874 = vmatpush2.bf16.msra.mxu0 0
        %4875 = vmatprep.subr.bf16.mxu0 0
        %4876 = vmatpush2.bf16.msra.mxu0 0
        %4877 = vmatprep.subr.bf16.mxu0 0
        %4878 = vmatpush2.bf16.msra.mxu0 0
        %4879 = vmatprep.mubr.bf16.mxu0 0
        %4880 = vmatmul.mubr.bf16.gmra.mxu0 %v4833
        %v4881 = vpop.f32.mrf.mxu0
        %v4882 = vadd.f32 0.0, %v4881
        %v4883 = vpop.f32.mrf.mxu0
        %v4884 = vadd.f32 0.0, %v4883
        %v4885 = vpop.f32.mrf.mxu0
        %v4886 = vpop.f32.mrf.mxu0
        %4887 = vdwg.mxu0
        %4888 = vmatprep.subr.bf16.mxu0 0
        %4889 = vmatpush1.bf16.msra.mxu0 0
        %4890 = vmatprep.subr.bf16.mxu0 0
        %4891 = vmatpush1.bf16.msra.mxu0 0
        %4892 = vmatprep.subr.bf16.mxu0 0
        %4893 = vmatpush1.bf16.msra.mxu0 0
        %4894 = vmatprep.subr.bf16.mxu0 0
        %4895 = vmatpush1.bf16.msra.mxu0 0
        %4896 = vmatprep.subr.bf16.mxu0 0
        %4897 = vmatpush1.bf16.msra.mxu0 0
        %4898 = vmatprep.subr.bf16.mxu0 0
        %4899 = vmatpush1.bf16.msra.mxu0 0
        %4900 = vmatprep.subr.bf16.mxu0 0
        %4901 = vmatpush1.bf16.msra.mxu0 0
        %4902 = vmatprep.subr.bf16.mxu0 %v4845
        %4903 = vmatpush1.bf16.msra.mxu0 %v4842
        %4904 = vmatprep.subr.bf16.mxu0 0
        %4905 = vmatpush2.bf16.msra.mxu0 0
        %4906 = vmatprep.subr.bf16.mxu0 0
        %4907 = vmatpush2.bf16.msra.mxu0 0
        %4908 = vmatprep.subr.bf16.mxu0 0
        %4909 = vmatpush2.bf16.msra.mxu0 0
        %4910 = vmatprep.subr.bf16.mxu0 0
        %4911 = vmatpush2.bf16.msra.mxu0 0
        %4912 = vmatprep.subr.bf16.mxu0 0
        %4913 = vmatpush2.bf16.msra.mxu0 0
        %4914 = vmatprep.subr.bf16.mxu0 0
        %4915 = vmatpush2.bf16.msra.mxu0 0
        %4916 = vmatprep.subr.bf16.mxu0 0
        %4917 = vmatpush2.bf16.msra.mxu0 0
        %4918 = vmatprep.subr.bf16.mxu0 0
        %4919 = vmatpush2.bf16.msra.mxu0 0
        %4920 = vmatprep.mubr.bf16.mxu0 0
        %4921 = vmatmul.mubr.bf16.gmra.mxu0 %v4833
        %v4922 = vpop.f32.mrf.mxu0
        %v4923 = vadd.f32 0.0, %v4922
        %v4924 = vpop.f32.mrf.mxu0
        %v4925 = vadd.f32 0.0, %v4924
        %v4926 = vpop.f32.mrf.mxu0
        %v4927 = vpop.f32.mrf.mxu0
        %4928 = vdwg.mxu0
        %v4929 = vadd.f32 %v4811, %v4882
        %v4930 = vadd.f32 %v4812, %v4884
        %v4931 = vadd.f32 %v4813, %v4923
        %v4932 = vadd.f32 %v4814, %v4925
        %s4933 = scalar_lea.vmem %s1, 164
        %v4934 = vld [vmem:[%s4933] sm:$0xf]
        %4935 = vrot.lane.b32.xlu0 %v3396, 2
        %v4936 = vpop.permute.xlu0 %4935
        %4937 = vrot.lane.b32.xlu0 %v3397, 2
        %v4938 = vpop.permute.xlu0 %4937
        %4939 = vrot.lane.b32.xlu0 %v3398, 2
        %v4940 = vpop.permute.xlu0 %4939
        %4941 = vrot.lane.b32.xlu0 %v3399, 2
        %v4942 = vpop.permute.xlu0 %4941
        %4943 = vrot.lane.b32.xlu0 %v3400, 2
        %v4944 = vpop.permute.xlu0 %4943
        %vm4945 = vcmask 15360
        %v4946 = vsel %vm4945, %v4936, %v4938
        %v4947 = vsel %vm4945, %v4938, %v4940
        %v4948 = vsel %vm4945, %v4940, %v4942
        %v4949 = vsel %vm4945, %v4942, %v4944
        %v4951 = vsel %vm197, %v4934, 0
        %v4954 = vsel %vm201, %v4946, 0
        %v4957 = vsel %vm201, %v4947, 0
        %v4960 = vsel %vm201, %v4948, 0
        %v4963 = vsel %vm201, %v4949, 0
        %4965 = vmatprep.subr.bf16.mxu0 0
        %4966 = vmatpush1.bf16.msra.mxu0 0
        %4967 = vmatprep.subr.bf16.mxu0 0
        %4968 = vmatpush1.bf16.msra.mxu0 0
        %4969 = vmatprep.subr.bf16.mxu0 0
        %4970 = vmatpush1.bf16.msra.mxu0 0
        %4971 = vmatprep.subr.bf16.mxu0 0
        %4972 = vmatpush1.bf16.msra.mxu0 0
        %4973 = vmatprep.subr.bf16.mxu0 0
        %4974 = vmatpush1.bf16.msra.mxu0 0
        %4975 = vmatprep.subr.bf16.mxu0 0
        %4976 = vmatpush1.bf16.msra.mxu0 0
        %4977 = vmatprep.subr.bf16.mxu0 0
        %4978 = vmatpush1.bf16.msra.mxu0 0
        %4979 = vmatprep.subr.bf16.mxu0 %v4957
        %4980 = vmatpush1.bf16.msra.mxu0 %v4954
        %4981 = vmatprep.subr.bf16.mxu0 0
        %4982 = vmatpush2.bf16.msra.mxu0 0
        %4983 = vmatprep.subr.bf16.mxu0 0
        %4984 = vmatpush2.bf16.msra.mxu0 0
        %4985 = vmatprep.subr.bf16.mxu0 0
        %4986 = vmatpush2.bf16.msra.mxu0 0
        %4987 = vmatprep.subr.bf16.mxu0 0
        %4988 = vmatpush2.bf16.msra.mxu0 0
        %4989 = vmatprep.subr.bf16.mxu0 0
        %4990 = vmatpush2.bf16.msra.mxu0 0
        %4991 = vmatprep.subr.bf16.mxu0 0
        %4992 = vmatpush2.bf16.msra.mxu0 0
        %4993 = vmatprep.subr.bf16.mxu0 0
        %4994 = vmatpush2.bf16.msra.mxu0 0
        %4995 = vmatprep.subr.bf16.mxu0 0
        %4996 = vmatpush2.bf16.msra.mxu0 0
        %4997 = vmatprep.mubr.bf16.mxu0 0
        %4998 = vmatmul.mubr.bf16.gmra.mxu0 %v4951
        %v4999 = vpop.f32.mrf.mxu0
        %v5000 = vadd.f32 0.0, %v4999
        %v5001 = vpop.f32.mrf.mxu0
        %v5002 = vadd.f32 0.0, %v5001
        %v5003 = vpop.f32.mrf.mxu0
        %v5004 = vpop.f32.mrf.mxu0
        %5005 = vdwg.mxu0
        %5006 = vmatprep.subr.bf16.mxu0 0
        %5007 = vmatpush1.bf16.msra.mxu0 0
        %5008 = vmatprep.subr.bf16.mxu0 0
        %5009 = vmatpush1.bf16.msra.mxu0 0
        %5010 = vmatprep.subr.bf16.mxu0 0
        %5011 = vmatpush1.bf16.msra.mxu0 0
        %5012 = vmatprep.subr.bf16.mxu0 0
        %5013 = vmatpush1.bf16.msra.mxu0 0
        %5014 = vmatprep.subr.bf16.mxu0 0
        %5015 = vmatpush1.bf16.msra.mxu0 0
        %5016 = vmatprep.subr.bf16.mxu0 0
        %5017 = vmatpush1.bf16.msra.mxu0 0
        %5018 = vmatprep.subr.bf16.mxu0 0
        %5019 = vmatpush1.bf16.msra.mxu0 0
        %5020 = vmatprep.subr.bf16.mxu0 %v4963
        %5021 = vmatpush1.bf16.msra.mxu0 %v4960
        %5022 = vmatprep.subr.bf16.mxu0 0
        %5023 = vmatpush2.bf16.msra.mxu0 0
        %5024 = vmatprep.subr.bf16.mxu0 0
        %5025 = vmatpush2.bf16.msra.mxu0 0
        %5026 = vmatprep.subr.bf16.mxu0 0
        %5027 = vmatpush2.bf16.msra.mxu0 0
        %5028 = vmatprep.subr.bf16.mxu0 0
        %5029 = vmatpush2.bf16.msra.mxu0 0
        %5030 = vmatprep.subr.bf16.mxu0 0
        %5031 = vmatpush2.bf16.msra.mxu0 0
        %5032 = vmatprep.subr.bf16.mxu0 0
        %5033 = vmatpush2.bf16.msra.mxu0 0
        %5034 = vmatprep.subr.bf16.mxu0 0
        %5035 = vmatpush2.bf16.msra.mxu0 0
        %5036 = vmatprep.subr.bf16.mxu0 0
        %5037 = vmatpush2.bf16.msra.mxu0 0
        %5038 = vmatprep.mubr.bf16.mxu0 0
        %5039 = vmatmul.mubr.bf16.gmra.mxu0 %v4951
        %v5040 = vpop.f32.mrf.mxu0
        %v5041 = vadd.f32 0.0, %v5040
        %v5042 = vpop.f32.mrf.mxu0
        %v5043 = vadd.f32 0.0, %v5042
        %v5044 = vpop.f32.mrf.mxu0
        %v5045 = vpop.f32.mrf.mxu0
        %5046 = vdwg.mxu0
        %v5047 = vadd.f32 %v4929, %v5000
        %v5048 = vadd.f32 %v4930, %v5002
        %v5049 = vadd.f32 %v4931, %v5041
        %v5050 = vadd.f32 %v4932, %v5043
        %v5051 = vld [vmem:[%s168 + $0x4] sm:$0xff]
        %v5052 = vld [vmem:[%s168 + $0xc] sm:$0xff]
        %s5053 = scalar_lea.vmem %s1, 168
        %v5054 = vld [vmem:[%s5053] sm:$0xf]
        %v5057 = vunpack.c.l.b16 %v5051
        %v5058 = vunpack.c.h.b16 %v5051
        %v5059 = vunpack.c.l.b16 %v5052
        %v5060 = vunpack.c.h.b16 %v5052
        %v5061 = vpack.c.b16 %v5057, %v5057
        %v5062 = vpack.c.b16 %v5058, %v5058
        %v5063 = vpack.c.b16 %v5059, %v5059
        %v5064 = vpack.c.b16 %v5060, %v5060
        %5065 = vrot.lane.b32.xlu0 %v5061, 112
        %v5066 = vpop.permute.xlu0 %5065
        %5067 = vrot.lane.b32.xlu0 %v5062, 112
        %v5068 = vpop.permute.xlu0 %5067
        %5069 = vrot.lane.b32.xlu0 %v5063, 112
        %v5070 = vpop.permute.xlu0 %5069
        %5071 = vrot.lane.b32.xlu0 %v5064, 112
        %v5072 = vpop.permute.xlu0 %5071
        %vm5073 = vcmask 916480
        %v5074 = vsel %vm5073, %v5066, %v5068
        %v5075 = vsel %vm5073, %v5068, %v5070
        %v5076 = vsel %vm5073, %v5070, %v5072
        %v5078 = vsel %vm197, %v5054, 0
        %v5081 = vsel %vm201, %v5074, 0
        %v5084 = vsel %vm201, %v5075, 0
        %v5087 = vsel %vm201, %v5076, 0
        %v5090 = vsel %vm201, %v5072, 0
        %5092 = vmatprep.subr.bf16.mxu0 0
        %5093 = vmatpush1.bf16.msra.mxu0 0
        %5094 = vmatprep.subr.bf16.mxu0 0
        %5095 = vmatpush1.bf16.msra.mxu0 0
        %5096 = vmatprep.subr.bf16.mxu0 0
        %5097 = vmatpush1.bf16.msra.mxu0 0
        %5098 = vmatprep.subr.bf16.mxu0 0
        %5099 = vmatpush1.bf16.msra.mxu0 0
        %5100 = vmatprep.subr.bf16.mxu0 0
        %5101 = vmatpush1.bf16.msra.mxu0 0
        %5102 = vmatprep.subr.bf16.mxu0 0
        %5103 = vmatpush1.bf16.msra.mxu0 0
        %5104 = vmatprep.subr.bf16.mxu0 0
        %5105 = vmatpush1.bf16.msra.mxu0 0
        %5106 = vmatprep.subr.bf16.mxu0 %v5084
        %5107 = vmatpush1.bf16.msra.mxu0 %v5081
        %5108 = vmatprep.subr.bf16.mxu0 0
        %5109 = vmatpush2.bf16.msra.mxu0 0
        %5110 = vmatprep.subr.bf16.mxu0 0
        %5111 = vmatpush2.bf16.msra.mxu0 0
        %5112 = vmatprep.subr.bf16.mxu0 0
        %5113 = vmatpush2.bf16.msra.mxu0 0
        %5114 = vmatprep.subr.bf16.mxu0 0
        %5115 = vmatpush2.bf16.msra.mxu0 0
        %5116 = vmatprep.subr.bf16.mxu0 0
        %5117 = vmatpush2.bf16.msra.mxu0 0
        %5118 = vmatprep.subr.bf16.mxu0 0
        %5119 = vmatpush2.bf16.msra.mxu0 0
        %5120 = vmatprep.subr.bf16.mxu0 0
        %5121 = vmatpush2.bf16.msra.mxu0 0
        %5122 = vmatprep.subr.bf16.mxu0 0
        %5123 = vmatpush2.bf16.msra.mxu0 0
        %5124 = vmatprep.mubr.bf16.mxu0 0
        %5125 = vmatmul.mubr.bf16.gmra.mxu0 %v5078
        %v5126 = vpop.f32.mrf.mxu0
        %v5127 = vadd.f32 0.0, %v5126
        %v5128 = vpop.f32.mrf.mxu0
        %v5129 = vadd.f32 0.0, %v5128
        %v5130 = vpop.f32.mrf.mxu0
        %v5131 = vpop.f32.mrf.mxu0
        %5132 = vdwg.mxu0
        %5133 = vmatprep.subr.bf16.mxu0 0
        %5134 = vmatpush1.bf16.msra.mxu0 0
        %5135 = vmatprep.subr.bf16.mxu0 0
        %5136 = vmatpush1.bf16.msra.mxu0 0
        %5137 = vmatprep.subr.bf16.mxu0 0
        %5138 = vmatpush1.bf16.msra.mxu0 0
        %5139 = vmatprep.subr.bf16.mxu0 0
        %5140 = vmatpush1.bf16.msra.mxu0 0
        %5141 = vmatprep.subr.bf16.mxu0 0
        %5142 = vmatpush1.bf16.msra.mxu0 0
        %5143 = vmatprep.subr.bf16.mxu0 0
        %5144 = vmatpush1.bf16.msra.mxu0 0
        %5145 = vmatprep.subr.bf16.mxu0 0
        %5146 = vmatpush1.bf16.msra.mxu0 0
        %5147 = vmatprep.subr.bf16.mxu0 %v5090
        %5148 = vmatpush1.bf16.msra.mxu0 %v5087
        %5149 = vmatprep.subr.bf16.mxu0 0
        %5150 = vmatpush2.bf16.msra.mxu0 0
        %5151 = vmatprep.subr.bf16.mxu0 0
        %5152 = vmatpush2.bf16.msra.mxu0 0
        %5153 = vmatprep.subr.bf16.mxu0 0
        %5154 = vmatpush2.bf16.msra.mxu0 0
        %5155 = vmatprep.subr.bf16.mxu0 0
        %5156 = vmatpush2.bf16.msra.mxu0 0
        %5157 = vmatprep.subr.bf16.mxu0 0
        %5158 = vmatpush2.bf16.msra.mxu0 0
        %5159 = vmatprep.subr.bf16.mxu0 0
        %5160 = vmatpush2.bf16.msra.mxu0 0
        %5161 = vmatprep.subr.bf16.mxu0 0
        %5162 = vmatpush2.bf16.msra.mxu0 0
        %5163 = vmatprep.subr.bf16.mxu0 0
        %5164 = vmatpush2.bf16.msra.mxu0 0
        %5165 = vmatprep.mubr.bf16.mxu0 0
        %5166 = vmatmul.mubr.bf16.gmra.mxu0 %v5078
        %v5167 = vpop.f32.mrf.mxu0
        %v5168 = vadd.f32 0.0, %v5167
        %v5169 = vpop.f32.mrf.mxu0
        %v5170 = vadd.f32 0.0, %v5169
        %v5171 = vpop.f32.mrf.mxu0
        %v5172 = vpop.f32.mrf.mxu0
        %5173 = vdwg.mxu0
        %v5174 = vadd.f32 %v5047, %v5127
        %v5175 = vadd.f32 %v5048, %v5129
        %v5176 = vadd.f32 %v5049, %v5168
        %v5177 = vadd.f32 %v5050, %v5170
        %s5178 = scalar_lea.vmem %s1, 172
        %v5179 = vld [vmem:[%s5178] sm:$0xf]
        %5180 = vrot.lane.b32.xlu0 %v5061, 111
        %v5181 = vpop.permute.xlu0 %5180
        %5182 = vrot.lane.b32.xlu0 %v5062, 111
        %v5183 = vpop.permute.xlu0 %5182
        %5184 = vrot.lane.b32.xlu0 %v5063, 111
        %v5185 = vpop.permute.xlu0 %5184
        %5186 = vrot.lane.b32.xlu0 %v5064, 111
        %v5187 = vpop.permute.xlu0 %5186
        %vm5188 = vcmask 908288
        %v5189 = vsel %vm5188, %v5181, %v5183
        %v5190 = vsel %vm5188, %v5183, %v5185
        %v5191 = vsel %vm5188, %v5185, %v5187
        %v5193 = vsel %vm197, %v5179, 0
        %v5196 = vsel %vm201, %v5189, 0
        %v5199 = vsel %vm201, %v5190, 0
        %v5202 = vsel %vm201, %v5191, 0
        %v5205 = vsel %vm201, %v5187, 0
        %5207 = vmatprep.subr.bf16.mxu0 0
        %5208 = vmatpush1.bf16.msra.mxu0 0
        %5209 = vmatprep.subr.bf16.mxu0 0
        %5210 = vmatpush1.bf16.msra.mxu0 0
        %5211 = vmatprep.subr.bf16.mxu0 0
        %5212 = vmatpush1.bf16.msra.mxu0 0
        %5213 = vmatprep.subr.bf16.mxu0 0
        %5214 = vmatpush1.bf16.msra.mxu0 0
        %5215 = vmatprep.subr.bf16.mxu0 0
        %5216 = vmatpush1.bf16.msra.mxu0 0
        %5217 = vmatprep.subr.bf16.mxu0 0
        %5218 = vmatpush1.bf16.msra.mxu0 0
        %5219 = vmatprep.subr.bf16.mxu0 0
        %5220 = vmatpush1.bf16.msra.mxu0 0
        %5221 = vmatprep.subr.bf16.mxu0 %v5199
        %5222 = vmatpush1.bf16.msra.mxu0 %v5196
        %5223 = vmatprep.subr.bf16.mxu0 0
        %5224 = vmatpush2.bf16.msra.mxu0 0
        %5225 = vmatprep.subr.bf16.mxu0 0
        %5226 = vmatpush2.bf16.msra.mxu0 0
        %5227 = vmatprep.subr.bf16.mxu0 0
        %5228 = vmatpush2.bf16.msra.mxu0 0
        %5229 = vmatprep.subr.bf16.mxu0 0
        %5230 = vmatpush2.bf16.msra.mxu0 0
        %5231 = vmatprep.subr.bf16.mxu0 0
        %5232 = vmatpush2.bf16.msra.mxu0 0
        %5233 = vmatprep.subr.bf16.mxu0 0
        %5234 = vmatpush2.bf16.msra.mxu0 0
        %5235 = vmatprep.subr.bf16.mxu0 0
        %5236 = vmatpush2.bf16.msra.mxu0 0
        %5237 = vmatprep.subr.bf16.mxu0 0
        %5238 = vmatpush2.bf16.msra.mxu0 0
        %5239 = vmatprep.mubr.bf16.mxu0 0
        %5240 = vmatmul.mubr.bf16.gmra.mxu0 %v5193
        %v5241 = vpop.f32.mrf.mxu0
        %v5242 = vadd.f32 0.0, %v5241
        %v5243 = vpop.f32.mrf.mxu0
        %v5244 = vadd.f32 0.0, %v5243
        %v5245 = vpop.f32.mrf.mxu0
        %v5246 = vpop.f32.mrf.mxu0
        %5247 = vdwg.mxu0
        %5248 = vmatprep.subr.bf16.mxu0 0
        %5249 = vmatpush1.bf16.msra.mxu0 0
        %5250 = vmatprep.subr.bf16.mxu0 0
        %5251 = vmatpush1.bf16.msra.mxu0 0
        %5252 = vmatprep.subr.bf16.mxu0 0
        %5253 = vmatpush1.bf16.msra.mxu0 0
        %5254 = vmatprep.subr.bf16.mxu0 0
        %5255 = vmatpush1.bf16.msra.mxu0 0
        %5256 = vmatprep.subr.bf16.mxu0 0
        %5257 = vmatpush1.bf16.msra.mxu0 0
        %5258 = vmatprep.subr.bf16.mxu0 0
        %5259 = vmatpush1.bf16.msra.mxu0 0
        %5260 = vmatprep.subr.bf16.mxu0 0
        %5261 = vmatpush1.bf16.msra.mxu0 0
        %5262 = vmatprep.subr.bf16.mxu0 %v5205
        %5263 = vmatpush1.bf16.msra.mxu0 %v5202
        %5264 = vmatprep.subr.bf16.mxu0 0
        %5265 = vmatpush2.bf16.msra.mxu0 0
        %5266 = vmatprep.subr.bf16.mxu0 0
        %5267 = vmatpush2.bf16.msra.mxu0 0
        %5268 = vmatprep.subr.bf16.mxu0 0
        %5269 = vmatpush2.bf16.msra.mxu0 0
        %5270 = vmatprep.subr.bf16.mxu0 0
        %5271 = vmatpush2.bf16.msra.mxu0 0
        %5272 = vmatprep.subr.bf16.mxu0 0
        %5273 = vmatpush2.bf16.msra.mxu0 0
        %5274 = vmatprep.subr.bf16.mxu0 0
        %5275 = vmatpush2.bf16.msra.mxu0 0
        %5276 = vmatprep.subr.bf16.mxu0 0
        %5277 = vmatpush2.bf16.msra.mxu0 0
        %5278 = vmatprep.subr.bf16.mxu0 0
        %5279 = vmatpush2.bf16.msra.mxu0 0
        %5280 = vmatprep.mubr.bf16.mxu0 0
        %5281 = vmatmul.mubr.bf16.gmra.mxu0 %v5193
        %v5282 = vpop.f32.mrf.mxu0
        %v5283 = vadd.f32 0.0, %v5282
        %v5284 = vpop.f32.mrf.mxu0
        %v5285 = vadd.f32 0.0, %v5284
        %v5286 = vpop.f32.mrf.mxu0
        %v5287 = vpop.f32.mrf.mxu0
        %5288 = vdwg.mxu0
        %v5289 = vadd.f32 %v5174, %v5242
        %v5290 = vadd.f32 %v5175, %v5244
        %v5291 = vadd.f32 %v5176, %v5283
        %v5292 = vadd.f32 %v5177, %v5285
        %s5293 = scalar_lea.vmem %s1, 176
        %v5294 = vld [vmem:[%s5293] sm:$0xf]
        %5295 = vrot.lane.b32.xlu0 %v5061, 110
        %v5296 = vpop.permute.xlu0 %5295
        %5297 = vrot.lane.b32.xlu0 %v5062, 110
        %v5298 = vpop.permute.xlu0 %5297
        %5299 = vrot.lane.b32.xlu0 %v5063, 110
        %v5300 = vpop.permute.xlu0 %5299
        %5301 = vrot.lane.b32.xlu0 %v5064, 110
        %v5302 = vpop.permute.xlu0 %5301
        %vm5303 = vcmask 900096
        %v5304 = vsel %vm5303, %v5296, %v5298
        %v5305 = vsel %vm5303, %v5298, %v5300
        %v5306 = vsel %vm5303, %v5300, %v5302
        %v5308 = vsel %vm197, %v5294, 0
        %v5311 = vsel %vm201, %v5304, 0
        %v5314 = vsel %vm201, %v5305, 0
        %v5317 = vsel %vm201, %v5306, 0
        %v5320 = vsel %vm201, %v5302, 0
        %5322 = vmatprep.subr.bf16.mxu0 0
        %5323 = vmatpush1.bf16.msra.mxu0 0
        %5324 = vmatprep.subr.bf16.mxu0 0
        %5325 = vmatpush1.bf16.msra.mxu0 0
        %5326 = vmatprep.subr.bf16.mxu0 0
        %5327 = vmatpush1.bf16.msra.mxu0 0
        %5328 = vmatprep.subr.bf16.mxu0 0
        %5329 = vmatpush1.bf16.msra.mxu0 0
        %5330 = vmatprep.subr.bf16.mxu0 0
        %5331 = vmatpush1.bf16.msra.mxu0 0
        %5332 = vmatprep.subr.bf16.mxu0 0
        %5333 = vmatpush1.bf16.msra.mxu0 0
        %5334 = vmatprep.subr.bf16.mxu0 0
        %5335 = vmatpush1.bf16.msra.mxu0 0
        %5336 = vmatprep.subr.bf16.mxu0 %v5314
        %5337 = vmatpush1.bf16.msra.mxu0 %v5311
        %5338 = vmatprep.subr.bf16.mxu0 0
        %5339 = vmatpush2.bf16.msra.mxu0 0
        %5340 = vmatprep.subr.bf16.mxu0 0
        %5341 = vmatpush2.bf16.msra.mxu0 0
        %5342 = vmatprep.subr.bf16.mxu0 0
        %5343 = vmatpush2.bf16.msra.mxu0 0
        %5344 = vmatprep.subr.bf16.mxu0 0
        %5345 = vmatpush2.bf16.msra.mxu0 0
        %5346 = vmatprep.subr.bf16.mxu0 0
        %5347 = vmatpush2.bf16.msra.mxu0 0
        %5348 = vmatprep.subr.bf16.mxu0 0
        %5349 = vmatpush2.bf16.msra.mxu0 0
        %5350 = vmatprep.subr.bf16.mxu0 0
        %5351 = vmatpush2.bf16.msra.mxu0 0
        %5352 = vmatprep.subr.bf16.mxu0 0
        %5353 = vmatpush2.bf16.msra.mxu0 0
        %5354 = vmatprep.mubr.bf16.mxu0 0
        %5355 = vmatmul.mubr.bf16.gmra.mxu0 %v5308
        %v5356 = vpop.f32.mrf.mxu0
        %v5357 = vadd.f32 0.0, %v5356
        %v5358 = vpop.f32.mrf.mxu0
        %v5359 = vadd.f32 0.0, %v5358
        %v5360 = vpop.f32.mrf.mxu0
        %v5361 = vpop.f32.mrf.mxu0
        %5362 = vdwg.mxu0
        %5363 = vmatprep.subr.bf16.mxu0 0
        %5364 = vmatpush1.bf16.msra.mxu0 0
        %5365 = vmatprep.subr.bf16.mxu0 0
        %5366 = vmatpush1.bf16.msra.mxu0 0
        %5367 = vmatprep.subr.bf16.mxu0 0
        %5368 = vmatpush1.bf16.msra.mxu0 0
        %5369 = vmatprep.subr.bf16.mxu0 0
        %5370 = vmatpush1.bf16.msra.mxu0 0
        %5371 = vmatprep.subr.bf16.mxu0 0
        %5372 = vmatpush1.bf16.msra.mxu0 0
        %5373 = vmatprep.subr.bf16.mxu0 0
        %5374 = vmatpush1.bf16.msra.mxu0 0
        %5375 = vmatprep.subr.bf16.mxu0 0
        %5376 = vmatpush1.bf16.msra.mxu0 0
        %5377 = vmatprep.subr.bf16.mxu0 %v5320
        %5378 = vmatpush1.bf16.msra.mxu0 %v5317
        %5379 = vmatprep.subr.bf16.mxu0 0
        %5380 = vmatpush2.bf16.msra.mxu0 0
        %5381 = vmatprep.subr.bf16.mxu0 0
        %5382 = vmatpush2.bf16.msra.mxu0 0
        %5383 = vmatprep.subr.bf16.mxu0 0
        %5384 = vmatpush2.bf16.msra.mxu0 0
        %5385 = vmatprep.subr.bf16.mxu0 0
        %5386 = vmatpush2.bf16.msra.mxu0 0
        %5387 = vmatprep.subr.bf16.mxu0 0
        %5388 = vmatpush2.bf16.msra.mxu0 0
        %5389 = vmatprep.subr.bf16.mxu0 0
        %5390 = vmatpush2.bf16.msra.mxu0 0
        %5391 = vmatprep.subr.bf16.mxu0 0
        %5392 = vmatpush2.bf16.msra.mxu0 0
        %5393 = vmatprep.subr.bf16.mxu0 0
        %5394 = vmatpush2.bf16.msra.mxu0 0
        %5395 = vmatprep.mubr.bf16.mxu0 0
        %5396 = vmatmul.mubr.bf16.gmra.mxu0 %v5308
        %v5397 = vpop.f32.mrf.mxu0
        %v5398 = vadd.f32 0.0, %v5397
        %v5399 = vpop.f32.mrf.mxu0
        %v5400 = vadd.f32 0.0, %v5399
        %v5401 = vpop.f32.mrf.mxu0
        %v5402 = vpop.f32.mrf.mxu0
        %5403 = vdwg.mxu0
        %v5404 = vadd.f32 %v5289, %v5357
        %v5405 = vadd.f32 %v5290, %v5359
        %v5406 = vadd.f32 %v5291, %v5398
        %v5407 = vadd.f32 %v5292, %v5400
        %s5408 = scalar_lea.vmem %s1, 180
        %v5409 = vld [vmem:[%s5408] sm:$0xf]
        %5410 = vrot.lane.b32.xlu0 %v5061, 109
        %v5411 = vpop.permute.xlu0 %5410
        %5412 = vrot.lane.b32.xlu0 %v5062, 109
        %v5413 = vpop.permute.xlu0 %5412
        %5414 = vrot.lane.b32.xlu0 %v5063, 109
        %v5415 = vpop.permute.xlu0 %5414
        %5416 = vrot.lane.b32.xlu0 %v5064, 109
        %v5417 = vpop.permute.xlu0 %5416
        %vm5418 = vcmask 891904
        %v5419 = vsel %vm5418, %v5411, %v5413
        %v5420 = vsel %vm5418, %v5413, %v5415
        %v5421 = vsel %vm5418, %v5415, %v5417
        %v5423 = vsel %vm197, %v5409, 0
        %v5426 = vsel %vm201, %v5419, 0
        %v5429 = vsel %vm201, %v5420, 0
        %v5432 = vsel %vm201, %v5421, 0
        %v5435 = vsel %vm201, %v5417, 0
        %5437 = vmatprep.subr.bf16.mxu0 0
        %5438 = vmatpush1.bf16.msra.mxu0 0
        %5439 = vmatprep.subr.bf16.mxu0 0
        %5440 = vmatpush1.bf16.msra.mxu0 0
        %5441 = vmatprep.subr.bf16.mxu0 0
        %5442 = vmatpush1.bf16.msra.mxu0 0
        %5443 = vmatprep.subr.bf16.mxu0 0
        %5444 = vmatpush1.bf16.msra.mxu0 0
        %5445 = vmatprep.subr.bf16.mxu0 0
        %5446 = vmatpush1.bf16.msra.mxu0 0
        %5447 = vmatprep.subr.bf16.mxu0 0
        %5448 = vmatpush1.bf16.msra.mxu0 0
        %5449 = vmatprep.subr.bf16.mxu0 0
        %5450 = vmatpush1.bf16.msra.mxu0 0
        %5451 = vmatprep.subr.bf16.mxu0 %v5429
        %5452 = vmatpush1.bf16.msra.mxu0 %v5426
        %5453 = vmatprep.subr.bf16.mxu0 0
        %5454 = vmatpush2.bf16.msra.mxu0 0
        %5455 = vmatprep.subr.bf16.mxu0 0
        %5456 = vmatpush2.bf16.msra.mxu0 0
        %5457 = vmatprep.subr.bf16.mxu0 0
        %5458 = vmatpush2.bf16.msra.mxu0 0
        %5459 = vmatprep.subr.bf16.mxu0 0
        %5460 = vmatpush2.bf16.msra.mxu0 0
        %5461 = vmatprep.subr.bf16.mxu0 0
        %5462 = vmatpush2.bf16.msra.mxu0 0
        %5463 = vmatprep.subr.bf16.mxu0 0
        %5464 = vmatpush2.bf16.msra.mxu0 0
        %5465 = vmatprep.subr.bf16.mxu0 0
        %5466 = vmatpush2.bf16.msra.mxu0 0
        %5467 = vmatprep.subr.bf16.mxu0 0
        %5468 = vmatpush2.bf16.msra.mxu0 0
        %5469 = vmatprep.mubr.bf16.mxu0 0
        %5470 = vmatmul.mubr.bf16.gmra.mxu0 %v5423
        %v5471 = vpop.f32.mrf.mxu0
        %v5472 = vadd.f32 0.0, %v5471
        %v5473 = vpop.f32.mrf.mxu0
        %v5474 = vadd.f32 0.0, %v5473
        %v5475 = vpop.f32.mrf.mxu0
        %v5476 = vpop.f32.mrf.mxu0
        %5477 = vdwg.mxu0
        %5478 = vmatprep.subr.bf16.mxu0 0
        %5479 = vmatpush1.bf16.msra.mxu0 0
        %5480 = vmatprep.subr.bf16.mxu0 0
        %5481 = vmatpush1.bf16.msra.mxu0 0
        %5482 = vmatprep.subr.bf16.mxu0 0
        %5483 = vmatpush1.bf16.msra.mxu0 0
        %5484 = vmatprep.subr.bf16.mxu0 0
        %5485 = vmatpush1.bf16.msra.mxu0 0
        %5486 = vmatprep.subr.bf16.mxu0 0
        %5487 = vmatpush1.bf16.msra.mxu0 0
        %5488 = vmatprep.subr.bf16.mxu0 0
        %5489 = vmatpush1.bf16.msra.mxu0 0
        %5490 = vmatprep.subr.bf16.mxu0 0
        %5491 = vmatpush1.bf16.msra.mxu0 0
        %5492 = vmatprep.subr.bf16.mxu0 %v5435
        %5493 = vmatpush1.bf16.msra.mxu0 %v5432
        %5494 = vmatprep.subr.bf16.mxu0 0
        %5495 = vmatpush2.bf16.msra.mxu0 0
        %5496 = vmatprep.subr.bf16.mxu0 0
        %5497 = vmatpush2.bf16.msra.mxu0 0
        %5498 = vmatprep.subr.bf16.mxu0 0
        %5499 = vmatpush2.bf16.msra.mxu0 0
        %5500 = vmatprep.subr.bf16.mxu0 0
        %5501 = vmatpush2.bf16.msra.mxu0 0
        %5502 = vmatprep.subr.bf16.mxu0 0
        %5503 = vmatpush2.bf16.msra.mxu0 0
        %5504 = vmatprep.subr.bf16.mxu0 0
        %5505 = vmatpush2.bf16.msra.mxu0 0
        %5506 = vmatprep.subr.bf16.mxu0 0
        %5507 = vmatpush2.bf16.msra.mxu0 0
        %5508 = vmatprep.subr.bf16.mxu0 0
        %5509 = vmatpush2.bf16.msra.mxu0 0
        %5510 = vmatprep.mubr.bf16.mxu0 0
        %5511 = vmatmul.mubr.bf16.gmra.mxu0 %v5423
        %v5512 = vpop.f32.mrf.mxu0
        %v5513 = vadd.f32 0.0, %v5512
        %v5514 = vpop.f32.mrf.mxu0
        %v5515 = vadd.f32 0.0, %v5514
        %v5516 = vpop.f32.mrf.mxu0
        %v5517 = vpop.f32.mrf.mxu0
        %5518 = vdwg.mxu0
        %v5519 = vadd.f32 %v5404, %v5472
        %v5520 = vadd.f32 %v5405, %v5474
        %v5521 = vadd.f32 %v5406, %v5513
        %v5522 = vadd.f32 %v5407, %v5515
        %s5523 = scalar_lea.vmem %s1, 184
        %v5524 = vld [vmem:[%s5523] sm:$0xf]
        %5525 = vrot.lane.b32.xlu0 %v5061, 108
        %v5526 = vpop.permute.xlu0 %5525
        %5527 = vrot.lane.b32.xlu0 %v5062, 108
        %v5528 = vpop.permute.xlu0 %5527
        %5529 = vrot.lane.b32.xlu0 %v5063, 108
        %v5530 = vpop.permute.xlu0 %5529
        %5531 = vrot.lane.b32.xlu0 %v5064, 108
        %v5532 = vpop.permute.xlu0 %5531
        %vm5533 = vcmask 883712
        %v5534 = vsel %vm5533, %v5526, %v5528
        %v5535 = vsel %vm5533, %v5528, %v5530
        %v5536 = vsel %vm5533, %v5530, %v5532
        %v5538 = vsel %vm197, %v5524, 0
        %v5541 = vsel %vm201, %v5534, 0
        %v5544 = vsel %vm201, %v5535, 0
        %v5547 = vsel %vm201, %v5536, 0
        %v5550 = vsel %vm201, %v5532, 0
        %5552 = vmatprep.subr.bf16.mxu0 0
        %5553 = vmatpush1.bf16.msra.mxu0 0
        %5554 = vmatprep.subr.bf16.mxu0 0
        %5555 = vmatpush1.bf16.msra.mxu0 0
        %5556 = vmatprep.subr.bf16.mxu0 0
        %5557 = vmatpush1.bf16.msra.mxu0 0
        %5558 = vmatprep.subr.bf16.mxu0 0
        %5559 = vmatpush1.bf16.msra.mxu0 0
        %5560 = vmatprep.subr.bf16.mxu0 0
        %5561 = vmatpush1.bf16.msra.mxu0 0
        %5562 = vmatprep.subr.bf16.mxu0 0
        %5563 = vmatpush1.bf16.msra.mxu0 0
        %5564 = vmatprep.subr.bf16.mxu0 0
        %5565 = vmatpush1.bf16.msra.mxu0 0
        %5566 = vmatprep.subr.bf16.mxu0 %v5544
        %5567 = vmatpush1.bf16.msra.mxu0 %v5541
        %5568 = vmatprep.subr.bf16.mxu0 0
        %5569 = vmatpush2.bf16.msra.mxu0 0
        %5570 = vmatprep.subr.bf16.mxu0 0
        %5571 = vmatpush2.bf16.msra.mxu0 0
        %5572 = vmatprep.subr.bf16.mxu0 0
        %5573 = vmatpush2.bf16.msra.mxu0 0
        %5574 = vmatprep.subr.bf16.mxu0 0
        %5575 = vmatpush2.bf16.msra.mxu0 0
        %5576 = vmatprep.subr.bf16.mxu0 0
        %5577 = vmatpush2.bf16.msra.mxu0 0
        %5578 = vmatprep.subr.bf16.mxu0 0
        %5579 = vmatpush2.bf16.msra.mxu0 0
        %5580 = vmatprep.subr.bf16.mxu0 0
        %5581 = vmatpush2.bf16.msra.mxu0 0
        %5582 = vmatprep.subr.bf16.mxu0 0
        %5583 = vmatpush2.bf16.msra.mxu0 0
        %5584 = vmatprep.mubr.bf16.mxu0 0
        %5585 = vmatmul.mubr.bf16.gmra.mxu0 %v5538
        %v5586 = vpop.f32.mrf.mxu0
        %v5587 = vadd.f32 0.0, %v5586
        %v5588 = vpop.f32.mrf.mxu0
        %v5589 = vadd.f32 0.0, %v5588
        %v5590 = vpop.f32.mrf.mxu0
        %v5591 = vpop.f32.mrf.mxu0
        %5592 = vdwg.mxu0
        %5593 = vmatprep.subr.bf16.mxu0 0
        %5594 = vmatpush1.bf16.msra.mxu0 0
        %5595 = vmatprep.subr.bf16.mxu0 0
        %5596 = vmatpush1.bf16.msra.mxu0 0
        %5597 = vmatprep.subr.bf16.mxu0 0
        %5598 = vmatpush1.bf16.msra.mxu0 0
        %5599 = vmatprep.subr.bf16.mxu0 0
        %5600 = vmatpush1.bf16.msra.mxu0 0
        %5601 = vmatprep.subr.bf16.mxu0 0
        %5602 = vmatpush1.bf16.msra.mxu0 0
        %5603 = vmatprep.subr.bf16.mxu0 0
        %5604 = vmatpush1.bf16.msra.mxu0 0
        %5605 = vmatprep.subr.bf16.mxu0 0
        %5606 = vmatpush1.bf16.msra.mxu0 0
        %5607 = vmatprep.subr.bf16.mxu0 %v5550
        %5608 = vmatpush1.bf16.msra.mxu0 %v5547
        %5609 = vmatprep.subr.bf16.mxu0 0
        %5610 = vmatpush2.bf16.msra.mxu0 0
        %5611 = vmatprep.subr.bf16.mxu0 0
        %5612 = vmatpush2.bf16.msra.mxu0 0
        %5613 = vmatprep.subr.bf16.mxu0 0
        %5614 = vmatpush2.bf16.msra.mxu0 0
        %5615 = vmatprep.subr.bf16.mxu0 0
        %5616 = vmatpush2.bf16.msra.mxu0 0
        %5617 = vmatprep.subr.bf16.mxu0 0
        %5618 = vmatpush2.bf16.msra.mxu0 0
        %5619 = vmatprep.subr.bf16.mxu0 0
        %5620 = vmatpush2.bf16.msra.mxu0 0
        %5621 = vmatprep.subr.bf16.mxu0 0
        %5622 = vmatpush2.bf16.msra.mxu0 0
        %5623 = vmatprep.subr.bf16.mxu0 0
        %5624 = vmatpush2.bf16.msra.mxu0 0
        %5625 = vmatprep.mubr.bf16.mxu0 0
        %5626 = vmatmul.mubr.bf16.gmra.mxu0 %v5538
        %v5627 = vpop.f32.mrf.mxu0
        %v5628 = vadd.f32 0.0, %v5627
        %v5629 = vpop.f32.mrf.mxu0
        %v5630 = vadd.f32 0.0, %v5629
        %v5631 = vpop.f32.mrf.mxu0
        %v5632 = vpop.f32.mrf.mxu0
        %5633 = vdwg.mxu0
        %v5634 = vadd.f32 %v5519, %v5587
        %v5635 = vadd.f32 %v5520, %v5589
        %v5636 = vadd.f32 %v5521, %v5628
        %v5637 = vadd.f32 %v5522, %v5630
        %s5638 = scalar_lea.vmem %s1, 188
        %v5639 = vld [vmem:[%s5638] sm:$0xf]
        %5640 = vrot.lane.b32.xlu0 %v5061, 107
        %v5641 = vpop.permute.xlu0 %5640
        %5642 = vrot.lane.b32.xlu0 %v5062, 107
        %v5643 = vpop.permute.xlu0 %5642
        %5644 = vrot.lane.b32.xlu0 %v5063, 107
        %v5645 = vpop.permute.xlu0 %5644
        %5646 = vrot.lane.b32.xlu0 %v5064, 107
        %v5647 = vpop.permute.xlu0 %5646
        %vm5648 = vcmask 875520
        %v5649 = vsel %vm5648, %v5641, %v5643
        %v5650 = vsel %vm5648, %v5643, %v5645
        %v5651 = vsel %vm5648, %v5645, %v5647
        %v5653 = vsel %vm197, %v5639, 0
        %v5656 = vsel %vm201, %v5649, 0
        %v5659 = vsel %vm201, %v5650, 0
        %v5662 = vsel %vm201, %v5651, 0
        %v5665 = vsel %vm201, %v5647, 0
        %5667 = vmatprep.subr.bf16.mxu0 0
        %5668 = vmatpush1.bf16.msra.mxu0 0
        %5669 = vmatprep.subr.bf16.mxu0 0
        %5670 = vmatpush1.bf16.msra.mxu0 0
        %5671 = vmatprep.subr.bf16.mxu0 0
        %5672 = vmatpush1.bf16.msra.mxu0 0
        %5673 = vmatprep.subr.bf16.mxu0 0
        %5674 = vmatpush1.bf16.msra.mxu0 0
        %5675 = vmatprep.subr.bf16.mxu0 0
        %5676 = vmatpush1.bf16.msra.mxu0 0
        %5677 = vmatprep.subr.bf16.mxu0 0
        %5678 = vmatpush1.bf16.msra.mxu0 0
        %5679 = vmatprep.subr.bf16.mxu0 0
        %5680 = vmatpush1.bf16.msra.mxu0 0
        %5681 = vmatprep.subr.bf16.mxu0 %v5659
        %5682 = vmatpush1.bf16.msra.mxu0 %v5656
        %5683 = vmatprep.subr.bf16.mxu0 0
        %5684 = vmatpush2.bf16.msra.mxu0 0
        %5685 = vmatprep.subr.bf16.mxu0 0
        %5686 = vmatpush2.bf16.msra.mxu0 0
        %5687 = vmatprep.subr.bf16.mxu0 0
        %5688 = vmatpush2.bf16.msra.mxu0 0
        %5689 = vmatprep.subr.bf16.mxu0 0
        %5690 = vmatpush2.bf16.msra.mxu0 0
        %5691 = vmatprep.subr.bf16.mxu0 0
        %5692 = vmatpush2.bf16.msra.mxu0 0
        %5693 = vmatprep.subr.bf16.mxu0 0
        %5694 = vmatpush2.bf16.msra.mxu0 0
        %5695 = vmatprep.subr.bf16.mxu0 0
        %5696 = vmatpush2.bf16.msra.mxu0 0
        %5697 = vmatprep.subr.bf16.mxu0 0
        %5698 = vmatpush2.bf16.msra.mxu0 0
        %5699 = vmatprep.mubr.bf16.mxu0 0
        %5700 = vmatmul.mubr.bf16.gmra.mxu0 %v5653
        %v5701 = vpop.f32.mrf.mxu0
        %v5702 = vadd.f32 0.0, %v5701
        %v5703 = vpop.f32.mrf.mxu0
        %v5704 = vadd.f32 0.0, %v5703
        %v5705 = vpop.f32.mrf.mxu0
        %v5706 = vpop.f32.mrf.mxu0
        %5707 = vdwg.mxu0
        %5708 = vmatprep.subr.bf16.mxu0 0
        %5709 = vmatpush1.bf16.msra.mxu0 0
        %5710 = vmatprep.subr.bf16.mxu0 0
        %5711 = vmatpush1.bf16.msra.mxu0 0
        %5712 = vmatprep.subr.bf16.mxu0 0
        %5713 = vmatpush1.bf16.msra.mxu0 0
        %5714 = vmatprep.subr.bf16.mxu0 0
        %5715 = vmatpush1.bf16.msra.mxu0 0
        %5716 = vmatprep.subr.bf16.mxu0 0
        %5717 = vmatpush1.bf16.msra.mxu0 0
        %5718 = vmatprep.subr.bf16.mxu0 0
        %5719 = vmatpush1.bf16.msra.mxu0 0
        %5720 = vmatprep.subr.bf16.mxu0 0
        %5721 = vmatpush1.bf16.msra.mxu0 0
        %5722 = vmatprep.subr.bf16.mxu0 %v5665
        %5723 = vmatpush1.bf16.msra.mxu0 %v5662
        %5724 = vmatprep.subr.bf16.mxu0 0
        %5725 = vmatpush2.bf16.msra.mxu0 0
        %5726 = vmatprep.subr.bf16.mxu0 0
        %5727 = vmatpush2.bf16.msra.mxu0 0
        %5728 = vmatprep.subr.bf16.mxu0 0
        %5729 = vmatpush2.bf16.msra.mxu0 0
        %5730 = vmatprep.subr.bf16.mxu0 0
        %5731 = vmatpush2.bf16.msra.mxu0 0
        %5732 = vmatprep.subr.bf16.mxu0 0
        %5733 = vmatpush2.bf16.msra.mxu0 0
        %5734 = vmatprep.subr.bf16.mxu0 0
        %5735 = vmatpush2.bf16.msra.mxu0 0
        %5736 = vmatprep.subr.bf16.mxu0 0
        %5737 = vmatpush2.bf16.msra.mxu0 0
        %5738 = vmatprep.subr.bf16.mxu0 0
        %5739 = vmatpush2.bf16.msra.mxu0 0
        %5740 = vmatprep.mubr.bf16.mxu0 0
        %5741 = vmatmul.mubr.bf16.gmra.mxu0 %v5653
        %v5742 = vpop.f32.mrf.mxu0
        %v5743 = vadd.f32 0.0, %v5742
        %v5744 = vpop.f32.mrf.mxu0
        %v5745 = vadd.f32 0.0, %v5744
        %v5746 = vpop.f32.mrf.mxu0
        %v5747 = vpop.f32.mrf.mxu0
        %5748 = vdwg.mxu0
        %v5749 = vadd.f32 %v5634, %v5702
        %v5750 = vadd.f32 %v5635, %v5704
        %v5751 = vadd.f32 %v5636, %v5743
        %v5752 = vadd.f32 %v5637, %v5745
        %s5753 = scalar_lea.vmem %s1, 192
        %v5754 = vld [vmem:[%s5753] sm:$0xf]
        %5755 = vrot.lane.b32.xlu0 %v5061, 106
        %v5756 = vpop.permute.xlu0 %5755
        %5757 = vrot.lane.b32.xlu0 %v5062, 106
        %v5758 = vpop.permute.xlu0 %5757
        %5759 = vrot.lane.b32.xlu0 %v5063, 106
        %v5760 = vpop.permute.xlu0 %5759
        %5761 = vrot.lane.b32.xlu0 %v5064, 106
        %v5762 = vpop.permute.xlu0 %5761
        %vm5763 = vcmask 867328
        %v5764 = vsel %vm5763, %v5756, %v5758
        %v5765 = vsel %vm5763, %v5758, %v5760
        %v5766 = vsel %vm5763, %v5760, %v5762
        %v5768 = vsel %vm197, %v5754, 0
        %v5771 = vsel %vm201, %v5764, 0
        %v5774 = vsel %vm201, %v5765, 0
        %v5777 = vsel %vm201, %v5766, 0
        %v5780 = vsel %vm201, %v5762, 0
        %5782 = vmatprep.subr.bf16.mxu0 0
        %5783 = vmatpush1.bf16.msra.mxu0 0
        %5784 = vmatprep.subr.bf16.mxu0 0
        %5785 = vmatpush1.bf16.msra.mxu0 0
        %5786 = vmatprep.subr.bf16.mxu0 0
        %5787 = vmatpush1.bf16.msra.mxu0 0
        %5788 = vmatprep.subr.bf16.mxu0 0
        %5789 = vmatpush1.bf16.msra.mxu0 0
        %5790 = vmatprep.subr.bf16.mxu0 0
        %5791 = vmatpush1.bf16.msra.mxu0 0
        %5792 = vmatprep.subr.bf16.mxu0 0
        %5793 = vmatpush1.bf16.msra.mxu0 0
        %5794 = vmatprep.subr.bf16.mxu0 0
        %5795 = vmatpush1.bf16.msra.mxu0 0
        %5796 = vmatprep.subr.bf16.mxu0 %v5774
        %5797 = vmatpush1.bf16.msra.mxu0 %v5771
        %5798 = vmatprep.subr.bf16.mxu0 0
        %5799 = vmatpush2.bf16.msra.mxu0 0
        %5800 = vmatprep.subr.bf16.mxu0 0
        %5801 = vmatpush2.bf16.msra.mxu0 0
        %5802 = vmatprep.subr.bf16.mxu0 0
        %5803 = vmatpush2.bf16.msra.mxu0 0
        %5804 = vmatprep.subr.bf16.mxu0 0
        %5805 = vmatpush2.bf16.msra.mxu0 0
        %5806 = vmatprep.subr.bf16.mxu0 0
        %5807 = vmatpush2.bf16.msra.mxu0 0
        %5808 = vmatprep.subr.bf16.mxu0 0
        %5809 = vmatpush2.bf16.msra.mxu0 0
        %5810 = vmatprep.subr.bf16.mxu0 0
        %5811 = vmatpush2.bf16.msra.mxu0 0
        %5812 = vmatprep.subr.bf16.mxu0 0
        %5813 = vmatpush2.bf16.msra.mxu0 0
        %5814 = vmatprep.mubr.bf16.mxu0 0
        %5815 = vmatmul.mubr.bf16.gmra.mxu0 %v5768
        %v5816 = vpop.f32.mrf.mxu0
        %v5817 = vadd.f32 0.0, %v5816
        %v5818 = vpop.f32.mrf.mxu0
        %v5819 = vadd.f32 0.0, %v5818
        %v5820 = vpop.f32.mrf.mxu0
        %v5821 = vpop.f32.mrf.mxu0
        %5822 = vdwg.mxu0
        %5823 = vmatprep.subr.bf16.mxu0 0
        %5824 = vmatpush1.bf16.msra.mxu0 0
        %5825 = vmatprep.subr.bf16.mxu0 0
        %5826 = vmatpush1.bf16.msra.mxu0 0
        %5827 = vmatprep.subr.bf16.mxu0 0
        %5828 = vmatpush1.bf16.msra.mxu0 0
        %5829 = vmatprep.subr.bf16.mxu0 0
        %5830 = vmatpush1.bf16.msra.mxu0 0
        %5831 = vmatprep.subr.bf16.mxu0 0
        %5832 = vmatpush1.bf16.msra.mxu0 0
        %5833 = vmatprep.subr.bf16.mxu0 0
        %5834 = vmatpush1.bf16.msra.mxu0 0
        %5835 = vmatprep.subr.bf16.mxu0 0
        %5836 = vmatpush1.bf16.msra.mxu0 0
        %5837 = vmatprep.subr.bf16.mxu0 %v5780
        %5838 = vmatpush1.bf16.msra.mxu0 %v5777
        %5839 = vmatprep.subr.bf16.mxu0 0
        %5840 = vmatpush2.bf16.msra.mxu0 0
        %5841 = vmatprep.subr.bf16.mxu0 0
        %5842 = vmatpush2.bf16.msra.mxu0 0
        %5843 = vmatprep.subr.bf16.mxu0 0
        %5844 = vmatpush2.bf16.msra.mxu0 0
        %5845 = vmatprep.subr.bf16.mxu0 0
        %5846 = vmatpush2.bf16.msra.mxu0 0
        %5847 = vmatprep.subr.bf16.mxu0 0
        %5848 = vmatpush2.bf16.msra.mxu0 0
        %5849 = vmatprep.subr.bf16.mxu0 0
        %5850 = vmatpush2.bf16.msra.mxu0 0
        %5851 = vmatprep.subr.bf16.mxu0 0
        %5852 = vmatpush2.bf16.msra.mxu0 0
        %5853 = vmatprep.subr.bf16.mxu0 0
        %5854 = vmatpush2.bf16.msra.mxu0 0
        %5855 = vmatprep.mubr.bf16.mxu0 0
        %5856 = vmatmul.mubr.bf16.gmra.mxu0 %v5768
        %v5857 = vpop.f32.mrf.mxu0
        %v5858 = vadd.f32 0.0, %v5857
        %v5859 = vpop.f32.mrf.mxu0
        %v5860 = vadd.f32 0.0, %v5859
        %v5861 = vpop.f32.mrf.mxu0
        %v5862 = vpop.f32.mrf.mxu0
        %5863 = vdwg.mxu0
        %v5864 = vadd.f32 %v5749, %v5817
        %v5865 = vadd.f32 %v5750, %v5819
        %v5866 = vadd.f32 %v5751, %v5858
        %v5867 = vadd.f32 %v5752, %v5860
        %v5868 = vld [vmem:[%s2] sm:$0xf]
        %v5870 = vlaneseq
        %v5871 = vshrl.u32 %v5870, 7
        %v5872 = vsub.s32 0, %v5871
        %v5873 = vrot.slane %v5868, %v5872
        %v5874 = vlaneseq
        %v5875 = vshrl.u32 %v5874, 7
        %v5876 = vsub.s32 1, %v5875
        %v5877 = vrot.slane %v5868, %v5876
        %v5878 = vlaneseq
        %v5879 = vshrl.u32 %v5878, 7
        %v5880 = vsub.s32 2, %v5879
        %v5881 = vrot.slane %v5868, %v5880
        %v5882 = vlaneseq
        %v5883 = vshrl.u32 %v5882, 7
        %v5884 = vsub.s32 3, %v5883
        %v5885 = vrot.slane %v5868, %v5884
        %v5890 = vmul.f32 %v5864, %v5873
        %v5891 = vmul.f32 %v5865, %v5877
        %v5892 = vmul.f32 %v5866, %v5881
        %v5893 = vmul.f32 %v5867, %v5885
        %v5894 = vadd.f32 %v5890, %v5891
        %v5895 = vadd.f32 %v5894, %v5892
        %vm5896 = vcmask 392192
        %v5897 = vsel %vm5896, %v5893, 0.0
        %v5898 = vadd.f32 %v5895, %v5897
        %5899 = vadd.xlane.f32.xlu0 %v5898
        %v5900 = vpop.xlane.xlu0 %5899
        %v5901 = vmul.f32 %v5900, 0.0030864198
        %v5902 = vsub.f32 %v5864, %v5901
        %v5903 = vsub.f32 %v5865, %v5901
        %v5904 = vsub.f32 %v5866, %v5901
        %v5905 = vsub.f32 %v5867, %v5901
        %v5906 = vmul.f32 %v5902, %v5902
        %v5907 = vmul.f32 %v5903, %v5903
        %v5908 = vmul.f32 %v5904, %v5904
        %v5909 = vmul.f32 %v5905, %v5905
        %v5910 = vmul.f32 %v5906, %v5873
        %v5911 = vmul.f32 %v5907, %v5877
        %v5912 = vmul.f32 %v5908, %v5881
        %v5913 = vmul.f32 %v5909, %v5885
        %v5914 = vadd.f32 %v5910, %v5911
        %v5915 = vadd.f32 %v5914, %v5912
        %v5916 = vsel %vm5896, %v5913, 0.0
        %v5917 = vadd.f32 %v5915, %v5916
        %5918 = vadd.xlane.f32.xlu0 %v5917
        %v5919 = vpop.xlane.xlu0 %5918
        %v5920 = vmul.f32 %v5919, 0.0030864198
        %v5921 = vadd.f32 %v5920, 1e-05
        %v5922 = vrsqrt.pop %v5921
        %v5923 = vmul.f32 %v5902, %v5922
        %v5924 = vmul.f32 %v5903, %v5922
        %v5925 = vmul.f32 %v5904, %v5922
        %v5926 = vmul.f32 %v5905, %v5922
        %v5927 = vmax.f32 %v5923, 0.0
        %v5928 = vmax.f32 %v5924, 0.0
        %v5929 = vmax.f32 %v5925, 0.0
        %v5930 = vmax.f32 %v5926, 0.0
        %5931 = vst [vmem:[%s163] sm:$0xff] %v5927
        %5932 = vst [vmem:[%s163 + $0x8] sm:$0xff] %v5928
        %5933 = vst [vmem:[%s163 + $0x10] sm:$0xff] %v5929
        %5934 = vst.msk [vmem:[%s163 + $0x18] sm:$0xff] %vm5896, %v5930
        %s5935 = sand.u32 %s93, 1
        %s5936 = scalar_lea.sflag [#allocation3], %s5935
        %s5937 = sand.u32 %s93, 1
        %s5938 = smul.addr %s5937, 32
        %s5939 = scalar_lea.vmem [#allocation2], %s5938
        // Predicated region
        $region33: #{tpu_custom_call.1} parent=31 // pred_check
          %p5940 = pneg %p103
        $region34: #{tpu_custom_call.1} parent=31 // pred_check_branch
          %5942 = sbr.rel (%p5940) target = $region36
        $region35: #{tpu_custom_call.1} parent=31 // pred_region
          %s5944 = ssub.s32 512, 512
          %5945 = vsyncadd %s5936, %s5944
          %s5946 = smul.addr %s17, 4
          %s5947 = smul.addr %s5946, 128
          %s5948 = scalar_lea.hbm %s3, %s5947
          %s5950 = sshll.u32 %s5939, 4
          %s5951 = int_to_ptr.vmem [resolvable:$true] %s5950
          %5953 = dma.vmem_to_hbm [thread:$0]  %s5951, 512, %s5948, %s5936
        $region36: #{tpu_custom_call.1} parent=31 // pred_fallthru
          _
      $region32: #{tpu_custom_call.1} parent=5 // pred_fallthru
        _
      %p5954 = scmp.le.s32.totalorder 2, %s12
      // Predicated region
      $region37: #{tpu_custom_call.1} parent=5 // pred_check
        %p5955 = pneg %p5954
      $region38: #{tpu_custom_call.1} parent=5 // pred_check_branch
        %5957 = sbr.rel (%p5955) target = $region40
      $region39: #{tpu_custom_call.1} parent=5 // pred_region
        %s5958 = ssub.s32 %s12, 2
        // Predicated region
        $region41: #{tpu_custom_call.1} parent=39 // pred_check
          %p5959 = pneg %p109
        $region42: #{tpu_custom_call.1} parent=39 // pred_check_branch
          %5961 = sbr.rel (%p5959) target = $region44
        $region43: #{tpu_custom_call.1} parent=39 // pred_region
          %s5962 = sand.u32 %s94, 1
          %s5963 = scalar_lea.sflag [#allocation3], %s5962
          %s5964 = sand.u32 %s94, 1
          %s5965 = smul.addr %s5964, 32
          %s5966 = scalar_lea.vmem [#allocation2], %s5965
          %5967 = dma.done %s5963, 512
        $region44: #{tpu_custom_call.1} parent=39 // pred_fallthru
          _
      $region40: #{tpu_custom_call.1} parent=5 // pred_fallthru
        _
    $region6: #{tpu_custom_call.1} parent=1 // loop_footer
      %s16 = sadd.s32 1, %s12
    $region7: #{tpu_custom_call.1} parent=1 // loop_footer_branch
      %11 = sbr.rel target = $region3
    $region8: #{tpu_custom_call.1} parent=1 // loop_exit
      _
    %5968 = vsyncpa [#allocation3], 1
    %s5969 = scalar_lea.sflag [#allocation3], 1
    %5970 = vsyncpa %s5969, 1

</llo_original>
